<compile_context>
chip_gen: v5e
topology: v5e:2x2
jax: 0.10.0
libtpu: 0.0.40
codegen_flags: <defaults>
</compile_context>

<pallas_src>
import math
from functools import partial

import jax
import jax.numpy as jnp
from jax.experimental import pallas as pl
from jax.experimental.pallas import tpu as pltpu

_VMEM_LIMIT = 32 * 1024 * 1024  # default scoped limit on v6e/v7x; safe on v5e too


# ----------------------------------------------------------------------------- helpers
def make_div(v, divisor, min_value=None):
    if min_value is None:
        min_value = divisor
    new_v = max(min_value, int(v + divisor / 2) // divisor * divisor)
    if new_v < 0.9 * v:
        new_v += divisor
    return new_v


def _round_up(v, m):
    return ((v + m - 1) // m) * m


def _m_tiling(M):
    """Pad M to a multiple of 128 and pick a tile that divides it."""
    Mpad = _round_up(M, 128)
    Mt = 256 if Mpad % 256 == 0 else 128
    return Mpad, Mt


def _apply_act(y, act):
    if act == "relu":
        return jnp.maximum(y, 0.0)
    if act == "hardswish":  # F.hardswish: x * relu6(x+3) / 6
        return y * jnp.clip(y + 3.0, 0.0, 6.0) * (1.0 / 6.0)
    return y


def hardswish(x):
    return x * jnp.clip(x + 3.0, 0.0, 6.0) * (1.0 / 6.0)


def extract_patches_im2col(x_nhwc, K, stride, pad):
    """x: [N,H,W,C] -> A [N*Ho*Wo, K*K*C] with (kh, kw, c) column ordering."""
    N, H, W, C = x_nhwc.shape
    xp = jnp.pad(x_nhwc, ((0, 0), (pad, pad), (pad, pad), (0, 0)))
    Ho = (H + 2 * pad - K) // stride + 1
    Wo = (W + 2 * pad - K) // stride + 1
    pats = []
    for kh in range(K):
        for kw in range(K):
            sl = xp[:, kh:kh + stride * (Ho - 1) + 1:stride,
                    kw:kw + stride * (Wo - 1) + 1:stride, :]
            pats.append(sl)
    a = jnp.stack(pats, axis=3).reshape(N * Ho * Wo, K * K * C)
    return a, Ho, Wo


def extract_patches_cm(x_nhwc, K, stride, pad):
    """x: [N,H,W,C] -> patches [K*K, C, N*Ho*Wo] (lane-dense M-last layout)."""
    N, H, W, C = x_nhwc.shape
    x = jnp.transpose(x_nhwc, (3, 0, 1, 2))  # [C, N, H, W]
    xp = jnp.pad(x, ((0, 0), (0, 0), (pad, pad), (pad, pad)))
    Ho = (H + 2 * pad - K) // stride + 1
    Wo = (W + 2 * pad - K) // stride + 1
    pats = []
    for kh in range(K):
        for kw in range(K):
            sl = xp[:, :, kh:kh + stride * (Ho - 1) + 1:stride,
                    kw:kw + stride * (Wo - 1) + 1:stride]
            pats.append(sl.reshape(C, N * Ho * Wo))
    return jnp.stack(pats, axis=0), Ho, Wo


# ----------------------------------------------------------------------------- Pallas kernels
def matmul_bn_act_kernel(a_ref, b_ref, scale_ref, bias_ref, o_ref, *, act):
    y = jnp.dot(a_ref[...], b_ref[...], preferred_element_type=jnp.float32)
    y = y * scale_ref[...] + bias_ref[...]
    o_ref[...] = _apply_act(y, act)


def matmul_bn_act_res_kernel(a_ref, b_ref, scale_ref, bias_ref, res_ref, o_ref, *, act):
    y = jnp.dot(a_ref[...], b_ref[...], preferred_element_type=jnp.float32)
    y = y * scale_ref[...] + bias_ref[...]
    o_ref[...] = _apply_act(y, act) + res_ref[...]


def dw_conv_bn_act_kernel(p_ref, w_ref, scale_ref, bias_ref, o_ref, *, kk, act):
    # p: [KK, C, Mt]   w: [KK, C, 1]   scale/bias: [C, 1]   o: [C, Mt]
    acc = p_ref[0] * w_ref[0]
    for k in range(1, kk):
        acc = acc + p_ref[k] * w_ref[k]
    y = acc * scale_ref[...] + bias_ref[...]
    o_ref[...] = _apply_act(y, act)


def adder_dw_bn_relu_kernel(p_ref, w_ref, scale_ref, bias_ref, o_ref, *, kk):
    # AdderNet grouped-depthwise: out[g, r, m] = -sum_k |p[k, g, m] - w[k, g, r]|
    # p: [KK, Cin, Mt]  w: [KK, Cin, mult]  scale/bias: [Cin, mult, 1]  o: [Cin, mult, Mt]
    acc = jnp.abs(p_ref[0][:, None, :] - w_ref[0][:, :, None])
    for k in range(1, kk):
        acc = acc + jnp.abs(p_ref[k][:, None, :] - w_ref[k][:, :, None])
    y = (-acc) * scale_ref[...] + bias_ref[...]
    o_ref[...] = jnp.maximum(y, 0.0)


# ----------------------------------------------------------------------------- kernel wrappers
def matmul_bn_act(a, b, scale, bias, act="none", residual=None):
    """act((a @ b) * scale + bias) [+ residual].  a:[M,K] b:[K,N] f32.
    MXU is fed bf16; epilogue stays f32.  N padded to 128 for lane-dense output."""
    M, K = a.shape
    N = b.shape[1]
    Npad = _round_up(N, 128)
    tm = 256 if M >= 256 else _round_up(M, 8)
    Mpad = _round_up(M, tm)

    a_p = a if Mpad == M else jnp.pad(a, ((0, Mpad - M), (0, 0)))
    b_p = jnp.pad(b, ((0, 0), (0, Npad - N)))
    scale_p = jnp.pad(scale.reshape(1, N), ((0, 0), (0, Npad - N)))
    bias_p = jnp.pad(bias.reshape(1, N), ((0, 0), (0, Npad - N)))

    args = [a_p.astype(jnp.bfloat16), b_p.astype(jnp.bfloat16), scale_p, bias_p]
    in_specs = [
        pl.BlockSpec((tm, K), lambda i: (i, 0)),
        pl.BlockSpec((K, Npad), lambda i: (0, 0)),
        pl.BlockSpec((1, Npad), lambda i: (0, 0)),
        pl.BlockSpec((1, Npad), lambda i: (0, 0)),
    ]
    if residual is not None:
        res_p = jnp.pad(residual.astype(jnp.float32),
                        ((0, Mpad - M), (0, Npad - N)))
        args.append(res_p)
        in_specs.append(pl.BlockSpec((tm, Npad), lambda i: (i, 0)))
        kernel = partial(matmul_bn_act_res_kernel, act=act)
    else:
        kernel = partial(matmul_bn_act_kernel, act=act)

    out = pl.pallas_call(
        kernel,
        out_shape=jax.ShapeDtypeStruct((Mpad, Npad), jnp.float32),
        grid=(Mpad // tm,),
        in_specs=in_specs,
        out_specs=pl.BlockSpec((tm, Npad), lambda i: (i, 0)),
        compiler_params=pltpu.CompilerParams(
            dimension_semantics=("parallel",),
            vmem_limit_bytes=_VMEM_LIMIT),
    )(*args)
    return out[:M, :N]


def conv2d_bn_act(x, w, bn, stride, pad, act, residual=None):
    """Standard (groups=1) conv + folded BN + act via im2col matmul.  NHWC in/out."""
    N, H, W, Cin = x.shape
    Cout = w.shape[0]
    K = w.shape[-1]
    a, Ho, Wo = extract_patches_im2col(x, K, stride, pad)          # [M, KK*Cin]
    b = jnp.transpose(w, (2, 3, 1, 0)).reshape(K * K * Cin, Cout)  # (kh,kw,c) rows
    scale, bias = bn
    res2d = None if residual is None else residual.reshape(N * Ho * Wo, Cout)
    out = matmul_bn_act(a, b, scale, bias, act, residual=res2d)
    return out.reshape(N, Ho, Wo, Cout)


def dwconv_bn_act(x, w, bn, stride, pad, act):
    """Depthwise conv (groups=C) + folded BN + act.  x: [N,H,W,C] NHWC."""
    N, H, W, C = x.shape
    K = w.shape[-1]
    KK = K * K
    p, Ho, Wo = extract_patches_cm(x, K, stride, pad)   # [KK, C, M]
    M = N * Ho * Wo
    Mpad, Mt = _m_tiling(M)
    if Mpad != M:
        p = jnp.pad(p, ((0, 0), (0, 0), (0, Mpad - M)))
    w2 = w.reshape(C, KK).T.reshape(KK, C, 1)
    scale, bias = bn
    out = pl.pallas_call(
        partial(dw_conv_bn_act_kernel, kk=KK, act=act),
        out_shape=jax.ShapeDtypeStruct((C, Mpad), jnp.float32),
        grid=(Mpad // Mt,),
        in_specs=[
            pl.BlockSpec((KK, C, Mt), lambda i: (0, 0, i)),
            pl.BlockSpec((KK, C, 1), lambda i: (0, 0, 0)),
            pl.BlockSpec((C, 1), lambda i: (0, 0)),
            pl.BlockSpec((C, 1), lambda i: (0, 0)),
        ],
        out_specs=pl.BlockSpec((C, Mt), lambda i: (0, i)),
        compiler_params=pltpu.CompilerParams(
            dimension_semantics=("parallel",),
            vmem_limit_bytes=_VMEM_LIMIT),
    )(p, w2, scale.reshape(C, 1), bias.reshape(C, 1))
    out = out[:, :M]
    return jnp.transpose(out.reshape(C, N, Ho, Wo), (1, 2, 3, 0))


def adder_dw_bn_relu(x, w, bn, pad):
    """adder.Adder2D(groups=Cin) + BN + ReLU (negative L1 distance).  NHWC in/out."""
    N, H, W, Cin = x.shape
    Cout = w.shape[0]
    K = w.shape[-1]
    KK = K * K
    mult = Cout // Cin
    p, Ho, Wo = extract_patches_cm(x, K, 1, pad)        # [KK, Cin, M]
    M = N * Ho * Wo
    Mpad, Mt = _m_tiling(M)
    if Mpad != M:
        p = jnp.pad(p, ((0, 0), (0, 0), (0, Mpad - M)))
    # w[co,0,kh,kw] with co = g*mult + r  ->  [KK, Cin, mult]
    w2 = jnp.transpose(w.reshape(Cin, mult, KK), (2, 0, 1))
    scale, bias = bn
    out = pl.pallas_call(
        partial(adder_dw_bn_relu_kernel, kk=KK),
        out_shape=jax.ShapeDtypeStruct((Cin, mult, Mpad), jnp.float32),
        grid=(Mpad // Mt,),
        in_specs=[
            pl.BlockSpec((KK, Cin, Mt), lambda i: (0, 0, i)),
            pl.BlockSpec((KK, Cin, mult), lambda i: (0, 0, 0)),
            pl.BlockSpec((Cin, mult, 1), lambda i: (0, 0, 0)),
            pl.BlockSpec((Cin, mult, 1), lambda i: (0, 0, 0)),
        ],
        out_specs=pl.BlockSpec((Cin, mult, Mt), lambda i: (0, 0, i)),
        compiler_params=pltpu.CompilerParams(
            dimension_semantics=("parallel",),
            vmem_limit_bytes=_VMEM_LIMIT),
    )(p, w2, scale.reshape(Cin, mult, 1), bias.reshape(Cin, mult, 1))
    out = out.reshape(Cout, Mpad)[:, :M]
    return jnp.transpose(out.reshape(Cout, N, Ho, Wo), (1, 2, 3, 0))


# ----------------------------------------------------------------------------- modules
def ghost_module(x, p, oup):
    # primary_conv: 1x1 conv + BN, depthwise 3x3 + BN, nn.Identity (no ReLU)
    x1 = conv2d_bn_act(x, p["pw_w"], p["pw_bn"], 1, 0, "none")
    x1 = dwconv_bn_act(x1, p["dw_w"], p["dw_bn"], 1, 1, "none")
    # cheap_operation: Adder2D (groups=init_ch) + BN + ReLU
    x2 = adder_dw_bn_relu(x1, p["add_w"], p["add_bn"], 1)
    out = jnp.concatenate([x1, x2], axis=-1)
    return out[..., :oup]


def squeeze_excite(x, w_red, w_exp):
    # Tiny tensors -> plain JAX (pallas_call overhead dominated this path).
    # gate_fn = F.hardswish, matching the reference module.
    pooled = jnp.mean(x, axis=(1, 2))                                   # [N, C]
    R = w_red.shape[0]
    C = x.shape[-1]
    t = jnp.maximum(pooled @ w_red.reshape(R, C).T, 0.0)                # ReLU
    gate = hardswish(t @ w_exp.reshape(C, R).T)
    return x * gate[:, None, None, :]


def ghost_bottleneck(x, p, in_chs, mid, out_chs, k, stride, se_ratio):
    residual = x
    y = ghost_module(x, p["ghost1"], mid)
    if stride > 1:
        y = dwconv_bn_act(y, p["dw_w"], p["dw_bn"], stride, (k - 1) // 2, "none")
    if se_ratio is not None and se_ratio > 0.0:
        y = squeeze_excite(y, p["se_reduce"], p["se_expand"])
    y = ghost_module(y, p["ghost2"], out_chs)
    if in_chs == out_chs and stride == 1:
        return y + residual
    # conv shortcut: depthwise(stride)+BN, then 1x1+BN with the residual add fused
    # into the matmul epilogue (saves an HBM round trip of the activation).
    s = dwconv_bn_act(residual, p["short_dw_w"], p["short_dw_bn"],
                      stride, (k - 1) // 2, "none")
    return conv2d_bn_act(s, p["short_pw_w"], p["short_pw_bn"], 1, 0, "none",
                         residual=y)


def resnet_ghost_forward(params, x, cfgs, width=1.0):
    y = jnp.transpose(x, (0, 2, 3, 1))                       # NCHW -> NHWC once
    y = conv2d_bn_act(y, params["stem_w"], params["stem_bn"], 1, 1, "relu")
    inplanes = make_div(16 * width, 4)
    exp_size = 16
    for si, cfg in enumerate(cfgs):
        for bi, (k, exp_size, c, se_ratio, s) in enumerate(cfg):
            planes = make_div(c, 4)
            hidden = make_div(exp_size, 4)
            y = ghost_bottleneck(y, params["blocks"][si][bi],
                                 inplanes, hidden, planes, k, s, se_ratio)
            inplanes = planes
    # final ConvBnAct(inplanes, planes, 1)
    y = conv2d_bn_act(y, params["final_w"], params["final_bn"], 1, 0, "relu")
    N, H, W, C = y.shape
    # AvgPool2d(8, stride=1): this configuration reaches exactly 8x8 -> global mean.
    # Plain JAX per perf review (8x8xC pool is tinier than a kernel launch).
    # TODO(synk): general sliding 8x8 average pooling for spatial sizes > 8 not needed here.
    assert H == 8 and W == 8
    pooled = jnp.mean(y, axis=(1, 2))                        # [N, C]
    # conv_head (1x1, no bias) + bn ; act2 / classifier are NOT applied in the reference forward
    head_w = params["head_w"]
    scale, bias = params["head_bn"]
    out = matmul_bn_act(pooled, head_w.reshape(head_w.shape[0], C).T, scale, bias, "none")
    return out.reshape(N, -1)


# ----------------------------------------------------------------------------- parameter init
class KeyGen:
    def __init__(self, seed):
        self.key = jax.random.PRNGKey(seed)

    def __call__(self):
        self.key, sub = jax.random.split(self.key)
        return sub


def init_conv(kg, cout, cin, k):
    fan = cin * k * k
    return (jax.random.normal(kg(), (cout, cin, k, k), jnp.float32)
            * (1.0 / math.sqrt(fan))).astype(jnp.float32)


def init_bn(kg, c, eps=1e-5):
    gamma = 1.0 + 0.1 * jax.random.normal(kg(), (c,), jnp.float32)
    beta = 0.05 * jax.random.normal(kg(), (c,), jnp.float32)
    mean = 0.05 * jax.random.normal(kg(), (c,), jnp.float32)
    var = 0.5 + jax.random.uniform(kg(), (c,), jnp.float32)
    scale = gamma / jnp.sqrt(var + eps)
    bias = beta - mean * scale
    return (scale, bias)


def init_ghost(kg, inp, oup, ratio=10, dw=3):
    init_ch = math.ceil(oup / ratio)
    new_ch = init_ch * (ratio - 1)
    return {
        "pw_w": init_conv(kg, init_ch, inp, 1),
        "pw_bn": init_bn(kg, init_ch),
        "dw_w": init_conv(kg, init_ch, 1, dw),
        "dw_bn": init_bn(kg, init_ch),
        "add_w": init_conv(kg, new_ch, 1, dw),
        "add_bn": init_bn(kg, new_ch),
    }


def init_bottleneck(kg, in_chs, mid, out_chs, k, stride, se_ratio):
    p = {"ghost1": init_ghost(kg, in_chs, mid),
         "ghost2": init_ghost(kg, mid, out_chs)}
    if stride > 1:
        p["dw_w"] = init_conv(kg, mid, 1, k)
        p["dw_bn"] = init_bn(kg, mid)
    if se_ratio is not None and se_ratio > 0.0:
        red = make_div(mid * se_ratio, 4)
        p["se_reduce"] = init_conv(kg, red, mid, 1)
        p["se_expand"] = init_conv(kg, mid, red, 1)
    if not (in_chs == out_chs and stride == 1):
        p["short_dw_w"] = init_conv(kg, in_chs, 1, k)
        p["short_dw_bn"] = init_bn(kg, in_chs)
        p["short_pw_w"] = init_conv(kg, out_chs, in_chs, 1)
        p["short_pw_bn"] = init_bn(kg, out_chs)
    return p


def init_params(kg, cfgs, width=1.0):
    params = {}
    planes = make_div(16 * width, 4)
    params["stem_w"] = init_conv(kg, planes, 3, 3)
    params["stem_bn"] = init_bn(kg, planes)
    inplanes = planes
    blocks = []
    exp_size = 16
    for cfg in cfgs:
        stage = []
        for k, exp_size, c, se_ratio, s in cfg:
            planes = make_div(c, 4)
            hidden = make_div(exp_size, 4)
            stage.append(init_bottleneck(kg, inplanes, hidden, planes, k, s, se_ratio))
            inplanes = planes
        blocks.append(stage)
    params["blocks"] = blocks
    planes = make_div(exp_size, 4)
    params["final_w"] = init_conv(kg, planes, inplanes, 1)
    params["final_bn"] = init_bn(kg, planes)
    params["head_w"] = init_conv(kg, planes, planes, 1)
    params["head_bn"] = init_bn(kg, planes)
    return params


# ----------------------------------------------------------------------------- main
if __name__ == "__main__":
    # cfg rows: [kernel, exp_size, out_channels, se_ratio, stride]
    cfgs = [
        [[3, 16, 16, 0.0, 1]],    # stride-1 block, identity shortcut
        [[3, 24, 24, 0.25, 2]],   # stride-2 block with SqueezeExcite and conv shortcut
    ]
    kg = KeyGen(1234)
    params = init_params(kg, cfgs)

    x = jax.random.normal(jax.random.PRNGKey(0), (2, 3, 16, 16), jnp.float32)

    fwd = jax.jit(partial(resnet_ghost_forward, cfgs=cfgs))
    out = fwd(params, x)
    jax.block_until_ready(out)

    assert out.shape == (2, 24), out.shape
    assert bool(jnp.all(jnp.isfinite(out)))
    print("KERNEL_OK")
</pallas_src>

<mosaic_0001>
module attributes {stable_mosaic.version = 11 : i64} {
  func.func @matmul_bn_act_kernel(%arg0: i32, %arg1: memref<256x27xbf16, #tpu.memory_space<vmem>>, %arg2: memref<27x128xbf16, #tpu.memory_space<vmem>>, %arg3: memref<1x128xf32, #tpu.memory_space<vmem>>, %arg4: memref<1x128xf32, #tpu.memory_space<vmem>>, %arg5: memref<256x128xf32, #tpu.memory_space<vmem>>) attributes {dimension_semantics = [#tpu.dimension_semantics<parallel>], iteration_bounds = array<i64: 2>, scalar_prefetch = 0 : i64, scratch_operands = 0 : i64, tpu.core_type = #tpu.core_type<tc>, window_params = [{transform_indices = @transform_0, window_bounds = array<i64: 256, 27>}, {pipeline_mode = #tpu.pipeline_mode<synchronous>, transform_indices = @transform_1, window_bounds = array<i64: 27, 128>}, {pipeline_mode = #tpu.pipeline_mode<synchronous>, transform_indices = @transform_2, window_bounds = array<i64: 1, 128>}, {pipeline_mode = #tpu.pipeline_mode<synchronous>, transform_indices = @transform_3, window_bounds = array<i64: 1, 128>}, {transform_indices = @transform_4, window_bounds = array<i64: 256, 128>}]} {
    %c0 = arith.constant 0 : index
    %c0_0 = arith.constant 0 : index
    %0 = vector.load %arg1[%c0, %c0_0] : memref<256x27xbf16, #tpu.memory_space<vmem>>, vector<256x27xbf16>
    %c0_1 = arith.constant 0 : index
    %c0_2 = arith.constant 0 : index
    %1 = vector.load %arg2[%c0_1, %c0_2] : memref<27x128xbf16, #tpu.memory_space<vmem>>, vector<27x128xbf16>
    %cst = arith.constant dense<0.000000e+00> : vector<256x128xf32>
    %2 = tpu.matmul %0, %1, %cst {dimension_numbers = #tpu.dot_dimension_numbers<[1], [0], [0], [1], [0, 0, 1, 1], [], []>} : vector<256x27xbf16>, vector<27x128xbf16>, vector<256x128xf32> -> vector<256x128xf32>
    %c0_3 = arith.constant 0 : index
    %c0_4 = arith.constant 0 : index
    %3 = vector.load %arg3[%c0_3, %c0_4] : memref<1x128xf32, #tpu.memory_space<vmem>>, vector<1x128xf32>
    %4 = vector.broadcast %3 : vector<1x128xf32> to vector<256x128xf32>
    %5 = arith.mulf %2, %4 : vector<256x128xf32>
    %c0_5 = arith.constant 0 : index
    %c0_6 = arith.constant 0 : index
    %6 = vector.load %arg4[%c0_5, %c0_6] : memref<1x128xf32, #tpu.memory_space<vmem>>, vector<1x128xf32>
    %7 = vector.broadcast %6 : vector<1x128xf32> to vector<256x128xf32>
    %8 = arith.addf %5, %7 : vector<256x128xf32>
    %cst_7 = arith.constant 0.000000e+00 : f32
    %9 = vector.broadcast %cst_7 : f32 to vector<256x128xf32>
    %10 = arith.maximumf %8, %9 : vector<256x128xf32>
    %c0_8 = arith.constant 0 : index
    %c0_9 = arith.constant 0 : index
    %11 = vector.load %arg5[%c0_8, %c0_9] : memref<256x128xf32, #tpu.memory_space<vmem>>, vector<256x128xf32>
    tpu.vector_store %arg5[%c0_8, %c0_9], %10 {strides = array<i32>} : memref<256x128xf32, #tpu.memory_space<vmem>>, vector<256x128xf32>,
    return
  }
  func.func @transform_0(%arg0: i32) -> (i32, i32) {
    %c0_i32 = arith.constant 0 : i32
    %c0_i32_0 = arith.constant 0 : i32
    return %arg0, %c0_i32 : i32, i32
  }
  func.func @transform_1(%arg0: i32) -> (i32, i32) {
    %c0_i32 = arith.constant 0 : i32
    %c0_i32_0 = arith.constant 0 : i32
    %c0_i32_1 = arith.constant 0 : i32
    return %c0_i32, %c0_i32_0 : i32, i32
  }
  func.func @transform_2(%arg0: i32) -> (i32, i32) {
    %c0_i32 = arith.constant 0 : i32
    %c0_i32_0 = arith.constant 0 : i32
    %c0_i32_1 = arith.constant 0 : i32
    return %c0_i32, %c0_i32_0 : i32, i32
  }
  func.func @transform_3(%arg0: i32) -> (i32, i32) {
    %c0_i32 = arith.constant 0 : i32
    %c0_i32_0 = arith.constant 0 : i32
    %c0_i32_1 = arith.constant 0 : i32
    return %c0_i32, %c0_i32_0 : i32, i32
  }
  func.func @transform_4(%arg0: i32) -> (i32, i32) {
    %c0_i32 = arith.constant 0 : i32
    %c0_i32_0 = arith.constant 0 : i32
    return %arg0, %c0_i32 : i32, i32
  }
}

module attributes {stable_mosaic.version = 11 : i64} {
  func.func @matmul_bn_act_kernel(%arg0: i32, %arg1: memref<256x16xbf16, #tpu.memory_space<vmem>>, %arg2: memref<16x128xbf16, #tpu.memory_space<vmem>>, %arg3: memref<1x128xf32, #tpu.memory_space<vmem>>, %arg4: memref<1x128xf32, #tpu.memory_space<vmem>>, %arg5: memref<256x128xf32, #tpu.memory_space<vmem>>) attributes {dimension_semantics = [#tpu.dimension_semantics<parallel>], iteration_bounds = array<i64: 2>, scalar_prefetch = 0 : i64, scratch_operands = 0 : i64, tpu.core_type = #tpu.core_type<tc>, window_params = [{transform_indices = @transform_0, window_bounds = array<i64: 256, 16>}, {pipeline_mode = #tpu.pipeline_mode<synchronous>, transform_indices = @transform_1, window_bounds = array<i64: 16, 128>}, {pipeline_mode = #tpu.pipeline_mode<synchronous>, transform_indices = @transform_2, window_bounds = array<i64: 1, 128>}, {pipeline_mode = #tpu.pipeline_mode<synchronous>, transform_indices = @transform_3, window_bounds = array<i64: 1, 128>}, {transform_indices = @transform_4, window_bounds = array<i64: 256, 128>}]} {
    %c0 = arith.constant 0 : index
    %c0_0 = arith.constant 0 : index
    %0 = vector.load %arg1[%c0, %c0_0] : memref<256x16xbf16, #tpu.memory_space<vmem>>, vector<256x16xbf16>
    %c0_1 = arith.constant 0 : index
    %c0_2 = arith.constant 0 : index
    %1 = vector.load %arg2[%c0_1, %c0_2] : memref<16x128xbf16, #tpu.memory_space<vmem>>, vector<16x128xbf16>
    %cst = arith.constant dense<0.000000e+00> : vector<256x128xf32>
    %2 = tpu.matmul %0, %1, %cst {dimension_numbers = #tpu.dot_dimension_numbers<[1], [0], [0], [1], [0, 0, 1, 1], [], []>} : vector<256x16xbf16>, vector<16x128xbf16>, vector<256x128xf32> -> vector<256x128xf32>
    %c0_3 = arith.constant 0 : index
    %c0_4 = arith.constant 0 : index
    %3 = vector.load %arg3[%c0_3, %c0_4] : memref<1x128xf32, #tpu.memory_space<vmem>>, vector<1x128xf32>
    %4 = vector.broadcast %3 : vector<1x128xf32> to vector<256x128xf32>
    %5 = arith.mulf %2, %4 : vector<256x128xf32>
    %c0_5 = arith.constant 0 : index
    %c0_6 = arith.constant 0 : index
    %6 = vector.load %arg4[%c0_5, %c0_6] : memref<1x128xf32, #tpu.memory_space<vmem>>, vector<1x128xf32>
    %7 = vector.broadcast %6 : vector<1x128xf32> to vector<256x128xf32>
    %8 = arith.addf %5, %7 : vector<256x128xf32>
    %c0_7 = arith.constant 0 : index
    %c0_8 = arith.constant 0 : index
    %9 = vector.load %arg5[%c0_7, %c0_8] : memref<256x128xf32, #tpu.memory_space<vmem>>, vector<256x128xf32>
    tpu.vector_store %arg5[%c0_7, %c0_8], %8 {strides = array<i32>} : memref<256x128xf32, #tpu.memory_space<vmem>>, vector<256x128xf32>,
    return
  }
  func.func @transform_0(%arg0: i32) -> (i32, i32) {
    %c0_i32 = arith.constant 0 : i32
    %c0_i32_0 = arith.constant 0 : i32
    return %arg0, %c0_i32 : i32, i32
  }
  func.func @transform_1(%arg0: i32) -> (i32, i32) {
    %c0_i32 = arith.constant 0 : i32
    %c0_i32_0 = arith.constant 0 : i32
    %c0_i32_1 = arith.constant 0 : i32
    return %c0_i32, %c0_i32_0 : i32, i32
  }
  func.func @transform_2(%arg0: i32) -> (i32, i32) {
    %c0_i32 = arith.constant 0 : i32
    %c0_i32_0 = arith.constant 0 : i32
    %c0_i32_1 = arith.constant 0 : i32
    return %c0_i32, %c0_i32_0 : i32, i32
  }
  func.func @transform_3(%arg0: i32) -> (i32, i32) {
    %c0_i32 = arith.constant 0 : i32
    %c0_i32_0 = arith.constant 0 : i32
    %c0_i32_1 = arith.constant 0 : i32
    return %c0_i32, %c0_i32_0 : i32, i32
  }
  func.func @transform_4(%arg0: i32) -> (i32, i32) {
    %c0_i32 = arith.constant 0 : i32
    %c0_i32_0 = arith.constant 0 : i32
    return %arg0, %c0_i32 : i32, i32
  }
}

module attributes {stable_mosaic.version = 11 : i64} {
  func.func @dw_conv_bn_act_kernel(%arg0: i32, %arg1: memref<9x2x256xf32, #tpu.memory_space<vmem>>, %arg2: memref<9x2x1xf32, #tpu.memory_space<vmem>>, %arg3: memref<2x1xf32, #tpu.memory_space<vmem>>, %arg4: memref<2x1xf32, #tpu.memory_space<vmem>>, %arg5: memref<2x256xf32, #tpu.memory_space<vmem>>) attributes {dimension_semantics = [#tpu.dimension_semantics<parallel>], iteration_bounds = array<i64: 2>, scalar_prefetch = 0 : i64, scratch_operands = 0 : i64, tpu.core_type = #tpu.core_type<tc>, window_params = [{transform_indices = @transform_0, window_bounds = array<i64: 9, 2, 256>}, {pipeline_mode = #tpu.pipeline_mode<synchronous>, transform_indices = @transform_1, window_bounds = array<i64: 9, 2, 1>}, {pipeline_mode = #tpu.pipeline_mode<synchronous>, transform_indices = @transform_2, window_bounds = array<i64: 2, 1>}, {pipeline_mode = #tpu.pipeline_mode<synchronous>, transform_indices = @transform_3, window_bounds = array<i64: 2, 1>}, {transform_indices = @transform_4, window_bounds = array<i64: 2, 256>}]} {
    %c0 = arith.constant 0 : index
    %c0_0 = arith.constant 0 : index
    %c0_1 = arith.constant 0 : index
    %0 = vector.load %arg1[%c0, %c0_0, %c0_1] : memref<9x2x256xf32, #tpu.memory_space<vmem>>, vector<1x2x256xf32>
    %1 = vector.shape_cast %0 : vector<1x2x256xf32> to vector<2x256xf32>
    %c0_2 = arith.constant 0 : index
    %c0_3 = arith.constant 0 : index
    %c0_4 = arith.constant 0 : index
    %2 = vector.load %arg2[%c0_2, %c0_3, %c0_4] : memref<9x2x1xf32, #tpu.memory_space<vmem>>, vector<1x2x1xf32>
    %3 = vector.shape_cast %2 : vector<1x2x1xf32> to vector<2x1xf32>
    %4 = vector.broadcast %3 : vector<2x1xf32> to vector<2x256xf32>
    %5 = arith.mulf %1, %4 : vector<2x256xf32>
    %c1 = arith.constant 1 : index
    %c0_5 = arith.constant 0 : index
    %c0_6 = arith.constant 0 : index
    %6 = vector.load %arg1[%c1, %c0_5, %c0_6] : memref<9x2x256xf32, #tpu.memory_space<vmem>>, vector<1x2x256xf32>
    %7 = vector.shape_cast %6 : vector<1x2x256xf32> to vector<2x256xf32>
    %c1_7 = arith.constant 1 : index
    %c0_8 = arith.constant 0 : index
    %c0_9 = arith.constant 0 : index
    %8 = vector.load %arg2[%c1_7, %c0_8, %c0_9] : memref<9x2x1xf32, #tpu.memory_space<vmem>>, vector<1x2x1xf32>
    %9 = vector.shape_cast %8 : vector<1x2x1xf32> to vector<2x1xf32>
    %10 = vector.broadcast %9 : vector<2x1xf32> to vector<2x256xf32>
    %11 = arith.mulf %7, %10 : vector<2x256xf32>
    %12 = arith.addf %5, %11 : vector<2x256xf32>
    %c2 = arith.constant 2 : index
    %c0_10 = arith.constant 0 : index
    %c0_11 = arith.constant 0 : index
    %13 = vector.load %arg1[%c2, %c0_10, %c0_11] : memref<9x2x256xf32, #tpu.memory_space<vmem>>, vector<1x2x256xf32>
    %14 = vector.shape_cast %13 : vector<1x2x256xf32> to vector<2x256xf32>
    %c2_12 = arith.constant 2 : index
    %c0_13 = arith.constant 0 : index
    %c0_14 = arith.constant 0 : index
    %15 = vector.load %arg2[%c2_12, %c0_13, %c0_14] : memref<9x2x1xf32, #tpu.memory_space<vmem>>, vector<1x2x1xf32>
    %16 = vector.shape_cast %15 : vector<1x2x1xf32> to vector<2x1xf32>
    %17 = vector.broadcast %16 : vector<2x1xf32> to vector<2x256xf32>
    %18 = arith.mulf %14, %17 : vector<2x256xf32>
    %19 = arith.addf %12, %18 : vector<2x256xf32>
    %c3 = arith.constant 3 : index
    %c0_15 = arith.constant 0 : index
    %c0_16 = arith.constant 0 : index
    %20 = vector.load %arg1[%c3, %c0_15, %c0_16] : memref<9x2x256xf32, #tpu.memory_space<vmem>>, vector<1x2x256xf32>
    %21 = vector.shape_cast %20 : vector<1x2x256xf32> to vector<2x256xf32>
    %c3_17 = arith.constant 3 : index
    %c0_18 = arith.constant 0 : index
    %c0_19 = arith.constant 0 : index
    %22 = vector.load %arg2[%c3_17, %c0_18, %c0_19] : memref<9x2x1xf32, #tpu.memory_space<vmem>>, vector<1x2x1xf32>
    %23 = vector.shape_cast %22 : vector<1x2x1xf32> to vector<2x1xf32>
    %24 = vector.broadcast %23 : vector<2x1xf32> to vector<2x256xf32>
    %25 = arith.mulf %21, %24 : vector<2x256xf32>
    %26 = arith.addf %19, %25 : vector<2x256xf32>
    %c4 = arith.constant 4 : index
    %c0_20 = arith.constant 0 : index
    %c0_21 = arith.constant 0 : index
    %27 = vector.load %arg1[%c4, %c0_20, %c0_21] : memref<9x2x256xf32, #tpu.memory_space<vmem>>, vector<1x2x256xf32>
    %28 = vector.shape_cast %27 : vector<1x2x256xf32> to vector<2x256xf32>
    %c4_22 = arith.constant 4 : index
    %c0_23 = arith.constant 0 : index
    %c0_24 = arith.constant 0 : index
    %29 = vector.load %arg2[%c4_22, %c0_23, %c0_24] : memref<9x2x1xf32, #tpu.memory_space<vmem>>, vector<1x2x1xf32>
    %30 = vector.shape_cast %29 : vector<1x2x1xf32> to vector<2x1xf32>
    %31 = vector.broadcast %30 : vector<2x1xf32> to vector<2x256xf32>
    %32 = arith.mulf %28, %31 : vector<2x256xf32>
    %33 = arith.addf %26, %32 : vector<2x256xf32>
    %c5 = arith.constant 5 : index
    %c0_25 = arith.constant 0 : index
    %c0_26 = arith.constant 0 : index
    %34 = vector.load %arg1[%c5, %c0_25, %c0_26] : memref<9x2x256xf32, #tpu.memory_space<vmem>>, vector<1x2x256xf32>
    %35 = vector.shape_cast %34 : vector<1x2x256xf32> to vector<2x256xf32>
    %c5_27 = arith.constant 5 : index
    %c0_28 = arith.constant 0 : index
    %c0_29 = arith.constant 0 : index
    %36 = vector.load %arg2[%c5_27, %c0_28, %c0_29] : memref<9x2x1xf32, #tpu.memory_space<vmem>>, vector<1x2x1xf32>
    %37 = vector.shape_cast %36 : vector<1x2x1xf32> to vector<2x1xf32>
    %38 = vector.broadcast %37 : vector<2x1xf32> to vector<2x256xf32>
    %39 = arith.mulf %35, %38 : vector<2x256xf32>
    %40 = arith.addf %33, %39 : vector<2x256xf32>
    %c6 = arith.constant 6 : index
    %c0_30 = arith.constant 0 : index
    %c0_31 = arith.constant 0 : index
    %41 = vector.load %arg1[%c6, %c0_30, %c0_31] : memref<9x2x256xf32, #tpu.memory_space<vmem>>, vector<1x2x256xf32>
    %42 = vector.shape_cast %41 : vector<1x2x256xf32> to vector<2x256xf32>
    %c6_32 = arith.constant 6 : index
    %c0_33 = arith.constant 0 : index
    %c0_34 = arith.constant 0 : index
    %43 = vector.load %arg2[%c6_32, %c0_33, %c0_34] : memref<9x2x1xf32, #tpu.memory_space<vmem>>, vector<1x2x1xf32>
    %44 = vector.shape_cast %43 : vector<1x2x1xf32> to vector<2x1xf32>
    %45 = vector.broadcast %44 : vector<2x1xf32> to vector<2x256xf32>
    %46 = arith.mulf %42, %45 : vector<2x256xf32>
    %47 = arith.addf %40, %46 : vector<2x256xf32>
    %c7 = arith.constant 7 : index
    %c0_35 = arith.constant 0 : index
    %c0_36 = arith.constant 0 : index
    %48 = vector.load %arg1[%c7, %c0_35, %c0_36] : memref<9x2x256xf32, #tpu.memory_space<vmem>>, vector<1x2x256xf32>
    %49 = vector.shape_cast %48 : vector<1x2x256xf32> to vector<2x256xf32>
    %c7_37 = arith.constant 7 : index
    %c0_38 = arith.constant 0 : index
    %c0_39 = arith.constant 0 : index
    %50 = vector.load %arg2[%c7_37, %c0_38, %c0_39] : memref<9x2x1xf32, #tpu.memory_space<vmem>>, vector<1x2x1xf32>
    %51 = vector.shape_cast %50 : vector<1x2x1xf32> to vector<2x1xf32>
    %52 = vector.broadcast %51 : vector<2x1xf32> to vector<2x256xf32>
    %53 = arith.mulf %49, %52 : vector<2x256xf32>
    %54 = arith.addf %47, %53 : vector<2x256xf32>
    %c8 = arith.constant 8 : index
    %c0_40 = arith.constant 0 : index
    %c0_41 = arith.constant 0 : index
    %55 = vector.load %arg1[%c8, %c0_40, %c0_41] : memref<9x2x256xf32, #tpu.memory_space<vmem>>, vector<1x2x256xf32>
    %56 = vector.shape_cast %55 : vector<1x2x256xf32> to vector<2x256xf32>
    %c8_42 = arith.constant 8 : index
    %c0_43 = arith.constant 0 : index
    %c0_44 = arith.constant 0 : index
    %57 = vector.load %arg2[%c8_42, %c0_43, %c0_44] : memref<9x2x1xf32, #tpu.memory_space<vmem>>, vector<1x2x1xf32>
    %58 = vector.shape_cast %57 : vector<1x2x1xf32> to vector<2x1xf32>
    %59 = vector.broadcast %58 : vector<2x1xf32> to vector<2x256xf32>
    %60 = arith.mulf %56, %59 : vector<2x256xf32>
    %61 = arith.addf %54, %60 : vector<2x256xf32>
    %c0_45 = arith.constant 0 : index
    %c0_46 = arith.constant 0 : index
    %62 = vector.load %arg3[%c0_45, %c0_46] : memref<2x1xf32, #tpu.memory_space<vmem>>, vector<2x1xf32>
    %63 = vector.broadcast %62 : vector<2x1xf32> to vector<2x256xf32>
    %64 = arith.mulf %61, %63 : vector<2x256xf32>
    %c0_47 = arith.constant 0 : index
    %c0_48 = arith.constant 0 : index
    %65 = vector.load %arg4[%c0_47, %c0_48] : memref<2x1xf32, #tpu.memory_space<vmem>>, vector<2x1xf32>
    %66 = vector.broadcast %65 : vector<2x1xf32> to vector<2x256xf32>
    %67 = arith.addf %64, %66 : vector<2x256xf32>
    %c0_49 = arith.constant 0 : index
    %c0_50 = arith.constant 0 : index
    %68 = vector.load %arg5[%c0_49, %c0_50] : memref<2x256xf32, #tpu.memory_space<vmem>>, vector<2x256xf32>
    tpu.vector_store %arg5[%c0_49, %c0_50], %67 {strides = array<i32>} : memref<2x256xf32, #tpu.memory_space<vmem>>, vector<2x256xf32>,
    return
  }
  func.func @transform_0(%arg0: i32) -> (i32, i32, i32) {
    %c0_i32 = arith.constant 0 : i32
    %c0_i32_0 = arith.constant 0 : i32
    %c0_i32_1 = arith.constant 0 : i32
    return %c0_i32, %c0_i32_0, %arg0 : i32, i32, i32
  }
  func.func @transform_1(%arg0: i32) -> (i32, i32, i32) {
    %c0_i32 = arith.constant 0 : i32
    %c0_i32_0 = arith.constant 0 : i32
    %c0_i32_1 = arith.constant 0 : i32
    %c0_i32_2 = arith.constant 0 : i32
    return %c0_i32, %c0_i32_0, %c0_i32_1 : i32, i32, i32
  }
  func.func @transform_2(%arg0: i32) -> (i32, i32) {
    %c0_i32 = arith.constant 0 : i32
    %c0_i32_0 = arith.constant 0 : i32
    %c0_i32_1 = arith.constant 0 : i32
    return %c0_i32, %c0_i32_0 : i32, i32
  }
  func.func @transform_3(%arg0: i32) -> (i32, i32) {
    %c0_i32 = arith.constant 0 : i32
    %c0_i32_0 = arith.constant 0 : i32
    %c0_i32_1 = arith.constant 0 : i32
    return %c0_i32, %c0_i32_0 : i32, i32
  }
  func.func @transform_4(%arg0: i32) -> (i32, i32) {
    %c0_i32 = arith.constant 0 : i32
    %c0_i32_0 = arith.constant 0 : i32
    return %c0_i32, %arg0 : i32, i32
  }
}

module attributes {stable_mosaic.version = 11 : i64} {
  func.func @adder_dw_bn_relu_kernel(%arg0: i32, %arg1: memref<9x2x256xf32, #tpu.memory_space<vmem>>, %arg2: memref<9x2x9xf32, #tpu.memory_space<vmem>>, %arg3: memref<2x9x1xf32, #tpu.memory_space<vmem>>, %arg4: memref<2x9x1xf32, #tpu.memory_space<vmem>>, %arg5: memref<2x9x256xf32, #tpu.memory_space<vmem>>) attributes {dimension_semantics = [#tpu.dimension_semantics<parallel>], iteration_bounds = array<i64: 2>, scalar_prefetch = 0 : i64, scratch_operands = 0 : i64, tpu.core_type = #tpu.core_type<tc>, window_params = [{transform_indices = @transform_0, window_bounds = array<i64: 9, 2, 256>}, {pipeline_mode = #tpu.pipeline_mode<synchronous>, transform_indices = @transform_1, window_bounds = array<i64: 9, 2, 9>}, {pipeline_mode = #tpu.pipeline_mode<synchronous>, transform_indices = @transform_2, window_bounds = array<i64: 2, 9, 1>}, {pipeline_mode = #tpu.pipeline_mode<synchronous>, transform_indices = @transform_3, window_bounds = array<i64: 2, 9, 1>}, {transform_indices = @transform_4, window_bounds = array<i64: 2, 9, 256>}]} {
    %c0 = arith.constant 0 : index
    %c0_0 = arith.constant 0 : index
    %c0_1 = arith.constant 0 : index
    %0 = vector.load %arg1[%c0, %c0_0, %c0_1] : memref<9x2x256xf32, #tpu.memory_space<vmem>>, vector<1x2x256xf32>
    %1 = vector.shape_cast %0 : vector<1x2x256xf32> to vector<2x256xf32>
    %2 = vector.shape_cast %1 : vector<2x256xf32> to vector<2x1x256xf32>
    %c0_2 = arith.constant 0 : index
    %c0_3 = arith.constant 0 : index
    %c0_4 = arith.constant 0 : index
    %3 = vector.load %arg2[%c0_2, %c0_3, %c0_4] : memref<9x2x9xf32, #tpu.memory_space<vmem>>, vector<1x2x9xf32>
    %4 = vector.shape_cast %3 : vector<1x2x9xf32> to vector<2x9xf32>
    %5 = vector.shape_cast %4 : vector<2x9xf32> to vector<2x9x1xf32>
    %6 = vector.broadcast %2 : vector<2x1x256xf32> to vector<2x9x256xf32>
    %7 = vector.broadcast %5 : vector<2x9x1xf32> to vector<2x9x256xf32>
    %8 = arith.subf %6, %7 : vector<2x9x256xf32>
    %9 = math.absf %8 : vector<2x9x256xf32>
    %c1 = arith.constant 1 : index
    %c0_5 = arith.constant 0 : index
    %c0_6 = arith.constant 0 : index
    %10 = vector.load %arg1[%c1, %c0_5, %c0_6] : memref<9x2x256xf32, #tpu.memory_space<vmem>>, vector<1x2x256xf32>
    %11 = vector.shape_cast %10 : vector<1x2x256xf32> to vector<2x256xf32>
    %12 = vector.shape_cast %11 : vector<2x256xf32> to vector<2x1x256xf32>
    %c1_7 = arith.constant 1 : index
    %c0_8 = arith.constant 0 : index
    %c0_9 = arith.constant 0 : index
    %13 = vector.load %arg2[%c1_7, %c0_8, %c0_9] : memref<9x2x9xf32, #tpu.memory_space<vmem>>, vector<1x2x9xf32>
    %14 = vector.shape_cast %13 : vector<1x2x9xf32> to vector<2x9xf32>
    %15 = vector.shape_cast %14 : vector<2x9xf32> to vector<2x9x1xf32>
    %16 = vector.broadcast %12 : vector<2x1x256xf32> to vector<2x9x256xf32>
    %17 = vector.broadcast %15 : vector<2x9x1xf32> to vector<2x9x256xf32>
    %18 = arith.subf %16, %17 : vector<2x9x256xf32>
    %19 = math.absf %18 : vector<2x9x256xf32>
    %20 = arith.addf %9, %19 : vector<2x9x256xf32>
    %c2 = arith.constant 2 : index
    %c0_10 = arith.constant 0 : index
    %c0_11 = arith.constant 0 : index
    %21 = vector.load %arg1[%c2, %c0_10, %c0_11] : memref<9x2x256xf32, #tpu.memory_space<vmem>>, vector<1x2x256xf32>
    %22 = vector.shape_cast %21 : vector<1x2x256xf32> to vector<2x256xf32>
    %23 = vector.shape_cast %22 : vector<2x256xf32> to vector<2x1x256xf32>
    %c2_12 = arith.constant 2 : index
    %c0_13 = arith.constant 0 : index
    %c0_14 = arith.constant 0 : index
    %24 = vector.load %arg2[%c2_12, %c0_13, %c0_14] : memref<9x2x9xf32, #tpu.memory_space<vmem>>, vector<1x2x9xf32>
    %25 = vector.shape_cast %24 : vector<1x2x9xf32> to vector<2x9xf32>
    %26 = vector.shape_cast %25 : vector<2x9xf32> to vector<2x9x1xf32>
    %27 = vector.broadcast %23 : vector<2x1x256xf32> to vector<2x9x256xf32>
    %28 = vector.broadcast %26 : vector<2x9x1xf32> to vector<2x9x256xf32>
    %29 = arith.subf %27, %28 : vector<2x9x256xf32>
    %30 = math.absf %29 : vector<2x9x256xf32>
    %31 = arith.addf %20, %30 : vector<2x9x256xf32>
    %c3 = arith.constant 3 : index
    %c0_15 = arith.constant 0 : index
    %c0_16 = arith.constant 0 : index
    %32 = vector.load %arg1[%c3, %c0_15, %c0_16] : memref<9x2x256xf32, #tpu.memory_space<vmem>>, vector<1x2x256xf32>
    %33 = vector.shape_cast %32 : vector<1x2x256xf32> to vector<2x256xf32>
    %34 = vector.shape_cast %33 : vector<2x256xf32> to vector<2x1x256xf32>
    %c3_17 = arith.constant 3 : index
    %c0_18 = arith.constant 0 : index
    %c0_19 = arith.constant 0 : index
    %35 = vector.load %arg2[%c3_17, %c0_18, %c0_19] : memref<9x2x9xf32, #tpu.memory_space<vmem>>, vector<1x2x9xf32>
    %36 = vector.shape_cast %35 : vector<1x2x9xf32> to vector<2x9xf32>
    %37 = vector.shape_cast %36 : vector<2x9xf32> to vector<2x9x1xf32>
    %38 = vector.broadcast %34 : vector<2x1x256xf32> to vector<2x9x256xf32>
    %39 = vector.broadcast %37 : vector<2x9x1xf32> to vector<2x9x256xf32>
    %40 = arith.subf %38, %39 : vector<2x9x256xf32>
    %41 = math.absf %40 : vector<2x9x256xf32>
    %42 = arith.addf %31, %41 : vector<2x9x256xf32>
    %c4 = arith.constant 4 : index
    %c0_20 = arith.constant 0 : index
    %c0_21 = arith.constant 0 : index
    %43 = vector.load %arg1[%c4, %c0_20, %c0_21] : memref<9x2x256xf32, #tpu.memory_space<vmem>>, vector<1x2x256xf32>
    %44 = vector.shape_cast %43 : vector<1x2x256xf32> to vector<2x256xf32>
    %45 = vector.shape_cast %44 : vector<2x256xf32> to vector<2x1x256xf32>
    %c4_22 = arith.constant 4 : index
    %c0_23 = arith.constant 0 : index
    %c0_24 = arith.constant 0 : index
    %46 = vector.load %arg2[%c4_22, %c0_23, %c0_24] : memref<9x2x9xf32, #tpu.memory_space<vmem>>, vector<1x2x9xf32>
    %47 = vector.shape_cast %46 : vector<1x2x9xf32> to vector<2x9xf32>
    %48 = vector.shape_cast %47 : vector<2x9xf32> to vector<2x9x1xf32>
    %49 = vector.broadcast %45 : vector<2x1x256xf32> to vector<2x9x256xf32>
    %50 = vector.broadcast %48 : vector<2x9x1xf32> to vector<2x9x256xf32>
    %51 = arith.subf %49, %50 : vector<2x9x256xf32>
    %52 = math.absf %51 : vector<2x9x256xf32>
    %53 = arith.addf %42, %52 : vector<2x9x256xf32>
    %c5 = arith.constant 5 : index
    %c0_25 = arith.constant 0 : index
    %c0_26 = arith.constant 0 : index
    %54 = vector.load %arg1[%c5, %c0_25, %c0_26] : memref<9x2x256xf32, #tpu.memory_space<vmem>>, vector<1x2x256xf32>
    %55 = vector.shape_cast %54 : vector<1x2x256xf32> to vector<2x256xf32>
    %56 = vector.shape_cast %55 : vector<2x256xf32> to vector<2x1x256xf32>
    %c5_27 = arith.constant 5 : index
    %c0_28 = arith.constant 0 : index
    %c0_29 = arith.constant 0 : index
    %57 = vector.load %arg2[%c5_27, %c0_28, %c0_29] : memref<9x2x9xf32, #tpu.memory_space<vmem>>, vector<1x2x9xf32>
    %58 = vector.shape_cast %57 : vector<1x2x9xf32> to vector<2x9xf32>
    %59 = vector.shape_cast %58 : vector<2x9xf32> to vector<2x9x1xf32>
    %60 = vector.broadcast %56 : vector<2x1x256xf32> to vector<2x9x256xf32>
    %61 = vector.broadcast %59 : vector<2x9x1xf32> to vector<2x9x256xf32>
    %62 = arith.subf %60, %61 : vector<2x9x256xf32>
    %63 = math.absf %62 : vector<2x9x256xf32>
    %64 = arith.addf %53, %63 : vector<2x9x256xf32>
    %c6 = arith.constant 6 : index
    %c0_30 = arith.constant 0 : index
    %c0_31 = arith.constant 0 : index
    %65 = vector.load %arg1[%c6, %c0_30, %c0_31] : memref<9x2x256xf32, #tpu.memory_space<vmem>>, vector<1x2x256xf32>
    %66 = vector.shape_cast %65 : vector<1x2x256xf32> to vector<2x256xf32>
    %67 = vector.shape_cast %66 : vector<2x256xf32> to vector<2x1x256xf32>
    %c6_32 = arith.constant 6 : index
    %c0_33 = arith.constant 0 : index
    %c0_34 = arith.constant 0 : index
    %68 = vector.load %arg2[%c6_32, %c0_33, %c0_34] : memref<9x2x9xf32, #tpu.memory_space<vmem>>, vector<1x2x9xf32>
    %69 = vector.shape_cast %68 : vector<1x2x9xf32> to vector<2x9xf32>
    %70 = vector.shape_cast %69 : vector<2x9xf32> to vector<2x9x1xf32>
    %71 = vector.broadcast %67 : vector<2x1x256xf32> to vector<2x9x256xf32>
    %72 = vector.broadcast %70 : vector<2x9x1xf32> to vector<2x9x256xf32>
    %73 = arith.subf %71, %72 : vector<2x9x256xf32>
    %74 = math.absf %73 : vector<2x9x256xf32>
    %75 = arith.addf %64, %74 : vector<2x9x256xf32>
    %c7 = arith.constant 7 : index
    %c0_35 = arith.constant 0 : index
    %c0_36 = arith.constant 0 : index
    %76 = vector.load %arg1[%c7, %c0_35, %c0_36] : memref<9x2x256xf32, #tpu.memory_space<vmem>>, vector<1x2x256xf32>
    %77 = vector.shape_cast %76 : vector<1x2x256xf32> to vector<2x256xf32>
    %78 = vector.shape_cast %77 : vector<2x256xf32> to vector<2x1x256xf32>
    %c7_37 = arith.constant 7 : index
    %c0_38 = arith.constant 0 : index
    %c0_39 = arith.constant 0 : index
    %79 = vector.load %arg2[%c7_37, %c0_38, %c0_39] : memref<9x2x9xf32, #tpu.memory_space<vmem>>, vector<1x2x9xf32>
    %80 = vector.shape_cast %79 : vector<1x2x9xf32> to vector<2x9xf32>
    %81 = vector.shape_cast %80 : vector<2x9xf32> to vector<2x9x1xf32>
    %82 = vector.broadcast %78 : vector<2x1x256xf32> to vector<2x9x256xf32>
    %83 = vector.broadcast %81 : vector<2x9x1xf32> to vector<2x9x256xf32>
    %84 = arith.subf %82, %83 : vector<2x9x256xf32>
    %85 = math.absf %84 : vector<2x9x256xf32>
    %86 = arith.addf %75, %85 : vector<2x9x256xf32>
    %c8 = arith.constant 8 : index
    %c0_40 = arith.constant 0 : index
    %c0_41 = arith.constant 0 : index
    %87 = vector.load %arg1[%c8, %c0_40, %c0_41] : memref<9x2x256xf32, #tpu.memory_space<vmem>>, vector<1x2x256xf32>
    %88 = vector.shape_cast %87 : vector<1x2x256xf32> to vector<2x256xf32>
    %89 = vector.shape_cast %88 : vector<2x256xf32> to vector<2x1x256xf32>
    %c8_42 = arith.constant 8 : index
    %c0_43 = arith.constant 0 : index
    %c0_44 = arith.constant 0 : index
    %90 = vector.load %arg2[%c8_42, %c0_43, %c0_44] : memref<9x2x9xf32, #tpu.memory_space<vmem>>, vector<1x2x9xf32>
    %91 = vector.shape_cast %90 : vector<1x2x9xf32> to vector<2x9xf32>
    %92 = vector.shape_cast %91 : vector<2x9xf32> to vector<2x9x1xf32>
    %93 = vector.broadcast %89 : vector<2x1x256xf32> to vector<2x9x256xf32>
    %94 = vector.broadcast %92 : vector<2x9x1xf32> to vector<2x9x256xf32>
    %95 = arith.subf %93, %94 : vector<2x9x256xf32>
    %96 = math.absf %95 : vector<2x9x256xf32>
    %97 = arith.addf %86, %96 : vector<2x9x256xf32>
    %cst = arith.constant 0.000000e+00 : f32
    %98 = vector.broadcast %cst : f32 to vector<2x9x256xf32>
    %99 = arith.subf %98, %97 : vector<2x9x256xf32>
    %c0_45 = arith.constant 0 : index
    %c0_46 = arith.constant 0 : index
    %c0_47 = arith.constant 0 : index
    %100 = vector.load %arg3[%c0_45, %c0_46, %c0_47] : memref<2x9x1xf32, #tpu.memory_space<vmem>>, vector<2x9x1xf32>
    %101 = vector.broadcast %100 : vector<2x9x1xf32> to vector<2x9x256xf32>
    %102 = arith.mulf %99, %101 : vector<2x9x256xf32>
    %c0_48 = arith.constant 0 : index
    %c0_49 = arith.constant 0 : index
    %c0_50 = arith.constant 0 : index
    %103 = vector.load %arg4[%c0_48, %c0_49, %c0_50] : memref<2x9x1xf32, #tpu.memory_space<vmem>>, vector<2x9x1xf32>
    %104 = vector.broadcast %103 : vector<2x9x1xf32> to vector<2x9x256xf32>
    %105 = arith.addf %102, %104 : vector<2x9x256xf32>
    %cst_51 = arith.constant 0.000000e+00 : f32
    %106 = vector.broadcast %cst_51 : f32 to vector<2x9x256xf32>
    %107 = arith.maximumf %105, %106 : vector<2x9x256xf32>
    %c0_52 = arith.constant 0 : index
    %c0_53 = arith.constant 0 : index
    %c0_54 = arith.constant 0 : index
    %108 = vector.load %arg5[%c0_52, %c0_53, %c0_54] : memref<2x9x256xf32, #tpu.memory_space<vmem>>, vector<2x9x256xf32>
    tpu.vector_store %arg5[%c0_52, %c0_53, %c0_54], %107 {strides = array<i32>} : memref<2x9x256xf32, #tpu.memory_space<vmem>>, vector<2x9x256xf32>,
    return
  }
  func.func @transform_0(%arg0: i32) -> (i32, i32, i32) {
    %c0_i32 = arith.constant 0 : i32
    %c0_i32_0 = arith.constant 0 : i32
    %c0_i32_1 = arith.constant 0 : i32
    return %c0_i32, %c0_i32_0, %arg0 : i32, i32, i32
  }
  func.func @transform_1(%arg0: i32) -> (i32, i32, i32) {
    %c0_i32 = arith.constant 0 : i32
    %c0_i32_0 = arith.constant 0 : i32
    %c0_i32_1 = arith.constant 0 : i32
    %c0_i32_2 = arith.constant 0 : i32
    return %c0_i32, %c0_i32_0, %c0_i32_1 : i32, i32, i32
  }
  func.func @transform_2(%arg0: i32) -> (i32, i32, i32) {
    %c0_i32 = arith.constant 0 : i32
    %c0_i32_0 = arith.constant 0 : i32
    %c0_i32_1 = arith.constant 0 : i32
    %c0_i32_2 = arith.constant 0 : i32
    return %c0_i32, %c0_i32_0, %c0_i32_1 : i32, i32, i32
  }
  func.func @transform_3(%arg0: i32) -> (i32, i32, i32) {
    %c0_i32 = arith.constant 0 : i32
    %c0_i32_0 = arith.constant 0 : i32
    %c0_i32_1 = arith.constant 0 : i32
    %c0_i32_2 = arith.constant 0 : i32
    return %c0_i32, %c0_i32_0, %c0_i32_1 : i32, i32, i32
  }
  func.func @transform_4(%arg0: i32) -> (i32, i32, i32) {
    %c0_i32 = arith.constant 0 : i32
    %c0_i32_0 = arith.constant 0 : i32
    %c0_i32_1 = arith.constant 0 : i32
    return %c0_i32, %c0_i32_0, %arg0 : i32, i32, i32
  }
}

module attributes {stable_mosaic.version = 11 : i64} {
  func.func @dw_conv_bn_act_kernel(%arg0: i32, %arg1: memref<9x16x128xf32, #tpu.memory_space<vmem>>, %arg2: memref<9x16x1xf32, #tpu.memory_space<vmem>>, %arg3: memref<16x1xf32, #tpu.memory_space<vmem>>, %arg4: memref<16x1xf32, #tpu.memory_space<vmem>>, %arg5: memref<16x128xf32, #tpu.memory_space<vmem>>) attributes {dimension_semantics = [#tpu.dimension_semantics<parallel>], iteration_bounds = array<i64: 1>, scalar_prefetch = 0 : i64, scratch_operands = 0 : i64, tpu.core_type = #tpu.core_type<tc>, window_params = [{transform_indices = @transform_0, window_bounds = array<i64: 9, 16, 128>}, {pipeline_mode = #tpu.pipeline_mode<synchronous>, transform_indices = @transform_1, window_bounds = array<i64: 9, 16, 1>}, {pipeline_mode = #tpu.pipeline_mode<synchronous>, transform_indices = @transform_2, window_bounds = array<i64: 16, 1>}, {pipeline_mode = #tpu.pipeline_mode<synchronous>, transform_indices = @transform_3, window_bounds = array<i64: 16, 1>}, {transform_indices = @transform_4, window_bounds = array<i64: 16, 128>}]} {
    %c0 = arith.constant 0 : index
    %c0_0 = arith.constant 0 : index
    %c0_1 = arith.constant 0 : index
    %0 = vector.load %arg1[%c0, %c0_0, %c0_1] : memref<9x16x128xf32, #tpu.memory_space<vmem>>, vector<1x16x128xf32>
    %1 = vector.shape_cast %0 : vector<1x16x128xf32> to vector<16x128xf32>
    %c0_2 = arith.constant 0 : index
    %c0_3 = arith.constant 0 : index
    %c0_4 = arith.constant 0 : index
    %2 = vector.load %arg2[%c0_2, %c0_3, %c0_4] : memref<9x16x1xf32, #tpu.memory_space<vmem>>, vector<1x16x1xf32>
    %3 = vector.shape_cast %2 : vector<1x16x1xf32> to vector<16x1xf32>
    %4 = vector.broadcast %3 : vector<16x1xf32> to vector<16x128xf32>
    %5 = arith.mulf %1, %4 : vector<16x128xf32>
    %c1 = arith.constant 1 : index
    %c0_5 = arith.constant 0 : index
    %c0_6 = arith.constant 0 : index
    %6 = vector.load %arg1[%c1, %c0_5, %c0_6] : memref<9x16x128xf32, #tpu.memory_space<vmem>>, vector<1x16x128xf32>
    %7 = vector.shape_cast %6 : vector<1x16x128xf32> to vector<16x128xf32>
    %c1_7 = arith.constant 1 : index
    %c0_8 = arith.constant 0 : index
    %c0_9 = arith.constant 0 : index
    %8 = vector.load %arg2[%c1_7, %c0_8, %c0_9] : memref<9x16x1xf32, #tpu.memory_space<vmem>>, vector<1x16x1xf32>
    %9 = vector.shape_cast %8 : vector<1x16x1xf32> to vector<16x1xf32>
    %10 = vector.broadcast %9 : vector<16x1xf32> to vector<16x128xf32>
    %11 = arith.mulf %7, %10 : vector<16x128xf32>
    %12 = arith.addf %5, %11 : vector<16x128xf32>
    %c2 = arith.constant 2 : index
    %c0_10 = arith.constant 0 : index
    %c0_11 = arith.constant 0 : index
    %13 = vector.load %arg1[%c2, %c0_10, %c0_11] : memref<9x16x128xf32, #tpu.memory_space<vmem>>, vector<1x16x128xf32>
    %14 = vector.shape_cast %13 : vector<1x16x128xf32> to vector<16x128xf32>
    %c2_12 = arith.constant 2 : index
    %c0_13 = arith.constant 0 : index
    %c0_14 = arith.constant 0 : index
    %15 = vector.load %arg2[%c2_12, %c0_13, %c0_14] : memref<9x16x1xf32, #tpu.memory_space<vmem>>, vector<1x16x1xf32>
    %16 = vector.shape_cast %15 : vector<1x16x1xf32> to vector<16x1xf32>
    %17 = vector.broadcast %16 : vector<16x1xf32> to vector<16x128xf32>
    %18 = arith.mulf %14, %17 : vector<16x128xf32>
    %19 = arith.addf %12, %18 : vector<16x128xf32>
    %c3 = arith.constant 3 : index
    %c0_15 = arith.constant 0 : index
    %c0_16 = arith.constant 0 : index
    %20 = vector.load %arg1[%c3, %c0_15, %c0_16] : memref<9x16x128xf32, #tpu.memory_space<vmem>>, vector<1x16x128xf32>
    %21 = vector.shape_cast %20 : vector<1x16x128xf32> to vector<16x128xf32>
    %c3_17 = arith.constant 3 : index
    %c0_18 = arith.constant 0 : index
    %c0_19 = arith.constant 0 : index
    %22 = vector.load %arg2[%c3_17, %c0_18, %c0_19] : memref<9x16x1xf32, #tpu.memory_space<vmem>>, vector<1x16x1xf32>
    %23 = vector.shape_cast %22 : vector<1x16x1xf32> to vector<16x1xf32>
    %24 = vector.broadcast %23 : vector<16x1xf32> to vector<16x128xf32>
    %25 = arith.mulf %21, %24 : vector<16x128xf32>
    %26 = arith.addf %19, %25 : vector<16x128xf32>
    %c4 = arith.constant 4 : index
    %c0_20 = arith.constant 0 : index
    %c0_21 = arith.constant 0 : index
    %27 = vector.load %arg1[%c4, %c0_20, %c0_21] : memref<9x16x128xf32, #tpu.memory_space<vmem>>, vector<1x16x128xf32>
    %28 = vector.shape_cast %27 : vector<1x16x128xf32> to vector<16x128xf32>
    %c4_22 = arith.constant 4 : index
    %c0_23 = arith.constant 0 : index
    %c0_24 = arith.constant 0 : index
    %29 = vector.load %arg2[%c4_22, %c0_23, %c0_24] : memref<9x16x1xf32, #tpu.memory_space<vmem>>, vector<1x16x1xf32>
    %30 = vector.shape_cast %29 : vector<1x16x1xf32> to vector<16x1xf32>
    %31 = vector.broadcast %30 : vector<16x1xf32> to vector<16x128xf32>
    %32 = arith.mulf %28, %31 : vector<16x128xf32>
    %33 = arith.addf %26, %32 : vector<16x128xf32>
    %c5 = arith.constant 5 : index
    %c0_25 = arith.constant 0 : index
    %c0_26 = arith.constant 0 : index
    %34 = vector.load %arg1[%c5, %c0_25, %c0_26] : memref<9x16x128xf32, #tpu.memory_space<vmem>>, vector<1x16x128xf32>
    %35 = vector.shape_cast %34 : vector<1x16x128xf32> to vector<16x128xf32>
    %c5_27 = arith.constant 5 : index
    %c0_28 = arith.constant 0 : index
    %c0_29 = arith.constant 0 : index
    %36 = vector.load %arg2[%c5_27, %c0_28, %c0_29] : memref<9x16x1xf32, #tpu.memory_space<vmem>>, vector<1x16x1xf32>
    %37 = vector.shape_cast %36 : vector<1x16x1xf32> to vector<16x1xf32>
    %38 = vector.broadcast %37 : vector<16x1xf32> to vector<16x128xf32>
    %39 = arith.mulf %35, %38 : vector<16x128xf32>
    %40 = arith.addf %33, %39 : vector<16x128xf32>
    %c6 = arith.constant 6 : index
    %c0_30 = arith.constant 0 : index
    %c0_31 = arith.constant 0 : index
    %41 = vector.load %arg1[%c6, %c0_30, %c0_31] : memref<9x16x128xf32, #tpu.memory_space<vmem>>, vector<1x16x128xf32>
    %42 = vector.shape_cast %41 : vector<1x16x128xf32> to vector<16x128xf32>
    %c6_32 = arith.constant 6 : index
    %c0_33 = arith.constant 0 : index
    %c0_34 = arith.constant 0 : index
    %43 = vector.load %arg2[%c6_32, %c0_33, %c0_34] : memref<9x16x1xf32, #tpu.memory_space<vmem>>, vector<1x16x1xf32>
    %44 = vector.shape_cast %43 : vector<1x16x1xf32> to vector<16x1xf32>
    %45 = vector.broadcast %44 : vector<16x1xf32> to vector<16x128xf32>
    %46 = arith.mulf %42, %45 : vector<16x128xf32>
    %47 = arith.addf %40, %46 : vector<16x128xf32>
    %c7 = arith.constant 7 : index
    %c0_35 = arith.constant 0 : index
    %c0_36 = arith.constant 0 : index
    %48 = vector.load %arg1[%c7, %c0_35, %c0_36] : memref<9x16x128xf32, #tpu.memory_space<vmem>>, vector<1x16x128xf32>
    %49 = vector.shape_cast %48 : vector<1x16x128xf32> to vector<16x128xf32>
    %c7_37 = arith.constant 7 : index
    %c0_38 = arith.constant 0 : index
    %c0_39 = arith.constant 0 : index
    %50 = vector.load %arg2[%c7_37, %c0_38, %c0_39] : memref<9x16x1xf32, #tpu.memory_space<vmem>>, vector<1x16x1xf32>
    %51 = vector.shape_cast %50 : vector<1x16x1xf32> to vector<16x1xf32>
    %52 = vector.broadcast %51 : vector<16x1xf32> to vector<16x128xf32>
    %53 = arith.mulf %49, %52 : vector<16x128xf32>
    %54 = arith.addf %47, %53 : vector<16x128xf32>
    %c8 = arith.constant 8 : index
    %c0_40 = arith.constant 0 : index
    %c0_41 = arith.constant 0 : index
    %55 = vector.load %arg1[%c8, %c0_40, %c0_41] : memref<9x16x128xf32, #tpu.memory_space<vmem>>, vector<1x16x128xf32>
    %56 = vector.shape_cast %55 : vector<1x16x128xf32> to vector<16x128xf32>
    %c8_42 = arith.constant 8 : index
    %c0_43 = arith.constant 0 : index
    %c0_44 = arith.constant 0 : index
    %57 = vector.load %arg2[%c8_42, %c0_43, %c0_44] : memref<9x16x1xf32, #tpu.memory_space<vmem>>, vector<1x16x1xf32>
    %58 = vector.shape_cast %57 : vector<1x16x1xf32> to vector<16x1xf32>
    %59 = vector.broadcast %58 : vector<16x1xf32> to vector<16x128xf32>
    %60 = arith.mulf %56, %59 : vector<16x128xf32>
    %61 = arith.addf %54, %60 : vector<16x128xf32>
    %c0_45 = arith.constant 0 : index
    %c0_46 = arith.constant 0 : index
    %62 = vector.load %arg3[%c0_45, %c0_46] : memref<16x1xf32, #tpu.memory_space<vmem>>, vector<16x1xf32>
    %63 = vector.broadcast %62 : vector<16x1xf32> to vector<16x128xf32>
    %64 = arith.mulf %61, %63 : vector<16x128xf32>
    %c0_47 = arith.constant 0 : index
    %c0_48 = arith.constant 0 : index
    %65 = vector.load %arg4[%c0_47, %c0_48] : memref<16x1xf32, #tpu.memory_space<vmem>>, vector<16x1xf32>
    %66 = vector.broadcast %65 : vector<16x1xf32> to vector<16x128xf32>
    %67 = arith.addf %64, %66 : vector<16x128xf32>
    %c0_49 = arith.constant 0 : index
    %c0_50 = arith.constant 0 : index
    %68 = vector.load %arg5[%c0_49, %c0_50] : memref<16x128xf32, #tpu.memory_space<vmem>>, vector<16x128xf32>
    tpu.vector_store %arg5[%c0_49, %c0_50], %67 {strides = array<i32>} : memref<16x128xf32, #tpu.memory_space<vmem>>, vector<16x128xf32>,
    return
  }
  func.func @transform_0(%arg0: i32) -> (i32, i32, i32) {
    %c0_i32 = arith.constant 0 : i32
    %c0_i32_0 = arith.constant 0 : i32
    %c0_i32_1 = arith.constant 0 : i32
    return %c0_i32, %c0_i32_0, %arg0 : i32, i32, i32
  }
  func.func @transform_1(%arg0: i32) -> (i32, i32, i32) {
    %c0_i32 = arith.constant 0 : i32
    %c0_i32_0 = arith.constant 0 : i32
    %c0_i32_1 = arith.constant 0 : i32
    %c0_i32_2 = arith.constant 0 : i32
    return %c0_i32, %c0_i32_0, %c0_i32_1 : i32, i32, i32
  }
  func.func @transform_2(%arg0: i32) -> (i32, i32) {
    %c0_i32 = arith.constant 0 : i32
    %c0_i32_0 = arith.constant 0 : i32
    %c0_i32_1 = arith.constant 0 : i32
    return %c0_i32, %c0_i32_0 : i32, i32
  }
  func.func @transform_3(%arg0: i32) -> (i32, i32) {
    %c0_i32 = arith.constant 0 : i32
    %c0_i32_0 = arith.constant 0 : i32
    %c0_i32_1 = arith.constant 0 : i32
    return %c0_i32, %c0_i32_0 : i32, i32
  }
  func.func @transform_4(%arg0: i32) -> (i32, i32) {
    %c0_i32 = arith.constant 0 : i32
    %c0_i32_0 = arith.constant 0 : i32
    return %c0_i32, %arg0 : i32, i32
  }
}

module attributes {stable_mosaic.version = 11 : i64} {
  func.func @dw_conv_bn_act_kernel(%arg0: i32, %arg1: memref<9x3x256xf32, #tpu.memory_space<vmem>>, %arg2: memref<9x3x1xf32, #tpu.memory_space<vmem>>, %arg3: memref<3x1xf32, #tpu.memory_space<vmem>>, %arg4: memref<3x1xf32, #tpu.memory_space<vmem>>, %arg5: memref<3x256xf32, #tpu.memory_space<vmem>>) attributes {dimension_semantics = [#tpu.dimension_semantics<parallel>], iteration_bounds = array<i64: 2>, scalar_prefetch = 0 : i64, scratch_operands = 0 : i64, tpu.core_type = #tpu.core_type<tc>, window_params = [{transform_indices = @transform_0, window_bounds = array<i64: 9, 3, 256>}, {pipeline_mode = #tpu.pipeline_mode<synchronous>, transform_indices = @transform_1, window_bounds = array<i64: 9, 3, 1>}, {pipeline_mode = #tpu.pipeline_mode<synchronous>, transform_indices = @transform_2, window_bounds = array<i64: 3, 1>}, {pipeline_mode = #tpu.pipeline_mode<synchronous>, transform_indices = @transform_3, window_bounds = array<i64: 3, 1>}, {transform_indices = @transform_4, window_bounds = array<i64: 3, 256>}]} {
    %c0 = arith.constant 0 : index
    %c0_0 = arith.constant 0 : index
    %c0_1 = arith.constant 0 : index
    %0 = vector.load %arg1[%c0, %c0_0, %c0_1] : memref<9x3x256xf32, #tpu.memory_space<vmem>>, vector<1x3x256xf32>
    %1 = vector.shape_cast %0 : vector<1x3x256xf32> to vector<3x256xf32>
    %c0_2 = arith.constant 0 : index
    %c0_3 = arith.constant 0 : index
    %c0_4 = arith.constant 0 : index
    %2 = vector.load %arg2[%c0_2, %c0_3, %c0_4] : memref<9x3x1xf32, #tpu.memory_space<vmem>>, vector<1x3x1xf32>
    %3 = vector.shape_cast %2 : vector<1x3x1xf32> to vector<3x1xf32>
    %4 = vector.broadcast %3 : vector<3x1xf32> to vector<3x256xf32>
    %5 = arith.mulf %1, %4 : vector<3x256xf32>
    %c1 = arith.constant 1 : index
    %c0_5 = arith.constant 0 : index
    %c0_6 = arith.constant 0 : index
    %6 = vector.load %arg1[%c1, %c0_5, %c0_6] : memref<9x3x256xf32, #tpu.memory_space<vmem>>, vector<1x3x256xf32>
    %7 = vector.shape_cast %6 : vector<1x3x256xf32> to vector<3x256xf32>
    %c1_7 = arith.constant 1 : index
    %c0_8 = arith.constant 0 : index
    %c0_9 = arith.constant 0 : index
    %8 = vector.load %arg2[%c1_7, %c0_8, %c0_9] : memref<9x3x1xf32, #tpu.memory_space<vmem>>, vector<1x3x1xf32>
    %9 = vector.shape_cast %8 : vector<1x3x1xf32> to vector<3x1xf32>
    %10 = vector.broadcast %9 : vector<3x1xf32> to vector<3x256xf32>
    %11 = arith.mulf %7, %10 : vector<3x256xf32>
    %12 = arith.addf %5, %11 : vector<3x256xf32>
    %c2 = arith.constant 2 : index
    %c0_10 = arith.constant 0 : index
    %c0_11 = arith.constant 0 : index
    %13 = vector.load %arg1[%c2, %c0_10, %c0_11] : memref<9x3x256xf32, #tpu.memory_space<vmem>>, vector<1x3x256xf32>
    %14 = vector.shape_cast %13 : vector<1x3x256xf32> to vector<3x256xf32>
    %c2_12 = arith.constant 2 : index
    %c0_13 = arith.constant 0 : index
    %c0_14 = arith.constant 0 : index
    %15 = vector.load %arg2[%c2_12, %c0_13, %c0_14] : memref<9x3x1xf32, #tpu.memory_space<vmem>>, vector<1x3x1xf32>
    %16 = vector.shape_cast %15 : vector<1x3x1xf32> to vector<3x1xf32>
    %17 = vector.broadcast %16 : vector<3x1xf32> to vector<3x256xf32>
    %18 = arith.mulf %14, %17 : vector<3x256xf32>
    %19 = arith.addf %12, %18 : vector<3x256xf32>
    %c3 = arith.constant 3 : index
    %c0_15 = arith.constant 0 : index
    %c0_16 = arith.constant 0 : index
    %20 = vector.load %arg1[%c3, %c0_15, %c0_16] : memref<9x3x256xf32, #tpu.memory_space<vmem>>, vector<1x3x256xf32>
    %21 = vector.shape_cast %20 : vector<1x3x256xf32> to vector<3x256xf32>
    %c3_17 = arith.constant 3 : index
    %c0_18 = arith.constant 0 : index
    %c0_19 = arith.constant 0 : index
    %22 = vector.load %arg2[%c3_17, %c0_18, %c0_19] : memref<9x3x1xf32, #tpu.memory_space<vmem>>, vector<1x3x1xf32>
    %23 = vector.shape_cast %22 : vector<1x3x1xf32> to vector<3x1xf32>
    %24 = vector.broadcast %23 : vector<3x1xf32> to vector<3x256xf32>
    %25 = arith.mulf %21, %24 : vector<3x256xf32>
    %26 = arith.addf %19, %25 : vector<3x256xf32>
    %c4 = arith.constant 4 : index
    %c0_20 = arith.constant 0 : index
    %c0_21 = arith.constant 0 : index
    %27 = vector.load %arg1[%c4, %c0_20, %c0_21] : memref<9x3x256xf32, #tpu.memory_space<vmem>>, vector<1x3x256xf32>
    %28 = vector.shape_cast %27 : vector<1x3x256xf32> to vector<3x256xf32>
    %c4_22 = arith.constant 4 : index
    %c0_23 = arith.constant 0 : index
    %c0_24 = arith.constant 0 : index
    %29 = vector.load %arg2[%c4_22, %c0_23, %c0_24] : memref<9x3x1xf32, #tpu.memory_space<vmem>>, vector<1x3x1xf32>
    %30 = vector.shape_cast %29 : vector<1x3x1xf32> to vector<3x1xf32>
    %31 = vector.broadcast %30 : vector<3x1xf32> to vector<3x256xf32>
    %32 = arith.mulf %28, %31 : vector<3x256xf32>
    %33 = arith.addf %26, %32 : vector<3x256xf32>
    %c5 = arith.constant 5 : index
    %c0_25 = arith.constant 0 : index
    %c0_26 = arith.constant 0 : index
    %34 = vector.load %arg1[%c5, %c0_25, %c0_26] : memref<9x3x256xf32, #tpu.memory_space<vmem>>, vector<1x3x256xf32>
    %35 = vector.shape_cast %34 : vector<1x3x256xf32> to vector<3x256xf32>
    %c5_27 = arith.constant 5 : index
    %c0_28 = arith.constant 0 : index
    %c0_29 = arith.constant 0 : index
    %36 = vector.load %arg2[%c5_27, %c0_28, %c0_29] : memref<9x3x1xf32, #tpu.memory_space<vmem>>, vector<1x3x1xf32>
    %37 = vector.shape_cast %36 : vector<1x3x1xf32> to vector<3x1xf32>
    %38 = vector.broadcast %37 : vector<3x1xf32> to vector<3x256xf32>
    %39 = arith.mulf %35, %38 : vector<3x256xf32>
    %40 = arith.addf %33, %39 : vector<3x256xf32>
    %c6 = arith.constant 6 : index
    %c0_30 = arith.constant 0 : index
    %c0_31 = arith.constant 0 : index
    %41 = vector.load %arg1[%c6, %c0_30, %c0_31] : memref<9x3x256xf32, #tpu.memory_space<vmem>>, vector<1x3x256xf32>
    %42 = vector.shape_cast %41 : vector<1x3x256xf32> to vector<3x256xf32>
    %c6_32 = arith.constant 6 : index
    %c0_33 = arith.constant 0 : index
    %c0_34 = arith.constant 0 : index
    %43 = vector.load %arg2[%c6_32, %c0_33, %c0_34] : memref<9x3x1xf32, #tpu.memory_space<vmem>>, vector<1x3x1xf32>
    %44 = vector.shape_cast %43 : vector<1x3x1xf32> to vector<3x1xf32>
    %45 = vector.broadcast %44 : vector<3x1xf32> to vector<3x256xf32>
    %46 = arith.mulf %42, %45 : vector<3x256xf32>
    %47 = arith.addf %40, %46 : vector<3x256xf32>
    %c7 = arith.constant 7 : index
    %c0_35 = arith.constant 0 : index
    %c0_36 = arith.constant 0 : index
    %48 = vector.load %arg1[%c7, %c0_35, %c0_36] : memref<9x3x256xf32, #tpu.memory_space<vmem>>, vector<1x3x256xf32>
    %49 = vector.shape_cast %48 : vector<1x3x256xf32> to vector<3x256xf32>
    %c7_37 = arith.constant 7 : index
    %c0_38 = arith.constant 0 : index
    %c0_39 = arith.constant 0 : index
    %50 = vector.load %arg2[%c7_37, %c0_38, %c0_39] : memref<9x3x1xf32, #tpu.memory_space<vmem>>, vector<1x3x1xf32>
    %51 = vector.shape_cast %50 : vector<1x3x1xf32> to vector<3x1xf32>
    %52 = vector.broadcast %51 : vector<3x1xf32> to vector<3x256xf32>
    %53 = arith.mulf %49, %52 : vector<3x256xf32>
    %54 = arith.addf %47, %53 : vector<3x256xf32>
    %c8 = arith.constant 8 : index
    %c0_40 = arith.constant 0 : index
    %c0_41 = arith.constant 0 : index
    %55 = vector.load %arg1[%c8, %c0_40, %c0_41] : memref<9x3x256xf32, #tpu.memory_space<vmem>>, vector<1x3x256xf32>
    %56 = vector.shape_cast %55 : vector<1x3x256xf32> to vector<3x256xf32>
    %c8_42 = arith.constant 8 : index
    %c0_43 = arith.constant 0 : index
    %c0_44 = arith.constant 0 : index
    %57 = vector.load %arg2[%c8_42, %c0_43, %c0_44] : memref<9x3x1xf32, #tpu.memory_space<vmem>>, vector<1x3x1xf32>
    %58 = vector.shape_cast %57 : vector<1x3x1xf32> to vector<3x1xf32>
    %59 = vector.broadcast %58 : vector<3x1xf32> to vector<3x256xf32>
    %60 = arith.mulf %56, %59 : vector<3x256xf32>
    %61 = arith.addf %54, %60 : vector<3x256xf32>
    %c0_45 = arith.constant 0 : index
    %c0_46 = arith.constant 0 : index
    %62 = vector.load %arg3[%c0_45, %c0_46] : memref<3x1xf32, #tpu.memory_space<vmem>>, vector<3x1xf32>
    %63 = vector.broadcast %62 : vector<3x1xf32> to vector<3x256xf32>
    %64 = arith.mulf %61, %63 : vector<3x256xf32>
    %c0_47 = arith.constant 0 : index
    %c0_48 = arith.constant 0 : index
    %65 = vector.load %arg4[%c0_47, %c0_48] : memref<3x1xf32, #tpu.memory_space<vmem>>, vector<3x1xf32>
    %66 = vector.broadcast %65 : vector<3x1xf32> to vector<3x256xf32>
    %67 = arith.addf %64, %66 : vector<3x256xf32>
    %c0_49 = arith.constant 0 : index
    %c0_50 = arith.constant 0 : index
    %68 = vector.load %arg5[%c0_49, %c0_50] : memref<3x256xf32, #tpu.memory_space<vmem>>, vector<3x256xf32>
    tpu.vector_store %arg5[%c0_49, %c0_50], %67 {strides = array<i32>} : memref<3x256xf32, #tpu.memory_space<vmem>>, vector<3x256xf32>,
    return
  }
  func.func @transform_0(%arg0: i32) -> (i32, i32, i32) {
    %c0_i32 = arith.constant 0 : i32
    %c0_i32_0 = arith.constant 0 : i32
    %c0_i32_1 = arith.constant 0 : i32
    return %c0_i32, %c0_i32_0, %arg0 : i32, i32, i32
  }
  func.func @transform_1(%arg0: i32) -> (i32, i32, i32) {
    %c0_i32 = arith.constant 0 : i32
    %c0_i32_0 = arith.constant 0 : i32
    %c0_i32_1 = arith.constant 0 : i32
    %c0_i32_2 = arith.constant 0 : i32
    return %c0_i32, %c0_i32_0, %c0_i32_1 : i32, i32, i32
  }
  func.func @transform_2(%arg0: i32) -> (i32, i32) {
    %c0_i32 = arith.constant 0 : i32
    %c0_i32_0 = arith.constant 0 : i32
    %c0_i32_1 = arith.constant 0 : i32
    return %c0_i32, %c0_i32_0 : i32, i32
  }
  func.func @transform_3(%arg0: i32) -> (i32, i32) {
    %c0_i32 = arith.constant 0 : i32
    %c0_i32_0 = arith.constant 0 : i32
    %c0_i32_1 = arith.constant 0 : i32
    return %c0_i32, %c0_i32_0 : i32, i32
  }
  func.func @transform_4(%arg0: i32) -> (i32, i32) {
    %c0_i32 = arith.constant 0 : i32
    %c0_i32_0 = arith.constant 0 : i32
    return %c0_i32, %arg0 : i32, i32
  }
}

module attributes {stable_mosaic.version = 11 : i64} {
  func.func @adder_dw_bn_relu_kernel(%arg0: i32, %arg1: memref<9x3x256xf32, #tpu.memory_space<vmem>>, %arg2: memref<9x3x9xf32, #tpu.memory_space<vmem>>, %arg3: memref<3x9x1xf32, #tpu.memory_space<vmem>>, %arg4: memref<3x9x1xf32, #tpu.memory_space<vmem>>, %arg5: memref<3x9x256xf32, #tpu.memory_space<vmem>>) attributes {dimension_semantics = [#tpu.dimension_semantics<parallel>], iteration_bounds = array<i64: 2>, scalar_prefetch = 0 : i64, scratch_operands = 0 : i64, tpu.core_type = #tpu.core_type<tc>, window_params = [{transform_indices = @transform_0, window_bounds = array<i64: 9, 3, 256>}, {pipeline_mode = #tpu.pipeline_mode<synchronous>, transform_indices = @transform_1, window_bounds = array<i64: 9, 3, 9>}, {pipeline_mode = #tpu.pipeline_mode<synchronous>, transform_indices = @transform_2, window_bounds = array<i64: 3, 9, 1>}, {pipeline_mode = #tpu.pipeline_mode<synchronous>, transform_indices = @transform_3, window_bounds = array<i64: 3, 9, 1>}, {transform_indices = @transform_4, window_bounds = array<i64: 3, 9, 256>}]} {
    %c0 = arith.constant 0 : index
    %c0_0 = arith.constant 0 : index
    %c0_1 = arith.constant 0 : index
    %0 = vector.load %arg1[%c0, %c0_0, %c0_1] : memref<9x3x256xf32, #tpu.memory_space<vmem>>, vector<1x3x256xf32>
    %1 = vector.shape_cast %0 : vector<1x3x256xf32> to vector<3x256xf32>
    %2 = vector.shape_cast %1 : vector<3x256xf32> to vector<3x1x256xf32>
    %c0_2 = arith.constant 0 : index
    %c0_3 = arith.constant 0 : index
    %c0_4 = arith.constant 0 : index
    %3 = vector.load %arg2[%c0_2, %c0_3, %c0_4] : memref<9x3x9xf32, #tpu.memory_space<vmem>>, vector<1x3x9xf32>
    %4 = vector.shape_cast %3 : vector<1x3x9xf32> to vector<3x9xf32>
    %5 = vector.shape_cast %4 : vector<3x9xf32> to vector<3x9x1xf32>
    %6 = vector.broadcast %2 : vector<3x1x256xf32> to vector<3x9x256xf32>
    %7 = vector.broadcast %5 : vector<3x9x1xf32> to vector<3x9x256xf32>
    %8 = arith.subf %6, %7 : vector<3x9x256xf32>
    %9 = math.absf %8 : vector<3x9x256xf32>
    %c1 = arith.constant 1 : index
    %c0_5 = arith.constant 0 : index
    %c0_6 = arith.constant 0 : index
    %10 = vector.load %arg1[%c1, %c0_5, %c0_6] : memref<9x3x256xf32, #tpu.memory_space<vmem>>, vector<1x3x256xf32>
    %11 = vector.shape_cast %10 : vector<1x3x256xf32> to vector<3x256xf32>
    %12 = vector.shape_cast %11 : vector<3x256xf32> to vector<3x1x256xf32>
    %c1_7 = arith.constant 1 : index
    %c0_8 = arith.constant 0 : index
    %c0_9 = arith.constant 0 : index
    %13 = vector.load %arg2[%c1_7, %c0_8, %c0_9] : memref<9x3x9xf32, #tpu.memory_space<vmem>>, vector<1x3x9xf32>
    %14 = vector.shape_cast %13 : vector<1x3x9xf32> to vector<3x9xf32>
    %15 = vector.shape_cast %14 : vector<3x9xf32> to vector<3x9x1xf32>
    %16 = vector.broadcast %12 : vector<3x1x256xf32> to vector<3x9x256xf32>
    %17 = vector.broadcast %15 : vector<3x9x1xf32> to vector<3x9x256xf32>
    %18 = arith.subf %16, %17 : vector<3x9x256xf32>
    %19 = math.absf %18 : vector<3x9x256xf32>
    %20 = arith.addf %9, %19 : vector<3x9x256xf32>
    %c2 = arith.constant 2 : index
    %c0_10 = arith.constant 0 : index
    %c0_11 = arith.constant 0 : index
    %21 = vector.load %arg1[%c2, %c0_10, %c0_11] : memref<9x3x256xf32, #tpu.memory_space<vmem>>, vector<1x3x256xf32>
    %22 = vector.shape_cast %21 : vector<1x3x256xf32> to vector<3x256xf32>
    %23 = vector.shape_cast %22 : vector<3x256xf32> to vector<3x1x256xf32>
    %c2_12 = arith.constant 2 : index
    %c0_13 = arith.constant 0 : index
    %c0_14 = arith.constant 0 : index
    %24 = vector.load %arg2[%c2_12, %c0_13, %c0_14] : memref<9x3x9xf32, #tpu.memory_space<vmem>>, vector<1x3x9xf32>
    %25 = vector.shape_cast %24 : vector<1x3x9xf32> to vector<3x9xf32>
    %26 = vector.shape_cast %25 : vector<3x9xf32> to vector<3x9x1xf32>
    %27 = vector.broadcast %23 : vector<3x1x256xf32> to vector<3x9x256xf32>
    %28 = vector.broadcast %26 : vector<3x9x1xf32> to vector<3x9x256xf32>
    %29 = arith.subf %27, %28 : vector<3x9x256xf32>
    %30 = math.absf %29 : vector<3x9x256xf32>
    %31 = arith.addf %20, %30 : vector<3x9x256xf32>
    %c3 = arith.constant 3 : index
    %c0_15 = arith.constant 0 : index
    %c0_16 = arith.constant 0 : index
    %32 = vector.load %arg1[%c3, %c0_15, %c0_16] : memref<9x3x256xf32, #tpu.memory_space<vmem>>, vector<1x3x256xf32>
    %33 = vector.shape_cast %32 : vector<1x3x256xf32> to vector<3x256xf32>
    %34 = vector.shape_cast %33 : vector<3x256xf32> to vector<3x1x256xf32>
    %c3_17 = arith.constant 3 : index
    %c0_18 = arith.constant 0 : index
    %c0_19 = arith.constant 0 : index
    %35 = vector.load %arg2[%c3_17, %c0_18, %c0_19] : memref<9x3x9xf32, #tpu.memory_space<vmem>>, vector<1x3x9xf32>
    %36 = vector.shape_cast %35 : vector<1x3x9xf32> to vector<3x9xf32>
    %37 = vector.shape_cast %36 : vector<3x9xf32> to vector<3x9x1xf32>
    %38 = vector.broadcast %34 : vector<3x1x256xf32> to vector<3x9x256xf32>
    %39 = vector.broadcast %37 : vector<3x9x1xf32> to vector<3x9x256xf32>
    %40 = arith.subf %38, %39 : vector<3x9x256xf32>
    %41 = math.absf %40 : vector<3x9x256xf32>
    %42 = arith.addf %31, %41 : vector<3x9x256xf32>
    %c4 = arith.constant 4 : index
    %c0_20 = arith.constant 0 : index
    %c0_21 = arith.constant 0 : index
    %43 = vector.load %arg1[%c4, %c0_20, %c0_21] : memref<9x3x256xf32, #tpu.memory_space<vmem>>, vector<1x3x256xf32>
    %44 = vector.shape_cast %43 : vector<1x3x256xf32> to vector<3x256xf32>
    %45 = vector.shape_cast %44 : vector<3x256xf32> to vector<3x1x256xf32>
    %c4_22 = arith.constant 4 : index
    %c0_23 = arith.constant 0 : index
    %c0_24 = arith.constant 0 : index
    %46 = vector.load %arg2[%c4_22, %c0_23, %c0_24] : memref<9x3x9xf32, #tpu.memory_space<vmem>>, vector<1x3x9xf32>
    %47 = vector.shape_cast %46 : vector<1x3x9xf32> to vector<3x9xf32>
    %48 = vector.shape_cast %47 : vector<3x9xf32> to vector<3x9x1xf32>
    %49 = vector.broadcast %45 : vector<3x1x256xf32> to vector<3x9x256xf32>
    %50 = vector.broadcast %48 : vector<3x9x1xf32> to vector<3x9x256xf32>
    %51 = arith.subf %49, %50 : vector<3x9x256xf32>
    %52 = math.absf %51 : vector<3x9x256xf32>
    %53 = arith.addf %42, %52 : vector<3x9x256xf32>
    %c5 = arith.constant 5 : index
    %c0_25 = arith.constant 0 : index
    %c0_26 = arith.constant 0 : index
    %54 = vector.load %arg1[%c5, %c0_25, %c0_26] : memref<9x3x256xf32, #tpu.memory_space<vmem>>, vector<1x3x256xf32>
    %55 = vector.shape_cast %54 : vector<1x3x256xf32> to vector<3x256xf32>
    %56 = vector.shape_cast %55 : vector<3x256xf32> to vector<3x1x256xf32>
    %c5_27 = arith.constant 5 : index
    %c0_28 = arith.constant 0 : index
    %c0_29 = arith.constant 0 : index
    %57 = vector.load %arg2[%c5_27, %c0_28, %c0_29] : memref<9x3x9xf32, #tpu.memory_space<vmem>>, vector<1x3x9xf32>
    %58 = vector.shape_cast %57 : vector<1x3x9xf32> to vector<3x9xf32>
    %59 = vector.shape_cast %58 : vector<3x9xf32> to vector<3x9x1xf32>
    %60 = vector.broadcast %56 : vector<3x1x256xf32> to vector<3x9x256xf32>
    %61 = vector.broadcast %59 : vector<3x9x1xf32> to vector<3x9x256xf32>
    %62 = arith.subf %60, %61 : vector<3x9x256xf32>
    %63 = math.absf %62 : vector<3x9x256xf32>
    %64 = arith.addf %53, %63 : vector<3x9x256xf32>
    %c6 = arith.constant 6 : index
    %c0_30 = arith.constant 0 : index
    %c0_31 = arith.constant 0 : index
    %65 = vector.load %arg1[%c6, %c0_30, %c0_31] : memref<9x3x256xf32, #tpu.memory_space<vmem>>, vector<1x3x256xf32>
    %66 = vector.shape_cast %65 : vector<1x3x256xf32> to vector<3x256xf32>
    %67 = vector.shape_cast %66 : vector<3x256xf32> to vector<3x1x256xf32>
    %c6_32 = arith.constant 6 : index
    %c0_33 = arith.constant 0 : index
    %c0_34 = arith.constant 0 : index
    %68 = vector.load %arg2[%c6_32, %c0_33, %c0_34] : memref<9x3x9xf32, #tpu.memory_space<vmem>>, vector<1x3x9xf32>
    %69 = vector.shape_cast %68 : vector<1x3x9xf32> to vector<3x9xf32>
    %70 = vector.shape_cast %69 : vector<3x9xf32> to vector<3x9x1xf32>
    %71 = vector.broadcast %67 : vector<3x1x256xf32> to vector<3x9x256xf32>
    %72 = vector.broadcast %70 : vector<3x9x1xf32> to vector<3x9x256xf32>
    %73 = arith.subf %71, %72 : vector<3x9x256xf32>
    %74 = math.absf %73 : vector<3x9x256xf32>
    %75 = arith.addf %64, %74 : vector<3x9x256xf32>
    %c7 = arith.constant 7 : index
    %c0_35 = arith.constant 0 : index
    %c0_36 = arith.constant 0 : index
    %76 = vector.load %arg1[%c7, %c0_35, %c0_36] : memref<9x3x256xf32, #tpu.memory_space<vmem>>, vector<1x3x256xf32>
    %77 = vector.shape_cast %76 : vector<1x3x256xf32> to vector<3x256xf32>
    %78 = vector.shape_cast %77 : vector<3x256xf32> to vector<3x1x256xf32>
    %c7_37 = arith.constant 7 : index
    %c0_38 = arith.constant 0 : index
    %c0_39 = arith.constant 0 : index
    %79 = vector.load %arg2[%c7_37, %c0_38, %c0_39] : memref<9x3x9xf32, #tpu.memory_space<vmem>>, vector<1x3x9xf32>
    %80 = vector.shape_cast %79 : vector<1x3x9xf32> to vector<3x9xf32>
    %81 = vector.shape_cast %80 : vector<3x9xf32> to vector<3x9x1xf32>
    %82 = vector.broadcast %78 : vector<3x1x256xf32> to vector<3x9x256xf32>
    %83 = vector.broadcast %81 : vector<3x9x1xf32> to vector<3x9x256xf32>
    %84 = arith.subf %82, %83 : vector<3x9x256xf32>
    %85 = math.absf %84 : vector<3x9x256xf32>
    %86 = arith.addf %75, %85 : vector<3x9x256xf32>
    %c8 = arith.constant 8 : index
    %c0_40 = arith.constant 0 : index
    %c0_41 = arith.constant 0 : index
    %87 = vector.load %arg1[%c8, %c0_40, %c0_41] : memref<9x3x256xf32, #tpu.memory_space<vmem>>, vector<1x3x256xf32>
    %88 = vector.shape_cast %87 : vector<1x3x256xf32> to vector<3x256xf32>
    %89 = vector.shape_cast %88 : vector<3x256xf32> to vector<3x1x256xf32>
    %c8_42 = arith.constant 8 : index
    %c0_43 = arith.constant 0 : index
    %c0_44 = arith.constant 0 : index
    %90 = vector.load %arg2[%c8_42, %c0_43, %c0_44] : memref<9x3x9xf32, #tpu.memory_space<vmem>>, vector<1x3x9xf32>
    %91 = vector.shape_cast %90 : vector<1x3x9xf32> to vector<3x9xf32>
    %92 = vector.shape_cast %91 : vector<3x9xf32> to vector<3x9x1xf32>
    %93 = vector.broadcast %89 : vector<3x1x256xf32> to vector<3x9x256xf32>
    %94 = vector.broadcast %92 : vector<3x9x1xf32> to vector<3x9x256xf32>
    %95 = arith.subf %93, %94 : vector<3x9x256xf32>
    %96 = math.absf %95 : vector<3x9x256xf32>
    %97 = arith.addf %86, %96 : vector<3x9x256xf32>
    %cst = arith.constant 0.000000e+00 : f32
    %98 = vector.broadcast %cst : f32 to vector<3x9x256xf32>
    %99 = arith.subf %98, %97 : vector<3x9x256xf32>
    %c0_45 = arith.constant 0 : index
    %c0_46 = arith.constant 0 : index
    %c0_47 = arith.constant 0 : index
    %100 = vector.load %arg3[%c0_45, %c0_46, %c0_47] : memref<3x9x1xf32, #tpu.memory_space<vmem>>, vector<3x9x1xf32>
    %101 = vector.broadcast %100 : vector<3x9x1xf32> to vector<3x9x256xf32>
    %102 = arith.mulf %99, %101 : vector<3x9x256xf32>
    %c0_48 = arith.constant 0 : index
    %c0_49 = arith.constant 0 : index
    %c0_50 = arith.constant 0 : index
    %103 = vector.load %arg4[%c0_48, %c0_49, %c0_50] : memref<3x9x1xf32, #tpu.memory_space<vmem>>, vector<3x9x1xf32>
    %104 = vector.broadcast %103 : vector<3x9x1xf32> to vector<3x9x256xf32>
    %105 = arith.addf %102, %104 : vector<3x9x256xf32>
    %cst_51 = arith.constant 0.000000e+00 : f32
    %106 = vector.broadcast %cst_51 : f32 to vector<3x9x256xf32>
    %107 = arith.maximumf %105, %106 : vector<3x9x256xf32>
    %c0_52 = arith.constant 0 : index
    %c0_53 = arith.constant 0 : index
    %c0_54 = arith.constant 0 : index
    %108 = vector.load %arg5[%c0_52, %c0_53, %c0_54] : memref<3x9x256xf32, #tpu.memory_space<vmem>>, vector<3x9x256xf32>
    tpu.vector_store %arg5[%c0_52, %c0_53, %c0_54], %107 {strides = array<i32>} : memref<3x9x256xf32, #tpu.memory_space<vmem>>, vector<3x9x256xf32>,
    return
  }
  func.func @transform_0(%arg0: i32) -> (i32, i32, i32) {
    %c0_i32 = arith.constant 0 : i32
    %c0_i32_0 = arith.constant 0 : i32
    %c0_i32_1 = arith.constant 0 : i32
    return %c0_i32, %c0_i32_0, %arg0 : i32, i32, i32
  }
  func.func @transform_1(%arg0: i32) -> (i32, i32, i32) {
    %c0_i32 = arith.constant 0 : i32
    %c0_i32_0 = arith.constant 0 : i32
    %c0_i32_1 = arith.constant 0 : i32
    %c0_i32_2 = arith.constant 0 : i32
    return %c0_i32, %c0_i32_0, %c0_i32_1 : i32, i32, i32
  }
  func.func @transform_2(%arg0: i32) -> (i32, i32, i32) {
    %c0_i32 = arith.constant 0 : i32
    %c0_i32_0 = arith.constant 0 : i32
    %c0_i32_1 = arith.constant 0 : i32
    %c0_i32_2 = arith.constant 0 : i32
    return %c0_i32, %c0_i32_0, %c0_i32_1 : i32, i32, i32
  }
  func.func @transform_3(%arg0: i32) -> (i32, i32, i32) {
    %c0_i32 = arith.constant 0 : i32
    %c0_i32_0 = arith.constant 0 : i32
    %c0_i32_1 = arith.constant 0 : i32
    %c0_i32_2 = arith.constant 0 : i32
    return %c0_i32, %c0_i32_0, %c0_i32_1 : i32, i32, i32
  }
  func.func @transform_4(%arg0: i32) -> (i32, i32, i32) {
    %c0_i32 = arith.constant 0 : i32
    %c0_i32_0 = arith.constant 0 : i32
    %c0_i32_1 = arith.constant 0 : i32
    return %c0_i32, %c0_i32_0, %arg0 : i32, i32, i32
  }
}

module attributes {stable_mosaic.version = 11 : i64} {
  func.func @matmul_bn_act_kernel(%arg0: i32, %arg1: memref<128x24xbf16, #tpu.memory_space<vmem>>, %arg2: memref<24x128xbf16, #tpu.memory_space<vmem>>, %arg3: memref<1x128xf32, #tpu.memory_space<vmem>>, %arg4: memref<1x128xf32, #tpu.memory_space<vmem>>, %arg5: memref<128x128xf32, #tpu.memory_space<vmem>>) attributes {dimension_semantics = [#tpu.dimension_semantics<parallel>], iteration_bounds = array<i64: 1>, scalar_prefetch = 0 : i64, scratch_operands = 0 : i64, tpu.core_type = #tpu.core_type<tc>, window_params = [{transform_indices = @transform_0, window_bounds = array<i64: 128, 24>}, {pipeline_mode = #tpu.pipeline_mode<synchronous>, transform_indices = @transform_1, window_bounds = array<i64: 24, 128>}, {pipeline_mode = #tpu.pipeline_mode<synchronous>, transform_indices = @transform_2, window_bounds = array<i64: 1, 128>}, {pipeline_mode = #tpu.pipeline_mode<synchronous>, transform_indices = @transform_3, window_bounds = array<i64: 1, 128>}, {transform_indices = @transform_4, window_bounds = array<i64: 128, 128>}]} {
    %c0 = arith.constant 0 : index
    %c0_0 = arith.constant 0 : index
    %0 = vector.load %arg1[%c0, %c0_0] : memref<128x24xbf16, #tpu.memory_space<vmem>>, vector<128x24xbf16>
    %c0_1 = arith.constant 0 : index
    %c0_2 = arith.constant 0 : index
    %1 = vector.load %arg2[%c0_1, %c0_2] : memref<24x128xbf16, #tpu.memory_space<vmem>>, vector<24x128xbf16>
    %cst = arith.constant dense<0.000000e+00> : vector<128x128xf32>
    %2 = tpu.matmul %0, %1, %cst {dimension_numbers = #tpu.dot_dimension_numbers<[1], [0], [0], [1], [0, 0, 1, 1], [], []>} : vector<128x24xbf16>, vector<24x128xbf16>, vector<128x128xf32> -> vector<128x128xf32>
    %c0_3 = arith.constant 0 : index
    %c0_4 = arith.constant 0 : index
    %3 = vector.load %arg3[%c0_3, %c0_4] : memref<1x128xf32, #tpu.memory_space<vmem>>, vector<1x128xf32>
    %4 = vector.broadcast %3 : vector<1x128xf32> to vector<128x128xf32>
    %5 = arith.mulf %2, %4 : vector<128x128xf32>
    %c0_5 = arith.constant 0 : index
    %c0_6 = arith.constant 0 : index
    %6 = vector.load %arg4[%c0_5, %c0_6] : memref<1x128xf32, #tpu.memory_space<vmem>>, vector<1x128xf32>
    %7 = vector.broadcast %6 : vector<1x128xf32> to vector<128x128xf32>
    %8 = arith.addf %5, %7 : vector<128x128xf32>
    %c0_7 = arith.constant 0 : index
    %c0_8 = arith.constant 0 : index
    %9 = vector.load %arg5[%c0_7, %c0_8] : memref<128x128xf32, #tpu.memory_space<vmem>>, vector<128x128xf32>
    tpu.vector_store %arg5[%c0_7, %c0_8], %8 {strides = array<i32>} : memref<128x128xf32, #tpu.memory_space<vmem>>, vector<128x128xf32>,
    return
  }
  func.func @transform_0(%arg0: i32) -> (i32, i32) {
    %c0_i32 = arith.constant 0 : i32
    %c0_i32_0 = arith.constant 0 : i32
    return %arg0, %c0_i32 : i32, i32
  }
  func.func @transform_1(%arg0: i32) -> (i32, i32) {
    %c0_i32 = arith.constant 0 : i32
    %c0_i32_0 = arith.constant 0 : i32
    %c0_i32_1 = arith.constant 0 : i32
    return %c0_i32, %c0_i32_0 : i32, i32
  }
  func.func @transform_2(%arg0: i32) -> (i32, i32) {
    %c0_i32 = arith.constant 0 : i32
    %c0_i32_0 = arith.constant 0 : i32
    %c0_i32_1 = arith.constant 0 : i32
    return %c0_i32, %c0_i32_0 : i32, i32
  }
  func.func @transform_3(%arg0: i32) -> (i32, i32) {
    %c0_i32 = arith.constant 0 : i32
    %c0_i32_0 = arith.constant 0 : i32
    %c0_i32_1 = arith.constant 0 : i32
    return %c0_i32, %c0_i32_0 : i32, i32
  }
  func.func @transform_4(%arg0: i32) -> (i32, i32) {
    %c0_i32 = arith.constant 0 : i32
    %c0_i32_0 = arith.constant 0 : i32
    return %arg0, %c0_i32 : i32, i32
  }
}

module attributes {stable_mosaic.version = 11 : i64} {
  func.func @dw_conv_bn_act_kernel(%arg0: i32, %arg1: memref<9x24x128xf32, #tpu.memory_space<vmem>>, %arg2: memref<9x24x1xf32, #tpu.memory_space<vmem>>, %arg3: memref<24x1xf32, #tpu.memory_space<vmem>>, %arg4: memref<24x1xf32, #tpu.memory_space<vmem>>, %arg5: memref<24x128xf32, #tpu.memory_space<vmem>>) attributes {dimension_semantics = [#tpu.dimension_semantics<parallel>], iteration_bounds = array<i64: 1>, scalar_prefetch = 0 : i64, scratch_operands = 0 : i64, tpu.core_type = #tpu.core_type<tc>, window_params = [{transform_indices = @transform_0, window_bounds = array<i64: 9, 24, 128>}, {pipeline_mode = #tpu.pipeline_mode<synchronous>, transform_indices = @transform_1, window_bounds = array<i64: 9, 24, 1>}, {pipeline_mode = #tpu.pipeline_mode<synchronous>, transform_indices = @transform_2, window_bounds = array<i64: 24, 1>}, {pipeline_mode = #tpu.pipeline_mode<synchronous>, transform_indices = @transform_3, window_bounds = array<i64: 24, 1>}, {transform_indices = @transform_4, window_bounds = array<i64: 24, 128>}]} {
    %c0 = arith.constant 0 : index
    %c0_0 = arith.constant 0 : index
    %c0_1 = arith.constant 0 : index
    %0 = vector.load %arg1[%c0, %c0_0, %c0_1] : memref<9x24x128xf32, #tpu.memory_space<vmem>>, vector<1x24x128xf32>
    %1 = vector.shape_cast %0 : vector<1x24x128xf32> to vector<24x128xf32>
    %c0_2 = arith.constant 0 : index
    %c0_3 = arith.constant 0 : index
    %c0_4 = arith.constant 0 : index
    %2 = vector.load %arg2[%c0_2, %c0_3, %c0_4] : memref<9x24x1xf32, #tpu.memory_space<vmem>>, vector<1x24x1xf32>
    %3 = vector.shape_cast %2 : vector<1x24x1xf32> to vector<24x1xf32>
    %4 = vector.broadcast %3 : vector<24x1xf32> to vector<24x128xf32>
    %5 = arith.mulf %1, %4 : vector<24x128xf32>
    %c1 = arith.constant 1 : index
    %c0_5 = arith.constant 0 : index
    %c0_6 = arith.constant 0 : index
    %6 = vector.load %arg1[%c1, %c0_5, %c0_6] : memref<9x24x128xf32, #tpu.memory_space<vmem>>, vector<1x24x128xf32>
    %7 = vector.shape_cast %6 : vector<1x24x128xf32> to vector<24x128xf32>
    %c1_7 = arith.constant 1 : index
    %c0_8 = arith.constant 0 : index
    %c0_9 = arith.constant 0 : index
    %8 = vector.load %arg2[%c1_7, %c0_8, %c0_9] : memref<9x24x1xf32, #tpu.memory_space<vmem>>, vector<1x24x1xf32>
    %9 = vector.shape_cast %8 : vector<1x24x1xf32> to vector<24x1xf32>
    %10 = vector.broadcast %9 : vector<24x1xf32> to vector<24x128xf32>
    %11 = arith.mulf %7, %10 : vector<24x128xf32>
    %12 = arith.addf %5, %11 : vector<24x128xf32>
    %c2 = arith.constant 2 : index
    %c0_10 = arith.constant 0 : index
    %c0_11 = arith.constant 0 : index
    %13 = vector.load %arg1[%c2, %c0_10, %c0_11] : memref<9x24x128xf32, #tpu.memory_space<vmem>>, vector<1x24x128xf32>
    %14 = vector.shape_cast %13 : vector<1x24x128xf32> to vector<24x128xf32>
    %c2_12 = arith.constant 2 : index
    %c0_13 = arith.constant 0 : index
    %c0_14 = arith.constant 0 : index
    %15 = vector.load %arg2[%c2_12, %c0_13, %c0_14] : memref<9x24x1xf32, #tpu.memory_space<vmem>>, vector<1x24x1xf32>
    %16 = vector.shape_cast %15 : vector<1x24x1xf32> to vector<24x1xf32>
    %17 = vector.broadcast %16 : vector<24x1xf32> to vector<24x128xf32>
    %18 = arith.mulf %14, %17 : vector<24x128xf32>
    %19 = arith.addf %12, %18 : vector<24x128xf32>
    %c3 = arith.constant 3 : index
    %c0_15 = arith.constant 0 : index
    %c0_16 = arith.constant 0 : index
    %20 = vector.load %arg1[%c3, %c0_15, %c0_16] : memref<9x24x128xf32, #tpu.memory_space<vmem>>, vector<1x24x128xf32>
    %21 = vector.shape_cast %20 : vector<1x24x128xf32> to vector<24x128xf32>
    %c3_17 = arith.constant 3 : index
    %c0_18 = arith.constant 0 : index
    %c0_19 = arith.constant 0 : index
    %22 = vector.load %arg2[%c3_17, %c0_18, %c0_19] : memref<9x24x1xf32, #tpu.memory_space<vmem>>, vector<1x24x1xf32>
    %23 = vector.shape_cast %22 : vector<1x24x1xf32> to vector<24x1xf32>
    %24 = vector.broadcast %23 : vector<24x1xf32> to vector<24x128xf32>
    %25 = arith.mulf %21, %24 : vector<24x128xf32>
    %26 = arith.addf %19, %25 : vector<24x128xf32>
    %c4 = arith.constant 4 : index
    %c0_20 = arith.constant 0 : index
    %c0_21 = arith.constant 0 : index
    %27 = vector.load %arg1[%c4, %c0_20, %c0_21] : memref<9x24x128xf32, #tpu.memory_space<vmem>>, vector<1x24x128xf32>
    %28 = vector.shape_cast %27 : vector<1x24x128xf32> to vector<24x128xf32>
    %c4_22 = arith.constant 4 : index
    %c0_23 = arith.constant 0 : index
    %c0_24 = arith.constant 0 : index
    %29 = vector.load %arg2[%c4_22, %c0_23, %c0_24] : memref<9x24x1xf32, #tpu.memory_space<vmem>>, vector<1x24x1xf32>
    %30 = vector.shape_cast %29 : vector<1x24x1xf32> to vector<24x1xf32>
    %31 = vector.broadcast %30 : vector<24x1xf32> to vector<24x128xf32>
    %32 = arith.mulf %28, %31 : vector<24x128xf32>
    %33 = arith.addf %26, %32 : vector<24x128xf32>
    %c5 = arith.constant 5 : index
    %c0_25 = arith.constant 0 : index
    %c0_26 = arith.constant 0 : index
    %34 = vector.load %arg1[%c5, %c0_25, %c0_26] : memref<9x24x128xf32, #tpu.memory_space<vmem>>, vector<1x24x128xf32>
    %35 = vector.shape_cast %34 : vector<1x24x128xf32> to vector<24x128xf32>
    %c5_27 = arith.constant 5 : index
    %c0_28 = arith.constant 0 : index
    %c0_29 = arith.constant 0 : index
    %36 = vector.load %arg2[%c5_27, %c0_28, %c0_29] : memref<9x24x1xf32, #tpu.memory_space<vmem>>, vector<1x24x1xf32>
    %37 = vector.shape_cast %36 : vector<1x24x1xf32> to vector<24x1xf32>
    %38 = vector.broadcast %37 : vector<24x1xf32> to vector<24x128xf32>
    %39 = arith.mulf %35, %38 : vector<24x128xf32>
    %40 = arith.addf %33, %39 : vector<24x128xf32>
    %c6 = arith.constant 6 : index
    %c0_30 = arith.constant 0 : index
    %c0_31 = arith.constant 0 : index
    %41 = vector.load %arg1[%c6, %c0_30, %c0_31] : memref<9x24x128xf32, #tpu.memory_space<vmem>>, vector<1x24x128xf32>
    %42 = vector.shape_cast %41 : vector<1x24x128xf32> to vector<24x128xf32>
    %c6_32 = arith.constant 6 : index
    %c0_33 = arith.constant 0 : index
    %c0_34 = arith.constant 0 : index
    %43 = vector.load %arg2[%c6_32, %c0_33, %c0_34] : memref<9x24x1xf32, #tpu.memory_space<vmem>>, vector<1x24x1xf32>
    %44 = vector.shape_cast %43 : vector<1x24x1xf32> to vector<24x1xf32>
    %45 = vector.broadcast %44 : vector<24x1xf32> to vector<24x128xf32>
    %46 = arith.mulf %42, %45 : vector<24x128xf32>
    %47 = arith.addf %40, %46 : vector<24x128xf32>
    %c7 = arith.constant 7 : index
    %c0_35 = arith.constant 0 : index
    %c0_36 = arith.constant 0 : index
    %48 = vector.load %arg1[%c7, %c0_35, %c0_36] : memref<9x24x128xf32, #tpu.memory_space<vmem>>, vector<1x24x128xf32>
    %49 = vector.shape_cast %48 : vector<1x24x128xf32> to vector<24x128xf32>
    %c7_37 = arith.constant 7 : index
    %c0_38 = arith.constant 0 : index
    %c0_39 = arith.constant 0 : index
    %50 = vector.load %arg2[%c7_37, %c0_38, %c0_39] : memref<9x24x1xf32, #tpu.memory_space<vmem>>, vector<1x24x1xf32>
    %51 = vector.shape_cast %50 : vector<1x24x1xf32> to vector<24x1xf32>
    %52 = vector.broadcast %51 : vector<24x1xf32> to vector<24x128xf32>
    %53 = arith.mulf %49, %52 : vector<24x128xf32>
    %54 = arith.addf %47, %53 : vector<24x128xf32>
    %c8 = arith.constant 8 : index
    %c0_40 = arith.constant 0 : index
    %c0_41 = arith.constant 0 : index
    %55 = vector.load %arg1[%c8, %c0_40, %c0_41] : memref<9x24x128xf32, #tpu.memory_space<vmem>>, vector<1x24x128xf32>
    %56 = vector.shape_cast %55 : vector<1x24x128xf32> to vector<24x128xf32>
    %c8_42 = arith.constant 8 : index
    %c0_43 = arith.constant 0 : index
    %c0_44 = arith.constant 0 : index
    %57 = vector.load %arg2[%c8_42, %c0_43, %c0_44] : memref<9x24x1xf32, #tpu.memory_space<vmem>>, vector<1x24x1xf32>
    %58 = vector.shape_cast %57 : vector<1x24x1xf32> to vector<24x1xf32>
    %59 = vector.broadcast %58 : vector<24x1xf32> to vector<24x128xf32>
    %60 = arith.mulf %56, %59 : vector<24x128xf32>
    %61 = arith.addf %54, %60 : vector<24x128xf32>
    %c0_45 = arith.constant 0 : index
    %c0_46 = arith.constant 0 : index
    %62 = vector.load %arg3[%c0_45, %c0_46] : memref<24x1xf32, #tpu.memory_space<vmem>>, vector<24x1xf32>
    %63 = vector.broadcast %62 : vector<24x1xf32> to vector<24x128xf32>
    %64 = arith.mulf %61, %63 : vector<24x128xf32>
    %c0_47 = arith.constant 0 : index
    %c0_48 = arith.constant 0 : index
    %65 = vector.load %arg4[%c0_47, %c0_48] : memref<24x1xf32, #tpu.memory_space<vmem>>, vector<24x1xf32>
    %66 = vector.broadcast %65 : vector<24x1xf32> to vector<24x128xf32>
    %67 = arith.addf %64, %66 : vector<24x128xf32>
    %c0_49 = arith.constant 0 : index
    %c0_50 = arith.constant 0 : index
    %68 = vector.load %arg5[%c0_49, %c0_50] : memref<24x128xf32, #tpu.memory_space<vmem>>, vector<24x128xf32>
    tpu.vector_store %arg5[%c0_49, %c0_50], %67 {strides = array<i32>} : memref<24x128xf32, #tpu.memory_space<vmem>>, vector<24x128xf32>,
    return
  }
  func.func @transform_0(%arg0: i32) -> (i32, i32, i32) {
    %c0_i32 = arith.constant 0 : i32
    %c0_i32_0 = arith.constant 0 : i32
    %c0_i32_1 = arith.constant 0 : i32
    return %c0_i32, %c0_i32_0, %arg0 : i32, i32, i32
  }
  func.func @transform_1(%arg0: i32) -> (i32, i32, i32) {
    %c0_i32 = arith.constant 0 : i32
    %c0_i32_0 = arith.constant 0 : i32
    %c0_i32_1 = arith.constant 0 : i32
    %c0_i32_2 = arith.constant 0 : i32
    return %c0_i32, %c0_i32_0, %c0_i32_1 : i32, i32, i32
  }
  func.func @transform_2(%arg0: i32) -> (i32, i32) {
    %c0_i32 = arith.constant 0 : i32
    %c0_i32_0 = arith.constant 0 : i32
    %c0_i32_1 = arith.constant 0 : i32
    return %c0_i32, %c0_i32_0 : i32, i32
  }
  func.func @transform_3(%arg0: i32) -> (i32, i32) {
    %c0_i32 = arith.constant 0 : i32
    %c0_i32_0 = arith.constant 0 : i32
    %c0_i32_1 = arith.constant 0 : i32
    return %c0_i32, %c0_i32_0 : i32, i32
  }
  func.func @transform_4(%arg0: i32) -> (i32, i32) {
    %c0_i32 = arith.constant 0 : i32
    %c0_i32_0 = arith.constant 0 : i32
    return %c0_i32, %arg0 : i32, i32
  }
}

module attributes {stable_mosaic.version = 11 : i64} {
  func.func @dw_conv_bn_act_kernel(%arg0: i32, %arg1: memref<9x3x128xf32, #tpu.memory_space<vmem>>, %arg2: memref<9x3x1xf32, #tpu.memory_space<vmem>>, %arg3: memref<3x1xf32, #tpu.memory_space<vmem>>, %arg4: memref<3x1xf32, #tpu.memory_space<vmem>>, %arg5: memref<3x128xf32, #tpu.memory_space<vmem>>) attributes {dimension_semantics = [#tpu.dimension_semantics<parallel>], iteration_bounds = array<i64: 1>, scalar_prefetch = 0 : i64, scratch_operands = 0 : i64, tpu.core_type = #tpu.core_type<tc>, window_params = [{transform_indices = @transform_0, window_bounds = array<i64: 9, 3, 128>}, {pipeline_mode = #tpu.pipeline_mode<synchronous>, transform_indices = @transform_1, window_bounds = array<i64: 9, 3, 1>}, {pipeline_mode = #tpu.pipeline_mode<synchronous>, transform_indices = @transform_2, window_bounds = array<i64: 3, 1>}, {pipeline_mode = #tpu.pipeline_mode<synchronous>, transform_indices = @transform_3, window_bounds = array<i64: 3, 1>}, {transform_indices = @transform_4, window_bounds = array<i64: 3, 128>}]} {
    %c0 = arith.constant 0 : index
    %c0_0 = arith.constant 0 : index
    %c0_1 = arith.constant 0 : index
    %0 = vector.load %arg1[%c0, %c0_0, %c0_1] : memref<9x3x128xf32, #tpu.memory_space<vmem>>, vector<1x3x128xf32>
    %1 = vector.shape_cast %0 : vector<1x3x128xf32> to vector<3x128xf32>
    %c0_2 = arith.constant 0 : index
    %c0_3 = arith.constant 0 : index
    %c0_4 = arith.constant 0 : index
    %2 = vector.load %arg2[%c0_2, %c0_3, %c0_4] : memref<9x3x1xf32, #tpu.memory_space<vmem>>, vector<1x3x1xf32>
    %3 = vector.shape_cast %2 : vector<1x3x1xf32> to vector<3x1xf32>
    %4 = vector.broadcast %3 : vector<3x1xf32> to vector<3x128xf32>
    %5 = arith.mulf %1, %4 : vector<3x128xf32>
    %c1 = arith.constant 1 : index
    %c0_5 = arith.constant 0 : index
    %c0_6 = arith.constant 0 : index
    %6 = vector.load %arg1[%c1, %c0_5, %c0_6] : memref<9x3x128xf32, #tpu.memory_space<vmem>>, vector<1x3x128xf32>
    %7 = vector.shape_cast %6 : vector<1x3x128xf32> to vector<3x128xf32>
    %c1_7 = arith.constant 1 : index
    %c0_8 = arith.constant 0 : index
    %c0_9 = arith.constant 0 : index
    %8 = vector.load %arg2[%c1_7, %c0_8, %c0_9] : memref<9x3x1xf32, #tpu.memory_space<vmem>>, vector<1x3x1xf32>
    %9 = vector.shape_cast %8 : vector<1x3x1xf32> to vector<3x1xf32>
    %10 = vector.broadcast %9 : vector<3x1xf32> to vector<3x128xf32>
    %11 = arith.mulf %7, %10 : vector<3x128xf32>
    %12 = arith.addf %5, %11 : vector<3x128xf32>
    %c2 = arith.constant 2 : index
    %c0_10 = arith.constant 0 : index
    %c0_11 = arith.constant 0 : index
    %13 = vector.load %arg1[%c2, %c0_10, %c0_11] : memref<9x3x128xf32, #tpu.memory_space<vmem>>, vector<1x3x128xf32>
    %14 = vector.shape_cast %13 : vector<1x3x128xf32> to vector<3x128xf32>
    %c2_12 = arith.constant 2 : index
    %c0_13 = arith.constant 0 : index
    %c0_14 = arith.constant 0 : index
    %15 = vector.load %arg2[%c2_12, %c0_13, %c0_14] : memref<9x3x1xf32, #tpu.memory_space<vmem>>, vector<1x3x1xf32>
    %16 = vector.shape_cast %15 : vector<1x3x1xf32> to vector<3x1xf32>
    %17 = vector.broadcast %16 : vector<3x1xf32> to vector<3x128xf32>
    %18 = arith.mulf %14, %17 : vector<3x128xf32>
    %19 = arith.addf %12, %18 : vector<3x128xf32>
    %c3 = arith.constant 3 : index
    %c0_15 = arith.constant 0 : index
    %c0_16 = arith.constant 0 : index
    %20 = vector.load %arg1[%c3, %c0_15, %c0_16] : memref<9x3x128xf32, #tpu.memory_space<vmem>>, vector<1x3x128xf32>
    %21 = vector.shape_cast %20 : vector<1x3x128xf32> to vector<3x128xf32>
    %c3_17 = arith.constant 3 : index
    %c0_18 = arith.constant 0 : index
    %c0_19 = arith.constant 0 : index
    %22 = vector.load %arg2[%c3_17, %c0_18, %c0_19] : memref<9x3x1xf32, #tpu.memory_space<vmem>>, vector<1x3x1xf32>
    %23 = vector.shape_cast %22 : vector<1x3x1xf32> to vector<3x1xf32>
    %24 = vector.broadcast %23 : vector<3x1xf32> to vector<3x128xf32>
    %25 = arith.mulf %21, %24 : vector<3x128xf32>
    %26 = arith.addf %19, %25 : vector<3x128xf32>
    %c4 = arith.constant 4 : index
    %c0_20 = arith.constant 0 : index
    %c0_21 = arith.constant 0 : index
    %27 = vector.load %arg1[%c4, %c0_20, %c0_21] : memref<9x3x128xf32, #tpu.memory_space<vmem>>, vector<1x3x128xf32>
    %28 = vector.shape_cast %27 : vector<1x3x128xf32> to vector<3x128xf32>
    %c4_22 = arith.constant 4 : index
    %c0_23 = arith.constant 0 : index
    %c0_24 = arith.constant 0 : index
    %29 = vector.load %arg2[%c4_22, %c0_23, %c0_24] : memref<9x3x1xf32, #tpu.memory_space<vmem>>, vector<1x3x1xf32>
    %30 = vector.shape_cast %29 : vector<1x3x1xf32> to vector<3x1xf32>
    %31 = vector.broadcast %30 : vector<3x1xf32> to vector<3x128xf32>
    %32 = arith.mulf %28, %31 : vector<3x128xf32>
    %33 = arith.addf %26, %32 : vector<3x128xf32>
    %c5 = arith.constant 5 : index
    %c0_25 = arith.constant 0 : index
    %c0_26 = arith.constant 0 : index
    %34 = vector.load %arg1[%c5, %c0_25, %c0_26] : memref<9x3x128xf32, #tpu.memory_space<vmem>>, vector<1x3x128xf32>
    %35 = vector.shape_cast %34 : vector<1x3x128xf32> to vector<3x128xf32>
    %c5_27 = arith.constant 5 : index
    %c0_28 = arith.constant 0 : index
    %c0_29 = arith.constant 0 : index
    %36 = vector.load %arg2[%c5_27, %c0_28, %c0_29] : memref<9x3x1xf32, #tpu.memory_space<vmem>>, vector<1x3x1xf32>
    %37 = vector.shape_cast %36 : vector<1x3x1xf32> to vector<3x1xf32>
    %38 = vector.broadcast %37 : vector<3x1xf32> to vector<3x128xf32>
    %39 = arith.mulf %35, %38 : vector<3x128xf32>
    %40 = arith.addf %33, %39 : vector<3x128xf32>
    %c6 = arith.constant 6 : index
    %c0_30 = arith.constant 0 : index
    %c0_31 = arith.constant 0 : index
    %41 = vector.load %arg1[%c6, %c0_30, %c0_31] : memref<9x3x128xf32, #tpu.memory_space<vmem>>, vector<1x3x128xf32>
    %42 = vector.shape_cast %41 : vector<1x3x128xf32> to vector<3x128xf32>
    %c6_32 = arith.constant 6 : index
    %c0_33 = arith.constant 0 : index
    %c0_34 = arith.constant 0 : index
    %43 = vector.load %arg2[%c6_32, %c0_33, %c0_34] : memref<9x3x1xf32, #tpu.memory_space<vmem>>, vector<1x3x1xf32>
    %44 = vector.shape_cast %43 : vector<1x3x1xf32> to vector<3x1xf32>
    %45 = vector.broadcast %44 : vector<3x1xf32> to vector<3x128xf32>
    %46 = arith.mulf %42, %45 : vector<3x128xf32>
    %47 = arith.addf %40, %46 : vector<3x128xf32>
    %c7 = arith.constant 7 : index
    %c0_35 = arith.constant 0 : index
    %c0_36 = arith.constant 0 : index
    %48 = vector.load %arg1[%c7, %c0_35, %c0_36] : memref<9x3x128xf32, #tpu.memory_space<vmem>>, vector<1x3x128xf32>
    %49 = vector.shape_cast %48 : vector<1x3x128xf32> to vector<3x128xf32>
    %c7_37 = arith.constant 7 : index
    %c0_38 = arith.constant 0 : index
    %c0_39 = arith.constant 0 : index
    %50 = vector.load %arg2[%c7_37, %c0_38, %c0_39] : memref<9x3x1xf32, #tpu.memory_space<vmem>>, vector<1x3x1xf32>
    %51 = vector.shape_cast %50 : vector<1x3x1xf32> to vector<3x1xf32>
    %52 = vector.broadcast %51 : vector<3x1xf32> to vector<3x128xf32>
    %53 = arith.mulf %49, %52 : vector<3x128xf32>
    %54 = arith.addf %47, %53 : vector<3x128xf32>
    %c8 = arith.constant 8 : index
    %c0_40 = arith.constant 0 : index
    %c0_41 = arith.constant 0 : index
    %55 = vector.load %arg1[%c8, %c0_40, %c0_41] : memref<9x3x128xf32, #tpu.memory_space<vmem>>, vector<1x3x128xf32>
    %56 = vector.shape_cast %55 : vector<1x3x128xf32> to vector<3x128xf32>
    %c8_42 = arith.constant 8 : index
    %c0_43 = arith.constant 0 : index
    %c0_44 = arith.constant 0 : index
    %57 = vector.load %arg2[%c8_42, %c0_43, %c0_44] : memref<9x3x1xf32, #tpu.memory_space<vmem>>, vector<1x3x1xf32>
    %58 = vector.shape_cast %57 : vector<1x3x1xf32> to vector<3x1xf32>
    %59 = vector.broadcast %58 : vector<3x1xf32> to vector<3x128xf32>
    %60 = arith.mulf %56, %59 : vector<3x128xf32>
    %61 = arith.addf %54, %60 : vector<3x128xf32>
    %c0_45 = arith.constant 0 : index
    %c0_46 = arith.constant 0 : index
    %62 = vector.load %arg3[%c0_45, %c0_46] : memref<3x1xf32, #tpu.memory_space<vmem>>, vector<3x1xf32>
    %63 = vector.broadcast %62 : vector<3x1xf32> to vector<3x128xf32>
    %64 = arith.mulf %61, %63 : vector<3x128xf32>
    %c0_47 = arith.constant 0 : index
    %c0_48 = arith.constant 0 : index
    %65 = vector.load %arg4[%c0_47, %c0_48] : memref<3x1xf32, #tpu.memory_space<vmem>>, vector<3x1xf32>
    %66 = vector.broadcast %65 : vector<3x1xf32> to vector<3x128xf32>
    %67 = arith.addf %64, %66 : vector<3x128xf32>
    %c0_49 = arith.constant 0 : index
    %c0_50 = arith.constant 0 : index
    %68 = vector.load %arg5[%c0_49, %c0_50] : memref<3x128xf32, #tpu.memory_space<vmem>>, vector<3x128xf32>
    tpu.vector_store %arg5[%c0_49, %c0_50], %67 {strides = array<i32>} : memref<3x128xf32, #tpu.memory_space<vmem>>, vector<3x128xf32>,
    return
  }
  func.func @transform_0(%arg0: i32) -> (i32, i32, i32) {
    %c0_i32 = arith.constant 0 : i32
    %c0_i32_0 = arith.constant 0 : i32
    %c0_i32_1 = arith.constant 0 : i32
    return %c0_i32, %c0_i32_0, %arg0 : i32, i32, i32
  }
  func.func @transform_1(%arg0: i32) -> (i32, i32, i32) {
    %c0_i32 = arith.constant 0 : i32
    %c0_i32_0 = arith.constant 0 : i32
    %c0_i32_1 = arith.constant 0 : i32
    %c0_i32_2 = arith.constant 0 : i32
    return %c0_i32, %c0_i32_0, %c0_i32_1 : i32, i32, i32
  }
  func.func @transform_2(%arg0: i32) -> (i32, i32) {
    %c0_i32 = arith.constant 0 : i32
    %c0_i32_0 = arith.constant 0 : i32
    %c0_i32_1 = arith.constant 0 : i32
    return %c0_i32, %c0_i32_0 : i32, i32
  }
  func.func @transform_3(%arg0: i32) -> (i32, i32) {
    %c0_i32 = arith.constant 0 : i32
    %c0_i32_0 = arith.constant 0 : i32
    %c0_i32_1 = arith.constant 0 : i32
    return %c0_i32, %c0_i32_0 : i32, i32
  }
  func.func @transform_4(%arg0: i32) -> (i32, i32) {
    %c0_i32 = arith.constant 0 : i32
    %c0_i32_0 = arith.constant 0 : i32
    return %c0_i32, %arg0 : i32, i32
  }
}

module attributes {stable_mosaic.version = 11 : i64} {
  func.func @adder_dw_bn_relu_kernel(%arg0: i32, %arg1: memref<9x3x128xf32, #tpu.memory_space<vmem>>, %arg2: memref<9x3x9xf32, #tpu.memory_space<vmem>>, %arg3: memref<3x9x1xf32, #tpu.memory_space<vmem>>, %arg4: memref<3x9x1xf32, #tpu.memory_space<vmem>>, %arg5: memref<3x9x128xf32, #tpu.memory_space<vmem>>) attributes {dimension_semantics = [#tpu.dimension_semantics<parallel>], iteration_bounds = array<i64: 1>, scalar_prefetch = 0 : i64, scratch_operands = 0 : i64, tpu.core_type = #tpu.core_type<tc>, window_params = [{transform_indices = @transform_0, window_bounds = array<i64: 9, 3, 128>}, {pipeline_mode = #tpu.pipeline_mode<synchronous>, transform_indices = @transform_1, window_bounds = array<i64: 9, 3, 9>}, {pipeline_mode = #tpu.pipeline_mode<synchronous>, transform_indices = @transform_2, window_bounds = array<i64: 3, 9, 1>}, {pipeline_mode = #tpu.pipeline_mode<synchronous>, transform_indices = @transform_3, window_bounds = array<i64: 3, 9, 1>}, {transform_indices = @transform_4, window_bounds = array<i64: 3, 9, 128>}]} {
    %c0 = arith.constant 0 : index
    %c0_0 = arith.constant 0 : index
    %c0_1 = arith.constant 0 : index
    %0 = vector.load %arg1[%c0, %c0_0, %c0_1] : memref<9x3x128xf32, #tpu.memory_space<vmem>>, vector<1x3x128xf32>
    %1 = vector.shape_cast %0 : vector<1x3x128xf32> to vector<3x128xf32>
    %2 = vector.shape_cast %1 : vector<3x128xf32> to vector<3x1x128xf32>
    %c0_2 = arith.constant 0 : index
    %c0_3 = arith.constant 0 : index
    %c0_4 = arith.constant 0 : index
    %3 = vector.load %arg2[%c0_2, %c0_3, %c0_4] : memref<9x3x9xf32, #tpu.memory_space<vmem>>, vector<1x3x9xf32>
    %4 = vector.shape_cast %3 : vector<1x3x9xf32> to vector<3x9xf32>
    %5 = vector.shape_cast %4 : vector<3x9xf32> to vector<3x9x1xf32>
    %6 = vector.broadcast %2 : vector<3x1x128xf32> to vector<3x9x128xf32>
    %7 = vector.broadcast %5 : vector<3x9x1xf32> to vector<3x9x128xf32>
    %8 = arith.subf %6, %7 : vector<3x9x128xf32>
    %9 = math.absf %8 : vector<3x9x128xf32>
    %c1 = arith.constant 1 : index
    %c0_5 = arith.constant 0 : index
    %c0_6 = arith.constant 0 : index
    %10 = vector.load %arg1[%c1, %c0_5, %c0_6] : memref<9x3x128xf32, #tpu.memory_space<vmem>>, vector<1x3x128xf32>
    %11 = vector.shape_cast %10 : vector<1x3x128xf32> to vector<3x128xf32>
    %12 = vector.shape_cast %11 : vector<3x128xf32> to vector<3x1x128xf32>
    %c1_7 = arith.constant 1 : index
    %c0_8 = arith.constant 0 : index
    %c0_9 = arith.constant 0 : index
    %13 = vector.load %arg2[%c1_7, %c0_8, %c0_9] : memref<9x3x9xf32, #tpu.memory_space<vmem>>, vector<1x3x9xf32>
    %14 = vector.shape_cast %13 : vector<1x3x9xf32> to vector<3x9xf32>
    %15 = vector.shape_cast %14 : vector<3x9xf32> to vector<3x9x1xf32>
    %16 = vector.broadcast %12 : vector<3x1x128xf32> to vector<3x9x128xf32>
    %17 = vector.broadcast %15 : vector<3x9x1xf32> to vector<3x9x128xf32>
    %18 = arith.subf %16, %17 : vector<3x9x128xf32>
    %19 = math.absf %18 : vector<3x9x128xf32>
    %20 = arith.addf %9, %19 : vector<3x9x128xf32>
    %c2 = arith.constant 2 : index
    %c0_10 = arith.constant 0 : index
    %c0_11 = arith.constant 0 : index
    %21 = vector.load %arg1[%c2, %c0_10, %c0_11] : memref<9x3x128xf32, #tpu.memory_space<vmem>>, vector<1x3x128xf32>
    %22 = vector.shape_cast %21 : vector<1x3x128xf32> to vector<3x128xf32>
    %23 = vector.shape_cast %22 : vector<3x128xf32> to vector<3x1x128xf32>
    %c2_12 = arith.constant 2 : index
    %c0_13 = arith.constant 0 : index
    %c0_14 = arith.constant 0 : index
    %24 = vector.load %arg2[%c2_12, %c0_13, %c0_14] : memref<9x3x9xf32, #tpu.memory_space<vmem>>, vector<1x3x9xf32>
    %25 = vector.shape_cast %24 : vector<1x3x9xf32> to vector<3x9xf32>
    %26 = vector.shape_cast %25 : vector<3x9xf32> to vector<3x9x1xf32>
    %27 = vector.broadcast %23 : vector<3x1x128xf32> to vector<3x9x128xf32>
    %28 = vector.broadcast %26 : vector<3x9x1xf32> to vector<3x9x128xf32>
    %29 = arith.subf %27, %28 : vector<3x9x128xf32>
    %30 = math.absf %29 : vector<3x9x128xf32>
    %31 = arith.addf %20, %30 : vector<3x9x128xf32>
    %c3 = arith.constant 3 : index
    %c0_15 = arith.constant 0 : index
    %c0_16 = arith.constant 0 : index
    %32 = vector.load %arg1[%c3, %c0_15, %c0_16] : memref<9x3x128xf32, #tpu.memory_space<vmem>>, vector<1x3x128xf32>
    %33 = vector.shape_cast %32 : vector<1x3x128xf32> to vector<3x128xf32>
    %34 = vector.shape_cast %33 : vector<3x128xf32> to vector<3x1x128xf32>
    %c3_17 = arith.constant 3 : index
    %c0_18 = arith.constant 0 : index
    %c0_19 = arith.constant 0 : index
    %35 = vector.load %arg2[%c3_17, %c0_18, %c0_19] : memref<9x3x9xf32, #tpu.memory_space<vmem>>, vector<1x3x9xf32>
    %36 = vector.shape_cast %35 : vector<1x3x9xf32> to vector<3x9xf32>
    %37 = vector.shape_cast %36 : vector<3x9xf32> to vector<3x9x1xf32>
    %38 = vector.broadcast %34 : vector<3x1x128xf32> to vector<3x9x128xf32>
    %39 = vector.broadcast %37 : vector<3x9x1xf32> to vector<3x9x128xf32>
    %40 = arith.subf %38, %39 : vector<3x9x128xf32>
    %41 = math.absf %40 : vector<3x9x128xf32>
    %42 = arith.addf %31, %41 : vector<3x9x128xf32>
    %c4 = arith.constant 4 : index
    %c0_20 = arith.constant 0 : index
    %c0_21 = arith.constant 0 : index
    %43 = vector.load %arg1[%c4, %c0_20, %c0_21] : memref<9x3x128xf32, #tpu.memory_space<vmem>>, vector<1x3x128xf32>
    %44 = vector.shape_cast %43 : vector<1x3x128xf32> to vector<3x128xf32>
    %45 = vector.shape_cast %44 : vector<3x128xf32> to vector<3x1x128xf32>
    %c4_22 = arith.constant 4 : index
    %c0_23 = arith.constant 0 : index
    %c0_24 = arith.constant 0 : index
    %46 = vector.load %arg2[%c4_22, %c0_23, %c0_24] : memref<9x3x9xf32, #tpu.memory_space<vmem>>, vector<1x3x9xf32>
    %47 = vector.shape_cast %46 : vector<1x3x9xf32> to vector<3x9xf32>
    %48 = vector.shape_cast %47 : vector<3x9xf32> to vector<3x9x1xf32>
    %49 = vector.broadcast %45 : vector<3x1x128xf32> to vector<3x9x128xf32>
    %50 = vector.broadcast %48 : vector<3x9x1xf32> to vector<3x9x128xf32>
    %51 = arith.subf %49, %50 : vector<3x9x128xf32>
    %52 = math.absf %51 : vector<3x9x128xf32>
    %53 = arith.addf %42, %52 : vector<3x9x128xf32>
    %c5 = arith.constant 5 : index
    %c0_25 = arith.constant 0 : index
    %c0_26 = arith.constant 0 : index
    %54 = vector.load %arg1[%c5, %c0_25, %c0_26] : memref<9x3x128xf32, #tpu.memory_space<vmem>>, vector<1x3x128xf32>
    %55 = vector.shape_cast %54 : vector<1x3x128xf32> to vector<3x128xf32>
    %56 = vector.shape_cast %55 : vector<3x128xf32> to vector<3x1x128xf32>
    %c5_27 = arith.constant 5 : index
    %c0_28 = arith.constant 0 : index
    %c0_29 = arith.constant 0 : index
    %57 = vector.load %arg2[%c5_27, %c0_28, %c0_29] : memref<9x3x9xf32, #tpu.memory_space<vmem>>, vector<1x3x9xf32>
    %58 = vector.shape_cast %57 : vector<1x3x9xf32> to vector<3x9xf32>
    %59 = vector.shape_cast %58 : vector<3x9xf32> to vector<3x9x1xf32>
    %60 = vector.broadcast %56 : vector<3x1x128xf32> to vector<3x9x128xf32>
    %61 = vector.broadcast %59 : vector<3x9x1xf32> to vector<3x9x128xf32>
    %62 = arith.subf %60, %61 : vector<3x9x128xf32>
    %63 = math.absf %62 : vector<3x9x128xf32>
    %64 = arith.addf %53, %63 : vector<3x9x128xf32>
    %c6 = arith.constant 6 : index
    %c0_30 = arith.constant 0 : index
    %c0_31 = arith.constant 0 : index
    %65 = vector.load %arg1[%c6, %c0_30, %c0_31] : memref<9x3x128xf32, #tpu.memory_space<vmem>>, vector<1x3x128xf32>
    %66 = vector.shape_cast %65 : vector<1x3x128xf32> to vector<3x128xf32>
    %67 = vector.shape_cast %66 : vector<3x128xf32> to vector<3x1x128xf32>
    %c6_32 = arith.constant 6 : index
    %c0_33 = arith.constant 0 : index
    %c0_34 = arith.constant 0 : index
    %68 = vector.load %arg2[%c6_32, %c0_33, %c0_34] : memref<9x3x9xf32, #tpu.memory_space<vmem>>, vector<1x3x9xf32>
    %69 = vector.shape_cast %68 : vector<1x3x9xf32> to vector<3x9xf32>
    %70 = vector.shape_cast %69 : vector<3x9xf32> to vector<3x9x1xf32>
    %71 = vector.broadcast %67 : vector<3x1x128xf32> to vector<3x9x128xf32>
    %72 = vector.broadcast %70 : vector<3x9x1xf32> to vector<3x9x128xf32>
    %73 = arith.subf %71, %72 : vector<3x9x128xf32>
    %74 = math.absf %73 : vector<3x9x128xf32>
    %75 = arith.addf %64, %74 : vector<3x9x128xf32>
    %c7 = arith.constant 7 : index
    %c0_35 = arith.constant 0 : index
    %c0_36 = arith.constant 0 : index
    %76 = vector.load %arg1[%c7, %c0_35, %c0_36] : memref<9x3x128xf32, #tpu.memory_space<vmem>>, vector<1x3x128xf32>
    %77 = vector.shape_cast %76 : vector<1x3x128xf32> to vector<3x128xf32>
    %78 = vector.shape_cast %77 : vector<3x128xf32> to vector<3x1x128xf32>
    %c7_37 = arith.constant 7 : index
    %c0_38 = arith.constant 0 : index
    %c0_39 = arith.constant 0 : index
    %79 = vector.load %arg2[%c7_37, %c0_38, %c0_39] : memref<9x3x9xf32, #tpu.memory_space<vmem>>, vector<1x3x9xf32>
    %80 = vector.shape_cast %79 : vector<1x3x9xf32> to vector<3x9xf32>
    %81 = vector.shape_cast %80 : vector<3x9xf32> to vector<3x9x1xf32>
    %82 = vector.broadcast %78 : vector<3x1x128xf32> to vector<3x9x128xf32>
    %83 = vector.broadcast %81 : vector<3x9x1xf32> to vector<3x9x128xf32>
    %84 = arith.subf %82, %83 : vector<3x9x128xf32>
    %85 = math.absf %84 : vector<3x9x128xf32>
    %86 = arith.addf %75, %85 : vector<3x9x128xf32>
    %c8 = arith.constant 8 : index
    %c0_40 = arith.constant 0 : index
    %c0_41 = arith.constant 0 : index
    %87 = vector.load %arg1[%c8, %c0_40, %c0_41] : memref<9x3x128xf32, #tpu.memory_space<vmem>>, vector<1x3x128xf32>
    %88 = vector.shape_cast %87 : vector<1x3x128xf32> to vector<3x128xf32>
    %89 = vector.shape_cast %88 : vector<3x128xf32> to vector<3x1x128xf32>
    %c8_42 = arith.constant 8 : index
    %c0_43 = arith.constant 0 : index
    %c0_44 = arith.constant 0 : index
    %90 = vector.load %arg2[%c8_42, %c0_43, %c0_44] : memref<9x3x9xf32, #tpu.memory_space<vmem>>, vector<1x3x9xf32>
    %91 = vector.shape_cast %90 : vector<1x3x9xf32> to vector<3x9xf32>
    %92 = vector.shape_cast %91 : vector<3x9xf32> to vector<3x9x1xf32>
    %93 = vector.broadcast %89 : vector<3x1x128xf32> to vector<3x9x128xf32>
    %94 = vector.broadcast %92 : vector<3x9x1xf32> to vector<3x9x128xf32>
    %95 = arith.subf %93, %94 : vector<3x9x128xf32>
    %96 = math.absf %95 : vector<3x9x128xf32>
    %97 = arith.addf %86, %96 : vector<3x9x128xf32>
    %cst = arith.constant 0.000000e+00 : f32
    %98 = vector.broadcast %cst : f32 to vector<3x9x128xf32>
    %99 = arith.subf %98, %97 : vector<3x9x128xf32>
    %c0_45 = arith.constant 0 : index
    %c0_46 = arith.constant 0 : index
    %c0_47 = arith.constant 0 : index
    %100 = vector.load %arg3[%c0_45, %c0_46, %c0_47] : memref<3x9x1xf32, #tpu.memory_space<vmem>>, vector<3x9x1xf32>
    %101 = vector.broadcast %100 : vector<3x9x1xf32> to vector<3x9x128xf32>
    %102 = arith.mulf %99, %101 : vector<3x9x128xf32>
    %c0_48 = arith.constant 0 : index
    %c0_49 = arith.constant 0 : index
    %c0_50 = arith.constant 0 : index
    %103 = vector.load %arg4[%c0_48, %c0_49, %c0_50] : memref<3x9x1xf32, #tpu.memory_space<vmem>>, vector<3x9x1xf32>
    %104 = vector.broadcast %103 : vector<3x9x1xf32> to vector<3x9x128xf32>
    %105 = arith.addf %102, %104 : vector<3x9x128xf32>
    %cst_51 = arith.constant 0.000000e+00 : f32
    %106 = vector.broadcast %cst_51 : f32 to vector<3x9x128xf32>
    %107 = arith.maximumf %105, %106 : vector<3x9x128xf32>
    %c0_52 = arith.constant 0 : index
    %c0_53 = arith.constant 0 : index
    %c0_54 = arith.constant 0 : index
    %108 = vector.load %arg5[%c0_52, %c0_53, %c0_54] : memref<3x9x128xf32, #tpu.memory_space<vmem>>, vector<3x9x128xf32>
    tpu.vector_store %arg5[%c0_52, %c0_53, %c0_54], %107 {strides = array<i32>} : memref<3x9x128xf32, #tpu.memory_space<vmem>>, vector<3x9x128xf32>,
    return
  }
  func.func @transform_0(%arg0: i32) -> (i32, i32, i32) {
    %c0_i32 = arith.constant 0 : i32
    %c0_i32_0 = arith.constant 0 : i32
    %c0_i32_1 = arith.constant 0 : i32
    return %c0_i32, %c0_i32_0, %arg0 : i32, i32, i32
  }
  func.func @transform_1(%arg0: i32) -> (i32, i32, i32) {
    %c0_i32 = arith.constant 0 : i32
    %c0_i32_0 = arith.constant 0 : i32
    %c0_i32_1 = arith.constant 0 : i32
    %c0_i32_2 = arith.constant 0 : i32
    return %c0_i32, %c0_i32_0, %c0_i32_1 : i32, i32, i32
  }
  func.func @transform_2(%arg0: i32) -> (i32, i32, i32) {
    %c0_i32 = arith.constant 0 : i32
    %c0_i32_0 = arith.constant 0 : i32
    %c0_i32_1 = arith.constant 0 : i32
    %c0_i32_2 = arith.constant 0 : i32
    return %c0_i32, %c0_i32_0, %c0_i32_1 : i32, i32, i32
  }
  func.func @transform_3(%arg0: i32) -> (i32, i32, i32) {
    %c0_i32 = arith.constant 0 : i32
    %c0_i32_0 = arith.constant 0 : i32
    %c0_i32_1 = arith.constant 0 : i32
    %c0_i32_2 = arith.constant 0 : i32
    return %c0_i32, %c0_i32_0, %c0_i32_1 : i32, i32, i32
  }
  func.func @transform_4(%arg0: i32) -> (i32, i32, i32) {
    %c0_i32 = arith.constant 0 : i32
    %c0_i32_0 = arith.constant 0 : i32
    %c0_i32_1 = arith.constant 0 : i32
    return %c0_i32, %c0_i32_0, %arg0 : i32, i32, i32
  }
}

module attributes {stable_mosaic.version = 11 : i64} {
  func.func @matmul_bn_act_kernel(%arg0: i32, %arg1: memref<128x24xbf16, #tpu.memory_space<vmem>>, %arg2: memref<24x128xbf16, #tpu.memory_space<vmem>>, %arg3: memref<1x128xf32, #tpu.memory_space<vmem>>, %arg4: memref<1x128xf32, #tpu.memory_space<vmem>>, %arg5: memref<128x128xf32, #tpu.memory_space<vmem>>) attributes {dimension_semantics = [#tpu.dimension_semantics<parallel>], iteration_bounds = array<i64: 1>, scalar_prefetch = 0 : i64, scratch_operands = 0 : i64, tpu.core_type = #tpu.core_type<tc>, window_params = [{transform_indices = @transform_0, window_bounds = array<i64: 128, 24>}, {pipeline_mode = #tpu.pipeline_mode<synchronous>, transform_indices = @transform_1, window_bounds = array<i64: 24, 128>}, {pipeline_mode = #tpu.pipeline_mode<synchronous>, transform_indices = @transform_2, window_bounds = array<i64: 1, 128>}, {pipeline_mode = #tpu.pipeline_mode<synchronous>, transform_indices = @transform_3, window_bounds = array<i64: 1, 128>}, {transform_indices = @transform_4, window_bounds = array<i64: 128, 128>}]} {
    %c0 = arith.constant 0 : index
    %c0_0 = arith.constant 0 : index
    %0 = vector.load %arg1[%c0, %c0_0] : memref<128x24xbf16, #tpu.memory_space<vmem>>, vector<128x24xbf16>
    %c0_1 = arith.constant 0 : index
    %c0_2 = arith.constant 0 : index
    %1 = vector.load %arg2[%c0_1, %c0_2] : memref<24x128xbf16, #tpu.memory_space<vmem>>, vector<24x128xbf16>
    %cst = arith.constant dense<0.000000e+00> : vector<128x128xf32>
    %2 = tpu.matmul %0, %1, %cst {dimension_numbers = #tpu.dot_dimension_numbers<[1], [0], [0], [1], [0, 0, 1, 1], [], []>} : vector<128x24xbf16>, vector<24x128xbf16>, vector<128x128xf32> -> vector<128x128xf32>
    %c0_3 = arith.constant 0 : index
    %c0_4 = arith.constant 0 : index
    %3 = vector.load %arg3[%c0_3, %c0_4] : memref<1x128xf32, #tpu.memory_space<vmem>>, vector<1x128xf32>
    %4 = vector.broadcast %3 : vector<1x128xf32> to vector<128x128xf32>
    %5 = arith.mulf %2, %4 : vector<128x128xf32>
    %c0_5 = arith.constant 0 : index
    %c0_6 = arith.constant 0 : index
    %6 = vector.load %arg4[%c0_5, %c0_6] : memref<1x128xf32, #tpu.memory_space<vmem>>, vector<1x128xf32>
    %7 = vector.broadcast %6 : vector<1x128xf32> to vector<128x128xf32>
    %8 = arith.addf %5, %7 : vector<128x128xf32>
    %cst_7 = arith.constant 0.000000e+00 : f32
    %9 = vector.broadcast %cst_7 : f32 to vector<128x128xf32>
    %10 = arith.maximumf %8, %9 : vector<128x128xf32>
    %c0_8 = arith.constant 0 : index
    %c0_9 = arith.constant 0 : index
    %11 = vector.load %arg5[%c0_8, %c0_9] : memref<128x128xf32, #tpu.memory_space<vmem>>, vector<128x128xf32>
    tpu.vector_store %arg5[%c0_8, %c0_9], %10 {strides = array<i32>} : memref<128x128xf32, #tpu.memory_space<vmem>>, vector<128x128xf32>,
    return
  }
  func.func @transform_0(%arg0: i32) -> (i32, i32) {
    %c0_i32 = arith.constant 0 : i32
    %c0_i32_0 = arith.constant 0 : i32
    return %arg0, %c0_i32 : i32, i32
  }
  func.func @transform_1(%arg0: i32) -> (i32, i32) {
    %c0_i32 = arith.constant 0 : i32
    %c0_i32_0 = arith.constant 0 : i32
    %c0_i32_1 = arith.constant 0 : i32
    return %c0_i32, %c0_i32_0 : i32, i32
  }
  func.func @transform_2(%arg0: i32) -> (i32, i32) {
    %c0_i32 = arith.constant 0 : i32
    %c0_i32_0 = arith.constant 0 : i32
    %c0_i32_1 = arith.constant 0 : i32
    return %c0_i32, %c0_i32_0 : i32, i32
  }
  func.func @transform_3(%arg0: i32) -> (i32, i32) {
    %c0_i32 = arith.constant 0 : i32
    %c0_i32_0 = arith.constant 0 : i32
    %c0_i32_1 = arith.constant 0 : i32
    return %c0_i32, %c0_i32_0 : i32, i32
  }
  func.func @transform_4(%arg0: i32) -> (i32, i32) {
    %c0_i32 = arith.constant 0 : i32
    %c0_i32_0 = arith.constant 0 : i32
    return %arg0, %c0_i32 : i32, i32
  }
}

module attributes {stable_mosaic.version = 11 : i64} {
  func.func @matmul_bn_act_kernel(%arg0: i32, %arg1: memref<8x24xbf16, #tpu.memory_space<vmem>>, %arg2: memref<24x128xbf16, #tpu.memory_space<vmem>>, %arg3: memref<1x128xf32, #tpu.memory_space<vmem>>, %arg4: memref<1x128xf32, #tpu.memory_space<vmem>>, %arg5: memref<8x128xf32, #tpu.memory_space<vmem>>) attributes {dimension_semantics = [#tpu.dimension_semantics<parallel>], iteration_bounds = array<i64: 1>, scalar_prefetch = 0 : i64, scratch_operands = 0 : i64, tpu.core_type = #tpu.core_type<tc>, window_params = [{transform_indices = @transform_0, window_bounds = array<i64: 8, 24>}, {pipeline_mode = #tpu.pipeline_mode<synchronous>, transform_indices = @transform_1, window_bounds = array<i64: 24, 128>}, {pipeline_mode = #tpu.pipeline_mode<synchronous>, transform_indices = @transform_2, window_bounds = array<i64: 1, 128>}, {pipeline_mode = #tpu.pipeline_mode<synchronous>, transform_indices = @transform_3, window_bounds = array<i64: 1, 128>}, {transform_indices = @transform_4, window_bounds = array<i64: 8, 128>}]} {
    %c0 = arith.constant 0 : index
    %c0_0 = arith.constant 0 : index
    %0 = vector.load %arg1[%c0, %c0_0] : memref<8x24xbf16, #tpu.memory_space<vmem>>, vector<8x24xbf16>
    %c0_1 = arith.constant 0 : index
    %c0_2 = arith.constant 0 : index
    %1 = vector.load %arg2[%c0_1, %c0_2] : memref<24x128xbf16, #tpu.memory_space<vmem>>, vector<24x128xbf16>
    %cst = arith.constant dense<0.000000e+00> : vector<8x128xf32>
    %2 = tpu.matmul %0, %1, %cst {dimension_numbers = #tpu.dot_dimension_numbers<[1], [0], [0], [1], [0, 0, 1, 1], [], []>} : vector<8x24xbf16>, vector<24x128xbf16>, vector<8x128xf32> -> vector<8x128xf32>
    %c0_3 = arith.constant 0 : index
    %c0_4 = arith.constant 0 : index
    %3 = vector.load %arg3[%c0_3, %c0_4] : memref<1x128xf32, #tpu.memory_space<vmem>>, vector<1x128xf32>
    %4 = vector.broadcast %3 : vector<1x128xf32> to vector<8x128xf32>
    %5 = arith.mulf %2, %4 : vector<8x128xf32>
    %c0_5 = arith.constant 0 : index
    %c0_6 = arith.constant 0 : index
    %6 = vector.load %arg4[%c0_5, %c0_6] : memref<1x128xf32, #tpu.memory_space<vmem>>, vector<1x128xf32>
    %7 = vector.broadcast %6 : vector<1x128xf32> to vector<8x128xf32>
    %8 = arith.addf %5, %7 : vector<8x128xf32>
    %c0_7 = arith.constant 0 : index
    %c0_8 = arith.constant 0 : index
    %9 = vector.load %arg5[%c0_7, %c0_8] : memref<8x128xf32, #tpu.memory_space<vmem>>, vector<8x128xf32>
    tpu.vector_store %arg5[%c0_7, %c0_8], %8 {strides = array<i32>} : memref<8x128xf32, #tpu.memory_space<vmem>>, vector<8x128xf32>,
    return
  }
  func.func @transform_0(%arg0: i32) -> (i32, i32) {
    %c0_i32 = arith.constant 0 : i32
    %c0_i32_0 = arith.constant 0 : i32
    return %arg0, %c0_i32 : i32, i32
  }
  func.func @transform_1(%arg0: i32) -> (i32, i32) {
    %c0_i32 = arith.constant 0 : i32
    %c0_i32_0 = arith.constant 0 : i32
    %c0_i32_1 = arith.constant 0 : i32
    return %c0_i32, %c0_i32_0 : i32, i32
  }
  func.func @transform_2(%arg0: i32) -> (i32, i32) {
    %c0_i32 = arith.constant 0 : i32
    %c0_i32_0 = arith.constant 0 : i32
    %c0_i32_1 = arith.constant 0 : i32
    return %c0_i32, %c0_i32_0 : i32, i32
  }
  func.func @transform_3(%arg0: i32) -> (i32, i32) {
    %c0_i32 = arith.constant 0 : i32
    %c0_i32_0 = arith.constant 0 : i32
    %c0_i32_1 = arith.constant 0 : i32
    return %c0_i32, %c0_i32_0 : i32, i32
  }
  func.func @transform_4(%arg0: i32) -> (i32, i32) {
    %c0_i32 = arith.constant 0 : i32
    %c0_i32_0 = arith.constant 0 : i32
    return %arg0, %c0_i32 : i32, i32
  }
}

module attributes {stable_mosaic.version = 11 : i64} {
  func.func @matmul_bn_act_res_kernel(%arg0: i32, %arg1: memref<128x16xbf16, #tpu.memory_space<vmem>>, %arg2: memref<16x128xbf16, #tpu.memory_space<vmem>>, %arg3: memref<1x128xf32, #tpu.memory_space<vmem>>, %arg4: memref<1x128xf32, #tpu.memory_space<vmem>>, %arg5: memref<128x128xf32, #tpu.memory_space<vmem>>, %arg6: memref<128x128xf32, #tpu.memory_space<vmem>>) attributes {dimension_semantics = [#tpu.dimension_semantics<parallel>], iteration_bounds = array<i64: 1>, scalar_prefetch = 0 : i64, scratch_operands = 0 : i64, tpu.core_type = #tpu.core_type<tc>, window_params = [{transform_indices = @transform_0, window_bounds = array<i64: 128, 16>}, {pipeline_mode = #tpu.pipeline_mode<synchronous>, transform_indices = @transform_1, window_bounds = array<i64: 16, 128>}, {pipeline_mode = #tpu.pipeline_mode<synchronous>, transform_indices = @transform_2, window_bounds = array<i64: 1, 128>}, {pipeline_mode = #tpu.pipeline_mode<synchronous>, transform_indices = @transform_3, window_bounds = array<i64: 1, 128>}, {transform_indices = @transform_4, window_bounds = array<i64: 128, 128>}, {transform_indices = @transform_5, window_bounds = array<i64: 128, 128>}]} {
    %c0 = arith.constant 0 : index
    %c0_0 = arith.constant 0 : index
    %0 = vector.load %arg1[%c0, %c0_0] : memref<128x16xbf16, #tpu.memory_space<vmem>>, vector<128x16xbf16>
    %c0_1 = arith.constant 0 : index
    %c0_2 = arith.constant 0 : index
    %1 = vector.load %arg2[%c0_1, %c0_2] : memref<16x128xbf16, #tpu.memory_space<vmem>>, vector<16x128xbf16>
    %cst = arith.constant dense<0.000000e+00> : vector<128x128xf32>
    %2 = tpu.matmul %0, %1, %cst {dimension_numbers = #tpu.dot_dimension_numbers<[1], [0], [0], [1], [0, 0, 1, 1], [], []>} : vector<128x16xbf16>, vector<16x128xbf16>, vector<128x128xf32> -> vector<128x128xf32>
    %c0_3 = arith.constant 0 : index
    %c0_4 = arith.constant 0 : index
    %3 = vector.load %arg3[%c0_3, %c0_4] : memref<1x128xf32, #tpu.memory_space<vmem>>, vector<1x128xf32>
    %4 = vector.broadcast %3 : vector<1x128xf32> to vector<128x128xf32>
    %5 = arith.mulf %2, %4 : vector<128x128xf32>
    %c0_5 = arith.constant 0 : index
    %c0_6 = arith.constant 0 : index
    %6 = vector.load %arg4[%c0_5, %c0_6] : memref<1x128xf32, #tpu.memory_space<vmem>>, vector<1x128xf32>
    %7 = vector.broadcast %6 : vector<1x128xf32> to vector<128x128xf32>
    %8 = arith.addf %5, %7 : vector<128x128xf32>
    %c0_7 = arith.constant 0 : index
    %c0_8 = arith.constant 0 : index
    %9 = vector.load %arg5[%c0_7, %c0_8] : memref<128x128xf32, #tpu.memory_space<vmem>>, vector<128x128xf32>
    %10 = arith.addf %8, %9 : vector<128x128xf32>
    %c0_9 = arith.constant 0 : index
    %c0_10 = arith.constant 0 : index
    %11 = vector.load %arg6[%c0_9, %c0_10] : memref<128x128xf32, #tpu.memory_space<vmem>>, vector<128x128xf32>
    tpu.vector_store %arg6[%c0_9, %c0_10], %10 {strides = array<i32>} : memref<128x128xf32, #tpu.memory_space<vmem>>, vector<128x128xf32>,
    return
  }
  func.func @transform_0(%arg0: i32) -> (i32, i32) {
    %c0_i32 = arith.constant 0 : i32
    %c0_i32_0 = arith.constant 0 : i32
    return %arg0, %c0_i32 : i32, i32
  }
  func.func @transform_1(%arg0: i32) -> (i32, i32) {
    %c0_i32 = arith.constant 0 : i32
    %c0_i32_0 = arith.constant 0 : i32
    %c0_i32_1 = arith.constant 0 : i32
    return %c0_i32, %c0_i32_0 : i32, i32
  }
  func.func @transform_2(%arg0: i32) -> (i32, i32) {
    %c0_i32 = arith.constant 0 : i32
    %c0_i32_0 = arith.constant 0 : i32
    %c0_i32_1 = arith.constant 0 : i32
    return %c0_i32, %c0_i32_0 : i32, i32
  }
  func.func @transform_3(%arg0: i32) -> (i32, i32) {
    %c0_i32 = arith.constant 0 : i32
    %c0_i32_0 = arith.constant 0 : i32
    %c0_i32_1 = arith.constant 0 : i32
    return %c0_i32, %c0_i32_0 : i32, i32
  }
  func.func @transform_4(%arg0: i32) -> (i32, i32) {
    %c0_i32 = arith.constant 0 : i32
    %c0_i32_0 = arith.constant 0 : i32
    return %arg0, %c0_i32 : i32, i32
  }
  func.func @transform_5(%arg0: i32) -> (i32, i32) {
    %c0_i32 = arith.constant 0 : i32
    %c0_i32_0 = arith.constant 0 : i32
    return %arg0, %c0_i32 : i32, i32
  }
}

</mosaic_0001>

<llo_original>
// kernel: resnet_ghost_forward.19
$region0: #{resnet_ghost_forward.19}
  #allocation0 [shape = 'u32[]', space=smem, size = 0x4, offset = 0x4, fixed_abs, tag = 'smem constant byte address 0x4 - core index']
  #allocation1 [shape = 'u32[72,128]{1,0:T(1,128)}', space=vmem, size = 0x9000, scoped, tag = 'internal scratch']
  %s0 = inlined_call_operand.vmem [shape: bf16[512,16], index: 0, kind: input, shape index: {}]
  %s1 = inlined_call_operand.vmem [shape: bf16[16,128], index: 1, kind: input, shape index: {}]
  %s2 = inlined_call_operand.vmem [shape: f32[1,128], index: 2, kind: input, shape index: {}]
  %s3 = inlined_call_operand.vmem [shape: f32[1,128], index: 3, kind: input, shape index: {}]
  %s4 = inlined_call_operand.vmem [shape: f32[512,128], index: 4, kind: output, shape index: {}]
  %s5 = sld [smem:[#allocation0]]
  $region49: #{resnet_ghost_forward.19} parent=0
    _
  %s7 = ssub.s32 1, %s5
  %s8 = scalar_select 0, %s7, %s5
  loop: start=0, step=1, limit=4
  $region2: #{resnet_ghost_forward.19} parent=0 // loop_pre_header
    _
  $region3: #{resnet_ghost_forward.19} parent=0 // loop_header
    %s10 = sphi 0, %s14
    %p11 = scmp.ge.s32.totalorder %s10, 4
    %s20 = sphi 0, %s22
    %s23 = sphi 0, %s20
    %s24 = sphi 0, %s23
    %s40 = sphi 0, %s24
    %s44 = sphi 0, %s44
    %s46 = sphi 0, %s44
    %s47 = sphi 0, %s46
    %s61 = sphi 0, %s47
    %s65 = sphi 0, %s65
    %s67 = sphi 0, %s65
    %s68 = sphi 0, %s67
    %s82 = sphi 0, %s68
    %s86 = sphi 0, %s86
    %s88 = sphi 0, %s86
    %s89 = sphi 0, %s88
    %s103 = sphi 0, %s89
    %s109 = sphi 0, %s111
    %s112 = sphi 0, %s109
    %s113 = sphi 0, %s112
    %s129 = sphi 0, %s113
  $region4: #{resnet_ghost_forward.19} parent=0 // loop_header_branch
    %13 = sbr.rel (%p11) target = $region8
  $region5: #{resnet_ghost_forward.19} parent=0 // loop_body
    %s15 = ssub.s32 %s10, 1
    %s16 = ssub.s32 %s10, 2
    %s17 = sadd.s32 %s10, 1
    %s18 = ssub.s32 %s10, %s17
    %p19 = scmp.eq.s32.totalorder %s18, 0
    %s21 = sadd.s32 %s20, 1
    %s22 = scalar_select %p19, %s20, %s21
    %p25 = pneg %p19
    %p26 = scmp.eq.s32.totalorder %s10, 1
    %p27 = por %p25, %p26
    %p28 = scmp.ne.s32.totalorder %s20, %s23
    %p29 = scmp.eq.s32.totalorder %s10, 0
    %p30 = por %p28, %p29
    %p31 = scmp.ne.s32.totalorder %s20, %s23
    %p32 = scmp.eq.s32.totalorder %s15, 1
    %p33 = por %p31, %p32
    %p34 = scmp.ne.s32.totalorder %s23, %s24
    %p35 = scmp.eq.s32.totalorder %s15, 0
    %p36 = por %p34, %p35
    %p37 = scmp.ne.s32.totalorder %s23, %s24
    %p38 = scmp.eq.s32.totalorder %s16, 1
    %p39 = por %p37, %p38
    %p41 = scmp.ne.s32.totalorder %s24, %s40
    %p42 = scmp.eq.s32.totalorder %s16, 0
    %p43 = por %p41, %p42
    %s45 = sadd.s32 %s44, 1
    %p48 = scmp.eq.s32.totalorder %s10, 1
    %p49 = scmp.ne.s32.totalorder %s44, %s46
    %p50 = scmp.eq.s32.totalorder %s10, 0
    %p51 = por %p49, %p50
    %p52 = scmp.ne.s32.totalorder %s44, %s46
    %p53 = scmp.eq.s32.totalorder %s15, 1
    %p54 = por %p52, %p53
    %p55 = scmp.ne.s32.totalorder %s46, %s47
    %p56 = scmp.eq.s32.totalorder %s15, 0
    %p57 = por %p55, %p56
    %p58 = scmp.ne.s32.totalorder %s46, %s47
    %p59 = scmp.eq.s32.totalorder %s16, 1
    %p60 = por %p58, %p59
    %p62 = scmp.ne.s32.totalorder %s47, %s61
    %p63 = scmp.eq.s32.totalorder %s16, 0
    %p64 = por %p62, %p63
    %s66 = sadd.s32 %s65, 1
    %p69 = scmp.eq.s32.totalorder %s10, 1
    %p70 = scmp.ne.s32.totalorder %s65, %s67
    %p71 = scmp.eq.s32.totalorder %s10, 0
    %p72 = por %p70, %p71
    %p73 = scmp.ne.s32.totalorder %s65, %s67
    %p74 = scmp.eq.s32.totalorder %s15, 1
    %p75 = por %p73, %p74
    %p76 = scmp.ne.s32.totalorder %s67, %s68
    %p77 = scmp.eq.s32.totalorder %s15, 0
    %p78 = por %p76, %p77
    %p79 = scmp.ne.s32.totalorder %s67, %s68
    %p80 = scmp.eq.s32.totalorder %s16, 1
    %p81 = por %p79, %p80
    %p83 = scmp.ne.s32.totalorder %s68, %s82
    %p84 = scmp.eq.s32.totalorder %s16, 0
    %p85 = por %p83, %p84
    %s87 = sadd.s32 %s86, 1
    %p90 = scmp.eq.s32.totalorder %s10, 1
    %p91 = scmp.ne.s32.totalorder %s86, %s88
    %p92 = scmp.eq.s32.totalorder %s10, 0
    %p93 = por %p91, %p92
    %p94 = scmp.ne.s32.totalorder %s86, %s88
    %p95 = scmp.eq.s32.totalorder %s15, 1
    %p96 = por %p94, %p95
    %p97 = scmp.ne.s32.totalorder %s88, %s89
    %p98 = scmp.eq.s32.totalorder %s15, 0
    %p99 = por %p97, %p98
    %p100 = scmp.ne.s32.totalorder %s88, %s89
    %p101 = scmp.eq.s32.totalorder %s16, 1
    %p102 = por %p100, %p101
    %p104 = scmp.ne.s32.totalorder %s89, %s103
    %p105 = scmp.eq.s32.totalorder %s16, 0
    %p106 = por %p104, %p105
    %s107 = ssub.s32 %s10, %s17
    %p108 = scmp.eq.s32.totalorder %s107, 0
    %s110 = sadd.s32 %s109, 1
    %s111 = scalar_select %p108, %s109, %s110
    %p114 = pneg %p108
    %p115 = scmp.eq.s32.totalorder %s10, 1
    %p116 = por %p114, %p115
    %p117 = scmp.ne.s32.totalorder %s109, %s112
    %p118 = scmp.eq.s32.totalorder %s10, 0
    %p119 = por %p117, %p118
    %p120 = scmp.ne.s32.totalorder %s109, %s112
    %p121 = scmp.eq.s32.totalorder %s15, 1
    %p122 = por %p120, %p121
    %p123 = scmp.ne.s32.totalorder %s112, %s113
    %p124 = scmp.eq.s32.totalorder %s15, 0
    %p125 = por %p123, %p124
    %p126 = scmp.ne.s32.totalorder %s112, %s113
    %p127 = scmp.eq.s32.totalorder %s16, 1
    %p128 = por %p126, %p127
    %p130 = scmp.ne.s32.totalorder %s113, %s129
    %p131 = scmp.eq.s32.totalorder %s16, 0
    %p132 = por %p130, %p131
    %p133 = scmp.le.s32.totalorder 1, %s10
    %p134 = scmp.lt.s32.totalorder %s10, 3
    %p135 = pnand %p133, %p134
    %p136 = pneg %p135
    // Predicated region
    $region9: #{resnet_ghost_forward.19} parent=5 // pred_check
      _
    $region10: #{resnet_ghost_forward.19} parent=5 // pred_check_branch
      %138 = sbr.rel (%p135) target = $region12
    $region11: #{resnet_ghost_forward.19} parent=5 // pred_region
      %s139 = ssub.s32 %s10, 1
      // Predicated region
      $region13: #{resnet_ghost_forward.19} parent=11 // pred_check
        %p140 = pneg %p57
      $region14: #{resnet_ghost_forward.19} parent=11 // pred_check_branch
        %142 = sbr.rel (%p140) target = $region16
      $region15: #{resnet_ghost_forward.19} parent=11 // pred_region
        _
      $region16: #{resnet_ghost_forward.19} parent=11 // pred_fallthru
        _
      // Predicated region
      $region17: #{resnet_ghost_forward.19} parent=11 // pred_check
        %p143 = pneg %p78
      $region18: #{resnet_ghost_forward.19} parent=11 // pred_check_branch
        %145 = sbr.rel (%p143) target = $region20
      $region19: #{resnet_ghost_forward.19} parent=11 // pred_region
        _
      $region20: #{resnet_ghost_forward.19} parent=11 // pred_fallthru
        _
      // Predicated region
      $region21: #{resnet_ghost_forward.19} parent=11 // pred_check
        %p146 = pneg %p99
      $region22: #{resnet_ghost_forward.19} parent=11 // pred_check_branch
        %148 = sbr.rel (%p146) target = $region24
      $region23: #{resnet_ghost_forward.19} parent=11 // pred_region
        _
      $region24: #{resnet_ghost_forward.19} parent=11 // pred_fallthru
        _
    $region12: #{resnet_ghost_forward.19} parent=5 // pred_fallthru
      _
    %p149 = scmp.lt.s32.totalorder %s10, 2
    // Predicated region
    $region25: #{resnet_ghost_forward.19} parent=5 // pred_check
      %p150 = pneg %p149
    $region26: #{resnet_ghost_forward.19} parent=5 // pred_check_branch
      %152 = sbr.rel (%p150) target = $region28
    $region27: #{resnet_ghost_forward.19} parent=5 // pred_region
      // Predicated region
      $region29: #{resnet_ghost_forward.19} parent=27 // pred_check
        %p153 = pneg %p30
      $region30: #{resnet_ghost_forward.19} parent=27 // pred_check_branch
        %155 = sbr.rel (%p153) target = $region32
      $region31: #{resnet_ghost_forward.19} parent=27 // pred_region
        %s156 = smul.u32 32, %s10
        %p157 = scmp.lt.s32.totalorder %s156, 63
        %s158 = scalar_select %p157, %s156, 63
        %s159 = smul.addr %s158, 4
        %s160 = scalar_lea.vmem %s0, %s159
        %s161 = smul.u32 32, %s10
      $region32: #{resnet_ghost_forward.19} parent=27 // pred_fallthru
        _
    $region28: #{resnet_ghost_forward.19} parent=5 // pred_fallthru
      _
    %p162 = scmp.le.s32.totalorder 1, %s10
    %p163 = scmp.lt.s32.totalorder %s10, 3
    %p164 = pnand %p162, %p163
    %p165 = pneg %p164
    // Predicated region
    $region33: #{resnet_ghost_forward.19} parent=5 // pred_check
      _
    $region34: #{resnet_ghost_forward.19} parent=5 // pred_check_branch
      %167 = sbr.rel (%p164) target = $region36
    $region35: #{resnet_ghost_forward.19} parent=5 // pred_region
      %s168 = ssub.s32 %s10, 1
      %s169 = smul.u32 32, %s15
      %p170 = scmp.lt.s32.totalorder %s169, 63
      %s171 = scalar_select %p170, %s169, 63
      %s172 = smul.addr %s171, 4
      %s173 = scalar_lea.vmem %s0, %s172
      %p174 = pneg %p36
      %p175 = pneg %p33
      %p176 = pneg %p57
      %p177 = pneg %p54
      %p178 = pneg %p78
      %p179 = pneg %p75
      %p180 = pneg %p99
      %p181 = pneg %p96
      %p182 = pneg %p125
      %p183 = pneg %p122
      %s184 = smul.u32 32, %s15
      %p185 = scmp.lt.s32.totalorder %s184, 63
      %s186 = scalar_select %p185, %s184, 63
      %s187 = smul.addr %s186, 8
      %s188 = scalar_lea.vmem %s4, %s187
      %s189 = smul.u32 32, %s15
      %p190 = scmp.lt.s32.totalorder %s189, 63
      %s191 = scalar_select %p190, %s189, 63
      %s192 = smul.addr %s191, 4
      %s193 = scalar_lea.vmem %s0, %s192
      %s194 = smul.u32 32, %s15
      %s195 = smul.u32 32, %s15
      %p196 = scmp.lt.s32.totalorder %s195, 63
      %s197 = scalar_select %p196, %s195, 63
      %s198 = smul.addr %s197, 8
      %s199 = scalar_lea.vmem %s4, %s198
      %s200 = smul.u32 32, %s15
      %v202 = vld [vmem:[%s193] sm:$0xf]
      %v203 = vld [vmem:[%s193 + $0x4] sm:$0xf]
      %v204 = vld [vmem:[%s193 + $0x8] sm:$0xf]
      %v205 = vld [vmem:[%s193 + $0xc] sm:$0xf]
      %v206 = vld [vmem:[%s193 + $0x10] sm:$0xf]
      %v207 = vld [vmem:[%s193 + $0x14] sm:$0xf]
      %v208 = vld [vmem:[%s193 + $0x18] sm:$0xf]
      %v209 = vld [vmem:[%s193 + $0x1c] sm:$0xf]
      %v210 = vld [vmem:[%s193 + $0x20] sm:$0xf]
      %v211 = vld [vmem:[%s193 + $0x24] sm:$0xf]
      %v212 = vld [vmem:[%s193 + $0x28] sm:$0xf]
      %v213 = vld [vmem:[%s193 + $0x2c] sm:$0xf]
      %v214 = vld [vmem:[%s193 + $0x30] sm:$0xf]
      %v215 = vld [vmem:[%s193 + $0x34] sm:$0xf]
      %v216 = vld [vmem:[%s193 + $0x38] sm:$0xf]
      %v217 = vld [vmem:[%s193 + $0x3c] sm:$0xf]
      %v218 = vld [vmem:[%s193 + $0x40] sm:$0xf]
      %v219 = vld [vmem:[%s193 + $0x44] sm:$0xf]
      %v220 = vld [vmem:[%s193 + $0x48] sm:$0xf]
      %v221 = vld [vmem:[%s193 + $0x4c] sm:$0xf]
      %v222 = vld [vmem:[%s193 + $0x50] sm:$0xf]
      %v223 = vld [vmem:[%s193 + $0x54] sm:$0xf]
      %v224 = vld [vmem:[%s193 + $0x58] sm:$0xf]
      %v225 = vld [vmem:[%s193 + $0x5c] sm:$0xf]
      %v226 = vld [vmem:[%s193 + $0x60] sm:$0xf]
      %v227 = vld [vmem:[%s193 + $0x64] sm:$0xf]
      %v228 = vld [vmem:[%s193 + $0x68] sm:$0xf]
      %v229 = vld [vmem:[%s193 + $0x6c] sm:$0xf]
      %v230 = vld [vmem:[%s193 + $0x70] sm:$0xf]
      %v231 = vld [vmem:[%s193 + $0x74] sm:$0xf]
      %v232 = vld [vmem:[%s193 + $0x78] sm:$0xf]
      %v233 = vld [vmem:[%s193 + $0x7c] sm:$0xf]
      %v234 = vld [vmem:[%s1] sm:$0xf]
      %v235 = vld [vmem:[%s1 + $0x4] sm:$0xf]
      %v268 = vunpack.c.l.b16 %v202
      %v269 = vunpack.c.l.b16 %v203
      %v270 = vunpack.c.l.b16 %v204
      %v271 = vunpack.c.l.b16 %v205
      %v272 = vunpack.c.l.b16 %v206
      %v273 = vunpack.c.l.b16 %v207
      %v274 = vunpack.c.l.b16 %v208
      %v275 = vunpack.c.l.b16 %v209
      %v276 = vunpack.c.l.b16 %v210
      %v277 = vunpack.c.l.b16 %v211
      %v278 = vunpack.c.l.b16 %v212
      %v279 = vunpack.c.l.b16 %v213
      %v280 = vunpack.c.l.b16 %v214
      %v281 = vunpack.c.l.b16 %v215
      %v282 = vunpack.c.l.b16 %v216
      %v283 = vunpack.c.l.b16 %v217
      %v284 = vunpack.c.l.b16 %v218
      %v285 = vunpack.c.l.b16 %v219
      %v286 = vunpack.c.l.b16 %v220
      %v287 = vunpack.c.l.b16 %v221
      %v288 = vunpack.c.l.b16 %v222
      %v289 = vunpack.c.l.b16 %v223
      %v290 = vunpack.c.l.b16 %v224
      %v291 = vunpack.c.l.b16 %v225
      %v292 = vunpack.c.l.b16 %v226
      %v293 = vunpack.c.l.b16 %v227
      %v294 = vunpack.c.l.b16 %v228
      %v295 = vunpack.c.l.b16 %v229
      %v296 = vunpack.c.l.b16 %v230
      %v297 = vunpack.c.l.b16 %v231
      %v298 = vunpack.c.l.b16 %v232
      %v299 = vunpack.c.l.b16 %v233
      %v300 = vpack.c.b16 %v269, %v268
      %v301 = vpack.c.b16 %v271, %v270
      %v302 = vpack.c.b16 %v273, %v272
      %v303 = vpack.c.b16 %v275, %v274
      %v304 = vpack.c.b16 %v277, %v276
      %v305 = vpack.c.b16 %v279, %v278
      %v306 = vpack.c.b16 %v281, %v280
      %v307 = vpack.c.b16 %v283, %v282
      %v308 = vpack.c.b16 %v285, %v284
      %v309 = vpack.c.b16 %v287, %v286
      %v310 = vpack.c.b16 %v289, %v288
      %v311 = vpack.c.b16 %v291, %v290
      %v312 = vpack.c.b16 %v293, %v292
      %v313 = vpack.c.b16 %v295, %v294
      %v314 = vpack.c.b16 %v297, %v296
      %v315 = vpack.c.b16 %v299, %v298
      %v318 = vunpack.c.l.b16 %v234
      %v319 = vunpack.c.l.b16 %v235
      %v320 = vpack.c.b16 %v319, %v318
      %vm322 = vcmask 130048
      %v324 = vsel %vm322, %v300, 0
      %v327 = vsel %vm322, %v301, 0
      %v330 = vsel %vm322, %v302, 0
      %v333 = vsel %vm322, %v303, 0
      %v336 = vsel %vm322, %v304, 0
      %v339 = vsel %vm322, %v305, 0
      %v342 = vsel %vm322, %v306, 0
      %v345 = vsel %vm322, %v307, 0
      %v348 = vsel %vm322, %v308, 0
      %v351 = vsel %vm322, %v309, 0
      %v354 = vsel %vm322, %v310, 0
      %v357 = vsel %vm322, %v311, 0
      %v360 = vsel %vm322, %v312, 0
      %v363 = vsel %vm322, %v313, 0
      %v366 = vsel %vm322, %v314, 0
      %v369 = vsel %vm322, %v315, 0
      %371 = vmatpush.bf16.msra.mxu0 0
      %372 = vmatpush.bf16.msra.mxu0 0
      %373 = vmatpush.bf16.msra.mxu0 0
      %374 = vmatpush.bf16.msra.mxu0 0
      %375 = vmatpush.bf16.msra.mxu0 0
      %376 = vmatpush.bf16.msra.mxu0 0
      %377 = vmatpush.bf16.msra.mxu0 0
      %378 = vmatpush.bf16.msra.mxu0 %v320
      %379 = vmatmul.bf16.gmra.mxu0 %v324
      %v380 = vpop.f32.mrf.mxu0
      %v381 = vadd.f32 0.0, %v380
      %v382 = vpop.f32.mrf.mxu0
      %v383 = vadd.f32 0.0, %v382
      %384 = vmatmul.bf16.gmra.mxu0 %v327
      %v385 = vpop.f32.mrf.mxu0
      %v386 = vadd.f32 0.0, %v385
      %v387 = vpop.f32.mrf.mxu0
      %v388 = vadd.f32 0.0, %v387
      %389 = vmatmul.bf16.gmra.mxu0 %v330
      %v390 = vpop.f32.mrf.mxu0
      %v391 = vadd.f32 0.0, %v390
      %v392 = vpop.f32.mrf.mxu0
      %v393 = vadd.f32 0.0, %v392
      %394 = vmatmul.bf16.gmra.mxu0 %v333
      %v395 = vpop.f32.mrf.mxu0
      %v396 = vadd.f32 0.0, %v395
      %v397 = vpop.f32.mrf.mxu0
      %v398 = vadd.f32 0.0, %v397
      %399 = vmatmul.bf16.gmra.mxu0 %v336
      %v400 = vpop.f32.mrf.mxu0
      %v401 = vadd.f32 0.0, %v400
      %v402 = vpop.f32.mrf.mxu0
      %v403 = vadd.f32 0.0, %v402
      %404 = vmatmul.bf16.gmra.mxu0 %v339
      %v405 = vpop.f32.mrf.mxu0
      %v406 = vadd.f32 0.0, %v405
      %v407 = vpop.f32.mrf.mxu0
      %v408 = vadd.f32 0.0, %v407
      %409 = vmatmul.bf16.gmra.mxu0 %v342
      %v410 = vpop.f32.mrf.mxu0
      %v411 = vadd.f32 0.0, %v410
      %v412 = vpop.f32.mrf.mxu0
      %v413 = vadd.f32 0.0, %v412
      %414 = vmatmul.bf16.gmra.mxu0 %v345
      %v415 = vpop.f32.mrf.mxu0
      %v416 = vadd.f32 0.0, %v415
      %v417 = vpop.f32.mrf.mxu0
      %v418 = vadd.f32 0.0, %v417
      %419 = vmatmul.bf16.gmra.mxu0 %v348
      %v420 = vpop.f32.mrf.mxu0
      %v421 = vadd.f32 0.0, %v420
      %v422 = vpop.f32.mrf.mxu0
      %v423 = vadd.f32 0.0, %v422
      %424 = vmatmul.bf16.gmra.mxu0 %v351
      %v425 = vpop.f32.mrf.mxu0
      %v426 = vadd.f32 0.0, %v425
      %v427 = vpop.f32.mrf.mxu0
      %v428 = vadd.f32 0.0, %v427
      %429 = vmatmul.bf16.gmra.mxu0 %v354
      %v430 = vpop.f32.mrf.mxu0
      %v431 = vadd.f32 0.0, %v430
      %v432 = vpop.f32.mrf.mxu0
      %v433 = vadd.f32 0.0, %v432
      %434 = vmatmul.bf16.gmra.mxu0 %v357
      %v435 = vpop.f32.mrf.mxu0
      %v436 = vadd.f32 0.0, %v435
      %v437 = vpop.f32.mrf.mxu0
      %v438 = vadd.f32 0.0, %v437
      %439 = vmatmul.bf16.gmra.mxu0 %v360
      %v440 = vpop.f32.mrf.mxu0
      %v441 = vadd.f32 0.0, %v440
      %v442 = vpop.f32.mrf.mxu0
      %v443 = vadd.f32 0.0, %v442
      %444 = vmatmul.bf16.gmra.mxu0 %v363
      %v445 = vpop.f32.mrf.mxu0
      %v446 = vadd.f32 0.0, %v445
      %v447 = vpop.f32.mrf.mxu0
      %v448 = vadd.f32 0.0, %v447
      %449 = vmatmul.bf16.gmra.mxu0 %v366
      %v450 = vpop.f32.mrf.mxu0
      %v451 = vadd.f32 0.0, %v450
      %v452 = vpop.f32.mrf.mxu0
      %v453 = vadd.f32 0.0, %v452
      %454 = vmatmul.bf16.gmra.mxu0 %v369
      %v455 = vpop.f32.mrf.mxu0
      %v456 = vadd.f32 0.0, %v455
      %v457 = vpop.f32.mrf.mxu0
      %v458 = vadd.f32 0.0, %v457
      %459 = vdwg.mxu0
      %v460 = vld [vmem:[%s2] sm:$0x1]
      %v462 = vperm.slane %v460, 0
      %v464 = vmul.f32 %v381, %v462
      %v465 = vmul.f32 %v383, %v462
      %v466 = vmul.f32 %v386, %v462
      %v467 = vmul.f32 %v388, %v462
      %v468 = vmul.f32 %v391, %v462
      %v469 = vmul.f32 %v393, %v462
      %v470 = vmul.f32 %v396, %v462
      %v471 = vmul.f32 %v398, %v462
      %v472 = vmul.f32 %v401, %v462
      %v473 = vmul.f32 %v403, %v462
      %v474 = vmul.f32 %v406, %v462
      %v475 = vmul.f32 %v408, %v462
      %v476 = vmul.f32 %v411, %v462
      %v477 = vmul.f32 %v413, %v462
      %v478 = vmul.f32 %v416, %v462
      %v479 = vmul.f32 %v418, %v462
      %v480 = vmul.f32 %v421, %v462
      %v481 = vmul.f32 %v423, %v462
      %v482 = vmul.f32 %v426, %v462
      %v483 = vmul.f32 %v428, %v462
      %v484 = vmul.f32 %v431, %v462
      %v485 = vmul.f32 %v433, %v462
      %v486 = vmul.f32 %v436, %v462
      %v487 = vmul.f32 %v438, %v462
      %v488 = vmul.f32 %v441, %v462
      %v489 = vmul.f32 %v443, %v462
      %v490 = vmul.f32 %v446, %v462
      %v491 = vmul.f32 %v448, %v462
      %v492 = vmul.f32 %v451, %v462
      %v493 = vmul.f32 %v453, %v462
      %v494 = vmul.f32 %v456, %v462
      %v495 = vmul.f32 %v458, %v462
      %v496 = vld [vmem:[%s3] sm:$0x1]
      %v498 = vperm.slane %v496, 0
      %v500 = vadd.f32 %v464, %v498
      %v501 = vadd.f32 %v465, %v498
      %v502 = vadd.f32 %v466, %v498
      %v503 = vadd.f32 %v467, %v498
      %v504 = vadd.f32 %v468, %v498
      %v505 = vadd.f32 %v469, %v498
      %v506 = vadd.f32 %v470, %v498
      %v507 = vadd.f32 %v471, %v498
      %v508 = vadd.f32 %v472, %v498
      %v509 = vadd.f32 %v473, %v498
      %v510 = vadd.f32 %v474, %v498
      %v511 = vadd.f32 %v475, %v498
      %v512 = vadd.f32 %v476, %v498
      %v513 = vadd.f32 %v477, %v498
      %v514 = vadd.f32 %v478, %v498
      %v515 = vadd.f32 %v479, %v498
      %v516 = vadd.f32 %v480, %v498
      %v517 = vadd.f32 %v481, %v498
      %v518 = vadd.f32 %v482, %v498
      %v519 = vadd.f32 %v483, %v498
      %v520 = vadd.f32 %v484, %v498
      %v521 = vadd.f32 %v485, %v498
      %v522 = vadd.f32 %v486, %v498
      %v523 = vadd.f32 %v487, %v498
      %v524 = vadd.f32 %v488, %v498
      %v525 = vadd.f32 %v489, %v498
      %v526 = vadd.f32 %v490, %v498
      %v527 = vadd.f32 %v491, %v498
      %v528 = vadd.f32 %v492, %v498
      %v529 = vadd.f32 %v493, %v498
      %v530 = vadd.f32 %v494, %v498
      %v531 = vadd.f32 %v495, %v498
      %532 = vst [vmem:[%s199] sm:$0xff] %v500
      %533 = vst [vmem:[%s199 + $0x8] sm:$0xff] %v501
      %534 = vst [vmem:[%s199 + $0x10] sm:$0xff] %v502
      %535 = vst [vmem:[%s199 + $0x18] sm:$0xff] %v503
      %536 = vst [vmem:[%s199 + $0x20] sm:$0xff] %v504
      %537 = vst [vmem:[%s199 + $0x28] sm:$0xff] %v505
      %538 = vst [vmem:[%s199 + $0x30] sm:$0xff] %v506
      %539 = vst [vmem:[%s199 + $0x38] sm:$0xff] %v507
      %540 = vst [vmem:[%s199 + $0x40] sm:$0xff] %v508
      %541 = vst [vmem:[%s199 + $0x48] sm:$0xff] %v509
      %542 = vst [vmem:[%s199 + $0x50] sm:$0xff] %v510
      %543 = vst [vmem:[%s199 + $0x58] sm:$0xff] %v511
      %544 = vst [vmem:[%s199 + $0x60] sm:$0xff] %v512
      %545 = vst [vmem:[%s199 + $0x68] sm:$0xff] %v513
      %546 = vst [vmem:[%s199 + $0x70] sm:$0xff] %v514
      %547 = vst [vmem:[%s199 + $0x78] sm:$0xff] %v515
      %548 = vst [vmem:[%s199 + $0x80] sm:$0xff] %v516
      %549 = vst [vmem:[%s199 + $0x88] sm:$0xff] %v517
      %550 = vst [vmem:[%s199 + $0x90] sm:$0xff] %v518
      %551 = vst [vmem:[%s199 + $0x98] sm:$0xff] %v519
      %552 = vst [vmem:[%s199 + $0xa0] sm:$0xff] %v520
      %553 = vst [vmem:[%s199 + $0xa8] sm:$0xff] %v521
      %554 = vst [vmem:[%s199 + $0xb0] sm:$0xff] %v522
      %555 = vst [vmem:[%s199 + $0xb8] sm:$0xff] %v523
      %556 = vst [vmem:[%s199 + $0xc0] sm:$0xff] %v524
      %557 = vst [vmem:[%s199 + $0xc8] sm:$0xff] %v525
      %558 = vst [vmem:[%s199 + $0xd0] sm:$0xff] %v526
      %559 = vst [vmem:[%s199 + $0xd8] sm:$0xff] %v527
      %560 = vst [vmem:[%s199 + $0xe0] sm:$0xff] %v528
      %561 = vst [vmem:[%s199 + $0xe8] sm:$0xff] %v529
      %562 = vst [vmem:[%s199 + $0xf0] sm:$0xff] %v530
      %563 = vst [vmem:[%s199 + $0xf8] sm:$0xff] %v531
      %s564 = smul.u32 32, %s15
      %p565 = scmp.lt.s32.totalorder %s564, 63
      %s566 = scalar_select %p565, %s564, 63
      %s567 = smul.addr %s566, 8
      %s568 = scalar_lea.vmem %s4, %s567
      // Predicated region
      $region37: #{resnet_ghost_forward.19} parent=35 // pred_check
        %p569 = pneg %p122
      $region38: #{resnet_ghost_forward.19} parent=35 // pred_check_branch
        %571 = sbr.rel (%p569) target = $region40
      $region39: #{resnet_ghost_forward.19} parent=35 // pred_region
        %s572 = smul.u32 32, %s15
      $region40: #{resnet_ghost_forward.19} parent=35 // pred_fallthru
        _
    $region36: #{resnet_ghost_forward.19} parent=5 // pred_fallthru
      _
    %p573 = scmp.le.s32.totalorder 2, %s10
    // Predicated region
    $region41: #{resnet_ghost_forward.19} parent=5 // pred_check
      %p574 = pneg %p573
    $region42: #{resnet_ghost_forward.19} parent=5 // pred_check_branch
      %576 = sbr.rel (%p574) target = $region44
    $region43: #{resnet_ghost_forward.19} parent=5 // pred_region
      %s577 = ssub.s32 %s10, 2
      // Predicated region
      $region45: #{resnet_ghost_forward.19} parent=43 // pred_check
        %p578 = pneg %p128
      $region46: #{resnet_ghost_forward.19} parent=43 // pred_check_branch
        %580 = sbr.rel (%p578) target = $region48
      $region47: #{resnet_ghost_forward.19} parent=43 // pred_region
        %s581 = smul.u32 32, %s16
        %p582 = scmp.lt.s32.totalorder %s581, 63
        %s583 = scalar_select %p582, %s581, 63
        %s584 = smul.addr %s583, 8
        %s585 = scalar_lea.vmem %s4, %s584
      $region48: #{resnet_ghost_forward.19} parent=43 // pred_fallthru
        _
    $region44: #{resnet_ghost_forward.19} parent=5 // pred_fallthru
      _
  $region6: #{resnet_ghost_forward.19} parent=0 // loop_footer
    %s14 = sadd.s32 1, %s10
  $region7: #{resnet_ghost_forward.19} parent=0 // loop_footer_branch
    %9 = sbr.rel target = $region3
  $region8: #{resnet_ghost_forward.19} parent=0 // loop_exit
    _

// kernel: resnet_ghost_forward.18
$region0: #{resnet_ghost_forward.18}
  #allocation0 [shape = 'u32[]', space=smem, size = 0x4, offset = 0x4, fixed_abs, tag = 'smem constant byte address 0x4 - core index']
  #allocation1 [shape = 'u32[72,128]{1,0:T(1,128)}', space=vmem, size = 0x9000, scoped, tag = 'internal scratch']
  %s0 = inlined_call_operand.vmem [shape: bf16[512,27], index: 0, kind: input, shape index: {}]
  %s1 = inlined_call_operand.vmem [shape: bf16[27,128], index: 1, kind: input, shape index: {}]
  %s2 = inlined_call_operand.vmem [shape: f32[1,128], index: 2, kind: input, shape index: {}]
  %s3 = inlined_call_operand.vmem [shape: f32[1,128], index: 3, kind: input, shape index: {}]
  %s4 = inlined_call_operand.vmem [shape: f32[512,128], index: 4, kind: output, shape index: {}]
  %s5 = sld [smem:[#allocation0]]
  $region49: #{resnet_ghost_forward.18} parent=0
    _
  %s7 = ssub.s32 1, %s5
  %s8 = scalar_select 0, %s7, %s5
  loop: start=0, step=1, limit=4
  $region2: #{resnet_ghost_forward.18} parent=0 // loop_pre_header
    _
  $region3: #{resnet_ghost_forward.18} parent=0 // loop_header
    %s10 = sphi 0, %s14
    %p11 = scmp.ge.s32.totalorder %s10, 4
    %s20 = sphi 0, %s22
    %s23 = sphi 0, %s20
    %s24 = sphi 0, %s23
    %s40 = sphi 0, %s24
    %s44 = sphi 0, %s44
    %s46 = sphi 0, %s44
    %s47 = sphi 0, %s46
    %s61 = sphi 0, %s47
    %s65 = sphi 0, %s65
    %s67 = sphi 0, %s65
    %s68 = sphi 0, %s67
    %s82 = sphi 0, %s68
    %s86 = sphi 0, %s86
    %s88 = sphi 0, %s86
    %s89 = sphi 0, %s88
    %s103 = sphi 0, %s89
    %s109 = sphi 0, %s111
    %s112 = sphi 0, %s109
    %s113 = sphi 0, %s112
    %s129 = sphi 0, %s113
  $region4: #{resnet_ghost_forward.18} parent=0 // loop_header_branch
    %13 = sbr.rel (%p11) target = $region8
  $region5: #{resnet_ghost_forward.18} parent=0 // loop_body
    %s15 = ssub.s32 %s10, 1
    %s16 = ssub.s32 %s10, 2
    %s17 = sadd.s32 %s10, 1
    %s18 = ssub.s32 %s10, %s17
    %p19 = scmp.eq.s32.totalorder %s18, 0
    %s21 = sadd.s32 %s20, 1
    %s22 = scalar_select %p19, %s20, %s21
    %p25 = pneg %p19
    %p26 = scmp.eq.s32.totalorder %s10, 1
    %p27 = por %p25, %p26
    %p28 = scmp.ne.s32.totalorder %s20, %s23
    %p29 = scmp.eq.s32.totalorder %s10, 0
    %p30 = por %p28, %p29
    %p31 = scmp.ne.s32.totalorder %s20, %s23
    %p32 = scmp.eq.s32.totalorder %s15, 1
    %p33 = por %p31, %p32
    %p34 = scmp.ne.s32.totalorder %s23, %s24
    %p35 = scmp.eq.s32.totalorder %s15, 0
    %p36 = por %p34, %p35
    %p37 = scmp.ne.s32.totalorder %s23, %s24
    %p38 = scmp.eq.s32.totalorder %s16, 1
    %p39 = por %p37, %p38
    %p41 = scmp.ne.s32.totalorder %s24, %s40
    %p42 = scmp.eq.s32.totalorder %s16, 0
    %p43 = por %p41, %p42
    %s45 = sadd.s32 %s44, 1
    %p48 = scmp.eq.s32.totalorder %s10, 1
    %p49 = scmp.ne.s32.totalorder %s44, %s46
    %p50 = scmp.eq.s32.totalorder %s10, 0
    %p51 = por %p49, %p50
    %p52 = scmp.ne.s32.totalorder %s44, %s46
    %p53 = scmp.eq.s32.totalorder %s15, 1
    %p54 = por %p52, %p53
    %p55 = scmp.ne.s32.totalorder %s46, %s47
    %p56 = scmp.eq.s32.totalorder %s15, 0
    %p57 = por %p55, %p56
    %p58 = scmp.ne.s32.totalorder %s46, %s47
    %p59 = scmp.eq.s32.totalorder %s16, 1
    %p60 = por %p58, %p59
    %p62 = scmp.ne.s32.totalorder %s47, %s61
    %p63 = scmp.eq.s32.totalorder %s16, 0
    %p64 = por %p62, %p63
    %s66 = sadd.s32 %s65, 1
    %p69 = scmp.eq.s32.totalorder %s10, 1
    %p70 = scmp.ne.s32.totalorder %s65, %s67
    %p71 = scmp.eq.s32.totalorder %s10, 0
    %p72 = por %p70, %p71
    %p73 = scmp.ne.s32.totalorder %s65, %s67
    %p74 = scmp.eq.s32.totalorder %s15, 1
    %p75 = por %p73, %p74
    %p76 = scmp.ne.s32.totalorder %s67, %s68
    %p77 = scmp.eq.s32.totalorder %s15, 0
    %p78 = por %p76, %p77
    %p79 = scmp.ne.s32.totalorder %s67, %s68
    %p80 = scmp.eq.s32.totalorder %s16, 1
    %p81 = por %p79, %p80
    %p83 = scmp.ne.s32.totalorder %s68, %s82
    %p84 = scmp.eq.s32.totalorder %s16, 0
    %p85 = por %p83, %p84
    %s87 = sadd.s32 %s86, 1
    %p90 = scmp.eq.s32.totalorder %s10, 1
    %p91 = scmp.ne.s32.totalorder %s86, %s88
    %p92 = scmp.eq.s32.totalorder %s10, 0
    %p93 = por %p91, %p92
    %p94 = scmp.ne.s32.totalorder %s86, %s88
    %p95 = scmp.eq.s32.totalorder %s15, 1
    %p96 = por %p94, %p95
    %p97 = scmp.ne.s32.totalorder %s88, %s89
    %p98 = scmp.eq.s32.totalorder %s15, 0
    %p99 = por %p97, %p98
    %p100 = scmp.ne.s32.totalorder %s88, %s89
    %p101 = scmp.eq.s32.totalorder %s16, 1
    %p102 = por %p100, %p101
    %p104 = scmp.ne.s32.totalorder %s89, %s103
    %p105 = scmp.eq.s32.totalorder %s16, 0
    %p106 = por %p104, %p105
    %s107 = ssub.s32 %s10, %s17
    %p108 = scmp.eq.s32.totalorder %s107, 0
    %s110 = sadd.s32 %s109, 1
    %s111 = scalar_select %p108, %s109, %s110
    %p114 = pneg %p108
    %p115 = scmp.eq.s32.totalorder %s10, 1
    %p116 = por %p114, %p115
    %p117 = scmp.ne.s32.totalorder %s109, %s112
    %p118 = scmp.eq.s32.totalorder %s10, 0
    %p119 = por %p117, %p118
    %p120 = scmp.ne.s32.totalorder %s109, %s112
    %p121 = scmp.eq.s32.totalorder %s15, 1
    %p122 = por %p120, %p121
    %p123 = scmp.ne.s32.totalorder %s112, %s113
    %p124 = scmp.eq.s32.totalorder %s15, 0
    %p125 = por %p123, %p124
    %p126 = scmp.ne.s32.totalorder %s112, %s113
    %p127 = scmp.eq.s32.totalorder %s16, 1
    %p128 = por %p126, %p127
    %p130 = scmp.ne.s32.totalorder %s113, %s129
    %p131 = scmp.eq.s32.totalorder %s16, 0
    %p132 = por %p130, %p131
    %p133 = scmp.le.s32.totalorder 1, %s10
    %p134 = scmp.lt.s32.totalorder %s10, 3
    %p135 = pnand %p133, %p134
    %p136 = pneg %p135
    // Predicated region
    $region9: #{resnet_ghost_forward.18} parent=5 // pred_check
      _
    $region10: #{resnet_ghost_forward.18} parent=5 // pred_check_branch
      %138 = sbr.rel (%p135) target = $region12
    $region11: #{resnet_ghost_forward.18} parent=5 // pred_region
      %s139 = ssub.s32 %s10, 1
      // Predicated region
      $region13: #{resnet_ghost_forward.18} parent=11 // pred_check
        %p140 = pneg %p57
      $region14: #{resnet_ghost_forward.18} parent=11 // pred_check_branch
        %142 = sbr.rel (%p140) target = $region16
      $region15: #{resnet_ghost_forward.18} parent=11 // pred_region
        _
      $region16: #{resnet_ghost_forward.18} parent=11 // pred_fallthru
        _
      // Predicated region
      $region17: #{resnet_ghost_forward.18} parent=11 // pred_check
        %p143 = pneg %p78
      $region18: #{resnet_ghost_forward.18} parent=11 // pred_check_branch
        %145 = sbr.rel (%p143) target = $region20
      $region19: #{resnet_ghost_forward.18} parent=11 // pred_region
        _
      $region20: #{resnet_ghost_forward.18} parent=11 // pred_fallthru
        _
      // Predicated region
      $region21: #{resnet_ghost_forward.18} parent=11 // pred_check
        %p146 = pneg %p99
      $region22: #{resnet_ghost_forward.18} parent=11 // pred_check_branch
        %148 = sbr.rel (%p146) target = $region24
      $region23: #{resnet_ghost_forward.18} parent=11 // pred_region
        _
      $region24: #{resnet_ghost_forward.18} parent=11 // pred_fallthru
        _
    $region12: #{resnet_ghost_forward.18} parent=5 // pred_fallthru
      _
    %p149 = scmp.lt.s32.totalorder %s10, 2
    // Predicated region
    $region25: #{resnet_ghost_forward.18} parent=5 // pred_check
      %p150 = pneg %p149
    $region26: #{resnet_ghost_forward.18} parent=5 // pred_check_branch
      %152 = sbr.rel (%p150) target = $region28
    $region27: #{resnet_ghost_forward.18} parent=5 // pred_region
      // Predicated region
      $region29: #{resnet_ghost_forward.18} parent=27 // pred_check
        %p153 = pneg %p30
      $region30: #{resnet_ghost_forward.18} parent=27 // pred_check_branch
        %155 = sbr.rel (%p153) target = $region32
      $region31: #{resnet_ghost_forward.18} parent=27 // pred_region
        %s156 = smul.u32 32, %s10
        %p157 = scmp.lt.s32.totalorder %s156, 63
        %s158 = scalar_select %p157, %s156, 63
        %s159 = smul.addr %s158, 4
        %s160 = scalar_lea.vmem %s0, %s159
        %s161 = smul.u32 32, %s10
      $region32: #{resnet_ghost_forward.18} parent=27 // pred_fallthru
        _
    $region28: #{resnet_ghost_forward.18} parent=5 // pred_fallthru
      _
    %p162 = scmp.le.s32.totalorder 1, %s10
    %p163 = scmp.lt.s32.totalorder %s10, 3
    %p164 = pnand %p162, %p163
    %p165 = pneg %p164
    // Predicated region
    $region33: #{resnet_ghost_forward.18} parent=5 // pred_check
      _
    $region34: #{resnet_ghost_forward.18} parent=5 // pred_check_branch
      %167 = sbr.rel (%p164) target = $region36
    $region35: #{resnet_ghost_forward.18} parent=5 // pred_region
      %s168 = ssub.s32 %s10, 1
      %s169 = smul.u32 32, %s15
      %p170 = scmp.lt.s32.totalorder %s169, 63
      %s171 = scalar_select %p170, %s169, 63
      %s172 = smul.addr %s171, 4
      %s173 = scalar_lea.vmem %s0, %s172
      %p174 = pneg %p36
      %p175 = pneg %p33
      %p176 = pneg %p57
      %p177 = pneg %p54
      %p178 = pneg %p78
      %p179 = pneg %p75
      %p180 = pneg %p99
      %p181 = pneg %p96
      %p182 = pneg %p125
      %p183 = pneg %p122
      %s184 = smul.u32 32, %s15
      %p185 = scmp.lt.s32.totalorder %s184, 63
      %s186 = scalar_select %p185, %s184, 63
      %s187 = smul.addr %s186, 8
      %s188 = scalar_lea.vmem %s4, %s187
      %s189 = smul.u32 32, %s15
      %p190 = scmp.lt.s32.totalorder %s189, 63
      %s191 = scalar_select %p190, %s189, 63
      %s192 = smul.addr %s191, 4
      %s193 = scalar_lea.vmem %s0, %s192
      %s194 = smul.u32 32, %s15
      %s195 = smul.u32 32, %s15
      %p196 = scmp.lt.s32.totalorder %s195, 63
      %s197 = scalar_select %p196, %s195, 63
      %s198 = smul.addr %s197, 8
      %s199 = scalar_lea.vmem %s4, %s198
      %s200 = smul.u32 32, %s15
      %v202 = vld [vmem:[%s193] sm:$0xf]
      %v203 = vld [vmem:[%s193 + $0x4] sm:$0xf]
      %v204 = vld [vmem:[%s193 + $0x8] sm:$0xf]
      %v205 = vld [vmem:[%s193 + $0xc] sm:$0xf]
      %v206 = vld [vmem:[%s193 + $0x10] sm:$0xf]
      %v207 = vld [vmem:[%s193 + $0x14] sm:$0xf]
      %v208 = vld [vmem:[%s193 + $0x18] sm:$0xf]
      %v209 = vld [vmem:[%s193 + $0x1c] sm:$0xf]
      %v210 = vld [vmem:[%s193 + $0x20] sm:$0xf]
      %v211 = vld [vmem:[%s193 + $0x24] sm:$0xf]
      %v212 = vld [vmem:[%s193 + $0x28] sm:$0xf]
      %v213 = vld [vmem:[%s193 + $0x2c] sm:$0xf]
      %v214 = vld [vmem:[%s193 + $0x30] sm:$0xf]
      %v215 = vld [vmem:[%s193 + $0x34] sm:$0xf]
      %v216 = vld [vmem:[%s193 + $0x38] sm:$0xf]
      %v217 = vld [vmem:[%s193 + $0x3c] sm:$0xf]
      %v218 = vld [vmem:[%s193 + $0x40] sm:$0xf]
      %v219 = vld [vmem:[%s193 + $0x44] sm:$0xf]
      %v220 = vld [vmem:[%s193 + $0x48] sm:$0xf]
      %v221 = vld [vmem:[%s193 + $0x4c] sm:$0xf]
      %v222 = vld [vmem:[%s193 + $0x50] sm:$0xf]
      %v223 = vld [vmem:[%s193 + $0x54] sm:$0xf]
      %v224 = vld [vmem:[%s193 + $0x58] sm:$0xf]
      %v225 = vld [vmem:[%s193 + $0x5c] sm:$0xf]
      %v226 = vld [vmem:[%s193 + $0x60] sm:$0xf]
      %v227 = vld [vmem:[%s193 + $0x64] sm:$0xf]
      %v228 = vld [vmem:[%s193 + $0x68] sm:$0xf]
      %v229 = vld [vmem:[%s193 + $0x6c] sm:$0xf]
      %v230 = vld [vmem:[%s193 + $0x70] sm:$0xf]
      %v231 = vld [vmem:[%s193 + $0x74] sm:$0xf]
      %v232 = vld [vmem:[%s193 + $0x78] sm:$0xf]
      %v233 = vld [vmem:[%s193 + $0x7c] sm:$0xf]
      %v234 = vld [vmem:[%s1] sm:$0xf]
      %v235 = vld [vmem:[%s1 + $0x4] sm:$0xf]
      %v236 = vld [vmem:[%s1 + $0x8] sm:$0xf]
      %v237 = vld [vmem:[%s1 + $0xc] sm:$0x3]
      %v270 = vunpack.c.l.b16 %v202
      %v271 = vunpack.c.l.b16 %v203
      %v272 = vunpack.c.l.b16 %v204
      %v273 = vunpack.c.l.b16 %v205
      %v274 = vunpack.c.l.b16 %v206
      %v275 = vunpack.c.l.b16 %v207
      %v276 = vunpack.c.l.b16 %v208
      %v277 = vunpack.c.l.b16 %v209
      %v278 = vunpack.c.l.b16 %v210
      %v279 = vunpack.c.l.b16 %v211
      %v280 = vunpack.c.l.b16 %v212
      %v281 = vunpack.c.l.b16 %v213
      %v282 = vunpack.c.l.b16 %v214
      %v283 = vunpack.c.l.b16 %v215
      %v284 = vunpack.c.l.b16 %v216
      %v285 = vunpack.c.l.b16 %v217
      %v286 = vunpack.c.l.b16 %v218
      %v287 = vunpack.c.l.b16 %v219
      %v288 = vunpack.c.l.b16 %v220
      %v289 = vunpack.c.l.b16 %v221
      %v290 = vunpack.c.l.b16 %v222
      %v291 = vunpack.c.l.b16 %v223
      %v292 = vunpack.c.l.b16 %v224
      %v293 = vunpack.c.l.b16 %v225
      %v294 = vunpack.c.l.b16 %v226
      %v295 = vunpack.c.l.b16 %v227
      %v296 = vunpack.c.l.b16 %v228
      %v297 = vunpack.c.l.b16 %v229
      %v298 = vunpack.c.l.b16 %v230
      %v299 = vunpack.c.l.b16 %v231
      %v300 = vunpack.c.l.b16 %v232
      %v301 = vunpack.c.l.b16 %v233
      %v302 = vpack.c.b16 %v271, %v270
      %v303 = vpack.c.b16 %v273, %v272
      %v304 = vpack.c.b16 %v275, %v274
      %v305 = vpack.c.b16 %v277, %v276
      %v306 = vpack.c.b16 %v279, %v278
      %v307 = vpack.c.b16 %v281, %v280
      %v308 = vpack.c.b16 %v283, %v282
      %v309 = vpack.c.b16 %v285, %v284
      %v310 = vpack.c.b16 %v287, %v286
      %v311 = vpack.c.b16 %v289, %v288
      %v312 = vpack.c.b16 %v291, %v290
      %v313 = vpack.c.b16 %v293, %v292
      %v314 = vpack.c.b16 %v295, %v294
      %v315 = vpack.c.b16 %v297, %v296
      %v316 = vpack.c.b16 %v299, %v298
      %v317 = vpack.c.b16 %v301, %v300
      %v322 = vunpack.c.l.b16 %v234
      %v323 = vunpack.c.l.b16 %v235
      %v324 = vunpack.c.l.b16 %v236
      %v325 = vunpack.c.l.b16 %v237
      %v326 = vpack.c.b16 %v323, %v322
      %v327 = vpack.c.b16 %v325, %v324
      %vm329 = vcmask 220160
      %v331 = vsel %vm329, %v302, 0
      %v334 = vsel %vm329, %v303, 0
      %v337 = vsel %vm329, %v304, 0
      %v340 = vsel %vm329, %v305, 0
      %v343 = vsel %vm329, %v306, 0
      %v346 = vsel %vm329, %v307, 0
      %v349 = vsel %vm329, %v308, 0
      %v352 = vsel %vm329, %v309, 0
      %v355 = vsel %vm329, %v310, 0
      %v358 = vsel %vm329, %v311, 0
      %v361 = vsel %vm329, %v312, 0
      %v364 = vsel %vm329, %v313, 0
      %v367 = vsel %vm329, %v314, 0
      %v370 = vsel %vm329, %v315, 0
      %v373 = vsel %vm329, %v316, 0
      %v376 = vsel %vm329, %v317, 0
      %vm378 = vcmask 1044480
      %vm379 = vcmask 1045504
      %v380 = vsel %vm378, 4294967295, 65535
      %v381 = vsel %vm379, %v380, 0
      %v383 = vand.u32 %v327, %v381
      %385 = vmatpush.bf16.msra.mxu0 0
      %386 = vmatpush.bf16.msra.mxu0 0
      %387 = vmatpush.bf16.msra.mxu0 0
      %388 = vmatpush.bf16.msra.mxu0 0
      %389 = vmatpush.bf16.msra.mxu0 0
      %390 = vmatpush.bf16.msra.mxu0 0
      %391 = vmatpush.bf16.msra.mxu0 %v383
      %392 = vmatpush.bf16.msra.mxu0 %v326
      %393 = vmatmul.bf16.gmra.mxu0 %v331
      %v394 = vpop.f32.mrf.mxu0
      %v395 = vadd.f32 0.0, %v394
      %v396 = vpop.f32.mrf.mxu0
      %v397 = vadd.f32 0.0, %v396
      %398 = vmatmul.bf16.gmra.mxu0 %v334
      %v399 = vpop.f32.mrf.mxu0
      %v400 = vadd.f32 0.0, %v399
      %v401 = vpop.f32.mrf.mxu0
      %v402 = vadd.f32 0.0, %v401
      %403 = vmatmul.bf16.gmra.mxu0 %v337
      %v404 = vpop.f32.mrf.mxu0
      %v405 = vadd.f32 0.0, %v404
      %v406 = vpop.f32.mrf.mxu0
      %v407 = vadd.f32 0.0, %v406
      %408 = vmatmul.bf16.gmra.mxu0 %v340
      %v409 = vpop.f32.mrf.mxu0
      %v410 = vadd.f32 0.0, %v409
      %v411 = vpop.f32.mrf.mxu0
      %v412 = vadd.f32 0.0, %v411
      %413 = vmatmul.bf16.gmra.mxu0 %v343
      %v414 = vpop.f32.mrf.mxu0
      %v415 = vadd.f32 0.0, %v414
      %v416 = vpop.f32.mrf.mxu0
      %v417 = vadd.f32 0.0, %v416
      %418 = vmatmul.bf16.gmra.mxu0 %v346
      %v419 = vpop.f32.mrf.mxu0
      %v420 = vadd.f32 0.0, %v419
      %v421 = vpop.f32.mrf.mxu0
      %v422 = vadd.f32 0.0, %v421
      %423 = vmatmul.bf16.gmra.mxu0 %v349
      %v424 = vpop.f32.mrf.mxu0
      %v425 = vadd.f32 0.0, %v424
      %v426 = vpop.f32.mrf.mxu0
      %v427 = vadd.f32 0.0, %v426
      %428 = vmatmul.bf16.gmra.mxu0 %v352
      %v429 = vpop.f32.mrf.mxu0
      %v430 = vadd.f32 0.0, %v429
      %v431 = vpop.f32.mrf.mxu0
      %v432 = vadd.f32 0.0, %v431
      %433 = vmatmul.bf16.gmra.mxu0 %v355
      %v434 = vpop.f32.mrf.mxu0
      %v435 = vadd.f32 0.0, %v434
      %v436 = vpop.f32.mrf.mxu0
      %v437 = vadd.f32 0.0, %v436
      %438 = vmatmul.bf16.gmra.mxu0 %v358
      %v439 = vpop.f32.mrf.mxu0
      %v440 = vadd.f32 0.0, %v439
      %v441 = vpop.f32.mrf.mxu0
      %v442 = vadd.f32 0.0, %v441
      %443 = vmatmul.bf16.gmra.mxu0 %v361
      %v444 = vpop.f32.mrf.mxu0
      %v445 = vadd.f32 0.0, %v444
      %v446 = vpop.f32.mrf.mxu0
      %v447 = vadd.f32 0.0, %v446
      %448 = vmatmul.bf16.gmra.mxu0 %v364
      %v449 = vpop.f32.mrf.mxu0
      %v450 = vadd.f32 0.0, %v449
      %v451 = vpop.f32.mrf.mxu0
      %v452 = vadd.f32 0.0, %v451
      %453 = vmatmul.bf16.gmra.mxu0 %v367
      %v454 = vpop.f32.mrf.mxu0
      %v455 = vadd.f32 0.0, %v454
      %v456 = vpop.f32.mrf.mxu0
      %v457 = vadd.f32 0.0, %v456
      %458 = vmatmul.bf16.gmra.mxu0 %v370
      %v459 = vpop.f32.mrf.mxu0
      %v460 = vadd.f32 0.0, %v459
      %v461 = vpop.f32.mrf.mxu0
      %v462 = vadd.f32 0.0, %v461
      %463 = vmatmul.bf16.gmra.mxu0 %v373
      %v464 = vpop.f32.mrf.mxu0
      %v465 = vadd.f32 0.0, %v464
      %v466 = vpop.f32.mrf.mxu0
      %v467 = vadd.f32 0.0, %v466
      %468 = vmatmul.bf16.gmra.mxu0 %v376
      %v469 = vpop.f32.mrf.mxu0
      %v470 = vadd.f32 0.0, %v469
      %v471 = vpop.f32.mrf.mxu0
      %v472 = vadd.f32 0.0, %v471
      %473 = vdwg.mxu0
      %v474 = vld [vmem:[%s2] sm:$0x1]
      %v476 = vperm.slane %v474, 0
      %v478 = vmul.f32 %v395, %v476
      %v479 = vmul.f32 %v397, %v476
      %v480 = vmul.f32 %v400, %v476
      %v481 = vmul.f32 %v402, %v476
      %v482 = vmul.f32 %v405, %v476
      %v483 = vmul.f32 %v407, %v476
      %v484 = vmul.f32 %v410, %v476
      %v485 = vmul.f32 %v412, %v476
      %v486 = vmul.f32 %v415, %v476
      %v487 = vmul.f32 %v417, %v476
      %v488 = vmul.f32 %v420, %v476
      %v489 = vmul.f32 %v422, %v476
      %v490 = vmul.f32 %v425, %v476
      %v491 = vmul.f32 %v427, %v476
      %v492 = vmul.f32 %v430, %v476
      %v493 = vmul.f32 %v432, %v476
      %v494 = vmul.f32 %v435, %v476
      %v495 = vmul.f32 %v437, %v476
      %v496 = vmul.f32 %v440, %v476
      %v497 = vmul.f32 %v442, %v476
      %v498 = vmul.f32 %v445, %v476
      %v499 = vmul.f32 %v447, %v476
      %v500 = vmul.f32 %v450, %v476
      %v501 = vmul.f32 %v452, %v476
      %v502 = vmul.f32 %v455, %v476
      %v503 = vmul.f32 %v457, %v476
      %v504 = vmul.f32 %v460, %v476
      %v505 = vmul.f32 %v462, %v476
      %v506 = vmul.f32 %v465, %v476
      %v507 = vmul.f32 %v467, %v476
      %v508 = vmul.f32 %v470, %v476
      %v509 = vmul.f32 %v472, %v476
      %v510 = vld [vmem:[%s3] sm:$0x1]
      %v512 = vperm.slane %v510, 0
      %v514 = vadd.f32 %v478, %v512
      %v515 = vadd.f32 %v479, %v512
      %v516 = vadd.f32 %v480, %v512
      %v517 = vadd.f32 %v481, %v512
      %v518 = vadd.f32 %v482, %v512
      %v519 = vadd.f32 %v483, %v512
      %v520 = vadd.f32 %v484, %v512
      %v521 = vadd.f32 %v485, %v512
      %v522 = vadd.f32 %v486, %v512
      %v523 = vadd.f32 %v487, %v512
      %v524 = vadd.f32 %v488, %v512
      %v525 = vadd.f32 %v489, %v512
      %v526 = vadd.f32 %v490, %v512
      %v527 = vadd.f32 %v491, %v512
      %v528 = vadd.f32 %v492, %v512
      %v529 = vadd.f32 %v493, %v512
      %v530 = vadd.f32 %v494, %v512
      %v531 = vadd.f32 %v495, %v512
      %v532 = vadd.f32 %v496, %v512
      %v533 = vadd.f32 %v497, %v512
      %v534 = vadd.f32 %v498, %v512
      %v535 = vadd.f32 %v499, %v512
      %v536 = vadd.f32 %v500, %v512
      %v537 = vadd.f32 %v501, %v512
      %v538 = vadd.f32 %v502, %v512
      %v539 = vadd.f32 %v503, %v512
      %v540 = vadd.f32 %v504, %v512
      %v541 = vadd.f32 %v505, %v512
      %v542 = vadd.f32 %v506, %v512
      %v543 = vadd.f32 %v507, %v512
      %v544 = vadd.f32 %v508, %v512
      %v545 = vadd.f32 %v509, %v512
      %v546 = vmax.f32 %v514, 0.0
      %v547 = vmax.f32 %v515, 0.0
      %v548 = vmax.f32 %v516, 0.0
      %v549 = vmax.f32 %v517, 0.0
      %v550 = vmax.f32 %v518, 0.0
      %v551 = vmax.f32 %v519, 0.0
      %v552 = vmax.f32 %v520, 0.0
      %v553 = vmax.f32 %v521, 0.0
      %v554 = vmax.f32 %v522, 0.0
      %v555 = vmax.f32 %v523, 0.0
      %v556 = vmax.f32 %v524, 0.0
      %v557 = vmax.f32 %v525, 0.0
      %v558 = vmax.f32 %v526, 0.0
      %v559 = vmax.f32 %v527, 0.0
      %v560 = vmax.f32 %v528, 0.0
      %v561 = vmax.f32 %v529, 0.0
      %v562 = vmax.f32 %v530, 0.0
      %v563 = vmax.f32 %v531, 0.0
      %v564 = vmax.f32 %v532, 0.0
      %v565 = vmax.f32 %v533, 0.0
      %v566 = vmax.f32 %v534, 0.0
      %v567 = vmax.f32 %v535, 0.0
      %v568 = vmax.f32 %v536, 0.0
      %v569 = vmax.f32 %v537, 0.0
      %v570 = vmax.f32 %v538, 0.0
      %v571 = vmax.f32 %v539, 0.0
      %v572 = vmax.f32 %v540, 0.0
      %v573 = vmax.f32 %v541, 0.0
      %v574 = vmax.f32 %v542, 0.0
      %v575 = vmax.f32 %v543, 0.0
      %v576 = vmax.f32 %v544, 0.0
      %v577 = vmax.f32 %v545, 0.0
      %578 = vst [vmem:[%s199] sm:$0xff] %v546
      %579 = vst [vmem:[%s199 + $0x8] sm:$0xff] %v547
      %580 = vst [vmem:[%s199 + $0x10] sm:$0xff] %v548
      %581 = vst [vmem:[%s199 + $0x18] sm:$0xff] %v549
      %582 = vst [vmem:[%s199 + $0x20] sm:$0xff] %v550
      %583 = vst [vmem:[%s199 + $0x28] sm:$0xff] %v551
      %584 = vst [vmem:[%s199 + $0x30] sm:$0xff] %v552
      %585 = vst [vmem:[%s199 + $0x38] sm:$0xff] %v553
      %586 = vst [vmem:[%s199 + $0x40] sm:$0xff] %v554
      %587 = vst [vmem:[%s199 + $0x48] sm:$0xff] %v555
      %588 = vst [vmem:[%s199 + $0x50] sm:$0xff] %v556
      %589 = vst [vmem:[%s199 + $0x58] sm:$0xff] %v557
      %590 = vst [vmem:[%s199 + $0x60] sm:$0xff] %v558
      %591 = vst [vmem:[%s199 + $0x68] sm:$0xff] %v559
      %592 = vst [vmem:[%s199 + $0x70] sm:$0xff] %v560
      %593 = vst [vmem:[%s199 + $0x78] sm:$0xff] %v561
      %594 = vst [vmem:[%s199 + $0x80] sm:$0xff] %v562
      %595 = vst [vmem:[%s199 + $0x88] sm:$0xff] %v563
      %596 = vst [vmem:[%s199 + $0x90] sm:$0xff] %v564
      %597 = vst [vmem:[%s199 + $0x98] sm:$0xff] %v565
      %598 = vst [vmem:[%s199 + $0xa0] sm:$0xff] %v566
      %599 = vst [vmem:[%s199 + $0xa8] sm:$0xff] %v567
      %600 = vst [vmem:[%s199 + $0xb0] sm:$0xff] %v568
      %601 = vst [vmem:[%s199 + $0xb8] sm:$0xff] %v569
      %602 = vst [vmem:[%s199 + $0xc0] sm:$0xff] %v570
      %603 = vst [vmem:[%s199 + $0xc8] sm:$0xff] %v571
      %604 = vst [vmem:[%s199 + $0xd0] sm:$0xff] %v572
      %605 = vst [vmem:[%s199 + $0xd8] sm:$0xff] %v573
      %606 = vst [vmem:[%s199 + $0xe0] sm:$0xff] %v574
      %607 = vst [vmem:[%s199 + $0xe8] sm:$0xff] %v575
      %608 = vst [vmem:[%s199 + $0xf0] sm:$0xff] %v576
      %609 = vst [vmem:[%s199 + $0xf8] sm:$0xff] %v577
      %s610 = smul.u32 32, %s15
      %p611 = scmp.lt.s32.totalorder %s610, 63
      %s612 = scalar_select %p611, %s610, 63
      %s613 = smul.addr %s612, 8
      %s614 = scalar_lea.vmem %s4, %s613
      // Predicated region
      $region37: #{resnet_ghost_forward.18} parent=35 // pred_check
        %p615 = pneg %p122
      $region38: #{resnet_ghost_forward.18} parent=35 // pred_check_branch
        %617 = sbr.rel (%p615) target = $region40
      $region39: #{resnet_ghost_forward.18} parent=35 // pred_region
        %s618 = smul.u32 32, %s15
      $region40: #{resnet_ghost_forward.18} parent=35 // pred_fallthru
        _
    $region36: #{resnet_ghost_forward.18} parent=5 // pred_fallthru
      _
    %p619 = scmp.le.s32.totalorder 2, %s10
    // Predicated region
    $region41: #{resnet_ghost_forward.18} parent=5 // pred_check
      %p620 = pneg %p619
    $region42: #{resnet_ghost_forward.18} parent=5 // pred_check_branch
      %622 = sbr.rel (%p620) target = $region44
    $region43: #{resnet_ghost_forward.18} parent=5 // pred_region
      %s623 = ssub.s32 %s10, 2
      // Predicated region
      $region45: #{resnet_ghost_forward.18} parent=43 // pred_check
        %p624 = pneg %p128
      $region46: #{resnet_ghost_forward.18} parent=43 // pred_check_branch
        %626 = sbr.rel (%p624) target = $region48
      $region47: #{resnet_ghost_forward.18} parent=43 // pred_region
        %s627 = smul.u32 32, %s16
        %p628 = scmp.lt.s32.totalorder %s627, 63
        %s629 = scalar_select %p628, %s627, 63
        %s630 = smul.addr %s629, 8
        %s631 = scalar_lea.vmem %s4, %s630
      $region48: #{resnet_ghost_forward.18} parent=43 // pred_fallthru
        _
    $region44: #{resnet_ghost_forward.18} parent=5 // pred_fallthru
      _
  $region6: #{resnet_ghost_forward.18} parent=0 // loop_footer
    %s14 = sadd.s32 1, %s10
  $region7: #{resnet_ghost_forward.18} parent=0 // loop_footer_branch
    %9 = sbr.rel target = $region3
  $region8: #{resnet_ghost_forward.18} parent=0 // loop_exit
    _

// kernel: resnet_ghost_forward.20
$region0: #{resnet_ghost_forward.20}
  #allocation0 [shape = 'u32[]', space=smem, size = 0x4, offset = 0x4, fixed_abs, tag = 'smem constant byte address 0x4 - core index']
  #allocation1 [shape = 'u32[72,128]{1,0:T(1,128)}', space=vmem, size = 0x9000, scoped, tag = 'internal scratch']
  %s0 = inlined_call_operand.vmem [shape: f32[9,2,512], index: 0, kind: input, shape index: {}]
  %s1 = inlined_call_operand.vmem [shape: f32[9,2,1], index: 1, kind: input, shape index: {}]
  %s2 = inlined_call_operand.vmem [shape: f32[2,1], index: 2, kind: input, shape index: {}]
  %s3 = inlined_call_operand.vmem [shape: f32[2,1], index: 3, kind: input, shape index: {}]
  %s4 = inlined_call_operand.vmem [shape: f32[2,512], index: 4, kind: output, shape index: {}]
  %s5 = sld [smem:[#allocation0]]
  $region90: #{resnet_ghost_forward.20} parent=0
    _
  %s7 = ssub.s32 1, %s5
  %s8 = scalar_select 0, %s7, %s5
  $region1: #{resnet_ghost_forward.20} parent=0
    #allocation2 [shape = 'u8[36864]{0}', space=vmem, size = 0x9000, scoped, tag = 'input window, operand 0']
    loop: start=0, step=1, limit=4
    $region2: #{resnet_ghost_forward.20} parent=1 // loop_pre_header
      _
    $region3: #{resnet_ghost_forward.20} parent=1 // loop_header
      %s10 = sphi 0, %s14
      %p11 = scmp.ge.s32.totalorder %s10, 4
      %s20 = sphi 0, %s22
      %s23 = sphi 0, %s20
      %s24 = sphi 0, %s23
      %s40 = sphi 0, %s24
      %s44 = sphi 0, %s44
      %s46 = sphi 0, %s44
      %s47 = sphi 0, %s46
      %s61 = sphi 0, %s47
      %s65 = sphi 0, %s65
      %s67 = sphi 0, %s65
      %s68 = sphi 0, %s67
      %s82 = sphi 0, %s68
      %s86 = sphi 0, %s86
      %s88 = sphi 0, %s86
      %s89 = sphi 0, %s88
      %s103 = sphi 0, %s89
      %s109 = sphi 0, %s111
      %s112 = sphi 0, %s109
      %s113 = sphi 0, %s112
      %s129 = sphi 0, %s113
    $region4: #{resnet_ghost_forward.20} parent=1 // loop_header_branch
      %13 = sbr.rel (%p11) target = $region8
    $region5: #{resnet_ghost_forward.20} parent=1 // loop_body
      %s15 = ssub.s32 %s10, 1
      %s16 = ssub.s32 %s10, 2
      %s17 = sadd.s32 %s10, 1
      %s18 = ssub.s32 %s10, %s17
      %p19 = scmp.eq.s32.totalorder %s18, 0
      %s21 = sadd.s32 %s20, 1
      %s22 = scalar_select %p19, %s20, %s21
      %p25 = pneg %p19
      %p26 = scmp.eq.s32.totalorder %s10, 1
      %p27 = por %p25, %p26
      %p28 = scmp.ne.s32.totalorder %s20, %s23
      %p29 = scmp.eq.s32.totalorder %s10, 0
      %p30 = por %p28, %p29
      %p31 = scmp.ne.s32.totalorder %s20, %s23
      %p32 = scmp.eq.s32.totalorder %s15, 1
      %p33 = por %p31, %p32
      %p34 = scmp.ne.s32.totalorder %s23, %s24
      %p35 = scmp.eq.s32.totalorder %s15, 0
      %p36 = por %p34, %p35
      %p37 = scmp.ne.s32.totalorder %s23, %s24
      %p38 = scmp.eq.s32.totalorder %s16, 1
      %p39 = por %p37, %p38
      %p41 = scmp.ne.s32.totalorder %s24, %s40
      %p42 = scmp.eq.s32.totalorder %s16, 0
      %p43 = por %p41, %p42
      %s45 = sadd.s32 %s44, 1
      %p48 = scmp.eq.s32.totalorder %s10, 1
      %p49 = scmp.ne.s32.totalorder %s44, %s46
      %p50 = scmp.eq.s32.totalorder %s10, 0
      %p51 = por %p49, %p50
      %p52 = scmp.ne.s32.totalorder %s44, %s46
      %p53 = scmp.eq.s32.totalorder %s15, 1
      %p54 = por %p52, %p53
      %p55 = scmp.ne.s32.totalorder %s46, %s47
      %p56 = scmp.eq.s32.totalorder %s15, 0
      %p57 = por %p55, %p56
      %p58 = scmp.ne.s32.totalorder %s46, %s47
      %p59 = scmp.eq.s32.totalorder %s16, 1
      %p60 = por %p58, %p59
      %p62 = scmp.ne.s32.totalorder %s47, %s61
      %p63 = scmp.eq.s32.totalorder %s16, 0
      %p64 = por %p62, %p63
      %s66 = sadd.s32 %s65, 1
      %p69 = scmp.eq.s32.totalorder %s10, 1
      %p70 = scmp.ne.s32.totalorder %s65, %s67
      %p71 = scmp.eq.s32.totalorder %s10, 0
      %p72 = por %p70, %p71
      %p73 = scmp.ne.s32.totalorder %s65, %s67
      %p74 = scmp.eq.s32.totalorder %s15, 1
      %p75 = por %p73, %p74
      %p76 = scmp.ne.s32.totalorder %s67, %s68
      %p77 = scmp.eq.s32.totalorder %s15, 0
      %p78 = por %p76, %p77
      %p79 = scmp.ne.s32.totalorder %s67, %s68
      %p80 = scmp.eq.s32.totalorder %s16, 1
      %p81 = por %p79, %p80
      %p83 = scmp.ne.s32.totalorder %s68, %s82
      %p84 = scmp.eq.s32.totalorder %s16, 0
      %p85 = por %p83, %p84
      %s87 = sadd.s32 %s86, 1
      %p90 = scmp.eq.s32.totalorder %s10, 1
      %p91 = scmp.ne.s32.totalorder %s86, %s88
      %p92 = scmp.eq.s32.totalorder %s10, 0
      %p93 = por %p91, %p92
      %p94 = scmp.ne.s32.totalorder %s86, %s88
      %p95 = scmp.eq.s32.totalorder %s15, 1
      %p96 = por %p94, %p95
      %p97 = scmp.ne.s32.totalorder %s88, %s89
      %p98 = scmp.eq.s32.totalorder %s15, 0
      %p99 = por %p97, %p98
      %p100 = scmp.ne.s32.totalorder %s88, %s89
      %p101 = scmp.eq.s32.totalorder %s16, 1
      %p102 = por %p100, %p101
      %p104 = scmp.ne.s32.totalorder %s89, %s103
      %p105 = scmp.eq.s32.totalorder %s16, 0
      %p106 = por %p104, %p105
      %s107 = ssub.s32 %s10, %s17
      %p108 = scmp.eq.s32.totalorder %s107, 0
      %s110 = sadd.s32 %s109, 1
      %s111 = scalar_select %p108, %s109, %s110
      %p114 = pneg %p108
      %p115 = scmp.eq.s32.totalorder %s10, 1
      %p116 = por %p114, %p115
      %p117 = scmp.ne.s32.totalorder %s109, %s112
      %p118 = scmp.eq.s32.totalorder %s10, 0
      %p119 = por %p117, %p118
      %p120 = scmp.ne.s32.totalorder %s109, %s112
      %p121 = scmp.eq.s32.totalorder %s15, 1
      %p122 = por %p120, %p121
      %p123 = scmp.ne.s32.totalorder %s112, %s113
      %p124 = scmp.eq.s32.totalorder %s15, 0
      %p125 = por %p123, %p124
      %p126 = scmp.ne.s32.totalorder %s112, %s113
      %p127 = scmp.eq.s32.totalorder %s16, 1
      %p128 = por %p126, %p127
      %p130 = scmp.ne.s32.totalorder %s113, %s129
      %p131 = scmp.eq.s32.totalorder %s16, 0
      %p132 = por %p130, %p131
      %p133 = scmp.le.s32.totalorder 1, %s10
      %p134 = scmp.lt.s32.totalorder %s10, 3
      %p135 = pnand %p133, %p134
      %p136 = pneg %p135
      // Predicated region
      $region9: #{resnet_ghost_forward.20} parent=5 // pred_check
        _
      $region10: #{resnet_ghost_forward.20} parent=5 // pred_check_branch
        %138 = sbr.rel (%p135) target = $region12
      $region11: #{resnet_ghost_forward.20} parent=5 // pred_region
        %s139 = ssub.s32 %s10, 1
        // Predicated region
        $region13: #{resnet_ghost_forward.20} parent=11 // pred_check
          %p140 = pneg %p57
        $region14: #{resnet_ghost_forward.20} parent=11 // pred_check_branch
          %142 = sbr.rel (%p140) target = $region16
        $region15: #{resnet_ghost_forward.20} parent=11 // pred_region
          _
        $region16: #{resnet_ghost_forward.20} parent=11 // pred_fallthru
          _
        // Predicated region
        $region17: #{resnet_ghost_forward.20} parent=11 // pred_check
          %p143 = pneg %p78
        $region18: #{resnet_ghost_forward.20} parent=11 // pred_check_branch
          %145 = sbr.rel (%p143) target = $region20
        $region19: #{resnet_ghost_forward.20} parent=11 // pred_region
          _
        $region20: #{resnet_ghost_forward.20} parent=11 // pred_fallthru
          _
        // Predicated region
        $region21: #{resnet_ghost_forward.20} parent=11 // pred_check
          %p146 = pneg %p99
        $region22: #{resnet_ghost_forward.20} parent=11 // pred_check_branch
          %148 = sbr.rel (%p146) target = $region24
        $region23: #{resnet_ghost_forward.20} parent=11 // pred_region
          _
        $region24: #{resnet_ghost_forward.20} parent=11 // pred_fallthru
          _
      $region12: #{resnet_ghost_forward.20} parent=5 // pred_fallthru
        _
      %p149 = scmp.lt.s32.totalorder %s10, 2
      // Predicated region
      $region25: #{resnet_ghost_forward.20} parent=5 // pred_check
        %p150 = pneg %p149
      $region26: #{resnet_ghost_forward.20} parent=5 // pred_check_branch
        %152 = sbr.rel (%p150) target = $region28
      $region27: #{resnet_ghost_forward.20} parent=5 // pred_region
        // Predicated region
        $region29: #{resnet_ghost_forward.20} parent=27 // pred_check
          %p153 = pneg %p30
        $region30: #{resnet_ghost_forward.20} parent=27 // pred_check_branch
          %155 = sbr.rel (%p153) target = $region32
        $region31: #{resnet_ghost_forward.20} parent=27 // pred_region
          %s156 = sand.u32 %s20, 1
          %s157 = sand.u32 %s20, 1
          %s158 = smul.addr %s157, 36
          %s159 = scalar_lea.vmem [#allocation2], %s158
          %s160 = smul.u32 2, %s10
          %s161 = smul.addr %s160, 2
          %s162 = scalar_lea.vmem %s0, %s161
          // Predicated region
          $region33: #{resnet_ghost_forward.20} parent=31 // pred_check
            _
          $region34: #{resnet_ghost_forward.20} parent=31 // pred_check_branch
            %164 = sbr.rel (0) target = $region36
          $region35: #{resnet_ghost_forward.20} parent=31 // pred_region
            // Predicated region
            $region37: #{resnet_ghost_forward.20} parent=35 // pred_check
              _
            $region38: #{resnet_ghost_forward.20} parent=35 // pred_check_branch
              %166 = sbr.rel target = $region40
            $region39: #{resnet_ghost_forward.20} parent=35 // pred_region
              // Predicated region
              $region52: #{resnet_ghost_forward.20} parent=39 // pred_check
                _
              $region53: #{resnet_ghost_forward.20} parent=39 // pred_check_branch
                %198 = sbr.rel (0) target = $region55
              $region54: #{resnet_ghost_forward.20} parent=39 // pred_region
                loop: start=0, step=1, limit=1
                $region56: #{resnet_ghost_forward.20} parent=54 // loop_pre_header
                  _
                $region57: #{resnet_ghost_forward.20} parent=54 // loop_header
                  %s200 = sphi 0, %s204
                  %p201 = scmp.ge.s32.totalorder %s200, 1
                  %s205 = sphi %s162, %s162
                  %s206 = sphi %s159, %s159
                $region58: #{resnet_ghost_forward.20} parent=54 // loop_header_branch
                  %203 = sbr.rel (%p201) target = $region62
                $region59: #{resnet_ghost_forward.20} parent=54 // loop_body
                  _
                $region60: #{resnet_ghost_forward.20} parent=54 // loop_footer
                  %s204 = sadd.s32 1, %s200
                $region61: #{resnet_ghost_forward.20} parent=54 // loop_footer_branch
                  %199 = sbr.rel target = $region57
                $region62: #{resnet_ghost_forward.20} parent=54 // loop_exit
                  _
                %s208 = ssub.s32 16, 1
                loop: start=0, step=1, limit=1
                $region63: #{resnet_ghost_forward.20} parent=54 // loop_pre_header
                  _
                $region64: #{resnet_ghost_forward.20} parent=54 // loop_header
                  %s210 = sphi 0, %s214
                  %p211 = scmp.ge.s32.totalorder %s210, 1
                  %s215 = sphi %s162, %s162
                  %s216 = sphi %s159, %s159
                $region65: #{resnet_ghost_forward.20} parent=54 // loop_header_branch
                  %213 = sbr.rel (%p211) target = $region69
                $region66: #{resnet_ghost_forward.20} parent=54 // loop_body
                  %v217 = vld [vmem:[%s215] sm:%s208]
                  %218 = vst [vmem:[%s216] sm:%s208] %v217
                  %v219 = vld [vmem:[%s215 + $0x8] sm:%s208]
                  %220 = vst [vmem:[%s216 + $0x4] sm:%s208] %v219
                  %v221 = vld [vmem:[%s215 + $0x10] sm:%s208]
                  %222 = vst [vmem:[%s216 + $0x8] sm:%s208] %v221
                  %v223 = vld [vmem:[%s215 + $0x18] sm:%s208]
                  %224 = vst [vmem:[%s216 + $0xc] sm:%s208] %v223
                  %v225 = vld [vmem:[%s215 + $0x20] sm:%s208]
                  %226 = vst [vmem:[%s216 + $0x10] sm:%s208] %v225
                  %v227 = vld [vmem:[%s215 + $0x28] sm:%s208]
                  %228 = vst [vmem:[%s216 + $0x14] sm:%s208] %v227
                  %v229 = vld [vmem:[%s215 + $0x30] sm:%s208]
                  %230 = vst [vmem:[%s216 + $0x18] sm:%s208] %v229
                  %v231 = vld [vmem:[%s215 + $0x38] sm:%s208]
                  %232 = vst [vmem:[%s216 + $0x1c] sm:%s208] %v231
                  %v233 = vld [vmem:[%s215 + $0x40] sm:%s208]
                  %234 = vst [vmem:[%s216 + $0x20] sm:%s208] %v233
                $region67: #{resnet_ghost_forward.20} parent=54 // loop_footer
                  %s214 = sadd.s32 1, %s210
                $region68: #{resnet_ghost_forward.20} parent=54 // loop_footer_branch
                  %209 = sbr.rel target = $region64
                $region69: #{resnet_ghost_forward.20} parent=54 // loop_exit
                  _
              $region55: #{resnet_ghost_forward.20} parent=39 // pred_fallthru
                _
            $region40: #{resnet_ghost_forward.20} parent=35 // pred_fallthru
              _
            // Predicated region
            $region41: #{resnet_ghost_forward.20} parent=35 // pred_check
              _
            $region42: #{resnet_ghost_forward.20} parent=35 // pred_check_branch
              %168 = sbr.rel (0) target = $region44
            $region43: #{resnet_ghost_forward.20} parent=35 // pred_region
              %s170 = ssub.s32 16, 1
              loop: start=0, step=1, limit=1
              $region45: #{resnet_ghost_forward.20} parent=43 // loop_pre_header
                _
              $region46: #{resnet_ghost_forward.20} parent=43 // loop_header
                %s172 = sphi 0, %s176
                %p173 = scmp.ge.s32.totalorder %s172, 1
                %s177 = sphi %s162, %s162
                %s178 = sphi %s159, %s159
              $region47: #{resnet_ghost_forward.20} parent=43 // loop_header_branch
                %175 = sbr.rel (%p173) target = $region51
              $region48: #{resnet_ghost_forward.20} parent=43 // loop_body
                %v179 = vld [vmem:[%s177] sm:%s170]
                %180 = vst [vmem:[%s178] sm:%s170] %v179
                %v181 = vld [vmem:[%s177 + $0x8] sm:%s170]
                %182 = vst [vmem:[%s178 + $0x4] sm:%s170] %v181
                %v183 = vld [vmem:[%s177 + $0x10] sm:%s170]
                %184 = vst [vmem:[%s178 + $0x8] sm:%s170] %v183
                %v185 = vld [vmem:[%s177 + $0x18] sm:%s170]
                %186 = vst [vmem:[%s178 + $0xc] sm:%s170] %v185
                %v187 = vld [vmem:[%s177 + $0x20] sm:%s170]
                %188 = vst [vmem:[%s178 + $0x10] sm:%s170] %v187
                %v189 = vld [vmem:[%s177 + $0x28] sm:%s170]
                %190 = vst [vmem:[%s178 + $0x14] sm:%s170] %v189
                %v191 = vld [vmem:[%s177 + $0x30] sm:%s170]
                %192 = vst [vmem:[%s178 + $0x18] sm:%s170] %v191
                %v193 = vld [vmem:[%s177 + $0x38] sm:%s170]
                %194 = vst [vmem:[%s178 + $0x1c] sm:%s170] %v193
                %v195 = vld [vmem:[%s177 + $0x40] sm:%s170]
                %196 = vst [vmem:[%s178 + $0x20] sm:%s170] %v195
              $region49: #{resnet_ghost_forward.20} parent=43 // loop_footer
                %s176 = sadd.s32 1, %s172
              $region50: #{resnet_ghost_forward.20} parent=43 // loop_footer_branch
                %171 = sbr.rel target = $region46
              $region51: #{resnet_ghost_forward.20} parent=43 // loop_exit
                _
            $region44: #{resnet_ghost_forward.20} parent=35 // pred_fallthru
              _
          $region36: #{resnet_ghost_forward.20} parent=31 // pred_fallthru
            _
          %235 = vnop
        $region32: #{resnet_ghost_forward.20} parent=27 // pred_fallthru
          _
      $region28: #{resnet_ghost_forward.20} parent=5 // pred_fallthru
        _
      %p236 = scmp.le.s32.totalorder 1, %s10
      %p237 = scmp.lt.s32.totalorder %s10, 3
      %p238 = pnand %p236, %p237
      %p239 = pneg %p238
      // Predicated region
      $region70: #{resnet_ghost_forward.20} parent=5 // pred_check
        _
      $region71: #{resnet_ghost_forward.20} parent=5 // pred_check_branch
        %241 = sbr.rel (%p238) target = $region73
      $region72: #{resnet_ghost_forward.20} parent=5 // pred_region
        %s242 = ssub.s32 %s10, 1
        %s243 = sand.u32 %s23, 1
        %s244 = sand.u32 %s23, 1
        %s245 = smul.addr %s244, 36
        %s246 = scalar_lea.vmem [#allocation2], %s245
        // Predicated region
        $region74: #{resnet_ghost_forward.20} parent=72 // pred_check
          %p247 = pneg %p36
        $region75: #{resnet_ghost_forward.20} parent=72 // pred_check_branch
          %249 = sbr.rel (%p247) target = $region77
        $region76: #{resnet_ghost_forward.20} parent=72 // pred_region
          _
        $region77: #{resnet_ghost_forward.20} parent=72 // pred_fallthru
          _
        %s250 = sand.u32 %s23, 1
        %s251 = sand.u32 %s23, 1
        %s252 = smul.addr %s251, 36
        %s253 = scalar_lea.vmem [#allocation2], %s252
        %p254 = pneg %p36
        %p255 = pneg %p33
        %p256 = pneg %p57
        %p257 = pneg %p54
        %p258 = pneg %p78
        %p259 = pneg %p75
        %p260 = pneg %p99
        %p261 = pneg %p96
        %p262 = pneg %p125
        %p263 = pneg %p122
        %s264 = smul.u32 2, %s15
        %p265 = scmp.lt.s32.totalorder %s264, 3
        %s266 = scalar_select %p265, %s264, 3
        %s267 = smul.addr %s266, 2
        %s268 = scalar_lea.vmem %s4, %s267
        %s269 = smul.u32 2, %s15
        %s270 = smul.u32 2, %s15
        %p271 = scmp.lt.s32.totalorder %s270, 3
        %s272 = scalar_select %p271, %s270, 3
        %s273 = smul.addr %s272, 2
        %s274 = scalar_lea.vmem %s4, %s273
        %s275 = smul.u32 2, %s15
        %v276 = vld [vmem:[%s246] sm:$0xf]
        %v277 = vld [vmem:[%s1] sm:$0x3]
        %279 = vset.pattern.permute.xlu0 0
        %280 = vperm.xlu0 %279, %v277
        %v281 = vpop.permute.xlu0 %280
        %v283 = vunpack.c.l.s4 269488144
        %v284 = vunpack.c.0.s8 %v283
        %v285 = vperm.slane %v281, %v284
        %v287 = vmul.f32 %v276, %v285
        %s288 = scalar_lea.vmem %s246, 4 [#allocation2]
        %v289 = vld [vmem:[%s288] sm:$0xf]
        %s290 = scalar_lea.vmem %s1, 2
        %v291 = vld [vmem:[%s290] sm:$0x3]
        %293 = vset.pattern.permute.xlu0 0
        %294 = vperm.xlu0 %293, %v291
        %v295 = vpop.permute.xlu0 %294
        %v297 = vunpack.c.l.s4 269488144
        %v298 = vunpack.c.0.s8 %v297
        %v299 = vperm.slane %v295, %v298
        %v301 = vmul.f32 %v289, %v299
        %v302 = vadd.f32 %v287, %v301
        %s303 = scalar_lea.vmem %s246, 8 [#allocation2]
        %v304 = vld [vmem:[%s303] sm:$0xf]
        %s305 = scalar_lea.vmem %s1, 4
        %v306 = vld [vmem:[%s305] sm:$0x3]
        %308 = vset.pattern.permute.xlu0 0
        %309 = vperm.xlu0 %308, %v306
        %v310 = vpop.permute.xlu0 %309
        %v312 = vunpack.c.l.s4 269488144
        %v313 = vunpack.c.0.s8 %v312
        %v314 = vperm.slane %v310, %v313
        %v316 = vmul.f32 %v304, %v314
        %v317 = vadd.f32 %v302, %v316
        %s318 = scalar_lea.vmem %s246, 12 [#allocation2]
        %v319 = vld [vmem:[%s318] sm:$0xf]
        %s320 = scalar_lea.vmem %s1, 6
        %v321 = vld [vmem:[%s320] sm:$0x3]
        %323 = vset.pattern.permute.xlu0 0
        %324 = vperm.xlu0 %323, %v321
        %v325 = vpop.permute.xlu0 %324
        %v327 = vunpack.c.l.s4 269488144
        %v328 = vunpack.c.0.s8 %v327
        %v329 = vperm.slane %v325, %v328
        %v331 = vmul.f32 %v319, %v329
        %v332 = vadd.f32 %v317, %v331
        %s333 = scalar_lea.vmem %s246, 16 [#allocation2]
        %v334 = vld [vmem:[%s333] sm:$0xf]
        %s335 = scalar_lea.vmem %s1, 8
        %v336 = vld [vmem:[%s335] sm:$0x3]
        %338 = vset.pattern.permute.xlu0 0
        %339 = vperm.xlu0 %338, %v336
        %v340 = vpop.permute.xlu0 %339
        %v342 = vunpack.c.l.s4 269488144
        %v343 = vunpack.c.0.s8 %v342
        %v344 = vperm.slane %v340, %v343
        %v346 = vmul.f32 %v334, %v344
        %v347 = vadd.f32 %v332, %v346
        %s348 = scalar_lea.vmem %s246, 20 [#allocation2]
        %v349 = vld [vmem:[%s348] sm:$0xf]
        %s350 = scalar_lea.vmem %s1, 10
        %v351 = vld [vmem:[%s350] sm:$0x3]
        %353 = vset.pattern.permute.xlu0 0
        %354 = vperm.xlu0 %353, %v351
        %v355 = vpop.permute.xlu0 %354
        %v357 = vunpack.c.l.s4 269488144
        %v358 = vunpack.c.0.s8 %v357
        %v359 = vperm.slane %v355, %v358
        %v361 = vmul.f32 %v349, %v359
        %v362 = vadd.f32 %v347, %v361
        %s363 = scalar_lea.vmem %s246, 24 [#allocation2]
        %v364 = vld [vmem:[%s363] sm:$0xf]
        %s365 = scalar_lea.vmem %s1, 12
        %v366 = vld [vmem:[%s365] sm:$0x3]
        %368 = vset.pattern.permute.xlu0 0
        %369 = vperm.xlu0 %368, %v366
        %v370 = vpop.permute.xlu0 %369
        %v372 = vunpack.c.l.s4 269488144
        %v373 = vunpack.c.0.s8 %v372
        %v374 = vperm.slane %v370, %v373
        %v376 = vmul.f32 %v364, %v374
        %v377 = vadd.f32 %v362, %v376
        %s378 = scalar_lea.vmem %s246, 28 [#allocation2]
        %v379 = vld [vmem:[%s378] sm:$0xf]
        %s380 = scalar_lea.vmem %s1, 14
        %v381 = vld [vmem:[%s380] sm:$0x3]
        %383 = vset.pattern.permute.xlu0 0
        %384 = vperm.xlu0 %383, %v381
        %v385 = vpop.permute.xlu0 %384
        %v387 = vunpack.c.l.s4 269488144
        %v388 = vunpack.c.0.s8 %v387
        %v389 = vperm.slane %v385, %v388
        %v391 = vmul.f32 %v379, %v389
        %v392 = vadd.f32 %v377, %v391
        %s393 = scalar_lea.vmem %s246, 32 [#allocation2]
        %v394 = vld [vmem:[%s393] sm:$0xf]
        %s395 = scalar_lea.vmem %s1, 16
        %v396 = vld [vmem:[%s395] sm:$0x3]
        %398 = vset.pattern.permute.xlu0 0
        %399 = vperm.xlu0 %398, %v396
        %v400 = vpop.permute.xlu0 %399
        %v402 = vunpack.c.l.s4 269488144
        %v403 = vunpack.c.0.s8 %v402
        %v404 = vperm.slane %v400, %v403
        %v406 = vmul.f32 %v394, %v404
        %v407 = vadd.f32 %v392, %v406
        %v408 = vld [vmem:[%s2] sm:$0x3]
        %410 = vset.pattern.permute.xlu0 0
        %411 = vperm.xlu0 %410, %v408
        %v412 = vpop.permute.xlu0 %411
        %v414 = vunpack.c.l.s4 269488144
        %v415 = vunpack.c.0.s8 %v414
        %v416 = vperm.slane %v412, %v415
        %v418 = vmul.f32 %v407, %v416
        %v419 = vld [vmem:[%s3] sm:$0x3]
        %421 = vset.pattern.permute.xlu0 0
        %422 = vperm.xlu0 %421, %v419
        %v423 = vpop.permute.xlu0 %422
        %v425 = vunpack.c.l.s4 269488144
        %v426 = vunpack.c.0.s8 %v425
        %v427 = vperm.slane %v423, %v426
        %v429 = vadd.f32 %v418, %v427
        %430 = vst [vmem:[%s274] sm:$0xf] %v429
        %s431 = smul.u32 2, %s15
        %p432 = scmp.lt.s32.totalorder %s431, 3
        %s433 = scalar_select %p432, %s431, 3
        %s434 = smul.addr %s433, 2
        %s435 = scalar_lea.vmem %s4, %s434
        // Predicated region
        $region78: #{resnet_ghost_forward.20} parent=72 // pred_check
          %p436 = pneg %p122
        $region79: #{resnet_ghost_forward.20} parent=72 // pred_check_branch
          %438 = sbr.rel (%p436) target = $region81
        $region80: #{resnet_ghost_forward.20} parent=72 // pred_region
          %s439 = smul.u32 2, %s15
        $region81: #{resnet_ghost_forward.20} parent=72 // pred_fallthru
          _
      $region73: #{resnet_ghost_forward.20} parent=5 // pred_fallthru
        _
      %p440 = scmp.le.s32.totalorder 2, %s10
      // Predicated region
      $region82: #{resnet_ghost_forward.20} parent=5 // pred_check
        %p441 = pneg %p440
      $region83: #{resnet_ghost_forward.20} parent=5 // pred_check_branch
        %443 = sbr.rel (%p441) target = $region85
      $region84: #{resnet_ghost_forward.20} parent=5 // pred_region
        %s444 = ssub.s32 %s10, 2
        // Predicated region
        $region86: #{resnet_ghost_forward.20} parent=84 // pred_check
          %p445 = pneg %p128
        $region87: #{resnet_ghost_forward.20} parent=84 // pred_check_branch
          %447 = sbr.rel (%p445) target = $region89
        $region88: #{resnet_ghost_forward.20} parent=84 // pred_region
          %s448 = smul.u32 2, %s16
          %p449 = scmp.lt.s32.totalorder %s448, 3
          %s450 = scalar_select %p449, %s448, 3
          %s451 = smul.addr %s450, 2
          %s452 = scalar_lea.vmem %s4, %s451
        $region89: #{resnet_ghost_forward.20} parent=84 // pred_fallthru
          _
      $region85: #{resnet_ghost_forward.20} parent=5 // pred_fallthru
        _
    $region6: #{resnet_ghost_forward.20} parent=1 // loop_footer
      %s14 = sadd.s32 1, %s10
    $region7: #{resnet_ghost_forward.20} parent=1 // loop_footer_branch
      %9 = sbr.rel target = $region3
    $region8: #{resnet_ghost_forward.20} parent=1 // loop_exit
      _

// kernel: resnet_ghost_forward.21
$region0: #{resnet_ghost_forward.21}
  #allocation0 [shape = 'u32[]', space=smem, size = 0x4, offset = 0x4, fixed_abs, tag = 'smem constant byte address 0x4 - core index']
  #allocation1 [shape = 'u32[72,128]{1,0:T(1,128)}', space=vmem, size = 0x9000, scoped, tag = 'internal scratch']
  %s0 = inlined_call_operand.vmem [shape: f32[9,2,512], index: 0, kind: input, shape index: {}]
  %s1 = inlined_call_operand.vmem [shape: f32[9,2,9], index: 1, kind: input, shape index: {}]
  %s2 = inlined_call_operand.vmem [shape: f32[2,9,1], index: 2, kind: input, shape index: {}]
  %s3 = inlined_call_operand.vmem [shape: f32[2,9,1], index: 3, kind: input, shape index: {}]
  %s4 = inlined_call_operand.vmem [shape: f32[2,9,512], index: 4, kind: output, shape index: {}]
  %s5 = sld [smem:[#allocation0]]
  $region109: #{resnet_ghost_forward.21} parent=0
    _
  %s7 = ssub.s32 1, %s5
  %s8 = scalar_select 0, %s7, %s5
  $region1: #{resnet_ghost_forward.21} parent=0
    #allocation2 [shape = 'u8[36864]{0}', space=vmem, size = 0x9000, scoped, tag = 'input window, operand 0']
    #allocation3 [shape = 'u8[65536]{0}', space=vmem, size = 0x10000, scoped, tag = 'output window, operand 0']
    loop: start=0, step=1, limit=4
    $region2: #{resnet_ghost_forward.21} parent=1 // loop_pre_header
      _
    $region3: #{resnet_ghost_forward.21} parent=1 // loop_header
      %s10 = sphi 0, %s14
      %p11 = scmp.ge.s32.totalorder %s10, 4
      %s20 = sphi 0, %s22
      %s23 = sphi 0, %s20
      %s24 = sphi 0, %s23
      %s40 = sphi 0, %s24
      %s44 = sphi 0, %s44
      %s46 = sphi 0, %s44
      %s47 = sphi 0, %s46
      %s61 = sphi 0, %s47
      %s65 = sphi 0, %s65
      %s67 = sphi 0, %s65
      %s68 = sphi 0, %s67
      %s82 = sphi 0, %s68
      %s86 = sphi 0, %s86
      %s88 = sphi 0, %s86
      %s89 = sphi 0, %s88
      %s103 = sphi 0, %s89
      %s109 = sphi 0, %s111
      %s112 = sphi 0, %s109
      %s113 = sphi 0, %s112
      %s129 = sphi 0, %s113
    $region4: #{resnet_ghost_forward.21} parent=1 // loop_header_branch
      %13 = sbr.rel (%p11) target = $region8
    $region5: #{resnet_ghost_forward.21} parent=1 // loop_body
      %s15 = ssub.s32 %s10, 1
      %s16 = ssub.s32 %s10, 2
      %s17 = sadd.s32 %s10, 1
      %s18 = ssub.s32 %s10, %s17
      %p19 = scmp.eq.s32.totalorder %s18, 0
      %s21 = sadd.s32 %s20, 1
      %s22 = scalar_select %p19, %s20, %s21
      %p25 = pneg %p19
      %p26 = scmp.eq.s32.totalorder %s10, 1
      %p27 = por %p25, %p26
      %p28 = scmp.ne.s32.totalorder %s20, %s23
      %p29 = scmp.eq.s32.totalorder %s10, 0
      %p30 = por %p28, %p29
      %p31 = scmp.ne.s32.totalorder %s20, %s23
      %p32 = scmp.eq.s32.totalorder %s15, 1
      %p33 = por %p31, %p32
      %p34 = scmp.ne.s32.totalorder %s23, %s24
      %p35 = scmp.eq.s32.totalorder %s15, 0
      %p36 = por %p34, %p35
      %p37 = scmp.ne.s32.totalorder %s23, %s24
      %p38 = scmp.eq.s32.totalorder %s16, 1
      %p39 = por %p37, %p38
      %p41 = scmp.ne.s32.totalorder %s24, %s40
      %p42 = scmp.eq.s32.totalorder %s16, 0
      %p43 = por %p41, %p42
      %s45 = sadd.s32 %s44, 1
      %p48 = scmp.eq.s32.totalorder %s10, 1
      %p49 = scmp.ne.s32.totalorder %s44, %s46
      %p50 = scmp.eq.s32.totalorder %s10, 0
      %p51 = por %p49, %p50
      %p52 = scmp.ne.s32.totalorder %s44, %s46
      %p53 = scmp.eq.s32.totalorder %s15, 1
      %p54 = por %p52, %p53
      %p55 = scmp.ne.s32.totalorder %s46, %s47
      %p56 = scmp.eq.s32.totalorder %s15, 0
      %p57 = por %p55, %p56
      %p58 = scmp.ne.s32.totalorder %s46, %s47
      %p59 = scmp.eq.s32.totalorder %s16, 1
      %p60 = por %p58, %p59
      %p62 = scmp.ne.s32.totalorder %s47, %s61
      %p63 = scmp.eq.s32.totalorder %s16, 0
      %p64 = por %p62, %p63
      %s66 = sadd.s32 %s65, 1
      %p69 = scmp.eq.s32.totalorder %s10, 1
      %p70 = scmp.ne.s32.totalorder %s65, %s67
      %p71 = scmp.eq.s32.totalorder %s10, 0
      %p72 = por %p70, %p71
      %p73 = scmp.ne.s32.totalorder %s65, %s67
      %p74 = scmp.eq.s32.totalorder %s15, 1
      %p75 = por %p73, %p74
      %p76 = scmp.ne.s32.totalorder %s67, %s68
      %p77 = scmp.eq.s32.totalorder %s15, 0
      %p78 = por %p76, %p77
      %p79 = scmp.ne.s32.totalorder %s67, %s68
      %p80 = scmp.eq.s32.totalorder %s16, 1
      %p81 = por %p79, %p80
      %p83 = scmp.ne.s32.totalorder %s68, %s82
      %p84 = scmp.eq.s32.totalorder %s16, 0
      %p85 = por %p83, %p84
      %s87 = sadd.s32 %s86, 1
      %p90 = scmp.eq.s32.totalorder %s10, 1
      %p91 = scmp.ne.s32.totalorder %s86, %s88
      %p92 = scmp.eq.s32.totalorder %s10, 0
      %p93 = por %p91, %p92
      %p94 = scmp.ne.s32.totalorder %s86, %s88
      %p95 = scmp.eq.s32.totalorder %s15, 1
      %p96 = por %p94, %p95
      %p97 = scmp.ne.s32.totalorder %s88, %s89
      %p98 = scmp.eq.s32.totalorder %s15, 0
      %p99 = por %p97, %p98
      %p100 = scmp.ne.s32.totalorder %s88, %s89
      %p101 = scmp.eq.s32.totalorder %s16, 1
      %p102 = por %p100, %p101
      %p104 = scmp.ne.s32.totalorder %s89, %s103
      %p105 = scmp.eq.s32.totalorder %s16, 0
      %p106 = por %p104, %p105
      %s107 = ssub.s32 %s10, %s17
      %p108 = scmp.eq.s32.totalorder %s107, 0
      %s110 = sadd.s32 %s109, 1
      %s111 = scalar_select %p108, %s109, %s110
      %p114 = pneg %p108
      %p115 = scmp.eq.s32.totalorder %s10, 1
      %p116 = por %p114, %p115
      %p117 = scmp.ne.s32.totalorder %s109, %s112
      %p118 = scmp.eq.s32.totalorder %s10, 0
      %p119 = por %p117, %p118
      %p120 = scmp.ne.s32.totalorder %s109, %s112
      %p121 = scmp.eq.s32.totalorder %s15, 1
      %p122 = por %p120, %p121
      %p123 = scmp.ne.s32.totalorder %s112, %s113
      %p124 = scmp.eq.s32.totalorder %s15, 0
      %p125 = por %p123, %p124
      %p126 = scmp.ne.s32.totalorder %s112, %s113
      %p127 = scmp.eq.s32.totalorder %s16, 1
      %p128 = por %p126, %p127
      %p130 = scmp.ne.s32.totalorder %s113, %s129
      %p131 = scmp.eq.s32.totalorder %s16, 0
      %p132 = por %p130, %p131
      %p133 = scmp.le.s32.totalorder 1, %s10
      %p134 = scmp.lt.s32.totalorder %s10, 3
      %p135 = pnand %p133, %p134
      %p136 = pneg %p135
      // Predicated region
      $region9: #{resnet_ghost_forward.21} parent=5 // pred_check
        _
      $region10: #{resnet_ghost_forward.21} parent=5 // pred_check_branch
        %138 = sbr.rel (%p135) target = $region12
      $region11: #{resnet_ghost_forward.21} parent=5 // pred_region
        %s139 = ssub.s32 %s10, 1
        // Predicated region
        $region13: #{resnet_ghost_forward.21} parent=11 // pred_check
          %p140 = pneg %p57
        $region14: #{resnet_ghost_forward.21} parent=11 // pred_check_branch
          %142 = sbr.rel (%p140) target = $region16
        $region15: #{resnet_ghost_forward.21} parent=11 // pred_region
          _
        $region16: #{resnet_ghost_forward.21} parent=11 // pred_fallthru
          _
        // Predicated region
        $region17: #{resnet_ghost_forward.21} parent=11 // pred_check
          %p143 = pneg %p78
        $region18: #{resnet_ghost_forward.21} parent=11 // pred_check_branch
          %145 = sbr.rel (%p143) target = $region20
        $region19: #{resnet_ghost_forward.21} parent=11 // pred_region
          _
        $region20: #{resnet_ghost_forward.21} parent=11 // pred_fallthru
          _
        // Predicated region
        $region21: #{resnet_ghost_forward.21} parent=11 // pred_check
          %p146 = pneg %p99
        $region22: #{resnet_ghost_forward.21} parent=11 // pred_check_branch
          %148 = sbr.rel (%p146) target = $region24
        $region23: #{resnet_ghost_forward.21} parent=11 // pred_region
          _
        $region24: #{resnet_ghost_forward.21} parent=11 // pred_fallthru
          _
      $region12: #{resnet_ghost_forward.21} parent=5 // pred_fallthru
        _
      %p149 = scmp.lt.s32.totalorder %s10, 2
      // Predicated region
      $region25: #{resnet_ghost_forward.21} parent=5 // pred_check
        %p150 = pneg %p149
      $region26: #{resnet_ghost_forward.21} parent=5 // pred_check_branch
        %152 = sbr.rel (%p150) target = $region28
      $region27: #{resnet_ghost_forward.21} parent=5 // pred_region
        // Predicated region
        $region29: #{resnet_ghost_forward.21} parent=27 // pred_check
          %p153 = pneg %p30
        $region30: #{resnet_ghost_forward.21} parent=27 // pred_check_branch
          %155 = sbr.rel (%p153) target = $region32
        $region31: #{resnet_ghost_forward.21} parent=27 // pred_region
          %s156 = sand.u32 %s20, 1
          %s157 = sand.u32 %s20, 1
          %s158 = smul.addr %s157, 36
          %s159 = scalar_lea.vmem [#allocation2], %s158
          %s160 = smul.u32 2, %s10
          %s161 = smul.addr %s160, 2
          %s162 = scalar_lea.vmem %s0, %s161
          // Predicated region
          $region33: #{resnet_ghost_forward.21} parent=31 // pred_check
            _
          $region34: #{resnet_ghost_forward.21} parent=31 // pred_check_branch
            %164 = sbr.rel (0) target = $region36
          $region35: #{resnet_ghost_forward.21} parent=31 // pred_region
            // Predicated region
            $region37: #{resnet_ghost_forward.21} parent=35 // pred_check
              _
            $region38: #{resnet_ghost_forward.21} parent=35 // pred_check_branch
              %166 = sbr.rel target = $region40
            $region39: #{resnet_ghost_forward.21} parent=35 // pred_region
              // Predicated region
              $region52: #{resnet_ghost_forward.21} parent=39 // pred_check
                _
              $region53: #{resnet_ghost_forward.21} parent=39 // pred_check_branch
                %198 = sbr.rel (0) target = $region55
              $region54: #{resnet_ghost_forward.21} parent=39 // pred_region
                loop: start=0, step=1, limit=1
                $region56: #{resnet_ghost_forward.21} parent=54 // loop_pre_header
                  _
                $region57: #{resnet_ghost_forward.21} parent=54 // loop_header
                  %s200 = sphi 0, %s204
                  %p201 = scmp.ge.s32.totalorder %s200, 1
                  %s205 = sphi %s162, %s162
                  %s206 = sphi %s159, %s159
                $region58: #{resnet_ghost_forward.21} parent=54 // loop_header_branch
                  %203 = sbr.rel (%p201) target = $region62
                $region59: #{resnet_ghost_forward.21} parent=54 // loop_body
                  _
                $region60: #{resnet_ghost_forward.21} parent=54 // loop_footer
                  %s204 = sadd.s32 1, %s200
                $region61: #{resnet_ghost_forward.21} parent=54 // loop_footer_branch
                  %199 = sbr.rel target = $region57
                $region62: #{resnet_ghost_forward.21} parent=54 // loop_exit
                  _
                %s208 = ssub.s32 16, 1
                loop: start=0, step=1, limit=1
                $region63: #{resnet_ghost_forward.21} parent=54 // loop_pre_header
                  _
                $region64: #{resnet_ghost_forward.21} parent=54 // loop_header
                  %s210 = sphi 0, %s214
                  %p211 = scmp.ge.s32.totalorder %s210, 1
                  %s215 = sphi %s162, %s162
                  %s216 = sphi %s159, %s159
                $region65: #{resnet_ghost_forward.21} parent=54 // loop_header_branch
                  %213 = sbr.rel (%p211) target = $region69
                $region66: #{resnet_ghost_forward.21} parent=54 // loop_body
                  %v217 = vld [vmem:[%s215] sm:%s208]
                  %218 = vst [vmem:[%s216] sm:%s208] %v217
                  %v219 = vld [vmem:[%s215 + $0x8] sm:%s208]
                  %220 = vst [vmem:[%s216 + $0x4] sm:%s208] %v219
                  %v221 = vld [vmem:[%s215 + $0x10] sm:%s208]
                  %222 = vst [vmem:[%s216 + $0x8] sm:%s208] %v221
                  %v223 = vld [vmem:[%s215 + $0x18] sm:%s208]
                  %224 = vst [vmem:[%s216 + $0xc] sm:%s208] %v223
                  %v225 = vld [vmem:[%s215 + $0x20] sm:%s208]
                  %226 = vst [vmem:[%s216 + $0x10] sm:%s208] %v225
                  %v227 = vld [vmem:[%s215 + $0x28] sm:%s208]
                  %228 = vst [vmem:[%s216 + $0x14] sm:%s208] %v227
                  %v229 = vld [vmem:[%s215 + $0x30] sm:%s208]
                  %230 = vst [vmem:[%s216 + $0x18] sm:%s208] %v229
                  %v231 = vld [vmem:[%s215 + $0x38] sm:%s208]
                  %232 = vst [vmem:[%s216 + $0x1c] sm:%s208] %v231
                  %v233 = vld [vmem:[%s215 + $0x40] sm:%s208]
                  %234 = vst [vmem:[%s216 + $0x20] sm:%s208] %v233
                $region67: #{resnet_ghost_forward.21} parent=54 // loop_footer
                  %s214 = sadd.s32 1, %s210
                $region68: #{resnet_ghost_forward.21} parent=54 // loop_footer_branch
                  %209 = sbr.rel target = $region64
                $region69: #{resnet_ghost_forward.21} parent=54 // loop_exit
                  _
              $region55: #{resnet_ghost_forward.21} parent=39 // pred_fallthru
                _
            $region40: #{resnet_ghost_forward.21} parent=35 // pred_fallthru
              _
            // Predicated region
            $region41: #{resnet_ghost_forward.21} parent=35 // pred_check
              _
            $region42: #{resnet_ghost_forward.21} parent=35 // pred_check_branch
              %168 = sbr.rel (0) target = $region44
            $region43: #{resnet_ghost_forward.21} parent=35 // pred_region
              %s170 = ssub.s32 16, 1
              loop: start=0, step=1, limit=1
              $region45: #{resnet_ghost_forward.21} parent=43 // loop_pre_header
                _
              $region46: #{resnet_ghost_forward.21} parent=43 // loop_header
                %s172 = sphi 0, %s176
                %p173 = scmp.ge.s32.totalorder %s172, 1
                %s177 = sphi %s162, %s162
                %s178 = sphi %s159, %s159
              $region47: #{resnet_ghost_forward.21} parent=43 // loop_header_branch
                %175 = sbr.rel (%p173) target = $region51
              $region48: #{resnet_ghost_forward.21} parent=43 // loop_body
                %v179 = vld [vmem:[%s177] sm:%s170]
                %180 = vst [vmem:[%s178] sm:%s170] %v179
                %v181 = vld [vmem:[%s177 + $0x8] sm:%s170]
                %182 = vst [vmem:[%s178 + $0x4] sm:%s170] %v181
                %v183 = vld [vmem:[%s177 + $0x10] sm:%s170]
                %184 = vst [vmem:[%s178 + $0x8] sm:%s170] %v183
                %v185 = vld [vmem:[%s177 + $0x18] sm:%s170]
                %186 = vst [vmem:[%s178 + $0xc] sm:%s170] %v185
                %v187 = vld [vmem:[%s177 + $0x20] sm:%s170]
                %188 = vst [vmem:[%s178 + $0x10] sm:%s170] %v187
                %v189 = vld [vmem:[%s177 + $0x28] sm:%s170]
                %190 = vst [vmem:[%s178 + $0x14] sm:%s170] %v189
                %v191 = vld [vmem:[%s177 + $0x30] sm:%s170]
                %192 = vst [vmem:[%s178 + $0x18] sm:%s170] %v191
                %v193 = vld [vmem:[%s177 + $0x38] sm:%s170]
                %194 = vst [vmem:[%s178 + $0x1c] sm:%s170] %v193
                %v195 = vld [vmem:[%s177 + $0x40] sm:%s170]
                %196 = vst [vmem:[%s178 + $0x20] sm:%s170] %v195
              $region49: #{resnet_ghost_forward.21} parent=43 // loop_footer
                %s176 = sadd.s32 1, %s172
              $region50: #{resnet_ghost_forward.21} parent=43 // loop_footer_branch
                %171 = sbr.rel target = $region46
              $region51: #{resnet_ghost_forward.21} parent=43 // loop_exit
                _
            $region44: #{resnet_ghost_forward.21} parent=35 // pred_fallthru
              _
          $region36: #{resnet_ghost_forward.21} parent=31 // pred_fallthru
            _
          %235 = vnop
        $region32: #{resnet_ghost_forward.21} parent=27 // pred_fallthru
          _
      $region28: #{resnet_ghost_forward.21} parent=5 // pred_fallthru
        _
      %p236 = scmp.le.s32.totalorder 1, %s10
      %p237 = scmp.lt.s32.totalorder %s10, 3
      %p238 = pnand %p236, %p237
      %p239 = pneg %p238
      // Predicated region
      $region70: #{resnet_ghost_forward.21} parent=5 // pred_check
        _
      $region71: #{resnet_ghost_forward.21} parent=5 // pred_check_branch
        %241 = sbr.rel (%p238) target = $region73
      $region72: #{resnet_ghost_forward.21} parent=5 // pred_region
        %s242 = ssub.s32 %s10, 1
        %s243 = sand.u32 %s23, 1
        %s244 = sand.u32 %s23, 1
        %s245 = smul.addr %s244, 36
        %s246 = scalar_lea.vmem [#allocation2], %s245
        // Predicated region
        $region74: #{resnet_ghost_forward.21} parent=72 // pred_check
          %p247 = pneg %p36
        $region75: #{resnet_ghost_forward.21} parent=72 // pred_check_branch
          %249 = sbr.rel (%p247) target = $region77
        $region76: #{resnet_ghost_forward.21} parent=72 // pred_region
          _
        $region77: #{resnet_ghost_forward.21} parent=72 // pred_fallthru
          _
        %s250 = sand.u32 %s23, 1
        %s251 = sand.u32 %s23, 1
        %s252 = smul.addr %s251, 36
        %s253 = scalar_lea.vmem [#allocation2], %s252
        %p254 = pneg %p36
        %p255 = pneg %p33
        %p256 = pneg %p57
        %p257 = pneg %p54
        %p258 = pneg %p78
        %p259 = pneg %p75
        %p260 = pneg %p99
        %p261 = pneg %p96
        %p262 = pneg %p125
        %p263 = pneg %p122
        %s264 = sand.u32 %s112, 1
        %s265 = sand.u32 %s112, 1
        %s266 = smul.addr %s265, 64
        %s267 = scalar_lea.vmem [#allocation3], %s266
        %s268 = smul.u32 2, %s15
        %s269 = smul.u32 2, %s15
        %v270 = vld [vmem:[%s246] sm:$0xf]
        %v272 = vrot.slane %v270, 1
        %v273 = vrot.slane %v270, 2
        %v274 = vrot.slane %v270, 3
        %vm275 = vcmask 1040384
        %v276 = vsel %vm275, %v270, %v272
        %vm277 = vcmask 1042434
        %v278 = vsel %vm277, %v273, %v274
        %vm279 = vcmask 1041408
        %v280 = vsel %vm279, %v276, %v278
        %vm281 = vcmask 1041409
        %v282 = vsel %vm281, %v270, %v272
        %vm283 = vcmask 1043459
        %v284 = vsel %vm283, %v273, %v274
        %vm285 = vcmask 1042433
        %v286 = vsel %vm285, %v282, %v284
        %v287 = vrot.slane %v286, 1
        %v288 = vld [vmem:[%s1] sm:$0x3]
        %v289 = vperm.slane %v288, 0
        %v290 = vlaneseq
        %v291 = vshrl.u32 %v290, 7
        %293 = vset.pattern.permute.xlu0 %v291
        %294 = vperm.xlu0 %293, %v289
        %v295 = vpop.permute.xlu0 %294
        %v296 = vlaneseq
        %v297 = vshrl.u32 %v296, 7
        %v298 = vadd.s32 %v297, 8
        %299 = vset.pattern.permute.xlu0 %v298
        %300 = vperm.xlu0 %299, %v289
        %v301 = vpop.permute.xlu0 %300
        %v302 = vperm.slane %v288, 1
        %v303 = vlaneseq
        %v304 = vshrl.u32 %v303, 7
        %306 = vset.pattern.permute.xlu0 %v304
        %307 = vperm.xlu0 %306, %v302
        %v308 = vpop.permute.xlu0 %307
        %v309 = vlaneseq
        %v310 = vshrl.u32 %v309, 7
        %v311 = vadd.s32 %v310, 8
        %312 = vset.pattern.permute.xlu0 %v311
        %313 = vperm.xlu0 %312, %v302
        %v314 = vpop.permute.xlu0 %313
        %v315 = vperm.slane %v280, 0
        %v316 = vperm.slane %v280, 1
        %v317 = vperm.slane %v287, 0
        %v318 = vperm.slane %v287, 1
        %v323 = vsub.f32 %v315, %v295
        %v324 = vsub.f32 %v316, %v295
        %v325 = vsub.f32 %v315, %v301
        %v326 = vsub.f32 %v316, %v301
        %v327 = vsub.f32 %v317, %v308
        %v328 = vsub.f32 %v318, %v308
        %v329 = vsub.f32 %v317, %v314
        %v330 = vsub.f32 %v318, %v314
        %v331 = vand.u32 2147483647, %v323
        %v332 = vand.u32 2147483647, %v324
        %v333 = vand.u32 2147483647, %v325
        %v334 = vand.u32 2147483647, %v326
        %v335 = vand.u32 2147483647, %v327
        %v336 = vand.u32 2147483647, %v328
        %v337 = vand.u32 2147483647, %v329
        %v338 = vand.u32 2147483647, %v330
        %s339 = scalar_lea.vmem %s246, 4 [#allocation2]
        %v340 = vld [vmem:[%s339] sm:$0xf]
        %v342 = vrot.slane %v340, 1
        %v343 = vrot.slane %v340, 2
        %v344 = vrot.slane %v340, 3
        %v345 = vsel %vm275, %v340, %v342
        %v346 = vsel %vm277, %v343, %v344
        %v347 = vsel %vm279, %v345, %v346
        %v348 = vsel %vm281, %v340, %v342
        %v349 = vsel %vm283, %v343, %v344
        %v350 = vsel %vm285, %v348, %v349
        %v351 = vrot.slane %v350, 1
        %s352 = scalar_lea.vmem %s1, 2
        %v353 = vld [vmem:[%s352] sm:$0x3]
        %v354 = vperm.slane %v353, 0
        %v355 = vlaneseq
        %v356 = vshrl.u32 %v355, 7
        %358 = vset.pattern.permute.xlu0 %v356
        %359 = vperm.xlu0 %358, %v354
        %v360 = vpop.permute.xlu0 %359
        %v361 = vlaneseq
        %v362 = vshrl.u32 %v361, 7
        %v363 = vadd.s32 %v362, 8
        %364 = vset.pattern.permute.xlu0 %v363
        %365 = vperm.xlu0 %364, %v354
        %v366 = vpop.permute.xlu0 %365
        %v367 = vperm.slane %v353, 1
        %v368 = vlaneseq
        %v369 = vshrl.u32 %v368, 7
        %371 = vset.pattern.permute.xlu0 %v369
        %372 = vperm.xlu0 %371, %v367
        %v373 = vpop.permute.xlu0 %372
        %v374 = vlaneseq
        %v375 = vshrl.u32 %v374, 7
        %v376 = vadd.s32 %v375, 8
        %377 = vset.pattern.permute.xlu0 %v376
        %378 = vperm.xlu0 %377, %v367
        %v379 = vpop.permute.xlu0 %378
        %v380 = vperm.slane %v347, 0
        %v381 = vperm.slane %v347, 1
        %v382 = vperm.slane %v351, 0
        %v383 = vperm.slane %v351, 1
        %v388 = vsub.f32 %v380, %v360
        %v389 = vsub.f32 %v381, %v360
        %v390 = vsub.f32 %v380, %v366
        %v391 = vsub.f32 %v381, %v366
        %v392 = vsub.f32 %v382, %v373
        %v393 = vsub.f32 %v383, %v373
        %v394 = vsub.f32 %v382, %v379
        %v395 = vsub.f32 %v383, %v379
        %v396 = vand.u32 2147483647, %v388
        %v397 = vand.u32 2147483647, %v389
        %v398 = vand.u32 2147483647, %v390
        %v399 = vand.u32 2147483647, %v391
        %v400 = vand.u32 2147483647, %v392
        %v401 = vand.u32 2147483647, %v393
        %v402 = vand.u32 2147483647, %v394
        %v403 = vand.u32 2147483647, %v395
        %v404 = vadd.f32 %v331, %v396
        %v405 = vadd.f32 %v332, %v397
        %v406 = vadd.f32 %v333, %v398
        %v407 = vadd.f32 %v334, %v399
        %v408 = vadd.f32 %v335, %v400
        %v409 = vadd.f32 %v336, %v401
        %v410 = vadd.f32 %v337, %v402
        %v411 = vadd.f32 %v338, %v403
        %s412 = scalar_lea.vmem %s246, 8 [#allocation2]
        %v413 = vld [vmem:[%s412] sm:$0xf]
        %v415 = vrot.slane %v413, 1
        %v416 = vrot.slane %v413, 2
        %v417 = vrot.slane %v413, 3
        %v418 = vsel %vm275, %v413, %v415
        %v419 = vsel %vm277, %v416, %v417
        %v420 = vsel %vm279, %v418, %v419
        %v421 = vsel %vm281, %v413, %v415
        %v422 = vsel %vm283, %v416, %v417
        %v423 = vsel %vm285, %v421, %v422
        %v424 = vrot.slane %v423, 1
        %s425 = scalar_lea.vmem %s1, 4
        %v426 = vld [vmem:[%s425] sm:$0x3]
        %v427 = vperm.slane %v426, 0
        %v428 = vlaneseq
        %v429 = vshrl.u32 %v428, 7
        %431 = vset.pattern.permute.xlu0 %v429
        %432 = vperm.xlu0 %431, %v427
        %v433 = vpop.permute.xlu0 %432
        %v434 = vlaneseq
        %v435 = vshrl.u32 %v434, 7
        %v436 = vadd.s32 %v435, 8
        %437 = vset.pattern.permute.xlu0 %v436
        %438 = vperm.xlu0 %437, %v427
        %v439 = vpop.permute.xlu0 %438
        %v440 = vperm.slane %v426, 1
        %v441 = vlaneseq
        %v442 = vshrl.u32 %v441, 7
        %444 = vset.pattern.permute.xlu0 %v442
        %445 = vperm.xlu0 %444, %v440
        %v446 = vpop.permute.xlu0 %445
        %v447 = vlaneseq
        %v448 = vshrl.u32 %v447, 7
        %v449 = vadd.s32 %v448, 8
        %450 = vset.pattern.permute.xlu0 %v449
        %451 = vperm.xlu0 %450, %v440
        %v452 = vpop.permute.xlu0 %451
        %v453 = vperm.slane %v420, 0
        %v454 = vperm.slane %v420, 1
        %v455 = vperm.slane %v424, 0
        %v456 = vperm.slane %v424, 1
        %v461 = vsub.f32 %v453, %v433
        %v462 = vsub.f32 %v454, %v433
        %v463 = vsub.f32 %v453, %v439
        %v464 = vsub.f32 %v454, %v439
        %v465 = vsub.f32 %v455, %v446
        %v466 = vsub.f32 %v456, %v446
        %v467 = vsub.f32 %v455, %v452
        %v468 = vsub.f32 %v456, %v452
        %v469 = vand.u32 2147483647, %v461
        %v470 = vand.u32 2147483647, %v462
        %v471 = vand.u32 2147483647, %v463
        %v472 = vand.u32 2147483647, %v464
        %v473 = vand.u32 2147483647, %v465
        %v474 = vand.u32 2147483647, %v466
        %v475 = vand.u32 2147483647, %v467
        %v476 = vand.u32 2147483647, %v468
        %v477 = vadd.f32 %v404, %v469
        %v478 = vadd.f32 %v405, %v470
        %v479 = vadd.f32 %v406, %v471
        %v480 = vadd.f32 %v407, %v472
        %v481 = vadd.f32 %v408, %v473
        %v482 = vadd.f32 %v409, %v474
        %v483 = vadd.f32 %v410, %v475
        %v484 = vadd.f32 %v411, %v476
        %s485 = scalar_lea.vmem %s246, 12 [#allocation2]
        %v486 = vld [vmem:[%s485] sm:$0xf]
        %v488 = vrot.slane %v486, 1
        %v489 = vrot.slane %v486, 2
        %v490 = vrot.slane %v486, 3
        %v491 = vsel %vm275, %v486, %v488
        %v492 = vsel %vm277, %v489, %v490
        %v493 = vsel %vm279, %v491, %v492
        %v494 = vsel %vm281, %v486, %v488
        %v495 = vsel %vm283, %v489, %v490
        %v496 = vsel %vm285, %v494, %v495
        %v497 = vrot.slane %v496, 1
        %s498 = scalar_lea.vmem %s1, 6
        %v499 = vld [vmem:[%s498] sm:$0x3]
        %v500 = vperm.slane %v499, 0
        %v501 = vlaneseq
        %v502 = vshrl.u32 %v501, 7
        %504 = vset.pattern.permute.xlu0 %v502
        %505 = vperm.xlu0 %504, %v500
        %v506 = vpop.permute.xlu0 %505
        %v507 = vlaneseq
        %v508 = vshrl.u32 %v507, 7
        %v509 = vadd.s32 %v508, 8
        %510 = vset.pattern.permute.xlu0 %v509
        %511 = vperm.xlu0 %510, %v500
        %v512 = vpop.permute.xlu0 %511
        %v513 = vperm.slane %v499, 1
        %v514 = vlaneseq
        %v515 = vshrl.u32 %v514, 7
        %517 = vset.pattern.permute.xlu0 %v515
        %518 = vperm.xlu0 %517, %v513
        %v519 = vpop.permute.xlu0 %518
        %v520 = vlaneseq
        %v521 = vshrl.u32 %v520, 7
        %v522 = vadd.s32 %v521, 8
        %523 = vset.pattern.permute.xlu0 %v522
        %524 = vperm.xlu0 %523, %v513
        %v525 = vpop.permute.xlu0 %524
        %v526 = vperm.slane %v493, 0
        %v527 = vperm.slane %v493, 1
        %v528 = vperm.slane %v497, 0
        %v529 = vperm.slane %v497, 1
        %v534 = vsub.f32 %v526, %v506
        %v535 = vsub.f32 %v527, %v506
        %v536 = vsub.f32 %v526, %v512
        %v537 = vsub.f32 %v527, %v512
        %v538 = vsub.f32 %v528, %v519
        %v539 = vsub.f32 %v529, %v519
        %v540 = vsub.f32 %v528, %v525
        %v541 = vsub.f32 %v529, %v525
        %v542 = vand.u32 2147483647, %v534
        %v543 = vand.u32 2147483647, %v535
        %v544 = vand.u32 2147483647, %v536
        %v545 = vand.u32 2147483647, %v537
        %v546 = vand.u32 2147483647, %v538
        %v547 = vand.u32 2147483647, %v539
        %v548 = vand.u32 2147483647, %v540
        %v549 = vand.u32 2147483647, %v541
        %v550 = vadd.f32 %v477, %v542
        %v551 = vadd.f32 %v478, %v543
        %v552 = vadd.f32 %v479, %v544
        %v553 = vadd.f32 %v480, %v545
        %v554 = vadd.f32 %v481, %v546
        %v555 = vadd.f32 %v482, %v547
        %v556 = vadd.f32 %v483, %v548
        %v557 = vadd.f32 %v484, %v549
        %s558 = scalar_lea.vmem %s246, 16 [#allocation2]
        %v559 = vld [vmem:[%s558] sm:$0xf]
        %v561 = vrot.slane %v559, 1
        %v562 = vrot.slane %v559, 2
        %v563 = vrot.slane %v559, 3
        %v564 = vsel %vm275, %v559, %v561
        %v565 = vsel %vm277, %v562, %v563
        %v566 = vsel %vm279, %v564, %v565
        %v567 = vsel %vm281, %v559, %v561
        %v568 = vsel %vm283, %v562, %v563
        %v569 = vsel %vm285, %v567, %v568
        %v570 = vrot.slane %v569, 1
        %s571 = scalar_lea.vmem %s1, 8
        %v572 = vld [vmem:[%s571] sm:$0x3]
        %v573 = vperm.slane %v572, 0
        %v574 = vlaneseq
        %v575 = vshrl.u32 %v574, 7
        %577 = vset.pattern.permute.xlu0 %v575
        %578 = vperm.xlu0 %577, %v573
        %v579 = vpop.permute.xlu0 %578
        %v580 = vlaneseq
        %v581 = vshrl.u32 %v580, 7
        %v582 = vadd.s32 %v581, 8
        %583 = vset.pattern.permute.xlu0 %v582
        %584 = vperm.xlu0 %583, %v573
        %v585 = vpop.permute.xlu0 %584
        %v586 = vperm.slane %v572, 1
        %v587 = vlaneseq
        %v588 = vshrl.u32 %v587, 7
        %590 = vset.pattern.permute.xlu0 %v588
        %591 = vperm.xlu0 %590, %v586
        %v592 = vpop.permute.xlu0 %591
        %v593 = vlaneseq
        %v594 = vshrl.u32 %v593, 7
        %v595 = vadd.s32 %v594, 8
        %596 = vset.pattern.permute.xlu0 %v595
        %597 = vperm.xlu0 %596, %v586
        %v598 = vpop.permute.xlu0 %597
        %v599 = vperm.slane %v566, 0
        %v600 = vperm.slane %v566, 1
        %v601 = vperm.slane %v570, 0
        %v602 = vperm.slane %v570, 1
        %v607 = vsub.f32 %v599, %v579
        %v608 = vsub.f32 %v600, %v579
        %v609 = vsub.f32 %v599, %v585
        %v610 = vsub.f32 %v600, %v585
        %v611 = vsub.f32 %v601, %v592
        %v612 = vsub.f32 %v602, %v592
        %v613 = vsub.f32 %v601, %v598
        %v614 = vsub.f32 %v602, %v598
        %v615 = vand.u32 2147483647, %v607
        %v616 = vand.u32 2147483647, %v608
        %v617 = vand.u32 2147483647, %v609
        %v618 = vand.u32 2147483647, %v610
        %v619 = vand.u32 2147483647, %v611
        %v620 = vand.u32 2147483647, %v612
        %v621 = vand.u32 2147483647, %v613
        %v622 = vand.u32 2147483647, %v614
        %v623 = vadd.f32 %v550, %v615
        %v624 = vadd.f32 %v551, %v616
        %v625 = vadd.f32 %v552, %v617
        %v626 = vadd.f32 %v553, %v618
        %v627 = vadd.f32 %v554, %v619
        %v628 = vadd.f32 %v555, %v620
        %v629 = vadd.f32 %v556, %v621
        %v630 = vadd.f32 %v557, %v622
        %s631 = scalar_lea.vmem %s246, 20 [#allocation2]
        %v632 = vld [vmem:[%s631] sm:$0xf]
        %v634 = vrot.slane %v632, 1
        %v635 = vrot.slane %v632, 2
        %v636 = vrot.slane %v632, 3
        %v637 = vsel %vm275, %v632, %v634
        %v638 = vsel %vm277, %v635, %v636
        %v639 = vsel %vm279, %v637, %v638
        %v640 = vsel %vm281, %v632, %v634
        %v641 = vsel %vm283, %v635, %v636
        %v642 = vsel %vm285, %v640, %v641
        %v643 = vrot.slane %v642, 1
        %s644 = scalar_lea.vmem %s1, 10
        %v645 = vld [vmem:[%s644] sm:$0x3]
        %v646 = vperm.slane %v645, 0
        %v647 = vlaneseq
        %v648 = vshrl.u32 %v647, 7
        %650 = vset.pattern.permute.xlu0 %v648
        %651 = vperm.xlu0 %650, %v646
        %v652 = vpop.permute.xlu0 %651
        %v653 = vlaneseq
        %v654 = vshrl.u32 %v653, 7
        %v655 = vadd.s32 %v654, 8
        %656 = vset.pattern.permute.xlu0 %v655
        %657 = vperm.xlu0 %656, %v646
        %v658 = vpop.permute.xlu0 %657
        %v659 = vperm.slane %v645, 1
        %v660 = vlaneseq
        %v661 = vshrl.u32 %v660, 7
        %663 = vset.pattern.permute.xlu0 %v661
        %664 = vperm.xlu0 %663, %v659
        %v665 = vpop.permute.xlu0 %664
        %v666 = vlaneseq
        %v667 = vshrl.u32 %v666, 7
        %v668 = vadd.s32 %v667, 8
        %669 = vset.pattern.permute.xlu0 %v668
        %670 = vperm.xlu0 %669, %v659
        %v671 = vpop.permute.xlu0 %670
        %v672 = vperm.slane %v639, 0
        %v673 = vperm.slane %v639, 1
        %v674 = vperm.slane %v643, 0
        %v675 = vperm.slane %v643, 1
        %v680 = vsub.f32 %v672, %v652
        %v681 = vsub.f32 %v673, %v652
        %v682 = vsub.f32 %v672, %v658
        %v683 = vsub.f32 %v673, %v658
        %v684 = vsub.f32 %v674, %v665
        %v685 = vsub.f32 %v675, %v665
        %v686 = vsub.f32 %v674, %v671
        %v687 = vsub.f32 %v675, %v671
        %v688 = vand.u32 2147483647, %v680
        %v689 = vand.u32 2147483647, %v681
        %v690 = vand.u32 2147483647, %v682
        %v691 = vand.u32 2147483647, %v683
        %v692 = vand.u32 2147483647, %v684
        %v693 = vand.u32 2147483647, %v685
        %v694 = vand.u32 2147483647, %v686
        %v695 = vand.u32 2147483647, %v687
        %v696 = vadd.f32 %v623, %v688
        %v697 = vadd.f32 %v624, %v689
        %v698 = vadd.f32 %v625, %v690
        %v699 = vadd.f32 %v626, %v691
        %v700 = vadd.f32 %v627, %v692
        %v701 = vadd.f32 %v628, %v693
        %v702 = vadd.f32 %v629, %v694
        %v703 = vadd.f32 %v630, %v695
        %s704 = scalar_lea.vmem %s246, 24 [#allocation2]
        %v705 = vld [vmem:[%s704] sm:$0xf]
        %v707 = vrot.slane %v705, 1
        %v708 = vrot.slane %v705, 2
        %v709 = vrot.slane %v705, 3
        %v710 = vsel %vm275, %v705, %v707
        %v711 = vsel %vm277, %v708, %v709
        %v712 = vsel %vm279, %v710, %v711
        %v713 = vsel %vm281, %v705, %v707
        %v714 = vsel %vm283, %v708, %v709
        %v715 = vsel %vm285, %v713, %v714
        %v716 = vrot.slane %v715, 1
        %s717 = scalar_lea.vmem %s1, 12
        %v718 = vld [vmem:[%s717] sm:$0x3]
        %v719 = vperm.slane %v718, 0
        %v720 = vlaneseq
        %v721 = vshrl.u32 %v720, 7
        %723 = vset.pattern.permute.xlu0 %v721
        %724 = vperm.xlu0 %723, %v719
        %v725 = vpop.permute.xlu0 %724
        %v726 = vlaneseq
        %v727 = vshrl.u32 %v726, 7
        %v728 = vadd.s32 %v727, 8
        %729 = vset.pattern.permute.xlu0 %v728
        %730 = vperm.xlu0 %729, %v719
        %v731 = vpop.permute.xlu0 %730
        %v732 = vperm.slane %v718, 1
        %v733 = vlaneseq
        %v734 = vshrl.u32 %v733, 7
        %736 = vset.pattern.permute.xlu0 %v734
        %737 = vperm.xlu0 %736, %v732
        %v738 = vpop.permute.xlu0 %737
        %v739 = vlaneseq
        %v740 = vshrl.u32 %v739, 7
        %v741 = vadd.s32 %v740, 8
        %742 = vset.pattern.permute.xlu0 %v741
        %743 = vperm.xlu0 %742, %v732
        %v744 = vpop.permute.xlu0 %743
        %v745 = vperm.slane %v712, 0
        %v746 = vperm.slane %v712, 1
        %v747 = vperm.slane %v716, 0
        %v748 = vperm.slane %v716, 1
        %v753 = vsub.f32 %v745, %v725
        %v754 = vsub.f32 %v746, %v725
        %v755 = vsub.f32 %v745, %v731
        %v756 = vsub.f32 %v746, %v731
        %v757 = vsub.f32 %v747, %v738
        %v758 = vsub.f32 %v748, %v738
        %v759 = vsub.f32 %v747, %v744
        %v760 = vsub.f32 %v748, %v744
        %v761 = vand.u32 2147483647, %v753
        %v762 = vand.u32 2147483647, %v754
        %v763 = vand.u32 2147483647, %v755
        %v764 = vand.u32 2147483647, %v756
        %v765 = vand.u32 2147483647, %v757
        %v766 = vand.u32 2147483647, %v758
        %v767 = vand.u32 2147483647, %v759
        %v768 = vand.u32 2147483647, %v760
        %v769 = vadd.f32 %v696, %v761
        %v770 = vadd.f32 %v697, %v762
        %v771 = vadd.f32 %v698, %v763
        %v772 = vadd.f32 %v699, %v764
        %v773 = vadd.f32 %v700, %v765
        %v774 = vadd.f32 %v701, %v766
        %v775 = vadd.f32 %v702, %v767
        %v776 = vadd.f32 %v703, %v768
        %s777 = scalar_lea.vmem %s246, 28 [#allocation2]
        %v778 = vld [vmem:[%s777] sm:$0xf]
        %v780 = vrot.slane %v778, 1
        %v781 = vrot.slane %v778, 2
        %v782 = vrot.slane %v778, 3
        %v783 = vsel %vm275, %v778, %v780
        %v784 = vsel %vm277, %v781, %v782
        %v785 = vsel %vm279, %v783, %v784
        %v786 = vsel %vm281, %v778, %v780
        %v787 = vsel %vm283, %v781, %v782
        %v788 = vsel %vm285, %v786, %v787
        %v789 = vrot.slane %v788, 1
        %s790 = scalar_lea.vmem %s1, 14
        %v791 = vld [vmem:[%s790] sm:$0x3]
        %v792 = vperm.slane %v791, 0
        %v793 = vlaneseq
        %v794 = vshrl.u32 %v793, 7
        %796 = vset.pattern.permute.xlu0 %v794
        %797 = vperm.xlu0 %796, %v792
        %v798 = vpop.permute.xlu0 %797
        %v799 = vlaneseq
        %v800 = vshrl.u32 %v799, 7
        %v801 = vadd.s32 %v800, 8
        %802 = vset.pattern.permute.xlu0 %v801
        %803 = vperm.xlu0 %802, %v792
        %v804 = vpop.permute.xlu0 %803
        %v805 = vperm.slane %v791, 1
        %v806 = vlaneseq
        %v807 = vshrl.u32 %v806, 7
        %809 = vset.pattern.permute.xlu0 %v807
        %810 = vperm.xlu0 %809, %v805
        %v811 = vpop.permute.xlu0 %810
        %v812 = vlaneseq
        %v813 = vshrl.u32 %v812, 7
        %v814 = vadd.s32 %v813, 8
        %815 = vset.pattern.permute.xlu0 %v814
        %816 = vperm.xlu0 %815, %v805
        %v817 = vpop.permute.xlu0 %816
        %v818 = vperm.slane %v785, 0
        %v819 = vperm.slane %v785, 1
        %v820 = vperm.slane %v789, 0
        %v821 = vperm.slane %v789, 1
        %v826 = vsub.f32 %v818, %v798
        %v827 = vsub.f32 %v819, %v798
        %v828 = vsub.f32 %v818, %v804
        %v829 = vsub.f32 %v819, %v804
        %v830 = vsub.f32 %v820, %v811
        %v831 = vsub.f32 %v821, %v811
        %v832 = vsub.f32 %v820, %v817
        %v833 = vsub.f32 %v821, %v817
        %v834 = vand.u32 2147483647, %v826
        %v835 = vand.u32 2147483647, %v827
        %v836 = vand.u32 2147483647, %v828
        %v837 = vand.u32 2147483647, %v829
        %v838 = vand.u32 2147483647, %v830
        %v839 = vand.u32 2147483647, %v831
        %v840 = vand.u32 2147483647, %v832
        %v841 = vand.u32 2147483647, %v833
        %v842 = vadd.f32 %v769, %v834
        %v843 = vadd.f32 %v770, %v835
        %v844 = vadd.f32 %v771, %v836
        %v845 = vadd.f32 %v772, %v837
        %v846 = vadd.f32 %v773, %v838
        %v847 = vadd.f32 %v774, %v839
        %v848 = vadd.f32 %v775, %v840
        %v849 = vadd.f32 %v776, %v841
        %s850 = scalar_lea.vmem %s246, 32 [#allocation2]
        %v851 = vld [vmem:[%s850] sm:$0xf]
        %v853 = vrot.slane %v851, 1
        %v854 = vrot.slane %v851, 2
        %v855 = vrot.slane %v851, 3
        %v856 = vsel %vm275, %v851, %v853
        %v857 = vsel %vm277, %v854, %v855
        %v858 = vsel %vm279, %v856, %v857
        %v859 = vsel %vm281, %v851, %v853
        %v860 = vsel %vm283, %v854, %v855
        %v861 = vsel %vm285, %v859, %v860
        %v862 = vrot.slane %v861, 1
        %s863 = scalar_lea.vmem %s1, 16
        %v864 = vld [vmem:[%s863] sm:$0x3]
        %v865 = vperm.slane %v864, 0
        %v866 = vlaneseq
        %v867 = vshrl.u32 %v866, 7
        %869 = vset.pattern.permute.xlu0 %v867
        %870 = vperm.xlu0 %869, %v865
        %v871 = vpop.permute.xlu0 %870
        %v872 = vlaneseq
        %v873 = vshrl.u32 %v872, 7
        %v874 = vadd.s32 %v873, 8
        %875 = vset.pattern.permute.xlu0 %v874
        %876 = vperm.xlu0 %875, %v865
        %v877 = vpop.permute.xlu0 %876
        %v878 = vperm.slane %v864, 1
        %v879 = vlaneseq
        %v880 = vshrl.u32 %v879, 7
        %882 = vset.pattern.permute.xlu0 %v880
        %883 = vperm.xlu0 %882, %v878
        %v884 = vpop.permute.xlu0 %883
        %v885 = vlaneseq
        %v886 = vshrl.u32 %v885, 7
        %v887 = vadd.s32 %v886, 8
        %888 = vset.pattern.permute.xlu0 %v887
        %889 = vperm.xlu0 %888, %v878
        %v890 = vpop.permute.xlu0 %889
        %v891 = vperm.slane %v858, 0
        %v892 = vperm.slane %v858, 1
        %v893 = vperm.slane %v862, 0
        %v894 = vperm.slane %v862, 1
        %v899 = vsub.f32 %v891, %v871
        %v900 = vsub.f32 %v892, %v871
        %v901 = vsub.f32 %v891, %v877
        %v902 = vsub.f32 %v892, %v877
        %v903 = vsub.f32 %v893, %v884
        %v904 = vsub.f32 %v894, %v884
        %v905 = vsub.f32 %v893, %v890
        %v906 = vsub.f32 %v894, %v890
        %v907 = vand.u32 2147483647, %v899
        %v908 = vand.u32 2147483647, %v900
        %v909 = vand.u32 2147483647, %v901
        %v910 = vand.u32 2147483647, %v902
        %v911 = vand.u32 2147483647, %v903
        %v912 = vand.u32 2147483647, %v904
        %v913 = vand.u32 2147483647, %v905
        %v914 = vand.u32 2147483647, %v906
        %v915 = vadd.f32 %v842, %v907
        %v916 = vadd.f32 %v843, %v908
        %v917 = vadd.f32 %v844, %v909
        %v918 = vadd.f32 %v845, %v910
        %v919 = vadd.f32 %v846, %v911
        %v920 = vadd.f32 %v847, %v912
        %v921 = vadd.f32 %v848, %v913
        %v922 = vadd.f32 %v849, %v914
        %v923 = vsub.f32 0.0, %v915
        %v924 = vsub.f32 0.0, %v916
        %v925 = vsub.f32 0.0, %v917
        %v926 = vsub.f32 0.0, %v918
        %v927 = vsub.f32 0.0, %v919
        %v928 = vsub.f32 0.0, %v920
        %v929 = vsub.f32 0.0, %v921
        %v930 = vsub.f32 0.0, %v922
        %v931 = vld [vmem:[%s2] sm:$0xff]
        %v932 = vld [vmem:[%s2 + $0x8] sm:$0x1]
        %v933 = vld [vmem:[%s2 + $0x10] sm:$0xff]
        %v934 = vld [vmem:[%s2 + $0x18] sm:$0x1]
        %936 = vset.pattern.permute.xlu0 0
        %937 = vperm.xlu0 %936, %v931
        %v938 = vpop.permute.xlu0 %937
        %941 = vset.pattern.permute.xlu0 0
        %942 = vperm.xlu0 %941, %v932
        %v943 = vpop.permute.xlu0 %942
        %946 = vset.pattern.permute.xlu0 0
        %947 = vperm.xlu0 %946, %v933
        %v948 = vpop.permute.xlu0 %947
        %951 = vset.pattern.permute.xlu0 0
        %952 = vperm.xlu0 %951, %v934
        %v953 = vpop.permute.xlu0 %952
        %v955 = vmul.f32 %v923, %v938
        %v956 = vmul.f32 %v924, %v938
        %v957 = vmul.f32 %v925, %v943
        %v958 = vmul.f32 %v926, %v943
        %v959 = vmul.f32 %v927, %v948
        %v960 = vmul.f32 %v928, %v948
        %v961 = vmul.f32 %v929, %v953
        %v962 = vmul.f32 %v930, %v953
        %v963 = vld [vmem:[%s3] sm:$0xff]
        %v964 = vld [vmem:[%s3 + $0x8] sm:$0x1]
        %v965 = vld [vmem:[%s3 + $0x10] sm:$0xff]
        %v966 = vld [vmem:[%s3 + $0x18] sm:$0x1]
        %968 = vset.pattern.permute.xlu0 0
        %969 = vperm.xlu0 %968, %v963
        %v970 = vpop.permute.xlu0 %969
        %973 = vset.pattern.permute.xlu0 0
        %974 = vperm.xlu0 %973, %v964
        %v975 = vpop.permute.xlu0 %974
        %978 = vset.pattern.permute.xlu0 0
        %979 = vperm.xlu0 %978, %v965
        %v980 = vpop.permute.xlu0 %979
        %983 = vset.pattern.permute.xlu0 0
        %984 = vperm.xlu0 %983, %v966
        %v985 = vpop.permute.xlu0 %984
        %v987 = vadd.f32 %v955, %v970
        %v988 = vadd.f32 %v956, %v970
        %v989 = vadd.f32 %v957, %v975
        %v990 = vadd.f32 %v958, %v975
        %v991 = vadd.f32 %v959, %v980
        %v992 = vadd.f32 %v960, %v980
        %v993 = vadd.f32 %v961, %v985
        %v994 = vadd.f32 %v962, %v985
        %v995 = vmax.f32 %v987, 0.0
        %v996 = vmax.f32 %v988, 0.0
        %v997 = vmax.f32 %v989, 0.0
        %v998 = vmax.f32 %v990, 0.0
        %v999 = vmax.f32 %v991, 0.0
        %v1000 = vmax.f32 %v992, 0.0
        %v1001 = vmax.f32 %v993, 0.0
        %v1002 = vmax.f32 %v994, 0.0
        %1003 = vst [vmem:[%s267] sm:$0xff] %v995
        %1004 = vst [vmem:[%s267 + $0x8] sm:$0xff] %v996
        %1005 = vst [vmem:[%s267 + $0x10] sm:$0x1] %v997
        %1006 = vst [vmem:[%s267 + $0x18] sm:$0x1] %v998
        %1007 = vst [vmem:[%s267 + $0x20] sm:$0xff] %v999
        %1008 = vst [vmem:[%s267 + $0x28] sm:$0xff] %v1000
        %1009 = vst [vmem:[%s267 + $0x30] sm:$0x1] %v1001
        %1010 = vst [vmem:[%s267 + $0x38] sm:$0x1] %v1002
        %s1011 = sand.u32 %s112, 1
        %s1012 = sand.u32 %s112, 1
        %s1013 = smul.addr %s1012, 64
        %s1014 = scalar_lea.vmem [#allocation3], %s1013
        // Predicated region
        $region78: #{resnet_ghost_forward.21} parent=72 // pred_check
          %p1015 = pneg %p122
        $region79: #{resnet_ghost_forward.21} parent=72 // pred_check_branch
          %1017 = sbr.rel (%p1015) target = $region81
        $region80: #{resnet_ghost_forward.21} parent=72 // pred_region
          %s1018 = smul.u32 2, %s15
          %s1019 = smul.addr %s1018, 8
          %s1020 = scalar_lea.vmem %s4, %s1019
          // Predicated region
          $region82: #{resnet_ghost_forward.21} parent=80 // pred_check
            _
          $region83: #{resnet_ghost_forward.21} parent=80 // pred_check_branch
            %1022 = sbr.rel (0) target = $region85
          $region84: #{resnet_ghost_forward.21} parent=80 // pred_region
            // Predicated region
            $region86: #{resnet_ghost_forward.21} parent=84 // pred_check
              _
            $region87: #{resnet_ghost_forward.21} parent=84 // pred_check_branch
              %1024 = sbr.rel (0) target = $region89
            $region88: #{resnet_ghost_forward.21} parent=84 // pred_region
              loop: start=0, step=1, limit=1
              $region90: #{resnet_ghost_forward.21} parent=88 // loop_pre_header
                _
              $region91: #{resnet_ghost_forward.21} parent=88 // loop_header
                %s1026 = sphi 0, %s1030
                %p1027 = scmp.ge.s32.totalorder %s1026, 1
                %s1031 = sphi %s1014, %s1014
                %s1032 = sphi %s1020, %s1020
              $region92: #{resnet_ghost_forward.21} parent=88 // loop_header_branch
                %1029 = sbr.rel (%p1027) target = $region96
              $region93: #{resnet_ghost_forward.21} parent=88 // loop_body
                %v1033 = vld [vmem:[%s1031] sm:$0xff]
                %1034 = vst [vmem:[%s1032] sm:$0xff] %v1033
                %v1035 = vld [vmem:[%s1031 + $0x8] sm:$0xff]
                %1036 = vst [vmem:[%s1032 + $0x8] sm:$0xff] %v1035
                %v1037 = vld [vmem:[%s1031 + $0x10] sm:$0xff]
                %1038 = vst [vmem:[%s1032 + $0x20] sm:$0xff] %v1037
                %v1039 = vld [vmem:[%s1031 + $0x18] sm:$0xff]
                %1040 = vst [vmem:[%s1032 + $0x28] sm:$0xff] %v1039
                %v1041 = vld [vmem:[%s1031 + $0x20] sm:$0xff]
                %1042 = vst [vmem:[%s1032 + $0x40] sm:$0xff] %v1041
                %v1043 = vld [vmem:[%s1031 + $0x28] sm:$0xff]
                %1044 = vst [vmem:[%s1032 + $0x48] sm:$0xff] %v1043
                %v1045 = vld [vmem:[%s1031 + $0x30] sm:$0xff]
                %1046 = vst [vmem:[%s1032 + $0x60] sm:$0xff] %v1045
                %v1047 = vld [vmem:[%s1031 + $0x38] sm:$0xff]
                %1048 = vst [vmem:[%s1032 + $0x68] sm:$0xff] %v1047
              $region94: #{resnet_ghost_forward.21} parent=88 // loop_footer
                %s1030 = sadd.s32 1, %s1026
              $region95: #{resnet_ghost_forward.21} parent=88 // loop_footer_branch
                %1025 = sbr.rel target = $region91
              $region96: #{resnet_ghost_forward.21} parent=88 // loop_exit
                _
            $region89: #{resnet_ghost_forward.21} parent=84 // pred_fallthru
              _
            // Predicated region
            $region97: #{resnet_ghost_forward.21} parent=84 // pred_check
              _
            $region98: #{resnet_ghost_forward.21} parent=84 // pred_check_branch
              %1050 = sbr.rel target = $region100
            $region99: #{resnet_ghost_forward.21} parent=84 // pred_region
              _
            $region100: #{resnet_ghost_forward.21} parent=84 // pred_fallthru
              _
          $region85: #{resnet_ghost_forward.21} parent=80 // pred_fallthru
            _
          %1051 = vnop
        $region81: #{resnet_ghost_forward.21} parent=72 // pred_fallthru
          _
      $region73: #{resnet_ghost_forward.21} parent=5 // pred_fallthru
        _
      %p1052 = scmp.le.s32.totalorder 2, %s10
      // Predicated region
      $region101: #{resnet_ghost_forward.21} parent=5 // pred_check
        %p1053 = pneg %p1052
      $region102: #{resnet_ghost_forward.21} parent=5 // pred_check_branch
        %1055 = sbr.rel (%p1053) target = $region104
      $region103: #{resnet_ghost_forward.21} parent=5 // pred_region
        %s1056 = ssub.s32 %s10, 2
        // Predicated region
        $region105: #{resnet_ghost_forward.21} parent=103 // pred_check
          %p1057 = pneg %p128
        $region106: #{resnet_ghost_forward.21} parent=103 // pred_check_branch
          %1059 = sbr.rel (%p1057) target = $region108
        $region107: #{resnet_ghost_forward.21} parent=103 // pred_region
          %s1060 = sand.u32 %s113, 1
          %s1061 = sand.u32 %s113, 1
          %s1062 = smul.addr %s1061, 64
          %s1063 = scalar_lea.vmem [#allocation3], %s1062
        $region108: #{resnet_ghost_forward.21} parent=103 // pred_fallthru
          _
      $region104: #{resnet_ghost_forward.21} parent=5 // pred_fallthru
        _
    $region6: #{resnet_ghost_forward.21} parent=1 // loop_footer
      %s14 = sadd.s32 1, %s10
    $region7: #{resnet_ghost_forward.21} parent=1 // loop_footer_branch
      %9 = sbr.rel target = $region3
    $region8: #{resnet_ghost_forward.21} parent=1 // loop_exit
      _

// kernel: resnet_ghost_forward.32
$region0: #{resnet_ghost_forward.32}
  #allocation0 [shape = 'u32[]', space=smem, size = 0x4, offset = 0x4, fixed_abs, tag = 'smem constant byte address 0x4 - core index']
  #allocation1 [shape = 'u32[72,128]{1,0:T(1,128)}', space=vmem, size = 0x9000, scoped, tag = 'internal scratch']
  %s0 = inlined_call_operand.vmem [shape: f32[9,16,128], index: 0, kind: input, shape index: {}]
  %s1 = inlined_call_operand.vmem [shape: f32[9,16,1], index: 1, kind: input, shape index: {}]
  %s2 = inlined_call_operand.vmem [shape: f32[16,1], index: 2, kind: input, shape index: {}]
  %s3 = inlined_call_operand.vmem [shape: f32[16,1], index: 3, kind: input, shape index: {}]
  %s4 = inlined_call_operand.vmem [shape: f32[16,128], index: 4, kind: output, shape index: {}]
  %s5 = sld [smem:[#allocation0]]
  $region26: #{resnet_ghost_forward.32} parent=0
    _
  %s7 = ssub.s32 1, %s5
  %s8 = scalar_select 0, %s7, %s5
  // Predicated region
  $region2: #{resnet_ghost_forward.32} parent=0 // pred_check
    _
  $region3: #{resnet_ghost_forward.32} parent=0 // pred_check_branch
    %10 = sbr.rel (0) target = $region5
  $region4: #{resnet_ghost_forward.32} parent=0 // pred_region
    _
  $region5: #{resnet_ghost_forward.32} parent=0 // pred_fallthru
    _
  // Predicated region
  $region6: #{resnet_ghost_forward.32} parent=0 // pred_check
    _
  $region7: #{resnet_ghost_forward.32} parent=0 // pred_check_branch
    %12 = sbr.rel (0) target = $region9
  $region8: #{resnet_ghost_forward.32} parent=0 // pred_region
    _
  $region9: #{resnet_ghost_forward.32} parent=0 // pred_fallthru
    _
  // Predicated region
  $region10: #{resnet_ghost_forward.32} parent=0 // pred_check
    _
  $region11: #{resnet_ghost_forward.32} parent=0 // pred_check_branch
    %14 = sbr.rel (0) target = $region13
  $region12: #{resnet_ghost_forward.32} parent=0 // pred_region
    _
  $region13: #{resnet_ghost_forward.32} parent=0 // pred_fallthru
    _
  // Predicated region
  $region14: #{resnet_ghost_forward.32} parent=0 // pred_check
    _
  $region15: #{resnet_ghost_forward.32} parent=0 // pred_check_branch
    %16 = sbr.rel (0) target = $region17
  $region16: #{resnet_ghost_forward.32} parent=0 // pred_region
    _
  $region17: #{resnet_ghost_forward.32} parent=0 // pred_fallthru
    _
  %v17 = vld [vmem:[%s0] sm:$0xff]
  %v18 = vld [vmem:[%s0 + $0x8] sm:$0xff]
  %v19 = vld [vmem:[%s1] sm:$0xff]
  %v20 = vld [vmem:[%s1 + $0x8] sm:$0xff]
  %22 = vset.pattern.permute.xlu0 0
  %23 = vperm.xlu0 %22, %v19
  %v24 = vpop.permute.xlu0 %23
  %27 = vset.pattern.permute.xlu0 0
  %28 = vperm.xlu0 %27, %v20
  %v29 = vpop.permute.xlu0 %28
  %v31 = vmul.f32 %v17, %v24
  %v32 = vmul.f32 %v18, %v29
  %s33 = scalar_lea.vmem %s0, 16
  %v34 = vld [vmem:[%s33] sm:$0xff]
  %v35 = vld [vmem:[%s33 + $0x8] sm:$0xff]
  %s36 = scalar_lea.vmem %s1, 16
  %v37 = vld [vmem:[%s36] sm:$0xff]
  %v38 = vld [vmem:[%s36 + $0x8] sm:$0xff]
  %40 = vset.pattern.permute.xlu0 0
  %41 = vperm.xlu0 %40, %v37
  %v42 = vpop.permute.xlu0 %41
  %45 = vset.pattern.permute.xlu0 0
  %46 = vperm.xlu0 %45, %v38
  %v47 = vpop.permute.xlu0 %46
  %v49 = vmul.f32 %v34, %v42
  %v50 = vmul.f32 %v35, %v47
  %v51 = vadd.f32 %v31, %v49
  %v52 = vadd.f32 %v32, %v50
  %s53 = scalar_lea.vmem %s0, 32
  %v54 = vld [vmem:[%s53] sm:$0xff]
  %v55 = vld [vmem:[%s53 + $0x8] sm:$0xff]
  %s56 = scalar_lea.vmem %s1, 32
  %v57 = vld [vmem:[%s56] sm:$0xff]
  %v58 = vld [vmem:[%s56 + $0x8] sm:$0xff]
  %60 = vset.pattern.permute.xlu0 0
  %61 = vperm.xlu0 %60, %v57
  %v62 = vpop.permute.xlu0 %61
  %65 = vset.pattern.permute.xlu0 0
  %66 = vperm.xlu0 %65, %v58
  %v67 = vpop.permute.xlu0 %66
  %v69 = vmul.f32 %v54, %v62
  %v70 = vmul.f32 %v55, %v67
  %v71 = vadd.f32 %v51, %v69
  %v72 = vadd.f32 %v52, %v70
  %s73 = scalar_lea.vmem %s0, 48
  %v74 = vld [vmem:[%s73] sm:$0xff]
  %v75 = vld [vmem:[%s73 + $0x8] sm:$0xff]
  %s76 = scalar_lea.vmem %s1, 48
  %v77 = vld [vmem:[%s76] sm:$0xff]
  %v78 = vld [vmem:[%s76 + $0x8] sm:$0xff]
  %80 = vset.pattern.permute.xlu0 0
  %81 = vperm.xlu0 %80, %v77
  %v82 = vpop.permute.xlu0 %81
  %85 = vset.pattern.permute.xlu0 0
  %86 = vperm.xlu0 %85, %v78
  %v87 = vpop.permute.xlu0 %86
  %v89 = vmul.f32 %v74, %v82
  %v90 = vmul.f32 %v75, %v87
  %v91 = vadd.f32 %v71, %v89
  %v92 = vadd.f32 %v72, %v90
  %s93 = scalar_lea.vmem %s0, 64
  %v94 = vld [vmem:[%s93] sm:$0xff]
  %v95 = vld [vmem:[%s93 + $0x8] sm:$0xff]
  %s96 = scalar_lea.vmem %s1, 64
  %v97 = vld [vmem:[%s96] sm:$0xff]
  %v98 = vld [vmem:[%s96 + $0x8] sm:$0xff]
  %100 = vset.pattern.permute.xlu0 0
  %101 = vperm.xlu0 %100, %v97
  %v102 = vpop.permute.xlu0 %101
  %105 = vset.pattern.permute.xlu0 0
  %106 = vperm.xlu0 %105, %v98
  %v107 = vpop.permute.xlu0 %106
  %v109 = vmul.f32 %v94, %v102
  %v110 = vmul.f32 %v95, %v107
  %v111 = vadd.f32 %v91, %v109
  %v112 = vadd.f32 %v92, %v110
  %s113 = scalar_lea.vmem %s0, 80
  %v114 = vld [vmem:[%s113] sm:$0xff]
  %v115 = vld [vmem:[%s113 + $0x8] sm:$0xff]
  %s116 = scalar_lea.vmem %s1, 80
  %v117 = vld [vmem:[%s116] sm:$0xff]
  %v118 = vld [vmem:[%s116 + $0x8] sm:$0xff]
  %120 = vset.pattern.permute.xlu0 0
  %121 = vperm.xlu0 %120, %v117
  %v122 = vpop.permute.xlu0 %121
  %125 = vset.pattern.permute.xlu0 0
  %126 = vperm.xlu0 %125, %v118
  %v127 = vpop.permute.xlu0 %126
  %v129 = vmul.f32 %v114, %v122
  %v130 = vmul.f32 %v115, %v127
  %v131 = vadd.f32 %v111, %v129
  %v132 = vadd.f32 %v112, %v130
  %s133 = scalar_lea.vmem %s0, 96
  %v134 = vld [vmem:[%s133] sm:$0xff]
  %v135 = vld [vmem:[%s133 + $0x8] sm:$0xff]
  %s136 = scalar_lea.vmem %s1, 96
  %v137 = vld [vmem:[%s136] sm:$0xff]
  %v138 = vld [vmem:[%s136 + $0x8] sm:$0xff]
  %140 = vset.pattern.permute.xlu0 0
  %141 = vperm.xlu0 %140, %v137
  %v142 = vpop.permute.xlu0 %141
  %145 = vset.pattern.permute.xlu0 0
  %146 = vperm.xlu0 %145, %v138
  %v147 = vpop.permute.xlu0 %146
  %v149 = vmul.f32 %v134, %v142
  %v150 = vmul.f32 %v135, %v147
  %v151 = vadd.f32 %v131, %v149
  %v152 = vadd.f32 %v132, %v150
  %s153 = scalar_lea.vmem %s0, 112
  %v154 = vld [vmem:[%s153] sm:$0xff]
  %v155 = vld [vmem:[%s153 + $0x8] sm:$0xff]
  %s156 = scalar_lea.vmem %s1, 112
  %v157 = vld [vmem:[%s156] sm:$0xff]
  %v158 = vld [vmem:[%s156 + $0x8] sm:$0xff]
  %160 = vset.pattern.permute.xlu0 0
  %161 = vperm.xlu0 %160, %v157
  %v162 = vpop.permute.xlu0 %161
  %165 = vset.pattern.permute.xlu0 0
  %166 = vperm.xlu0 %165, %v158
  %v167 = vpop.permute.xlu0 %166
  %v169 = vmul.f32 %v154, %v162
  %v170 = vmul.f32 %v155, %v167
  %v171 = vadd.f32 %v151, %v169
  %v172 = vadd.f32 %v152, %v170
  %s173 = scalar_lea.vmem %s0, 128
  %v174 = vld [vmem:[%s173] sm:$0xff]
  %v175 = vld [vmem:[%s173 + $0x8] sm:$0xff]
  %s176 = scalar_lea.vmem %s1, 128
  %v177 = vld [vmem:[%s176] sm:$0xff]
  %v178 = vld [vmem:[%s176 + $0x8] sm:$0xff]
  %180 = vset.pattern.permute.xlu0 0
  %181 = vperm.xlu0 %180, %v177
  %v182 = vpop.permute.xlu0 %181
  %185 = vset.pattern.permute.xlu0 0
  %186 = vperm.xlu0 %185, %v178
  %v187 = vpop.permute.xlu0 %186
  %v189 = vmul.f32 %v174, %v182
  %v190 = vmul.f32 %v175, %v187
  %v191 = vadd.f32 %v171, %v189
  %v192 = vadd.f32 %v172, %v190
  %v193 = vld [vmem:[%s2] sm:$0xff]
  %v194 = vld [vmem:[%s2 + $0x8] sm:$0xff]
  %196 = vset.pattern.permute.xlu0 0
  %197 = vperm.xlu0 %196, %v193
  %v198 = vpop.permute.xlu0 %197
  %201 = vset.pattern.permute.xlu0 0
  %202 = vperm.xlu0 %201, %v194
  %v203 = vpop.permute.xlu0 %202
  %v205 = vmul.f32 %v191, %v198
  %v206 = vmul.f32 %v192, %v203
  %v207 = vld [vmem:[%s3] sm:$0xff]
  %v208 = vld [vmem:[%s3 + $0x8] sm:$0xff]
  %210 = vset.pattern.permute.xlu0 0
  %211 = vperm.xlu0 %210, %v207
  %v212 = vpop.permute.xlu0 %211
  %215 = vset.pattern.permute.xlu0 0
  %216 = vperm.xlu0 %215, %v208
  %v217 = vpop.permute.xlu0 %216
  %v219 = vadd.f32 %v205, %v212
  %v220 = vadd.f32 %v206, %v217
  %221 = vst [vmem:[%s4] sm:$0xff] %v219
  %222 = vst [vmem:[%s4 + $0x8] sm:$0xff] %v220
  // Predicated region
  $region18: #{resnet_ghost_forward.32} parent=0 // pred_check
    _
  $region19: #{resnet_ghost_forward.32} parent=0 // pred_check_branch
    %224 = sbr.rel (0) target = $region21
  $region20: #{resnet_ghost_forward.32} parent=0 // pred_region
    _
  $region21: #{resnet_ghost_forward.32} parent=0 // pred_fallthru
    _
  // Predicated region
  $region22: #{resnet_ghost_forward.32} parent=0 // pred_check
    _
  $region23: #{resnet_ghost_forward.32} parent=0 // pred_check_branch
    %226 = sbr.rel (0) target = $region25
  $region24: #{resnet_ghost_forward.32} parent=0 // pred_region
    _
  $region25: #{resnet_ghost_forward.32} parent=0 // pred_fallthru
    _

// kernel: resnet_ghost_forward.26
$region0: #{resnet_ghost_forward.26}
  #allocation0 [shape = 'u32[]', space=smem, size = 0x4, offset = 0x4, fixed_abs, tag = 'smem constant byte address 0x4 - core index']
  #allocation1 [shape = 'u32[72,128]{1,0:T(1,128)}', space=vmem, size = 0x9000, scoped, tag = 'internal scratch']
  %s0 = inlined_call_operand.vmem [shape: f32[9,3,512], index: 0, kind: input, shape index: {}]
  %s1 = inlined_call_operand.vmem [shape: f32[9,3,1], index: 1, kind: input, shape index: {}]
  %s2 = inlined_call_operand.vmem [shape: f32[3,1], index: 2, kind: input, shape index: {}]
  %s3 = inlined_call_operand.vmem [shape: f32[3,1], index: 3, kind: input, shape index: {}]
  %s4 = inlined_call_operand.vmem [shape: f32[3,512], index: 4, kind: output, shape index: {}]
  %s5 = sld [smem:[#allocation0]]
  $region87: #{resnet_ghost_forward.26} parent=0
    _
  %s7 = ssub.s32 1, %s5
  %s8 = scalar_select 0, %s7, %s5
  $region1: #{resnet_ghost_forward.26} parent=0
    #allocation2 [shape = 'u8[73728]{0}', space=vmem, size = 0x12000, scoped, tag = 'input window, operand 0']
    loop: start=0, step=1, limit=4
    $region2: #{resnet_ghost_forward.26} parent=1 // loop_pre_header
      _
    $region3: #{resnet_ghost_forward.26} parent=1 // loop_header
      %s10 = sphi 0, %s14
      %p11 = scmp.ge.s32.totalorder %s10, 4
      %s20 = sphi 0, %s22
      %s23 = sphi 0, %s20
      %s24 = sphi 0, %s23
      %s40 = sphi 0, %s24
      %s44 = sphi 0, %s44
      %s46 = sphi 0, %s44
      %s47 = sphi 0, %s46
      %s61 = sphi 0, %s47
      %s65 = sphi 0, %s65
      %s67 = sphi 0, %s65
      %s68 = sphi 0, %s67
      %s82 = sphi 0, %s68
      %s86 = sphi 0, %s86
      %s88 = sphi 0, %s86
      %s89 = sphi 0, %s88
      %s103 = sphi 0, %s89
      %s109 = sphi 0, %s111
      %s112 = sphi 0, %s109
      %s113 = sphi 0, %s112
      %s129 = sphi 0, %s113
    $region4: #{resnet_ghost_forward.26} parent=1 // loop_header_branch
      %13 = sbr.rel (%p11) target = $region8
    $region5: #{resnet_ghost_forward.26} parent=1 // loop_body
      %s15 = ssub.s32 %s10, 1
      %s16 = ssub.s32 %s10, 2
      %s17 = sadd.s32 %s10, 1
      %s18 = ssub.s32 %s10, %s17
      %p19 = scmp.eq.s32.totalorder %s18, 0
      %s21 = sadd.s32 %s20, 1
      %s22 = scalar_select %p19, %s20, %s21
      %p25 = pneg %p19
      %p26 = scmp.eq.s32.totalorder %s10, 1
      %p27 = por %p25, %p26
      %p28 = scmp.ne.s32.totalorder %s20, %s23
      %p29 = scmp.eq.s32.totalorder %s10, 0
      %p30 = por %p28, %p29
      %p31 = scmp.ne.s32.totalorder %s20, %s23
      %p32 = scmp.eq.s32.totalorder %s15, 1
      %p33 = por %p31, %p32
      %p34 = scmp.ne.s32.totalorder %s23, %s24
      %p35 = scmp.eq.s32.totalorder %s15, 0
      %p36 = por %p34, %p35
      %p37 = scmp.ne.s32.totalorder %s23, %s24
      %p38 = scmp.eq.s32.totalorder %s16, 1
      %p39 = por %p37, %p38
      %p41 = scmp.ne.s32.totalorder %s24, %s40
      %p42 = scmp.eq.s32.totalorder %s16, 0
      %p43 = por %p41, %p42
      %s45 = sadd.s32 %s44, 1
      %p48 = scmp.eq.s32.totalorder %s10, 1
      %p49 = scmp.ne.s32.totalorder %s44, %s46
      %p50 = scmp.eq.s32.totalorder %s10, 0
      %p51 = por %p49, %p50
      %p52 = scmp.ne.s32.totalorder %s44, %s46
      %p53 = scmp.eq.s32.totalorder %s15, 1
      %p54 = por %p52, %p53
      %p55 = scmp.ne.s32.totalorder %s46, %s47
      %p56 = scmp.eq.s32.totalorder %s15, 0
      %p57 = por %p55, %p56
      %p58 = scmp.ne.s32.totalorder %s46, %s47
      %p59 = scmp.eq.s32.totalorder %s16, 1
      %p60 = por %p58, %p59
      %p62 = scmp.ne.s32.totalorder %s47, %s61
      %p63 = scmp.eq.s32.totalorder %s16, 0
      %p64 = por %p62, %p63
      %s66 = sadd.s32 %s65, 1
      %p69 = scmp.eq.s32.totalorder %s10, 1
      %p70 = scmp.ne.s32.totalorder %s65, %s67
      %p71 = scmp.eq.s32.totalorder %s10, 0
      %p72 = por %p70, %p71
      %p73 = scmp.ne.s32.totalorder %s65, %s67
      %p74 = scmp.eq.s32.totalorder %s15, 1
      %p75 = por %p73, %p74
      %p76 = scmp.ne.s32.totalorder %s67, %s68
      %p77 = scmp.eq.s32.totalorder %s15, 0
      %p78 = por %p76, %p77
      %p79 = scmp.ne.s32.totalorder %s67, %s68
      %p80 = scmp.eq.s32.totalorder %s16, 1
      %p81 = por %p79, %p80
      %p83 = scmp.ne.s32.totalorder %s68, %s82
      %p84 = scmp.eq.s32.totalorder %s16, 0
      %p85 = por %p83, %p84
      %s87 = sadd.s32 %s86, 1
      %p90 = scmp.eq.s32.totalorder %s10, 1
      %p91 = scmp.ne.s32.totalorder %s86, %s88
      %p92 = scmp.eq.s32.totalorder %s10, 0
      %p93 = por %p91, %p92
      %p94 = scmp.ne.s32.totalorder %s86, %s88
      %p95 = scmp.eq.s32.totalorder %s15, 1
      %p96 = por %p94, %p95
      %p97 = scmp.ne.s32.totalorder %s88, %s89
      %p98 = scmp.eq.s32.totalorder %s15, 0
      %p99 = por %p97, %p98
      %p100 = scmp.ne.s32.totalorder %s88, %s89
      %p101 = scmp.eq.s32.totalorder %s16, 1
      %p102 = por %p100, %p101
      %p104 = scmp.ne.s32.totalorder %s89, %s103
      %p105 = scmp.eq.s32.totalorder %s16, 0
      %p106 = por %p104, %p105
      %s107 = ssub.s32 %s10, %s17
      %p108 = scmp.eq.s32.totalorder %s107, 0
      %s110 = sadd.s32 %s109, 1
      %s111 = scalar_select %p108, %s109, %s110
      %p114 = pneg %p108
      %p115 = scmp.eq.s32.totalorder %s10, 1
      %p116 = por %p114, %p115
      %p117 = scmp.ne.s32.totalorder %s109, %s112
      %p118 = scmp.eq.s32.totalorder %s10, 0
      %p119 = por %p117, %p118
      %p120 = scmp.ne.s32.totalorder %s109, %s112
      %p121 = scmp.eq.s32.totalorder %s15, 1
      %p122 = por %p120, %p121
      %p123 = scmp.ne.s32.totalorder %s112, %s113
      %p124 = scmp.eq.s32.totalorder %s15, 0
      %p125 = por %p123, %p124
      %p126 = scmp.ne.s32.totalorder %s112, %s113
      %p127 = scmp.eq.s32.totalorder %s16, 1
      %p128 = por %p126, %p127
      %p130 = scmp.ne.s32.totalorder %s113, %s129
      %p131 = scmp.eq.s32.totalorder %s16, 0
      %p132 = por %p130, %p131
      %p133 = scmp.le.s32.totalorder 1, %s10
      %p134 = scmp.lt.s32.totalorder %s10, 3
      %p135 = pnand %p133, %p134
      %p136 = pneg %p135
      // Predicated region
      $region9: #{resnet_ghost_forward.26} parent=5 // pred_check
        _
      $region10: #{resnet_ghost_forward.26} parent=5 // pred_check_branch
        %138 = sbr.rel (%p135) target = $region12
      $region11: #{resnet_ghost_forward.26} parent=5 // pred_region
        %s139 = ssub.s32 %s10, 1
        // Predicated region
        $region13: #{resnet_ghost_forward.26} parent=11 // pred_check
          %p140 = pneg %p57
        $region14: #{resnet_ghost_forward.26} parent=11 // pred_check_branch
          %142 = sbr.rel (%p140) target = $region16
        $region15: #{resnet_ghost_forward.26} parent=11 // pred_region
          _
        $region16: #{resnet_ghost_forward.26} parent=11 // pred_fallthru
          _
        // Predicated region
        $region17: #{resnet_ghost_forward.26} parent=11 // pred_check
          %p143 = pneg %p78
        $region18: #{resnet_ghost_forward.26} parent=11 // pred_check_branch
          %145 = sbr.rel (%p143) target = $region20
        $region19: #{resnet_ghost_forward.26} parent=11 // pred_region
          _
        $region20: #{resnet_ghost_forward.26} parent=11 // pred_fallthru
          _
        // Predicated region
        $region21: #{resnet_ghost_forward.26} parent=11 // pred_check
          %p146 = pneg %p99
        $region22: #{resnet_ghost_forward.26} parent=11 // pred_check_branch
          %148 = sbr.rel (%p146) target = $region24
        $region23: #{resnet_ghost_forward.26} parent=11 // pred_region
          _
        $region24: #{resnet_ghost_forward.26} parent=11 // pred_fallthru
          _
      $region12: #{resnet_ghost_forward.26} parent=5 // pred_fallthru
        _
      %p149 = scmp.lt.s32.totalorder %s10, 2
      // Predicated region
      $region25: #{resnet_ghost_forward.26} parent=5 // pred_check
        %p150 = pneg %p149
      $region26: #{resnet_ghost_forward.26} parent=5 // pred_check_branch
        %152 = sbr.rel (%p150) target = $region28
      $region27: #{resnet_ghost_forward.26} parent=5 // pred_region
        // Predicated region
        $region29: #{resnet_ghost_forward.26} parent=27 // pred_check
          %p153 = pneg %p30
        $region30: #{resnet_ghost_forward.26} parent=27 // pred_check_branch
          %155 = sbr.rel (%p153) target = $region32
        $region31: #{resnet_ghost_forward.26} parent=27 // pred_region
          %s156 = sand.u32 %s20, 1
          %s157 = sand.u32 %s20, 1
          %s158 = smul.addr %s157, 72
          %s159 = scalar_lea.vmem [#allocation2], %s158
          %s160 = smul.u32 2, %s10
          %s161 = smul.addr %s160, 4
          %s162 = scalar_lea.vmem %s0, %s161
          // Predicated region
          $region33: #{resnet_ghost_forward.26} parent=31 // pred_check
            _
          $region34: #{resnet_ghost_forward.26} parent=31 // pred_check_branch
            %164 = sbr.rel (0) target = $region36
          $region35: #{resnet_ghost_forward.26} parent=31 // pred_region
            // Predicated region
            $region37: #{resnet_ghost_forward.26} parent=35 // pred_check
              _
            $region38: #{resnet_ghost_forward.26} parent=35 // pred_check_branch
              %166 = sbr.rel (0) target = $region40
            $region39: #{resnet_ghost_forward.26} parent=35 // pred_region
              // Predicated region
              $region52: #{resnet_ghost_forward.26} parent=39 // pred_check
                _
              $region53: #{resnet_ghost_forward.26} parent=39 // pred_check_branch
                %198 = sbr.rel (0) target = $region55
              $region54: #{resnet_ghost_forward.26} parent=39 // pred_region
                loop: start=0, step=1, limit=1
                $region56: #{resnet_ghost_forward.26} parent=54 // loop_pre_header
                  _
                $region57: #{resnet_ghost_forward.26} parent=54 // loop_header
                  %s200 = sphi 0, %s204
                  %p201 = scmp.ge.s32.totalorder %s200, 1
                  %s205 = sphi %s162, %s162
                  %s206 = sphi %s159, %s159
                $region58: #{resnet_ghost_forward.26} parent=54 // loop_header_branch
                  %203 = sbr.rel (%p201) target = $region62
                $region59: #{resnet_ghost_forward.26} parent=54 // loop_body
                  %v207 = vld [vmem:[%s205] sm:$0xff]
                  %208 = vst [vmem:[%s206] sm:$0xff] %v207
                  %v209 = vld [vmem:[%s205 + $0x10] sm:$0xff]
                  %210 = vst [vmem:[%s206 + $0x8] sm:$0xff] %v209
                  %v211 = vld [vmem:[%s205 + $0x20] sm:$0xff]
                  %212 = vst [vmem:[%s206 + $0x10] sm:$0xff] %v211
                  %v213 = vld [vmem:[%s205 + $0x30] sm:$0xff]
                  %214 = vst [vmem:[%s206 + $0x18] sm:$0xff] %v213
                  %v215 = vld [vmem:[%s205 + $0x40] sm:$0xff]
                  %216 = vst [vmem:[%s206 + $0x20] sm:$0xff] %v215
                  %v217 = vld [vmem:[%s205 + $0x50] sm:$0xff]
                  %218 = vst [vmem:[%s206 + $0x28] sm:$0xff] %v217
                  %v219 = vld [vmem:[%s205 + $0x60] sm:$0xff]
                  %220 = vst [vmem:[%s206 + $0x30] sm:$0xff] %v219
                  %v221 = vld [vmem:[%s205 + $0x70] sm:$0xff]
                  %222 = vst [vmem:[%s206 + $0x38] sm:$0xff] %v221
                  %v223 = vld [vmem:[%s205 + $0x80] sm:$0xff]
                  %224 = vst [vmem:[%s206 + $0x40] sm:$0xff] %v223
                $region60: #{resnet_ghost_forward.26} parent=54 // loop_footer
                  %s204 = sadd.s32 1, %s200
                $region61: #{resnet_ghost_forward.26} parent=54 // loop_footer_branch
                  %199 = sbr.rel target = $region57
                $region62: #{resnet_ghost_forward.26} parent=54 // loop_exit
                  _
              $region55: #{resnet_ghost_forward.26} parent=39 // pred_fallthru
                _
              // Predicated region
              $region63: #{resnet_ghost_forward.26} parent=39 // pred_check
                _
              $region64: #{resnet_ghost_forward.26} parent=39 // pred_check_branch
                %226 = sbr.rel target = $region66
              $region65: #{resnet_ghost_forward.26} parent=39 // pred_region
                _
              $region66: #{resnet_ghost_forward.26} parent=39 // pred_fallthru
                _
            $region40: #{resnet_ghost_forward.26} parent=35 // pred_fallthru
              _
            // Predicated region
            $region41: #{resnet_ghost_forward.26} parent=35 // pred_check
              _
            $region42: #{resnet_ghost_forward.26} parent=35 // pred_check_branch
              %168 = sbr.rel target = $region44
            $region43: #{resnet_ghost_forward.26} parent=35 // pred_region
              %s170 = ssub.s32 256, 1
              loop: start=0, step=1, limit=1
              $region45: #{resnet_ghost_forward.26} parent=43 // loop_pre_header
                _
              $region46: #{resnet_ghost_forward.26} parent=43 // loop_header
                %s172 = sphi 0, %s176
                %p173 = scmp.ge.s32.totalorder %s172, 1
                %s177 = sphi %s162, %s162
                %s178 = sphi %s159, %s159
              $region47: #{resnet_ghost_forward.26} parent=43 // loop_header_branch
                %175 = sbr.rel (%p173) target = $region51
              $region48: #{resnet_ghost_forward.26} parent=43 // loop_body
                %v179 = vld [vmem:[%s177] sm:%s170]
                %180 = vst [vmem:[%s178] sm:%s170] %v179
                %v181 = vld [vmem:[%s177 + $0x10] sm:%s170]
                %182 = vst [vmem:[%s178 + $0x8] sm:%s170] %v181
                %v183 = vld [vmem:[%s177 + $0x20] sm:%s170]
                %184 = vst [vmem:[%s178 + $0x10] sm:%s170] %v183
                %v185 = vld [vmem:[%s177 + $0x30] sm:%s170]
                %186 = vst [vmem:[%s178 + $0x18] sm:%s170] %v185
                %v187 = vld [vmem:[%s177 + $0x40] sm:%s170]
                %188 = vst [vmem:[%s178 + $0x20] sm:%s170] %v187
                %v189 = vld [vmem:[%s177 + $0x50] sm:%s170]
                %190 = vst [vmem:[%s178 + $0x28] sm:%s170] %v189
                %v191 = vld [vmem:[%s177 + $0x60] sm:%s170]
                %192 = vst [vmem:[%s178 + $0x30] sm:%s170] %v191
                %v193 = vld [vmem:[%s177 + $0x70] sm:%s170]
                %194 = vst [vmem:[%s178 + $0x38] sm:%s170] %v193
                %v195 = vld [vmem:[%s177 + $0x80] sm:%s170]
                %196 = vst [vmem:[%s178 + $0x40] sm:%s170] %v195
              $region49: #{resnet_ghost_forward.26} parent=43 // loop_footer
                %s176 = sadd.s32 1, %s172
              $region50: #{resnet_ghost_forward.26} parent=43 // loop_footer_branch
                %171 = sbr.rel target = $region46
              $region51: #{resnet_ghost_forward.26} parent=43 // loop_exit
                _
            $region44: #{resnet_ghost_forward.26} parent=35 // pred_fallthru
              _
          $region36: #{resnet_ghost_forward.26} parent=31 // pred_fallthru
            _
          %227 = vnop
        $region32: #{resnet_ghost_forward.26} parent=27 // pred_fallthru
          _
      $region28: #{resnet_ghost_forward.26} parent=5 // pred_fallthru
        _
      %p228 = scmp.le.s32.totalorder 1, %s10
      %p229 = scmp.lt.s32.totalorder %s10, 3
      %p230 = pnand %p228, %p229
      %p231 = pneg %p230
      // Predicated region
      $region67: #{resnet_ghost_forward.26} parent=5 // pred_check
        _
      $region68: #{resnet_ghost_forward.26} parent=5 // pred_check_branch
        %233 = sbr.rel (%p230) target = $region70
      $region69: #{resnet_ghost_forward.26} parent=5 // pred_region
        %s234 = ssub.s32 %s10, 1
        %s235 = sand.u32 %s23, 1
        %s236 = sand.u32 %s23, 1
        %s237 = smul.addr %s236, 72
        %s238 = scalar_lea.vmem [#allocation2], %s237
        // Predicated region
        $region71: #{resnet_ghost_forward.26} parent=69 // pred_check
          %p239 = pneg %p36
        $region72: #{resnet_ghost_forward.26} parent=69 // pred_check_branch
          %241 = sbr.rel (%p239) target = $region74
        $region73: #{resnet_ghost_forward.26} parent=69 // pred_region
          _
        $region74: #{resnet_ghost_forward.26} parent=69 // pred_fallthru
          _
        %s242 = sand.u32 %s23, 1
        %s243 = sand.u32 %s23, 1
        %s244 = smul.addr %s243, 72
        %s245 = scalar_lea.vmem [#allocation2], %s244
        %p246 = pneg %p36
        %p247 = pneg %p33
        %p248 = pneg %p57
        %p249 = pneg %p54
        %p250 = pneg %p78
        %p251 = pneg %p75
        %p252 = pneg %p99
        %p253 = pneg %p96
        %p254 = pneg %p125
        %p255 = pneg %p122
        %s256 = smul.u32 2, %s15
        %p257 = scmp.lt.s32.totalorder %s256, 3
        %s258 = scalar_select %p257, %s256, 3
        %s259 = smul.addr %s258, 4
        %s260 = scalar_lea.vmem %s4, %s259
        %s261 = smul.u32 2, %s15
        %s262 = smul.u32 2, %s15
        %p263 = scmp.lt.s32.totalorder %s262, 3
        %s264 = scalar_select %p263, %s262, 3
        %s265 = smul.addr %s264, 4
        %s266 = scalar_lea.vmem %s4, %s265
        %s267 = smul.u32 2, %s15
        %v268 = vld [vmem:[%s238] sm:$0x77]
        %v269 = vld [vmem:[%s1] sm:$0x7]
        %271 = vset.pattern.permute.xlu0 0
        %272 = vperm.xlu0 %271, %v269
        %v273 = vpop.permute.xlu0 %272
        %v275 = vunpack.c.l.s4 839922192
        %v276 = vunpack.c.0.s8 %v275
        %v277 = vperm.slane %v273, %v276
        %v279 = vmul.f32 %v268, %v277
        %s280 = scalar_lea.vmem %s238, 8 [#allocation2]
        %v281 = vld [vmem:[%s280] sm:$0x77]
        %s282 = scalar_lea.vmem %s1, 4
        %v283 = vld [vmem:[%s282] sm:$0x7]
        %285 = vset.pattern.permute.xlu0 0
        %286 = vperm.xlu0 %285, %v283
        %v287 = vpop.permute.xlu0 %286
        %v289 = vunpack.c.l.s4 839922192
        %v290 = vunpack.c.0.s8 %v289
        %v291 = vperm.slane %v287, %v290
        %v293 = vmul.f32 %v281, %v291
        %v294 = vadd.f32 %v279, %v293
        %s295 = scalar_lea.vmem %s238, 16 [#allocation2]
        %v296 = vld [vmem:[%s295] sm:$0x77]
        %s297 = scalar_lea.vmem %s1, 8
        %v298 = vld [vmem:[%s297] sm:$0x7]
        %300 = vset.pattern.permute.xlu0 0
        %301 = vperm.xlu0 %300, %v298
        %v302 = vpop.permute.xlu0 %301
        %v304 = vunpack.c.l.s4 839922192
        %v305 = vunpack.c.0.s8 %v304
        %v306 = vperm.slane %v302, %v305
        %v308 = vmul.f32 %v296, %v306
        %v309 = vadd.f32 %v294, %v308
        %s310 = scalar_lea.vmem %s238, 24 [#allocation2]
        %v311 = vld [vmem:[%s310] sm:$0x77]
        %s312 = scalar_lea.vmem %s1, 12
        %v313 = vld [vmem:[%s312] sm:$0x7]
        %315 = vset.pattern.permute.xlu0 0
        %316 = vperm.xlu0 %315, %v313
        %v317 = vpop.permute.xlu0 %316
        %v319 = vunpack.c.l.s4 839922192
        %v320 = vunpack.c.0.s8 %v319
        %v321 = vperm.slane %v317, %v320
        %v323 = vmul.f32 %v311, %v321
        %v324 = vadd.f32 %v309, %v323
        %s325 = scalar_lea.vmem %s238, 32 [#allocation2]
        %v326 = vld [vmem:[%s325] sm:$0x77]
        %s327 = scalar_lea.vmem %s1, 16
        %v328 = vld [vmem:[%s327] sm:$0x7]
        %330 = vset.pattern.permute.xlu0 0
        %331 = vperm.xlu0 %330, %v328
        %v332 = vpop.permute.xlu0 %331
        %v334 = vunpack.c.l.s4 839922192
        %v335 = vunpack.c.0.s8 %v334
        %v336 = vperm.slane %v332, %v335
        %v338 = vmul.f32 %v326, %v336
        %v339 = vadd.f32 %v324, %v338
        %s340 = scalar_lea.vmem %s238, 40 [#allocation2]
        %v341 = vld [vmem:[%s340] sm:$0x77]
        %s342 = scalar_lea.vmem %s1, 20
        %v343 = vld [vmem:[%s342] sm:$0x7]
        %345 = vset.pattern.permute.xlu0 0
        %346 = vperm.xlu0 %345, %v343
        %v347 = vpop.permute.xlu0 %346
        %v349 = vunpack.c.l.s4 839922192
        %v350 = vunpack.c.0.s8 %v349
        %v351 = vperm.slane %v347, %v350
        %v353 = vmul.f32 %v341, %v351
        %v354 = vadd.f32 %v339, %v353
        %s355 = scalar_lea.vmem %s238, 48 [#allocation2]
        %v356 = vld [vmem:[%s355] sm:$0x77]
        %s357 = scalar_lea.vmem %s1, 24
        %v358 = vld [vmem:[%s357] sm:$0x7]
        %360 = vset.pattern.permute.xlu0 0
        %361 = vperm.xlu0 %360, %v358
        %v362 = vpop.permute.xlu0 %361
        %v364 = vunpack.c.l.s4 839922192
        %v365 = vunpack.c.0.s8 %v364
        %v366 = vperm.slane %v362, %v365
        %v368 = vmul.f32 %v356, %v366
        %v369 = vadd.f32 %v354, %v368
        %s370 = scalar_lea.vmem %s238, 56 [#allocation2]
        %v371 = vld [vmem:[%s370] sm:$0x77]
        %s372 = scalar_lea.vmem %s1, 28
        %v373 = vld [vmem:[%s372] sm:$0x7]
        %375 = vset.pattern.permute.xlu0 0
        %376 = vperm.xlu0 %375, %v373
        %v377 = vpop.permute.xlu0 %376
        %v379 = vunpack.c.l.s4 839922192
        %v380 = vunpack.c.0.s8 %v379
        %v381 = vperm.slane %v377, %v380
        %v383 = vmul.f32 %v371, %v381
        %v384 = vadd.f32 %v369, %v383
        %s385 = scalar_lea.vmem %s238, 64 [#allocation2]
        %v386 = vld [vmem:[%s385] sm:$0x77]
        %s387 = scalar_lea.vmem %s1, 32
        %v388 = vld [vmem:[%s387] sm:$0x7]
        %390 = vset.pattern.permute.xlu0 0
        %391 = vperm.xlu0 %390, %v388
        %v392 = vpop.permute.xlu0 %391
        %v394 = vunpack.c.l.s4 839922192
        %v395 = vunpack.c.0.s8 %v394
        %v396 = vperm.slane %v392, %v395
        %v398 = vmul.f32 %v386, %v396
        %v399 = vadd.f32 %v384, %v398
        %v400 = vld [vmem:[%s2] sm:$0x7]
        %402 = vset.pattern.permute.xlu0 0
        %403 = vperm.xlu0 %402, %v400
        %v404 = vpop.permute.xlu0 %403
        %v406 = vunpack.c.l.s4 839922192
        %v407 = vunpack.c.0.s8 %v406
        %v408 = vperm.slane %v404, %v407
        %v410 = vmul.f32 %v399, %v408
        %v411 = vld [vmem:[%s3] sm:$0x7]
        %413 = vset.pattern.permute.xlu0 0
        %414 = vperm.xlu0 %413, %v411
        %v415 = vpop.permute.xlu0 %414
        %v417 = vunpack.c.l.s4 839922192
        %v418 = vunpack.c.0.s8 %v417
        %v419 = vperm.slane %v415, %v418
        %v421 = vadd.f32 %v410, %v419
        %422 = vst [vmem:[%s266] sm:$0x77] %v421
        %s423 = smul.u32 2, %s15
        %p424 = scmp.lt.s32.totalorder %s423, 3
        %s425 = scalar_select %p424, %s423, 3
        %s426 = smul.addr %s425, 4
        %s427 = scalar_lea.vmem %s4, %s426
        // Predicated region
        $region75: #{resnet_ghost_forward.26} parent=69 // pred_check
          %p428 = pneg %p122
        $region76: #{resnet_ghost_forward.26} parent=69 // pred_check_branch
          %430 = sbr.rel (%p428) target = $region78
        $region77: #{resnet_ghost_forward.26} parent=69 // pred_region
          %s431 = smul.u32 2, %s15
        $region78: #{resnet_ghost_forward.26} parent=69 // pred_fallthru
          _
      $region70: #{resnet_ghost_forward.26} parent=5 // pred_fallthru
        _
      %p432 = scmp.le.s32.totalorder 2, %s10
      // Predicated region
      $region79: #{resnet_ghost_forward.26} parent=5 // pred_check
        %p433 = pneg %p432
      $region80: #{resnet_ghost_forward.26} parent=5 // pred_check_branch
        %435 = sbr.rel (%p433) target = $region82
      $region81: #{resnet_ghost_forward.26} parent=5 // pred_region
        %s436 = ssub.s32 %s10, 2
        // Predicated region
        $region83: #{resnet_ghost_forward.26} parent=81 // pred_check
          %p437 = pneg %p128
        $region84: #{resnet_ghost_forward.26} parent=81 // pred_check_branch
          %439 = sbr.rel (%p437) target = $region86
        $region85: #{resnet_ghost_forward.26} parent=81 // pred_region
          %s440 = smul.u32 2, %s16
          %p441 = scmp.lt.s32.totalorder %s440, 3
          %s442 = scalar_select %p441, %s440, 3
          %s443 = smul.addr %s442, 4
          %s444 = scalar_lea.vmem %s4, %s443
        $region86: #{resnet_ghost_forward.26} parent=81 // pred_fallthru
          _
      $region82: #{resnet_ghost_forward.26} parent=5 // pred_fallthru
        _
    $region6: #{resnet_ghost_forward.26} parent=1 // loop_footer
      %s14 = sadd.s32 1, %s10
    $region7: #{resnet_ghost_forward.26} parent=1 // loop_footer_branch
      %9 = sbr.rel target = $region3
    $region8: #{resnet_ghost_forward.26} parent=1 // loop_exit
      _

// kernel: resnet_ghost_forward.27
$region0: #{resnet_ghost_forward.27}
  #allocation0 [shape = 'u32[]', space=smem, size = 0x4, offset = 0x4, fixed_abs, tag = 'smem constant byte address 0x4 - core index']
  #allocation1 [shape = 'u32[72,128]{1,0:T(1,128)}', space=vmem, size = 0x9000, scoped, tag = 'internal scratch']
  %s0 = inlined_call_operand.vmem [shape: f32[9,3,512], index: 0, kind: input, shape index: {}]
  %s1 = inlined_call_operand.vmem [shape: f32[9,3,9], index: 1, kind: input, shape index: {}]
  %s2 = inlined_call_operand.vmem [shape: f32[3,9,1], index: 2, kind: input, shape index: {}]
  %s3 = inlined_call_operand.vmem [shape: f32[3,9,1], index: 3, kind: input, shape index: {}]
  %s4 = inlined_call_operand.vmem [shape: f32[3,9,512], index: 4, kind: output, shape index: {}]
  %s5 = sld [smem:[#allocation0]]
  $region106: #{resnet_ghost_forward.27} parent=0
    _
  %s7 = ssub.s32 1, %s5
  %s8 = scalar_select 0, %s7, %s5
  $region1: #{resnet_ghost_forward.27} parent=0
    #allocation2 [shape = 'u8[73728]{0}', space=vmem, size = 0x12000, scoped, tag = 'input window, operand 0']
    #allocation3 [shape = 'u8[98304]{0}', space=vmem, size = 0x18000, scoped, tag = 'output window, operand 0']
    loop: start=0, step=1, limit=4
    $region2: #{resnet_ghost_forward.27} parent=1 // loop_pre_header
      _
    $region3: #{resnet_ghost_forward.27} parent=1 // loop_header
      %s10 = sphi 0, %s14
      %p11 = scmp.ge.s32.totalorder %s10, 4
      %s20 = sphi 0, %s22
      %s23 = sphi 0, %s20
      %s24 = sphi 0, %s23
      %s40 = sphi 0, %s24
      %s44 = sphi 0, %s44
      %s46 = sphi 0, %s44
      %s47 = sphi 0, %s46
      %s61 = sphi 0, %s47
      %s65 = sphi 0, %s65
      %s67 = sphi 0, %s65
      %s68 = sphi 0, %s67
      %s82 = sphi 0, %s68
      %s86 = sphi 0, %s86
      %s88 = sphi 0, %s86
      %s89 = sphi 0, %s88
      %s103 = sphi 0, %s89
      %s109 = sphi 0, %s111
      %s112 = sphi 0, %s109
      %s113 = sphi 0, %s112
      %s129 = sphi 0, %s113
    $region4: #{resnet_ghost_forward.27} parent=1 // loop_header_branch
      %13 = sbr.rel (%p11) target = $region8
    $region5: #{resnet_ghost_forward.27} parent=1 // loop_body
      %s15 = ssub.s32 %s10, 1
      %s16 = ssub.s32 %s10, 2
      %s17 = sadd.s32 %s10, 1
      %s18 = ssub.s32 %s10, %s17
      %p19 = scmp.eq.s32.totalorder %s18, 0
      %s21 = sadd.s32 %s20, 1
      %s22 = scalar_select %p19, %s20, %s21
      %p25 = pneg %p19
      %p26 = scmp.eq.s32.totalorder %s10, 1
      %p27 = por %p25, %p26
      %p28 = scmp.ne.s32.totalorder %s20, %s23
      %p29 = scmp.eq.s32.totalorder %s10, 0
      %p30 = por %p28, %p29
      %p31 = scmp.ne.s32.totalorder %s20, %s23
      %p32 = scmp.eq.s32.totalorder %s15, 1
      %p33 = por %p31, %p32
      %p34 = scmp.ne.s32.totalorder %s23, %s24
      %p35 = scmp.eq.s32.totalorder %s15, 0
      %p36 = por %p34, %p35
      %p37 = scmp.ne.s32.totalorder %s23, %s24
      %p38 = scmp.eq.s32.totalorder %s16, 1
      %p39 = por %p37, %p38
      %p41 = scmp.ne.s32.totalorder %s24, %s40
      %p42 = scmp.eq.s32.totalorder %s16, 0
      %p43 = por %p41, %p42
      %s45 = sadd.s32 %s44, 1
      %p48 = scmp.eq.s32.totalorder %s10, 1
      %p49 = scmp.ne.s32.totalorder %s44, %s46
      %p50 = scmp.eq.s32.totalorder %s10, 0
      %p51 = por %p49, %p50
      %p52 = scmp.ne.s32.totalorder %s44, %s46
      %p53 = scmp.eq.s32.totalorder %s15, 1
      %p54 = por %p52, %p53
      %p55 = scmp.ne.s32.totalorder %s46, %s47
      %p56 = scmp.eq.s32.totalorder %s15, 0
      %p57 = por %p55, %p56
      %p58 = scmp.ne.s32.totalorder %s46, %s47
      %p59 = scmp.eq.s32.totalorder %s16, 1
      %p60 = por %p58, %p59
      %p62 = scmp.ne.s32.totalorder %s47, %s61
      %p63 = scmp.eq.s32.totalorder %s16, 0
      %p64 = por %p62, %p63
      %s66 = sadd.s32 %s65, 1
      %p69 = scmp.eq.s32.totalorder %s10, 1
      %p70 = scmp.ne.s32.totalorder %s65, %s67
      %p71 = scmp.eq.s32.totalorder %s10, 0
      %p72 = por %p70, %p71
      %p73 = scmp.ne.s32.totalorder %s65, %s67
      %p74 = scmp.eq.s32.totalorder %s15, 1
      %p75 = por %p73, %p74
      %p76 = scmp.ne.s32.totalorder %s67, %s68
      %p77 = scmp.eq.s32.totalorder %s15, 0
      %p78 = por %p76, %p77
      %p79 = scmp.ne.s32.totalorder %s67, %s68
      %p80 = scmp.eq.s32.totalorder %s16, 1
      %p81 = por %p79, %p80
      %p83 = scmp.ne.s32.totalorder %s68, %s82
      %p84 = scmp.eq.s32.totalorder %s16, 0
      %p85 = por %p83, %p84
      %s87 = sadd.s32 %s86, 1
      %p90 = scmp.eq.s32.totalorder %s10, 1
      %p91 = scmp.ne.s32.totalorder %s86, %s88
      %p92 = scmp.eq.s32.totalorder %s10, 0
      %p93 = por %p91, %p92
      %p94 = scmp.ne.s32.totalorder %s86, %s88
      %p95 = scmp.eq.s32.totalorder %s15, 1
      %p96 = por %p94, %p95
      %p97 = scmp.ne.s32.totalorder %s88, %s89
      %p98 = scmp.eq.s32.totalorder %s15, 0
      %p99 = por %p97, %p98
      %p100 = scmp.ne.s32.totalorder %s88, %s89
      %p101 = scmp.eq.s32.totalorder %s16, 1
      %p102 = por %p100, %p101
      %p104 = scmp.ne.s32.totalorder %s89, %s103
      %p105 = scmp.eq.s32.totalorder %s16, 0
      %p106 = por %p104, %p105
      %s107 = ssub.s32 %s10, %s17
      %p108 = scmp.eq.s32.totalorder %s107, 0
      %s110 = sadd.s32 %s109, 1
      %s111 = scalar_select %p108, %s109, %s110
      %p114 = pneg %p108
      %p115 = scmp.eq.s32.totalorder %s10, 1
      %p116 = por %p114, %p115
      %p117 = scmp.ne.s32.totalorder %s109, %s112
      %p118 = scmp.eq.s32.totalorder %s10, 0
      %p119 = por %p117, %p118
      %p120 = scmp.ne.s32.totalorder %s109, %s112
      %p121 = scmp.eq.s32.totalorder %s15, 1
      %p122 = por %p120, %p121
      %p123 = scmp.ne.s32.totalorder %s112, %s113
      %p124 = scmp.eq.s32.totalorder %s15, 0
      %p125 = por %p123, %p124
      %p126 = scmp.ne.s32.totalorder %s112, %s113
      %p127 = scmp.eq.s32.totalorder %s16, 1
      %p128 = por %p126, %p127
      %p130 = scmp.ne.s32.totalorder %s113, %s129
      %p131 = scmp.eq.s32.totalorder %s16, 0
      %p132 = por %p130, %p131
      %p133 = scmp.le.s32.totalorder 1, %s10
      %p134 = scmp.lt.s32.totalorder %s10, 3
      %p135 = pnand %p133, %p134
      %p136 = pneg %p135
      // Predicated region
      $region9: #{resnet_ghost_forward.27} parent=5 // pred_check
        _
      $region10: #{resnet_ghost_forward.27} parent=5 // pred_check_branch
        %138 = sbr.rel (%p135) target = $region12
      $region11: #{resnet_ghost_forward.27} parent=5 // pred_region
        %s139 = ssub.s32 %s10, 1
        // Predicated region
        $region13: #{resnet_ghost_forward.27} parent=11 // pred_check
          %p140 = pneg %p57
        $region14: #{resnet_ghost_forward.27} parent=11 // pred_check_branch
          %142 = sbr.rel (%p140) target = $region16
        $region15: #{resnet_ghost_forward.27} parent=11 // pred_region
          _
        $region16: #{resnet_ghost_forward.27} parent=11 // pred_fallthru
          _
        // Predicated region
        $region17: #{resnet_ghost_forward.27} parent=11 // pred_check
          %p143 = pneg %p78
        $region18: #{resnet_ghost_forward.27} parent=11 // pred_check_branch
          %145 = sbr.rel (%p143) target = $region20
        $region19: #{resnet_ghost_forward.27} parent=11 // pred_region
          _
        $region20: #{resnet_ghost_forward.27} parent=11 // pred_fallthru
          _
        // Predicated region
        $region21: #{resnet_ghost_forward.27} parent=11 // pred_check
          %p146 = pneg %p99
        $region22: #{resnet_ghost_forward.27} parent=11 // pred_check_branch
          %148 = sbr.rel (%p146) target = $region24
        $region23: #{resnet_ghost_forward.27} parent=11 // pred_region
          _
        $region24: #{resnet_ghost_forward.27} parent=11 // pred_fallthru
          _
      $region12: #{resnet_ghost_forward.27} parent=5 // pred_fallthru
        _
      %p149 = scmp.lt.s32.totalorder %s10, 2
      // Predicated region
      $region25: #{resnet_ghost_forward.27} parent=5 // pred_check
        %p150 = pneg %p149
      $region26: #{resnet_ghost_forward.27} parent=5 // pred_check_branch
        %152 = sbr.rel (%p150) target = $region28
      $region27: #{resnet_ghost_forward.27} parent=5 // pred_region
        // Predicated region
        $region29: #{resnet_ghost_forward.27} parent=27 // pred_check
          %p153 = pneg %p30
        $region30: #{resnet_ghost_forward.27} parent=27 // pred_check_branch
          %155 = sbr.rel (%p153) target = $region32
        $region31: #{resnet_ghost_forward.27} parent=27 // pred_region
          %s156 = sand.u32 %s20, 1
          %s157 = sand.u32 %s20, 1
          %s158 = smul.addr %s157, 72
          %s159 = scalar_lea.vmem [#allocation2], %s158
          %s160 = smul.u32 2, %s10
          %s161 = smul.addr %s160, 4
          %s162 = scalar_lea.vmem %s0, %s161
          // Predicated region
          $region33: #{resnet_ghost_forward.27} parent=31 // pred_check
            _
          $region34: #{resnet_ghost_forward.27} parent=31 // pred_check_branch
            %164 = sbr.rel (0) target = $region36
          $region35: #{resnet_ghost_forward.27} parent=31 // pred_region
            // Predicated region
            $region37: #{resnet_ghost_forward.27} parent=35 // pred_check
              _
            $region38: #{resnet_ghost_forward.27} parent=35 // pred_check_branch
              %166 = sbr.rel (0) target = $region40
            $region39: #{resnet_ghost_forward.27} parent=35 // pred_region
              // Predicated region
              $region52: #{resnet_ghost_forward.27} parent=39 // pred_check
                _
              $region53: #{resnet_ghost_forward.27} parent=39 // pred_check_branch
                %198 = sbr.rel (0) target = $region55
              $region54: #{resnet_ghost_forward.27} parent=39 // pred_region
                loop: start=0, step=1, limit=1
                $region56: #{resnet_ghost_forward.27} parent=54 // loop_pre_header
                  _
                $region57: #{resnet_ghost_forward.27} parent=54 // loop_header
                  %s200 = sphi 0, %s204
                  %p201 = scmp.ge.s32.totalorder %s200, 1
                  %s205 = sphi %s162, %s162
                  %s206 = sphi %s159, %s159
                $region58: #{resnet_ghost_forward.27} parent=54 // loop_header_branch
                  %203 = sbr.rel (%p201) target = $region62
                $region59: #{resnet_ghost_forward.27} parent=54 // loop_body
                  %v207 = vld [vmem:[%s205] sm:$0xff]
                  %208 = vst [vmem:[%s206] sm:$0xff] %v207
                  %v209 = vld [vmem:[%s205 + $0x10] sm:$0xff]
                  %210 = vst [vmem:[%s206 + $0x8] sm:$0xff] %v209
                  %v211 = vld [vmem:[%s205 + $0x20] sm:$0xff]
                  %212 = vst [vmem:[%s206 + $0x10] sm:$0xff] %v211
                  %v213 = vld [vmem:[%s205 + $0x30] sm:$0xff]
                  %214 = vst [vmem:[%s206 + $0x18] sm:$0xff] %v213
                  %v215 = vld [vmem:[%s205 + $0x40] sm:$0xff]
                  %216 = vst [vmem:[%s206 + $0x20] sm:$0xff] %v215
                  %v217 = vld [vmem:[%s205 + $0x50] sm:$0xff]
                  %218 = vst [vmem:[%s206 + $0x28] sm:$0xff] %v217
                  %v219 = vld [vmem:[%s205 + $0x60] sm:$0xff]
                  %220 = vst [vmem:[%s206 + $0x30] sm:$0xff] %v219
                  %v221 = vld [vmem:[%s205 + $0x70] sm:$0xff]
                  %222 = vst [vmem:[%s206 + $0x38] sm:$0xff] %v221
                  %v223 = vld [vmem:[%s205 + $0x80] sm:$0xff]
                  %224 = vst [vmem:[%s206 + $0x40] sm:$0xff] %v223
                $region60: #{resnet_ghost_forward.27} parent=54 // loop_footer
                  %s204 = sadd.s32 1, %s200
                $region61: #{resnet_ghost_forward.27} parent=54 // loop_footer_branch
                  %199 = sbr.rel target = $region57
                $region62: #{resnet_ghost_forward.27} parent=54 // loop_exit
                  _
              $region55: #{resnet_ghost_forward.27} parent=39 // pred_fallthru
                _
              // Predicated region
              $region63: #{resnet_ghost_forward.27} parent=39 // pred_check
                _
              $region64: #{resnet_ghost_forward.27} parent=39 // pred_check_branch
                %226 = sbr.rel target = $region66
              $region65: #{resnet_ghost_forward.27} parent=39 // pred_region
                _
              $region66: #{resnet_ghost_forward.27} parent=39 // pred_fallthru
                _
            $region40: #{resnet_ghost_forward.27} parent=35 // pred_fallthru
              _
            // Predicated region
            $region41: #{resnet_ghost_forward.27} parent=35 // pred_check
              _
            $region42: #{resnet_ghost_forward.27} parent=35 // pred_check_branch
              %168 = sbr.rel target = $region44
            $region43: #{resnet_ghost_forward.27} parent=35 // pred_region
              %s170 = ssub.s32 256, 1
              loop: start=0, step=1, limit=1
              $region45: #{resnet_ghost_forward.27} parent=43 // loop_pre_header
                _
              $region46: #{resnet_ghost_forward.27} parent=43 // loop_header
                %s172 = sphi 0, %s176
                %p173 = scmp.ge.s32.totalorder %s172, 1
                %s177 = sphi %s162, %s162
                %s178 = sphi %s159, %s159
              $region47: #{resnet_ghost_forward.27} parent=43 // loop_header_branch
                %175 = sbr.rel (%p173) target = $region51
              $region48: #{resnet_ghost_forward.27} parent=43 // loop_body
                %v179 = vld [vmem:[%s177] sm:%s170]
                %180 = vst [vmem:[%s178] sm:%s170] %v179
                %v181 = vld [vmem:[%s177 + $0x10] sm:%s170]
                %182 = vst [vmem:[%s178 + $0x8] sm:%s170] %v181
                %v183 = vld [vmem:[%s177 + $0x20] sm:%s170]
                %184 = vst [vmem:[%s178 + $0x10] sm:%s170] %v183
                %v185 = vld [vmem:[%s177 + $0x30] sm:%s170]
                %186 = vst [vmem:[%s178 + $0x18] sm:%s170] %v185
                %v187 = vld [vmem:[%s177 + $0x40] sm:%s170]
                %188 = vst [vmem:[%s178 + $0x20] sm:%s170] %v187
                %v189 = vld [vmem:[%s177 + $0x50] sm:%s170]
                %190 = vst [vmem:[%s178 + $0x28] sm:%s170] %v189
                %v191 = vld [vmem:[%s177 + $0x60] sm:%s170]
                %192 = vst [vmem:[%s178 + $0x30] sm:%s170] %v191
                %v193 = vld [vmem:[%s177 + $0x70] sm:%s170]
                %194 = vst [vmem:[%s178 + $0x38] sm:%s170] %v193
                %v195 = vld [vmem:[%s177 + $0x80] sm:%s170]
                %196 = vst [vmem:[%s178 + $0x40] sm:%s170] %v195
              $region49: #{resnet_ghost_forward.27} parent=43 // loop_footer
                %s176 = sadd.s32 1, %s172
              $region50: #{resnet_ghost_forward.27} parent=43 // loop_footer_branch
                %171 = sbr.rel target = $region46
              $region51: #{resnet_ghost_forward.27} parent=43 // loop_exit
                _
            $region44: #{resnet_ghost_forward.27} parent=35 // pred_fallthru
              _
          $region36: #{resnet_ghost_forward.27} parent=31 // pred_fallthru
            _
          %227 = vnop
        $region32: #{resnet_ghost_forward.27} parent=27 // pred_fallthru
          _
      $region28: #{resnet_ghost_forward.27} parent=5 // pred_fallthru
        _
      %p228 = scmp.le.s32.totalorder 1, %s10
      %p229 = scmp.lt.s32.totalorder %s10, 3
      %p230 = pnand %p228, %p229
      %p231 = pneg %p230
      // Predicated region
      $region67: #{resnet_ghost_forward.27} parent=5 // pred_check
        _
      $region68: #{resnet_ghost_forward.27} parent=5 // pred_check_branch
        %233 = sbr.rel (%p230) target = $region70
      $region69: #{resnet_ghost_forward.27} parent=5 // pred_region
        %s234 = ssub.s32 %s10, 1
        %s235 = sand.u32 %s23, 1
        %s236 = sand.u32 %s23, 1
        %s237 = smul.addr %s236, 72
        %s238 = scalar_lea.vmem [#allocation2], %s237
        // Predicated region
        $region71: #{resnet_ghost_forward.27} parent=69 // pred_check
          %p239 = pneg %p36
        $region72: #{resnet_ghost_forward.27} parent=69 // pred_check_branch
          %241 = sbr.rel (%p239) target = $region74
        $region73: #{resnet_ghost_forward.27} parent=69 // pred_region
          _
        $region74: #{resnet_ghost_forward.27} parent=69 // pred_fallthru
          _
        %s242 = sand.u32 %s23, 1
        %s243 = sand.u32 %s23, 1
        %s244 = smul.addr %s243, 72
        %s245 = scalar_lea.vmem [#allocation2], %s244
        %p246 = pneg %p36
        %p247 = pneg %p33
        %p248 = pneg %p57
        %p249 = pneg %p54
        %p250 = pneg %p78
        %p251 = pneg %p75
        %p252 = pneg %p99
        %p253 = pneg %p96
        %p254 = pneg %p125
        %p255 = pneg %p122
        %s256 = sand.u32 %s112, 1
        %s257 = sand.u32 %s112, 1
        %s258 = smul.addr %s257, 96
        %s259 = scalar_lea.vmem [#allocation3], %s258
        %s260 = smul.u32 2, %s15
        %s261 = smul.u32 2, %s15
        %v262 = vld [vmem:[%s238] sm:$0x77]
        %v264 = vrot.slane %v262, 3
        %vm265 = vcmask 1040384
        %v266 = vsel %vm265, %v262, %v264
        %vm267 = vcmask 1041409
        %v268 = vsel %vm267, %v262, %v264
        %v269 = vrot.slane %v268, 1
        %vm270 = vcmask 1042434
        %v271 = vsel %vm270, %v262, %v264
        %v272 = vrot.slane %v271, 2
        %v273 = vld [vmem:[%s1] sm:$0x7]
        %v274 = vperm.slane %v273, 0
        %v275 = vlaneseq
        %v276 = vshrl.u32 %v275, 7
        %278 = vset.pattern.permute.xlu0 %v276
        %279 = vperm.xlu0 %278, %v274
        %v280 = vpop.permute.xlu0 %279
        %v281 = vlaneseq
        %v282 = vshrl.u32 %v281, 7
        %v283 = vadd.s32 %v282, 8
        %284 = vset.pattern.permute.xlu0 %v283
        %285 = vperm.xlu0 %284, %v274
        %v286 = vpop.permute.xlu0 %285
        %v287 = vperm.slane %v273, 1
        %v288 = vlaneseq
        %v289 = vshrl.u32 %v288, 7
        %291 = vset.pattern.permute.xlu0 %v289
        %292 = vperm.xlu0 %291, %v287
        %v293 = vpop.permute.xlu0 %292
        %v294 = vlaneseq
        %v295 = vshrl.u32 %v294, 7
        %v296 = vadd.s32 %v295, 8
        %297 = vset.pattern.permute.xlu0 %v296
        %298 = vperm.xlu0 %297, %v287
        %v299 = vpop.permute.xlu0 %298
        %v300 = vperm.slane %v273, 2
        %v301 = vlaneseq
        %v302 = vshrl.u32 %v301, 7
        %304 = vset.pattern.permute.xlu0 %v302
        %305 = vperm.xlu0 %304, %v300
        %v306 = vpop.permute.xlu0 %305
        %v307 = vlaneseq
        %v308 = vshrl.u32 %v307, 7
        %v309 = vadd.s32 %v308, 8
        %310 = vset.pattern.permute.xlu0 %v309
        %311 = vperm.xlu0 %310, %v300
        %v312 = vpop.permute.xlu0 %311
        %v313 = vperm.slane %v266, 0
        %v314 = vperm.slane %v266, 1
        %v315 = vperm.slane %v269, 0
        %v316 = vperm.slane %v269, 1
        %v317 = vperm.slane %v272, 0
        %v318 = vperm.slane %v272, 1
        %v325 = vsub.f32 %v313, %v280
        %v326 = vsub.f32 %v314, %v280
        %v327 = vsub.f32 %v313, %v286
        %v328 = vsub.f32 %v314, %v286
        %v329 = vsub.f32 %v315, %v293
        %v330 = vsub.f32 %v316, %v293
        %v331 = vsub.f32 %v315, %v299
        %v332 = vsub.f32 %v316, %v299
        %v333 = vsub.f32 %v317, %v306
        %v334 = vsub.f32 %v318, %v306
        %v335 = vsub.f32 %v317, %v312
        %v336 = vsub.f32 %v318, %v312
        %v337 = vand.u32 2147483647, %v325
        %v338 = vand.u32 2147483647, %v326
        %v339 = vand.u32 2147483647, %v327
        %v340 = vand.u32 2147483647, %v328
        %v341 = vand.u32 2147483647, %v329
        %v342 = vand.u32 2147483647, %v330
        %v343 = vand.u32 2147483647, %v331
        %v344 = vand.u32 2147483647, %v332
        %v345 = vand.u32 2147483647, %v333
        %v346 = vand.u32 2147483647, %v334
        %v347 = vand.u32 2147483647, %v335
        %v348 = vand.u32 2147483647, %v336
        %s349 = scalar_lea.vmem %s238, 8 [#allocation2]
        %v350 = vld [vmem:[%s349] sm:$0x77]
        %v352 = vrot.slane %v350, 3
        %v353 = vsel %vm265, %v350, %v352
        %v354 = vsel %vm267, %v350, %v352
        %v355 = vrot.slane %v354, 1
        %v356 = vsel %vm270, %v350, %v352
        %v357 = vrot.slane %v356, 2
        %s358 = scalar_lea.vmem %s1, 4
        %v359 = vld [vmem:[%s358] sm:$0x7]
        %v360 = vperm.slane %v359, 0
        %v361 = vlaneseq
        %v362 = vshrl.u32 %v361, 7
        %364 = vset.pattern.permute.xlu0 %v362
        %365 = vperm.xlu0 %364, %v360
        %v366 = vpop.permute.xlu0 %365
        %v367 = vlaneseq
        %v368 = vshrl.u32 %v367, 7
        %v369 = vadd.s32 %v368, 8
        %370 = vset.pattern.permute.xlu0 %v369
        %371 = vperm.xlu0 %370, %v360
        %v372 = vpop.permute.xlu0 %371
        %v373 = vperm.slane %v359, 1
        %v374 = vlaneseq
        %v375 = vshrl.u32 %v374, 7
        %377 = vset.pattern.permute.xlu0 %v375
        %378 = vperm.xlu0 %377, %v373
        %v379 = vpop.permute.xlu0 %378
        %v380 = vlaneseq
        %v381 = vshrl.u32 %v380, 7
        %v382 = vadd.s32 %v381, 8
        %383 = vset.pattern.permute.xlu0 %v382
        %384 = vperm.xlu0 %383, %v373
        %v385 = vpop.permute.xlu0 %384
        %v386 = vperm.slane %v359, 2
        %v387 = vlaneseq
        %v388 = vshrl.u32 %v387, 7
        %390 = vset.pattern.permute.xlu0 %v388
        %391 = vperm.xlu0 %390, %v386
        %v392 = vpop.permute.xlu0 %391
        %v393 = vlaneseq
        %v394 = vshrl.u32 %v393, 7
        %v395 = vadd.s32 %v394, 8
        %396 = vset.pattern.permute.xlu0 %v395
        %397 = vperm.xlu0 %396, %v386
        %v398 = vpop.permute.xlu0 %397
        %v399 = vperm.slane %v353, 0
        %v400 = vperm.slane %v353, 1
        %v401 = vperm.slane %v355, 0
        %v402 = vperm.slane %v355, 1
        %v403 = vperm.slane %v357, 0
        %v404 = vperm.slane %v357, 1
        %v411 = vsub.f32 %v399, %v366
        %v412 = vsub.f32 %v400, %v366
        %v413 = vsub.f32 %v399, %v372
        %v414 = vsub.f32 %v400, %v372
        %v415 = vsub.f32 %v401, %v379
        %v416 = vsub.f32 %v402, %v379
        %v417 = vsub.f32 %v401, %v385
        %v418 = vsub.f32 %v402, %v385
        %v419 = vsub.f32 %v403, %v392
        %v420 = vsub.f32 %v404, %v392
        %v421 = vsub.f32 %v403, %v398
        %v422 = vsub.f32 %v404, %v398
        %v423 = vand.u32 2147483647, %v411
        %v424 = vand.u32 2147483647, %v412
        %v425 = vand.u32 2147483647, %v413
        %v426 = vand.u32 2147483647, %v414
        %v427 = vand.u32 2147483647, %v415
        %v428 = vand.u32 2147483647, %v416
        %v429 = vand.u32 2147483647, %v417
        %v430 = vand.u32 2147483647, %v418
        %v431 = vand.u32 2147483647, %v419
        %v432 = vand.u32 2147483647, %v420
        %v433 = vand.u32 2147483647, %v421
        %v434 = vand.u32 2147483647, %v422
        %v435 = vadd.f32 %v337, %v423
        %v436 = vadd.f32 %v338, %v424
        %v437 = vadd.f32 %v339, %v425
        %v438 = vadd.f32 %v340, %v426
        %v439 = vadd.f32 %v341, %v427
        %v440 = vadd.f32 %v342, %v428
        %v441 = vadd.f32 %v343, %v429
        %v442 = vadd.f32 %v344, %v430
        %v443 = vadd.f32 %v345, %v431
        %v444 = vadd.f32 %v346, %v432
        %v445 = vadd.f32 %v347, %v433
        %v446 = vadd.f32 %v348, %v434
        %s447 = scalar_lea.vmem %s238, 16 [#allocation2]
        %v448 = vld [vmem:[%s447] sm:$0x77]
        %v450 = vrot.slane %v448, 3
        %v451 = vsel %vm265, %v448, %v450
        %v452 = vsel %vm267, %v448, %v450
        %v453 = vrot.slane %v452, 1
        %v454 = vsel %vm270, %v448, %v450
        %v455 = vrot.slane %v454, 2
        %s456 = scalar_lea.vmem %s1, 8
        %v457 = vld [vmem:[%s456] sm:$0x7]
        %v458 = vperm.slane %v457, 0
        %v459 = vlaneseq
        %v460 = vshrl.u32 %v459, 7
        %462 = vset.pattern.permute.xlu0 %v460
        %463 = vperm.xlu0 %462, %v458
        %v464 = vpop.permute.xlu0 %463
        %v465 = vlaneseq
        %v466 = vshrl.u32 %v465, 7
        %v467 = vadd.s32 %v466, 8
        %468 = vset.pattern.permute.xlu0 %v467
        %469 = vperm.xlu0 %468, %v458
        %v470 = vpop.permute.xlu0 %469
        %v471 = vperm.slane %v457, 1
        %v472 = vlaneseq
        %v473 = vshrl.u32 %v472, 7
        %475 = vset.pattern.permute.xlu0 %v473
        %476 = vperm.xlu0 %475, %v471
        %v477 = vpop.permute.xlu0 %476
        %v478 = vlaneseq
        %v479 = vshrl.u32 %v478, 7
        %v480 = vadd.s32 %v479, 8
        %481 = vset.pattern.permute.xlu0 %v480
        %482 = vperm.xlu0 %481, %v471
        %v483 = vpop.permute.xlu0 %482
        %v484 = vperm.slane %v457, 2
        %v485 = vlaneseq
        %v486 = vshrl.u32 %v485, 7
        %488 = vset.pattern.permute.xlu0 %v486
        %489 = vperm.xlu0 %488, %v484
        %v490 = vpop.permute.xlu0 %489
        %v491 = vlaneseq
        %v492 = vshrl.u32 %v491, 7
        %v493 = vadd.s32 %v492, 8
        %494 = vset.pattern.permute.xlu0 %v493
        %495 = vperm.xlu0 %494, %v484
        %v496 = vpop.permute.xlu0 %495
        %v497 = vperm.slane %v451, 0
        %v498 = vperm.slane %v451, 1
        %v499 = vperm.slane %v453, 0
        %v500 = vperm.slane %v453, 1
        %v501 = vperm.slane %v455, 0
        %v502 = vperm.slane %v455, 1
        %v509 = vsub.f32 %v497, %v464
        %v510 = vsub.f32 %v498, %v464
        %v511 = vsub.f32 %v497, %v470
        %v512 = vsub.f32 %v498, %v470
        %v513 = vsub.f32 %v499, %v477
        %v514 = vsub.f32 %v500, %v477
        %v515 = vsub.f32 %v499, %v483
        %v516 = vsub.f32 %v500, %v483
        %v517 = vsub.f32 %v501, %v490
        %v518 = vsub.f32 %v502, %v490
        %v519 = vsub.f32 %v501, %v496
        %v520 = vsub.f32 %v502, %v496
        %v521 = vand.u32 2147483647, %v509
        %v522 = vand.u32 2147483647, %v510
        %v523 = vand.u32 2147483647, %v511
        %v524 = vand.u32 2147483647, %v512
        %v525 = vand.u32 2147483647, %v513
        %v526 = vand.u32 2147483647, %v514
        %v527 = vand.u32 2147483647, %v515
        %v528 = vand.u32 2147483647, %v516
        %v529 = vand.u32 2147483647, %v517
        %v530 = vand.u32 2147483647, %v518
        %v531 = vand.u32 2147483647, %v519
        %v532 = vand.u32 2147483647, %v520
        %v533 = vadd.f32 %v435, %v521
        %v534 = vadd.f32 %v436, %v522
        %v535 = vadd.f32 %v437, %v523
        %v536 = vadd.f32 %v438, %v524
        %v537 = vadd.f32 %v439, %v525
        %v538 = vadd.f32 %v440, %v526
        %v539 = vadd.f32 %v441, %v527
        %v540 = vadd.f32 %v442, %v528
        %v541 = vadd.f32 %v443, %v529
        %v542 = vadd.f32 %v444, %v530
        %v543 = vadd.f32 %v445, %v531
        %v544 = vadd.f32 %v446, %v532
        %s545 = scalar_lea.vmem %s238, 24 [#allocation2]
        %v546 = vld [vmem:[%s545] sm:$0x77]
        %v548 = vrot.slane %v546, 3
        %v549 = vsel %vm265, %v546, %v548
        %v550 = vsel %vm267, %v546, %v548
        %v551 = vrot.slane %v550, 1
        %v552 = vsel %vm270, %v546, %v548
        %v553 = vrot.slane %v552, 2
        %s554 = scalar_lea.vmem %s1, 12
        %v555 = vld [vmem:[%s554] sm:$0x7]
        %v556 = vperm.slane %v555, 0
        %v557 = vlaneseq
        %v558 = vshrl.u32 %v557, 7
        %560 = vset.pattern.permute.xlu0 %v558
        %561 = vperm.xlu0 %560, %v556
        %v562 = vpop.permute.xlu0 %561
        %v563 = vlaneseq
        %v564 = vshrl.u32 %v563, 7
        %v565 = vadd.s32 %v564, 8
        %566 = vset.pattern.permute.xlu0 %v565
        %567 = vperm.xlu0 %566, %v556
        %v568 = vpop.permute.xlu0 %567
        %v569 = vperm.slane %v555, 1
        %v570 = vlaneseq
        %v571 = vshrl.u32 %v570, 7
        %573 = vset.pattern.permute.xlu0 %v571
        %574 = vperm.xlu0 %573, %v569
        %v575 = vpop.permute.xlu0 %574
        %v576 = vlaneseq
        %v577 = vshrl.u32 %v576, 7
        %v578 = vadd.s32 %v577, 8
        %579 = vset.pattern.permute.xlu0 %v578
        %580 = vperm.xlu0 %579, %v569
        %v581 = vpop.permute.xlu0 %580
        %v582 = vperm.slane %v555, 2
        %v583 = vlaneseq
        %v584 = vshrl.u32 %v583, 7
        %586 = vset.pattern.permute.xlu0 %v584
        %587 = vperm.xlu0 %586, %v582
        %v588 = vpop.permute.xlu0 %587
        %v589 = vlaneseq
        %v590 = vshrl.u32 %v589, 7
        %v591 = vadd.s32 %v590, 8
        %592 = vset.pattern.permute.xlu0 %v591
        %593 = vperm.xlu0 %592, %v582
        %v594 = vpop.permute.xlu0 %593
        %v595 = vperm.slane %v549, 0
        %v596 = vperm.slane %v549, 1
        %v597 = vperm.slane %v551, 0
        %v598 = vperm.slane %v551, 1
        %v599 = vperm.slane %v553, 0
        %v600 = vperm.slane %v553, 1
        %v607 = vsub.f32 %v595, %v562
        %v608 = vsub.f32 %v596, %v562
        %v609 = vsub.f32 %v595, %v568
        %v610 = vsub.f32 %v596, %v568
        %v611 = vsub.f32 %v597, %v575
        %v612 = vsub.f32 %v598, %v575
        %v613 = vsub.f32 %v597, %v581
        %v614 = vsub.f32 %v598, %v581
        %v615 = vsub.f32 %v599, %v588
        %v616 = vsub.f32 %v600, %v588
        %v617 = vsub.f32 %v599, %v594
        %v618 = vsub.f32 %v600, %v594
        %v619 = vand.u32 2147483647, %v607
        %v620 = vand.u32 2147483647, %v608
        %v621 = vand.u32 2147483647, %v609
        %v622 = vand.u32 2147483647, %v610
        %v623 = vand.u32 2147483647, %v611
        %v624 = vand.u32 2147483647, %v612
        %v625 = vand.u32 2147483647, %v613
        %v626 = vand.u32 2147483647, %v614
        %v627 = vand.u32 2147483647, %v615
        %v628 = vand.u32 2147483647, %v616
        %v629 = vand.u32 2147483647, %v617
        %v630 = vand.u32 2147483647, %v618
        %v631 = vadd.f32 %v533, %v619
        %v632 = vadd.f32 %v534, %v620
        %v633 = vadd.f32 %v535, %v621
        %v634 = vadd.f32 %v536, %v622
        %v635 = vadd.f32 %v537, %v623
        %v636 = vadd.f32 %v538, %v624
        %v637 = vadd.f32 %v539, %v625
        %v638 = vadd.f32 %v540, %v626
        %v639 = vadd.f32 %v541, %v627
        %v640 = vadd.f32 %v542, %v628
        %v641 = vadd.f32 %v543, %v629
        %v642 = vadd.f32 %v544, %v630
        %s643 = scalar_lea.vmem %s238, 32 [#allocation2]
        %v644 = vld [vmem:[%s643] sm:$0x77]
        %v646 = vrot.slane %v644, 3
        %v647 = vsel %vm265, %v644, %v646
        %v648 = vsel %vm267, %v644, %v646
        %v649 = vrot.slane %v648, 1
        %v650 = vsel %vm270, %v644, %v646
        %v651 = vrot.slane %v650, 2
        %s652 = scalar_lea.vmem %s1, 16
        %v653 = vld [vmem:[%s652] sm:$0x7]
        %v654 = vperm.slane %v653, 0
        %v655 = vlaneseq
        %v656 = vshrl.u32 %v655, 7
        %658 = vset.pattern.permute.xlu0 %v656
        %659 = vperm.xlu0 %658, %v654
        %v660 = vpop.permute.xlu0 %659
        %v661 = vlaneseq
        %v662 = vshrl.u32 %v661, 7
        %v663 = vadd.s32 %v662, 8
        %664 = vset.pattern.permute.xlu0 %v663
        %665 = vperm.xlu0 %664, %v654
        %v666 = vpop.permute.xlu0 %665
        %v667 = vperm.slane %v653, 1
        %v668 = vlaneseq
        %v669 = vshrl.u32 %v668, 7
        %671 = vset.pattern.permute.xlu0 %v669
        %672 = vperm.xlu0 %671, %v667
        %v673 = vpop.permute.xlu0 %672
        %v674 = vlaneseq
        %v675 = vshrl.u32 %v674, 7
        %v676 = vadd.s32 %v675, 8
        %677 = vset.pattern.permute.xlu0 %v676
        %678 = vperm.xlu0 %677, %v667
        %v679 = vpop.permute.xlu0 %678
        %v680 = vperm.slane %v653, 2
        %v681 = vlaneseq
        %v682 = vshrl.u32 %v681, 7
        %684 = vset.pattern.permute.xlu0 %v682
        %685 = vperm.xlu0 %684, %v680
        %v686 = vpop.permute.xlu0 %685
        %v687 = vlaneseq
        %v688 = vshrl.u32 %v687, 7
        %v689 = vadd.s32 %v688, 8
        %690 = vset.pattern.permute.xlu0 %v689
        %691 = vperm.xlu0 %690, %v680
        %v692 = vpop.permute.xlu0 %691
        %v693 = vperm.slane %v647, 0
        %v694 = vperm.slane %v647, 1
        %v695 = vperm.slane %v649, 0
        %v696 = vperm.slane %v649, 1
        %v697 = vperm.slane %v651, 0
        %v698 = vperm.slane %v651, 1
        %v705 = vsub.f32 %v693, %v660
        %v706 = vsub.f32 %v694, %v660
        %v707 = vsub.f32 %v693, %v666
        %v708 = vsub.f32 %v694, %v666
        %v709 = vsub.f32 %v695, %v673
        %v710 = vsub.f32 %v696, %v673
        %v711 = vsub.f32 %v695, %v679
        %v712 = vsub.f32 %v696, %v679
        %v713 = vsub.f32 %v697, %v686
        %v714 = vsub.f32 %v698, %v686
        %v715 = vsub.f32 %v697, %v692
        %v716 = vsub.f32 %v698, %v692
        %v717 = vand.u32 2147483647, %v705
        %v718 = vand.u32 2147483647, %v706
        %v719 = vand.u32 2147483647, %v707
        %v720 = vand.u32 2147483647, %v708
        %v721 = vand.u32 2147483647, %v709
        %v722 = vand.u32 2147483647, %v710
        %v723 = vand.u32 2147483647, %v711
        %v724 = vand.u32 2147483647, %v712
        %v725 = vand.u32 2147483647, %v713
        %v726 = vand.u32 2147483647, %v714
        %v727 = vand.u32 2147483647, %v715
        %v728 = vand.u32 2147483647, %v716
        %v729 = vadd.f32 %v631, %v717
        %v730 = vadd.f32 %v632, %v718
        %v731 = vadd.f32 %v633, %v719
        %v732 = vadd.f32 %v634, %v720
        %v733 = vadd.f32 %v635, %v721
        %v734 = vadd.f32 %v636, %v722
        %v735 = vadd.f32 %v637, %v723
        %v736 = vadd.f32 %v638, %v724
        %v737 = vadd.f32 %v639, %v725
        %v738 = vadd.f32 %v640, %v726
        %v739 = vadd.f32 %v641, %v727
        %v740 = vadd.f32 %v642, %v728
        %s741 = scalar_lea.vmem %s238, 40 [#allocation2]
        %v742 = vld [vmem:[%s741] sm:$0x77]
        %v744 = vrot.slane %v742, 3
        %v745 = vsel %vm265, %v742, %v744
        %v746 = vsel %vm267, %v742, %v744
        %v747 = vrot.slane %v746, 1
        %v748 = vsel %vm270, %v742, %v744
        %v749 = vrot.slane %v748, 2
        %s750 = scalar_lea.vmem %s1, 20
        %v751 = vld [vmem:[%s750] sm:$0x7]
        %v752 = vperm.slane %v751, 0
        %v753 = vlaneseq
        %v754 = vshrl.u32 %v753, 7
        %756 = vset.pattern.permute.xlu0 %v754
        %757 = vperm.xlu0 %756, %v752
        %v758 = vpop.permute.xlu0 %757
        %v759 = vlaneseq
        %v760 = vshrl.u32 %v759, 7
        %v761 = vadd.s32 %v760, 8
        %762 = vset.pattern.permute.xlu0 %v761
        %763 = vperm.xlu0 %762, %v752
        %v764 = vpop.permute.xlu0 %763
        %v765 = vperm.slane %v751, 1
        %v766 = vlaneseq
        %v767 = vshrl.u32 %v766, 7
        %769 = vset.pattern.permute.xlu0 %v767
        %770 = vperm.xlu0 %769, %v765
        %v771 = vpop.permute.xlu0 %770
        %v772 = vlaneseq
        %v773 = vshrl.u32 %v772, 7
        %v774 = vadd.s32 %v773, 8
        %775 = vset.pattern.permute.xlu0 %v774
        %776 = vperm.xlu0 %775, %v765
        %v777 = vpop.permute.xlu0 %776
        %v778 = vperm.slane %v751, 2
        %v779 = vlaneseq
        %v780 = vshrl.u32 %v779, 7
        %782 = vset.pattern.permute.xlu0 %v780
        %783 = vperm.xlu0 %782, %v778
        %v784 = vpop.permute.xlu0 %783
        %v785 = vlaneseq
        %v786 = vshrl.u32 %v785, 7
        %v787 = vadd.s32 %v786, 8
        %788 = vset.pattern.permute.xlu0 %v787
        %789 = vperm.xlu0 %788, %v778
        %v790 = vpop.permute.xlu0 %789
        %v791 = vperm.slane %v745, 0
        %v792 = vperm.slane %v745, 1
        %v793 = vperm.slane %v747, 0
        %v794 = vperm.slane %v747, 1
        %v795 = vperm.slane %v749, 0
        %v796 = vperm.slane %v749, 1
        %v803 = vsub.f32 %v791, %v758
        %v804 = vsub.f32 %v792, %v758
        %v805 = vsub.f32 %v791, %v764
        %v806 = vsub.f32 %v792, %v764
        %v807 = vsub.f32 %v793, %v771
        %v808 = vsub.f32 %v794, %v771
        %v809 = vsub.f32 %v793, %v777
        %v810 = vsub.f32 %v794, %v777
        %v811 = vsub.f32 %v795, %v784
        %v812 = vsub.f32 %v796, %v784
        %v813 = vsub.f32 %v795, %v790
        %v814 = vsub.f32 %v796, %v790
        %v815 = vand.u32 2147483647, %v803
        %v816 = vand.u32 2147483647, %v804
        %v817 = vand.u32 2147483647, %v805
        %v818 = vand.u32 2147483647, %v806
        %v819 = vand.u32 2147483647, %v807
        %v820 = vand.u32 2147483647, %v808
        %v821 = vand.u32 2147483647, %v809
        %v822 = vand.u32 2147483647, %v810
        %v823 = vand.u32 2147483647, %v811
        %v824 = vand.u32 2147483647, %v812
        %v825 = vand.u32 2147483647, %v813
        %v826 = vand.u32 2147483647, %v814
        %v827 = vadd.f32 %v729, %v815
        %v828 = vadd.f32 %v730, %v816
        %v829 = vadd.f32 %v731, %v817
        %v830 = vadd.f32 %v732, %v818
        %v831 = vadd.f32 %v733, %v819
        %v832 = vadd.f32 %v734, %v820
        %v833 = vadd.f32 %v735, %v821
        %v834 = vadd.f32 %v736, %v822
        %v835 = vadd.f32 %v737, %v823
        %v836 = vadd.f32 %v738, %v824
        %v837 = vadd.f32 %v739, %v825
        %v838 = vadd.f32 %v740, %v826
        %s839 = scalar_lea.vmem %s238, 48 [#allocation2]
        %v840 = vld [vmem:[%s839] sm:$0x77]
        %v842 = vrot.slane %v840, 3
        %v843 = vsel %vm265, %v840, %v842
        %v844 = vsel %vm267, %v840, %v842
        %v845 = vrot.slane %v844, 1
        %v846 = vsel %vm270, %v840, %v842
        %v847 = vrot.slane %v846, 2
        %s848 = scalar_lea.vmem %s1, 24
        %v849 = vld [vmem:[%s848] sm:$0x7]
        %v850 = vperm.slane %v849, 0
        %v851 = vlaneseq
        %v852 = vshrl.u32 %v851, 7
        %854 = vset.pattern.permute.xlu0 %v852
        %855 = vperm.xlu0 %854, %v850
        %v856 = vpop.permute.xlu0 %855
        %v857 = vlaneseq
        %v858 = vshrl.u32 %v857, 7
        %v859 = vadd.s32 %v858, 8
        %860 = vset.pattern.permute.xlu0 %v859
        %861 = vperm.xlu0 %860, %v850
        %v862 = vpop.permute.xlu0 %861
        %v863 = vperm.slane %v849, 1
        %v864 = vlaneseq
        %v865 = vshrl.u32 %v864, 7
        %867 = vset.pattern.permute.xlu0 %v865
        %868 = vperm.xlu0 %867, %v863
        %v869 = vpop.permute.xlu0 %868
        %v870 = vlaneseq
        %v871 = vshrl.u32 %v870, 7
        %v872 = vadd.s32 %v871, 8
        %873 = vset.pattern.permute.xlu0 %v872
        %874 = vperm.xlu0 %873, %v863
        %v875 = vpop.permute.xlu0 %874
        %v876 = vperm.slane %v849, 2
        %v877 = vlaneseq
        %v878 = vshrl.u32 %v877, 7
        %880 = vset.pattern.permute.xlu0 %v878
        %881 = vperm.xlu0 %880, %v876
        %v882 = vpop.permute.xlu0 %881
        %v883 = vlaneseq
        %v884 = vshrl.u32 %v883, 7
        %v885 = vadd.s32 %v884, 8
        %886 = vset.pattern.permute.xlu0 %v885
        %887 = vperm.xlu0 %886, %v876
        %v888 = vpop.permute.xlu0 %887
        %v889 = vperm.slane %v843, 0
        %v890 = vperm.slane %v843, 1
        %v891 = vperm.slane %v845, 0
        %v892 = vperm.slane %v845, 1
        %v893 = vperm.slane %v847, 0
        %v894 = vperm.slane %v847, 1
        %v901 = vsub.f32 %v889, %v856
        %v902 = vsub.f32 %v890, %v856
        %v903 = vsub.f32 %v889, %v862
        %v904 = vsub.f32 %v890, %v862
        %v905 = vsub.f32 %v891, %v869
        %v906 = vsub.f32 %v892, %v869
        %v907 = vsub.f32 %v891, %v875
        %v908 = vsub.f32 %v892, %v875
        %v909 = vsub.f32 %v893, %v882
        %v910 = vsub.f32 %v894, %v882
        %v911 = vsub.f32 %v893, %v888
        %v912 = vsub.f32 %v894, %v888
        %v913 = vand.u32 2147483647, %v901
        %v914 = vand.u32 2147483647, %v902
        %v915 = vand.u32 2147483647, %v903
        %v916 = vand.u32 2147483647, %v904
        %v917 = vand.u32 2147483647, %v905
        %v918 = vand.u32 2147483647, %v906
        %v919 = vand.u32 2147483647, %v907
        %v920 = vand.u32 2147483647, %v908
        %v921 = vand.u32 2147483647, %v909
        %v922 = vand.u32 2147483647, %v910
        %v923 = vand.u32 2147483647, %v911
        %v924 = vand.u32 2147483647, %v912
        %v925 = vadd.f32 %v827, %v913
        %v926 = vadd.f32 %v828, %v914
        %v927 = vadd.f32 %v829, %v915
        %v928 = vadd.f32 %v830, %v916
        %v929 = vadd.f32 %v831, %v917
        %v930 = vadd.f32 %v832, %v918
        %v931 = vadd.f32 %v833, %v919
        %v932 = vadd.f32 %v834, %v920
        %v933 = vadd.f32 %v835, %v921
        %v934 = vadd.f32 %v836, %v922
        %v935 = vadd.f32 %v837, %v923
        %v936 = vadd.f32 %v838, %v924
        %s937 = scalar_lea.vmem %s238, 56 [#allocation2]
        %v938 = vld [vmem:[%s937] sm:$0x77]
        %v940 = vrot.slane %v938, 3
        %v941 = vsel %vm265, %v938, %v940
        %v942 = vsel %vm267, %v938, %v940
        %v943 = vrot.slane %v942, 1
        %v944 = vsel %vm270, %v938, %v940
        %v945 = vrot.slane %v944, 2
        %s946 = scalar_lea.vmem %s1, 28
        %v947 = vld [vmem:[%s946] sm:$0x7]
        %v948 = vperm.slane %v947, 0
        %v949 = vlaneseq
        %v950 = vshrl.u32 %v949, 7
        %952 = vset.pattern.permute.xlu0 %v950
        %953 = vperm.xlu0 %952, %v948
        %v954 = vpop.permute.xlu0 %953
        %v955 = vlaneseq
        %v956 = vshrl.u32 %v955, 7
        %v957 = vadd.s32 %v956, 8
        %958 = vset.pattern.permute.xlu0 %v957
        %959 = vperm.xlu0 %958, %v948
        %v960 = vpop.permute.xlu0 %959
        %v961 = vperm.slane %v947, 1
        %v962 = vlaneseq
        %v963 = vshrl.u32 %v962, 7
        %965 = vset.pattern.permute.xlu0 %v963
        %966 = vperm.xlu0 %965, %v961
        %v967 = vpop.permute.xlu0 %966
        %v968 = vlaneseq
        %v969 = vshrl.u32 %v968, 7
        %v970 = vadd.s32 %v969, 8
        %971 = vset.pattern.permute.xlu0 %v970
        %972 = vperm.xlu0 %971, %v961
        %v973 = vpop.permute.xlu0 %972
        %v974 = vperm.slane %v947, 2
        %v975 = vlaneseq
        %v976 = vshrl.u32 %v975, 7
        %978 = vset.pattern.permute.xlu0 %v976
        %979 = vperm.xlu0 %978, %v974
        %v980 = vpop.permute.xlu0 %979
        %v981 = vlaneseq
        %v982 = vshrl.u32 %v981, 7
        %v983 = vadd.s32 %v982, 8
        %984 = vset.pattern.permute.xlu0 %v983
        %985 = vperm.xlu0 %984, %v974
        %v986 = vpop.permute.xlu0 %985
        %v987 = vperm.slane %v941, 0
        %v988 = vperm.slane %v941, 1
        %v989 = vperm.slane %v943, 0
        %v990 = vperm.slane %v943, 1
        %v991 = vperm.slane %v945, 0
        %v992 = vperm.slane %v945, 1
        %v999 = vsub.f32 %v987, %v954
        %v1000 = vsub.f32 %v988, %v954
        %v1001 = vsub.f32 %v987, %v960
        %v1002 = vsub.f32 %v988, %v960
        %v1003 = vsub.f32 %v989, %v967
        %v1004 = vsub.f32 %v990, %v967
        %v1005 = vsub.f32 %v989, %v973
        %v1006 = vsub.f32 %v990, %v973
        %v1007 = vsub.f32 %v991, %v980
        %v1008 = vsub.f32 %v992, %v980
        %v1009 = vsub.f32 %v991, %v986
        %v1010 = vsub.f32 %v992, %v986
        %v1011 = vand.u32 2147483647, %v999
        %v1012 = vand.u32 2147483647, %v1000
        %v1013 = vand.u32 2147483647, %v1001
        %v1014 = vand.u32 2147483647, %v1002
        %v1015 = vand.u32 2147483647, %v1003
        %v1016 = vand.u32 2147483647, %v1004
        %v1017 = vand.u32 2147483647, %v1005
        %v1018 = vand.u32 2147483647, %v1006
        %v1019 = vand.u32 2147483647, %v1007
        %v1020 = vand.u32 2147483647, %v1008
        %v1021 = vand.u32 2147483647, %v1009
        %v1022 = vand.u32 2147483647, %v1010
        %v1023 = vadd.f32 %v925, %v1011
        %v1024 = vadd.f32 %v926, %v1012
        %v1025 = vadd.f32 %v927, %v1013
        %v1026 = vadd.f32 %v928, %v1014
        %v1027 = vadd.f32 %v929, %v1015
        %v1028 = vadd.f32 %v930, %v1016
        %v1029 = vadd.f32 %v931, %v1017
        %v1030 = vadd.f32 %v932, %v1018
        %v1031 = vadd.f32 %v933, %v1019
        %v1032 = vadd.f32 %v934, %v1020
        %v1033 = vadd.f32 %v935, %v1021
        %v1034 = vadd.f32 %v936, %v1022
        %s1035 = scalar_lea.vmem %s238, 64 [#allocation2]
        %v1036 = vld [vmem:[%s1035] sm:$0x77]
        %v1038 = vrot.slane %v1036, 3
        %v1039 = vsel %vm265, %v1036, %v1038
        %v1040 = vsel %vm267, %v1036, %v1038
        %v1041 = vrot.slane %v1040, 1
        %v1042 = vsel %vm270, %v1036, %v1038
        %v1043 = vrot.slane %v1042, 2
        %s1044 = scalar_lea.vmem %s1, 32
        %v1045 = vld [vmem:[%s1044] sm:$0x7]
        %v1046 = vperm.slane %v1045, 0
        %v1047 = vlaneseq
        %v1048 = vshrl.u32 %v1047, 7
        %1050 = vset.pattern.permute.xlu0 %v1048
        %1051 = vperm.xlu0 %1050, %v1046
        %v1052 = vpop.permute.xlu0 %1051
        %v1053 = vlaneseq
        %v1054 = vshrl.u32 %v1053, 7
        %v1055 = vadd.s32 %v1054, 8
        %1056 = vset.pattern.permute.xlu0 %v1055
        %1057 = vperm.xlu0 %1056, %v1046
        %v1058 = vpop.permute.xlu0 %1057
        %v1059 = vperm.slane %v1045, 1
        %v1060 = vlaneseq
        %v1061 = vshrl.u32 %v1060, 7
        %1063 = vset.pattern.permute.xlu0 %v1061
        %1064 = vperm.xlu0 %1063, %v1059
        %v1065 = vpop.permute.xlu0 %1064
        %v1066 = vlaneseq
        %v1067 = vshrl.u32 %v1066, 7
        %v1068 = vadd.s32 %v1067, 8
        %1069 = vset.pattern.permute.xlu0 %v1068
        %1070 = vperm.xlu0 %1069, %v1059
        %v1071 = vpop.permute.xlu0 %1070
        %v1072 = vperm.slane %v1045, 2
        %v1073 = vlaneseq
        %v1074 = vshrl.u32 %v1073, 7
        %1076 = vset.pattern.permute.xlu0 %v1074
        %1077 = vperm.xlu0 %1076, %v1072
        %v1078 = vpop.permute.xlu0 %1077
        %v1079 = vlaneseq
        %v1080 = vshrl.u32 %v1079, 7
        %v1081 = vadd.s32 %v1080, 8
        %1082 = vset.pattern.permute.xlu0 %v1081
        %1083 = vperm.xlu0 %1082, %v1072
        %v1084 = vpop.permute.xlu0 %1083
        %v1085 = vperm.slane %v1039, 0
        %v1086 = vperm.slane %v1039, 1
        %v1087 = vperm.slane %v1041, 0
        %v1088 = vperm.slane %v1041, 1
        %v1089 = vperm.slane %v1043, 0
        %v1090 = vperm.slane %v1043, 1
        %v1097 = vsub.f32 %v1085, %v1052
        %v1098 = vsub.f32 %v1086, %v1052
        %v1099 = vsub.f32 %v1085, %v1058
        %v1100 = vsub.f32 %v1086, %v1058
        %v1101 = vsub.f32 %v1087, %v1065
        %v1102 = vsub.f32 %v1088, %v1065
        %v1103 = vsub.f32 %v1087, %v1071
        %v1104 = vsub.f32 %v1088, %v1071
        %v1105 = vsub.f32 %v1089, %v1078
        %v1106 = vsub.f32 %v1090, %v1078
        %v1107 = vsub.f32 %v1089, %v1084
        %v1108 = vsub.f32 %v1090, %v1084
        %v1109 = vand.u32 2147483647, %v1097
        %v1110 = vand.u32 2147483647, %v1098
        %v1111 = vand.u32 2147483647, %v1099
        %v1112 = vand.u32 2147483647, %v1100
        %v1113 = vand.u32 2147483647, %v1101
        %v1114 = vand.u32 2147483647, %v1102
        %v1115 = vand.u32 2147483647, %v1103
        %v1116 = vand.u32 2147483647, %v1104
        %v1117 = vand.u32 2147483647, %v1105
        %v1118 = vand.u32 2147483647, %v1106
        %v1119 = vand.u32 2147483647, %v1107
        %v1120 = vand.u32 2147483647, %v1108
        %v1121 = vadd.f32 %v1023, %v1109
        %v1122 = vadd.f32 %v1024, %v1110
        %v1123 = vadd.f32 %v1025, %v1111
        %v1124 = vadd.f32 %v1026, %v1112
        %v1125 = vadd.f32 %v1027, %v1113
        %v1126 = vadd.f32 %v1028, %v1114
        %v1127 = vadd.f32 %v1029, %v1115
        %v1128 = vadd.f32 %v1030, %v1116
        %v1129 = vadd.f32 %v1031, %v1117
        %v1130 = vadd.f32 %v1032, %v1118
        %v1131 = vadd.f32 %v1033, %v1119
        %v1132 = vadd.f32 %v1034, %v1120
        %v1133 = vsub.f32 0.0, %v1121
        %v1134 = vsub.f32 0.0, %v1122
        %v1135 = vsub.f32 0.0, %v1123
        %v1136 = vsub.f32 0.0, %v1124
        %v1137 = vsub.f32 0.0, %v1125
        %v1138 = vsub.f32 0.0, %v1126
        %v1139 = vsub.f32 0.0, %v1127
        %v1140 = vsub.f32 0.0, %v1128
        %v1141 = vsub.f32 0.0, %v1129
        %v1142 = vsub.f32 0.0, %v1130
        %v1143 = vsub.f32 0.0, %v1131
        %v1144 = vsub.f32 0.0, %v1132
        %v1145 = vld [vmem:[%s2] sm:$0xff]
        %v1146 = vld [vmem:[%s2 + $0x8] sm:$0x1]
        %v1147 = vld [vmem:[%s2 + $0x10] sm:$0xff]
        %v1148 = vld [vmem:[%s2 + $0x18] sm:$0x1]
        %v1149 = vld [vmem:[%s2 + $0x20] sm:$0xff]
        %v1150 = vld [vmem:[%s2 + $0x28] sm:$0x1]
        %1152 = vset.pattern.permute.xlu0 0
        %1153 = vperm.xlu0 %1152, %v1145
        %v1154 = vpop.permute.xlu0 %1153
        %1157 = vset.pattern.permute.xlu0 0
        %1158 = vperm.xlu0 %1157, %v1146
        %v1159 = vpop.permute.xlu0 %1158
        %1162 = vset.pattern.permute.xlu0 0
        %1163 = vperm.xlu0 %1162, %v1147
        %v1164 = vpop.permute.xlu0 %1163
        %1167 = vset.pattern.permute.xlu0 0
        %1168 = vperm.xlu0 %1167, %v1148
        %v1169 = vpop.permute.xlu0 %1168
        %1172 = vset.pattern.permute.xlu0 0
        %1173 = vperm.xlu0 %1172, %v1149
        %v1174 = vpop.permute.xlu0 %1173
        %1177 = vset.pattern.permute.xlu0 0
        %1178 = vperm.xlu0 %1177, %v1150
        %v1179 = vpop.permute.xlu0 %1178
        %v1181 = vmul.f32 %v1133, %v1154
        %v1182 = vmul.f32 %v1134, %v1154
        %v1183 = vmul.f32 %v1135, %v1159
        %v1184 = vmul.f32 %v1136, %v1159
        %v1185 = vmul.f32 %v1137, %v1164
        %v1186 = vmul.f32 %v1138, %v1164
        %v1187 = vmul.f32 %v1139, %v1169
        %v1188 = vmul.f32 %v1140, %v1169
        %v1189 = vmul.f32 %v1141, %v1174
        %v1190 = vmul.f32 %v1142, %v1174
        %v1191 = vmul.f32 %v1143, %v1179
        %v1192 = vmul.f32 %v1144, %v1179
        %v1193 = vld [vmem:[%s3] sm:$0xff]
        %v1194 = vld [vmem:[%s3 + $0x8] sm:$0x1]
        %v1195 = vld [vmem:[%s3 + $0x10] sm:$0xff]
        %v1196 = vld [vmem:[%s3 + $0x18] sm:$0x1]
        %v1197 = vld [vmem:[%s3 + $0x20] sm:$0xff]
        %v1198 = vld [vmem:[%s3 + $0x28] sm:$0x1]
        %1200 = vset.pattern.permute.xlu0 0
        %1201 = vperm.xlu0 %1200, %v1193
        %v1202 = vpop.permute.xlu0 %1201
        %1205 = vset.pattern.permute.xlu0 0
        %1206 = vperm.xlu0 %1205, %v1194
        %v1207 = vpop.permute.xlu0 %1206
        %1210 = vset.pattern.permute.xlu0 0
        %1211 = vperm.xlu0 %1210, %v1195
        %v1212 = vpop.permute.xlu0 %1211
        %1215 = vset.pattern.permute.xlu0 0
        %1216 = vperm.xlu0 %1215, %v1196
        %v1217 = vpop.permute.xlu0 %1216
        %1220 = vset.pattern.permute.xlu0 0
        %1221 = vperm.xlu0 %1220, %v1197
        %v1222 = vpop.permute.xlu0 %1221
        %1225 = vset.pattern.permute.xlu0 0
        %1226 = vperm.xlu0 %1225, %v1198
        %v1227 = vpop.permute.xlu0 %1226
        %v1229 = vadd.f32 %v1181, %v1202
        %v1230 = vadd.f32 %v1182, %v1202
        %v1231 = vadd.f32 %v1183, %v1207
        %v1232 = vadd.f32 %v1184, %v1207
        %v1233 = vadd.f32 %v1185, %v1212
        %v1234 = vadd.f32 %v1186, %v1212
        %v1235 = vadd.f32 %v1187, %v1217
        %v1236 = vadd.f32 %v1188, %v1217
        %v1237 = vadd.f32 %v1189, %v1222
        %v1238 = vadd.f32 %v1190, %v1222
        %v1239 = vadd.f32 %v1191, %v1227
        %v1240 = vadd.f32 %v1192, %v1227
        %v1241 = vmax.f32 %v1229, 0.0
        %v1242 = vmax.f32 %v1230, 0.0
        %v1243 = vmax.f32 %v1231, 0.0
        %v1244 = vmax.f32 %v1232, 0.0
        %v1245 = vmax.f32 %v1233, 0.0
        %v1246 = vmax.f32 %v1234, 0.0
        %v1247 = vmax.f32 %v1235, 0.0
        %v1248 = vmax.f32 %v1236, 0.0
        %v1249 = vmax.f32 %v1237, 0.0
        %v1250 = vmax.f32 %v1238, 0.0
        %v1251 = vmax.f32 %v1239, 0.0
        %v1252 = vmax.f32 %v1240, 0.0
        %1253 = vst [vmem:[%s259] sm:$0xff] %v1241
        %1254 = vst [vmem:[%s259 + $0x8] sm:$0xff] %v1242
        %1255 = vst [vmem:[%s259 + $0x10] sm:$0x1] %v1243
        %1256 = vst [vmem:[%s259 + $0x18] sm:$0x1] %v1244
        %1257 = vst [vmem:[%s259 + $0x20] sm:$0xff] %v1245
        %1258 = vst [vmem:[%s259 + $0x28] sm:$0xff] %v1246
        %1259 = vst [vmem:[%s259 + $0x30] sm:$0x1] %v1247
        %1260 = vst [vmem:[%s259 + $0x38] sm:$0x1] %v1248
        %1261 = vst [vmem:[%s259 + $0x40] sm:$0xff] %v1249
        %1262 = vst [vmem:[%s259 + $0x48] sm:$0xff] %v1250
        %1263 = vst [vmem:[%s259 + $0x50] sm:$0x1] %v1251
        %1264 = vst [vmem:[%s259 + $0x58] sm:$0x1] %v1252
        %s1265 = sand.u32 %s112, 1
        %s1266 = sand.u32 %s112, 1
        %s1267 = smul.addr %s1266, 96
        %s1268 = scalar_lea.vmem [#allocation3], %s1267
        // Predicated region
        $region75: #{resnet_ghost_forward.27} parent=69 // pred_check
          %p1269 = pneg %p122
        $region76: #{resnet_ghost_forward.27} parent=69 // pred_check_branch
          %1271 = sbr.rel (%p1269) target = $region78
        $region77: #{resnet_ghost_forward.27} parent=69 // pred_region
          %s1272 = smul.u32 2, %s15
          %s1273 = smul.addr %s1272, 8
          %s1274 = scalar_lea.vmem %s4, %s1273
          // Predicated region
          $region79: #{resnet_ghost_forward.27} parent=77 // pred_check
            _
          $region80: #{resnet_ghost_forward.27} parent=77 // pred_check_branch
            %1276 = sbr.rel (0) target = $region82
          $region81: #{resnet_ghost_forward.27} parent=77 // pred_region
            // Predicated region
            $region83: #{resnet_ghost_forward.27} parent=81 // pred_check
              _
            $region84: #{resnet_ghost_forward.27} parent=81 // pred_check_branch
              %1278 = sbr.rel (0) target = $region86
            $region85: #{resnet_ghost_forward.27} parent=81 // pred_region
              loop: start=0, step=1, limit=1
              $region87: #{resnet_ghost_forward.27} parent=85 // loop_pre_header
                _
              $region88: #{resnet_ghost_forward.27} parent=85 // loop_header
                %s1280 = sphi 0, %s1284
                %p1281 = scmp.ge.s32.totalorder %s1280, 1
                %s1285 = sphi %s1268, %s1268
                %s1286 = sphi %s1274, %s1274
              $region89: #{resnet_ghost_forward.27} parent=85 // loop_header_branch
                %1283 = sbr.rel (%p1281) target = $region93
              $region90: #{resnet_ghost_forward.27} parent=85 // loop_body
                %v1287 = vld [vmem:[%s1285] sm:$0xff]
                %1288 = vst [vmem:[%s1286] sm:$0xff] %v1287
                %v1289 = vld [vmem:[%s1285 + $0x8] sm:$0xff]
                %1290 = vst [vmem:[%s1286 + $0x8] sm:$0xff] %v1289
                %v1291 = vld [vmem:[%s1285 + $0x10] sm:$0xff]
                %1292 = vst [vmem:[%s1286 + $0x20] sm:$0xff] %v1291
                %v1293 = vld [vmem:[%s1285 + $0x18] sm:$0xff]
                %1294 = vst [vmem:[%s1286 + $0x28] sm:$0xff] %v1293
                %v1295 = vld [vmem:[%s1285 + $0x20] sm:$0xff]
                %1296 = vst [vmem:[%s1286 + $0x40] sm:$0xff] %v1295
                %v1297 = vld [vmem:[%s1285 + $0x28] sm:$0xff]
                %1298 = vst [vmem:[%s1286 + $0x48] sm:$0xff] %v1297
                %v1299 = vld [vmem:[%s1285 + $0x30] sm:$0xff]
                %1300 = vst [vmem:[%s1286 + $0x60] sm:$0xff] %v1299
                %v1301 = vld [vmem:[%s1285 + $0x38] sm:$0xff]
                %1302 = vst [vmem:[%s1286 + $0x68] sm:$0xff] %v1301
                %v1303 = vld [vmem:[%s1285 + $0x40] sm:$0xff]
                %1304 = vst [vmem:[%s1286 + $0x80] sm:$0xff] %v1303
                %v1305 = vld [vmem:[%s1285 + $0x48] sm:$0xff]
                %1306 = vst [vmem:[%s1286 + $0x88] sm:$0xff] %v1305
                %v1307 = vld [vmem:[%s1285 + $0x50] sm:$0xff]
                %1308 = vst [vmem:[%s1286 + $0xa0] sm:$0xff] %v1307
                %v1309 = vld [vmem:[%s1285 + $0x58] sm:$0xff]
                %1310 = vst [vmem:[%s1286 + $0xa8] sm:$0xff] %v1309
              $region91: #{resnet_ghost_forward.27} parent=85 // loop_footer
                %s1284 = sadd.s32 1, %s1280
              $region92: #{resnet_ghost_forward.27} parent=85 // loop_footer_branch
                %1279 = sbr.rel target = $region88
              $region93: #{resnet_ghost_forward.27} parent=85 // loop_exit
                _
            $region86: #{resnet_ghost_forward.27} parent=81 // pred_fallthru
              _
            // Predicated region
            $region94: #{resnet_ghost_forward.27} parent=81 // pred_check
              _
            $region95: #{resnet_ghost_forward.27} parent=81 // pred_check_branch
              %1312 = sbr.rel target = $region97
            $region96: #{resnet_ghost_forward.27} parent=81 // pred_region
              _
            $region97: #{resnet_ghost_forward.27} parent=81 // pred_fallthru
              _
          $region82: #{resnet_ghost_forward.27} parent=77 // pred_fallthru
            _
          %1313 = vnop
        $region78: #{resnet_ghost_forward.27} parent=69 // pred_fallthru
          _
      $region70: #{resnet_ghost_forward.27} parent=5 // pred_fallthru
        _
      %p1314 = scmp.le.s32.totalorder 2, %s10
      // Predicated region
      $region98: #{resnet_ghost_forward.27} parent=5 // pred_check
        %p1315 = pneg %p1314
      $region99: #{resnet_ghost_forward.27} parent=5 // pred_check_branch
        %1317 = sbr.rel (%p1315) target = $region101
      $region100: #{resnet_ghost_forward.27} parent=5 // pred_region
        %s1318 = ssub.s32 %s10, 2
        // Predicated region
        $region102: #{resnet_ghost_forward.27} parent=100 // pred_check
          %p1319 = pneg %p128
        $region103: #{resnet_ghost_forward.27} parent=100 // pred_check_branch
          %1321 = sbr.rel (%p1319) target = $region105
        $region104: #{resnet_ghost_forward.27} parent=100 // pred_region
          %s1322 = sand.u32 %s113, 1
          %s1323 = sand.u32 %s113, 1
          %s1324 = smul.addr %s1323, 96
          %s1325 = scalar_lea.vmem [#allocation3], %s1324
        $region105: #{resnet_ghost_forward.27} parent=100 // pred_fallthru
          _
      $region101: #{resnet_ghost_forward.27} parent=5 // pred_fallthru
        _
    $region6: #{resnet_ghost_forward.27} parent=1 // loop_footer
      %s14 = sadd.s32 1, %s10
    $region7: #{resnet_ghost_forward.27} parent=1 // loop_footer_branch
      %9 = sbr.rel target = $region3
    $region8: #{resnet_ghost_forward.27} parent=1 // loop_exit
      _

// kernel: resnet_ghost_forward.29
$region0: #{resnet_ghost_forward.29}
  #allocation0 [shape = 'u32[]', space=smem, size = 0x4, offset = 0x4, fixed_abs, tag = 'smem constant byte address 0x4 - core index']
  #allocation1 [shape = 'u32[72,128]{1,0:T(1,128)}', space=vmem, size = 0x9000, scoped, tag = 'internal scratch']
  %s0 = inlined_call_operand.vmem [shape: bf16[128,24], index: 0, kind: input, shape index: {}]
  %s1 = inlined_call_operand.vmem [shape: bf16[24,128], index: 1, kind: input, shape index: {}]
  %s2 = inlined_call_operand.vmem [shape: f32[1,128], index: 2, kind: input, shape index: {}]
  %s3 = inlined_call_operand.vmem [shape: f32[1,128], index: 3, kind: input, shape index: {}]
  %s4 = inlined_call_operand.vmem [shape: f32[128,128], index: 4, kind: output, shape index: {}]
  %s5 = sld [smem:[#allocation0]]
  $region26: #{resnet_ghost_forward.29} parent=0
    _
  %s7 = ssub.s32 1, %s5
  %s8 = scalar_select 0, %s7, %s5
  // Predicated region
  $region2: #{resnet_ghost_forward.29} parent=0 // pred_check
    _
  $region3: #{resnet_ghost_forward.29} parent=0 // pred_check_branch
    %10 = sbr.rel (0) target = $region5
  $region4: #{resnet_ghost_forward.29} parent=0 // pred_region
    _
  $region5: #{resnet_ghost_forward.29} parent=0 // pred_fallthru
    _
  // Predicated region
  $region6: #{resnet_ghost_forward.29} parent=0 // pred_check
    _
  $region7: #{resnet_ghost_forward.29} parent=0 // pred_check_branch
    %12 = sbr.rel (0) target = $region9
  $region8: #{resnet_ghost_forward.29} parent=0 // pred_region
    _
  $region9: #{resnet_ghost_forward.29} parent=0 // pred_fallthru
    _
  // Predicated region
  $region10: #{resnet_ghost_forward.29} parent=0 // pred_check
    _
  $region11: #{resnet_ghost_forward.29} parent=0 // pred_check_branch
    %14 = sbr.rel (0) target = $region13
  $region12: #{resnet_ghost_forward.29} parent=0 // pred_region
    _
  $region13: #{resnet_ghost_forward.29} parent=0 // pred_fallthru
    _
  // Predicated region
  $region14: #{resnet_ghost_forward.29} parent=0 // pred_check
    _
  $region15: #{resnet_ghost_forward.29} parent=0 // pred_check_branch
    %16 = sbr.rel (0) target = $region17
  $region16: #{resnet_ghost_forward.29} parent=0 // pred_region
    _
  $region17: #{resnet_ghost_forward.29} parent=0 // pred_fallthru
    _
  %v18 = vld [vmem:[%s0] sm:$0xf]
  %v19 = vld [vmem:[%s0 + $0x4] sm:$0xf]
  %v20 = vld [vmem:[%s0 + $0x8] sm:$0xf]
  %v21 = vld [vmem:[%s0 + $0xc] sm:$0xf]
  %v22 = vld [vmem:[%s0 + $0x10] sm:$0xf]
  %v23 = vld [vmem:[%s0 + $0x14] sm:$0xf]
  %v24 = vld [vmem:[%s0 + $0x18] sm:$0xf]
  %v25 = vld [vmem:[%s0 + $0x1c] sm:$0xf]
  %v26 = vld [vmem:[%s0 + $0x20] sm:$0xf]
  %v27 = vld [vmem:[%s0 + $0x24] sm:$0xf]
  %v28 = vld [vmem:[%s0 + $0x28] sm:$0xf]
  %v29 = vld [vmem:[%s0 + $0x2c] sm:$0xf]
  %v30 = vld [vmem:[%s0 + $0x30] sm:$0xf]
  %v31 = vld [vmem:[%s0 + $0x34] sm:$0xf]
  %v32 = vld [vmem:[%s0 + $0x38] sm:$0xf]
  %v33 = vld [vmem:[%s0 + $0x3c] sm:$0xf]
  %v34 = vld [vmem:[%s1] sm:$0xf]
  %v35 = vld [vmem:[%s1 + $0x4] sm:$0xf]
  %v36 = vld [vmem:[%s1 + $0x8] sm:$0xf]
  %v53 = vunpack.c.l.b16 %v18
  %v54 = vunpack.c.l.b16 %v19
  %v55 = vunpack.c.l.b16 %v20
  %v56 = vunpack.c.l.b16 %v21
  %v57 = vunpack.c.l.b16 %v22
  %v58 = vunpack.c.l.b16 %v23
  %v59 = vunpack.c.l.b16 %v24
  %v60 = vunpack.c.l.b16 %v25
  %v61 = vunpack.c.l.b16 %v26
  %v62 = vunpack.c.l.b16 %v27
  %v63 = vunpack.c.l.b16 %v28
  %v64 = vunpack.c.l.b16 %v29
  %v65 = vunpack.c.l.b16 %v30
  %v66 = vunpack.c.l.b16 %v31
  %v67 = vunpack.c.l.b16 %v32
  %v68 = vunpack.c.l.b16 %v33
  %v69 = vpack.c.b16 %v54, %v53
  %v70 = vpack.c.b16 %v56, %v55
  %v71 = vpack.c.b16 %v58, %v57
  %v72 = vpack.c.b16 %v60, %v59
  %v73 = vpack.c.b16 %v62, %v61
  %v74 = vpack.c.b16 %v64, %v63
  %v75 = vpack.c.b16 %v66, %v65
  %v76 = vpack.c.b16 %v68, %v67
  %v80 = vunpack.c.l.b16 %v34
  %v81 = vunpack.c.l.b16 %v35
  %v82 = vunpack.c.l.b16 %v36
  %v83 = vpack.c.b16 %v81, %v80
  %v84 = vpack.c.b16 %v82, %v82
  %vm86 = vcmask 195584
  %v88 = vsel %vm86, %v69, 0
  %v91 = vsel %vm86, %v70, 0
  %v94 = vsel %vm86, %v71, 0
  %v97 = vsel %vm86, %v72, 0
  %v100 = vsel %vm86, %v73, 0
  %v103 = vsel %vm86, %v74, 0
  %v106 = vsel %vm86, %v75, 0
  %v109 = vsel %vm86, %v76, 0
  %vm111 = vcmask 1043456
  %v113 = vsel %vm111, %v84, 0
  %115 = vmatpush.bf16.msra.mxu0 0
  %116 = vmatpush.bf16.msra.mxu0 0
  %117 = vmatpush.bf16.msra.mxu0 0
  %118 = vmatpush.bf16.msra.mxu0 0
  %119 = vmatpush.bf16.msra.mxu0 0
  %120 = vmatpush.bf16.msra.mxu0 0
  %121 = vmatpush.bf16.msra.mxu0 %v113
  %122 = vmatpush.bf16.msra.mxu0 %v83
  %123 = vmatmul.bf16.gmra.mxu0 %v88
  %v124 = vpop.f32.mrf.mxu0
  %v125 = vadd.f32 0.0, %v124
  %v126 = vpop.f32.mrf.mxu0
  %v127 = vadd.f32 0.0, %v126
  %128 = vmatmul.bf16.gmra.mxu0 %v91
  %v129 = vpop.f32.mrf.mxu0
  %v130 = vadd.f32 0.0, %v129
  %v131 = vpop.f32.mrf.mxu0
  %v132 = vadd.f32 0.0, %v131
  %133 = vmatmul.bf16.gmra.mxu0 %v94
  %v134 = vpop.f32.mrf.mxu0
  %v135 = vadd.f32 0.0, %v134
  %v136 = vpop.f32.mrf.mxu0
  %v137 = vadd.f32 0.0, %v136
  %138 = vmatmul.bf16.gmra.mxu0 %v97
  %v139 = vpop.f32.mrf.mxu0
  %v140 = vadd.f32 0.0, %v139
  %v141 = vpop.f32.mrf.mxu0
  %v142 = vadd.f32 0.0, %v141
  %143 = vmatmul.bf16.gmra.mxu0 %v100
  %v144 = vpop.f32.mrf.mxu0
  %v145 = vadd.f32 0.0, %v144
  %v146 = vpop.f32.mrf.mxu0
  %v147 = vadd.f32 0.0, %v146
  %148 = vmatmul.bf16.gmra.mxu0 %v103
  %v149 = vpop.f32.mrf.mxu0
  %v150 = vadd.f32 0.0, %v149
  %v151 = vpop.f32.mrf.mxu0
  %v152 = vadd.f32 0.0, %v151
  %153 = vmatmul.bf16.gmra.mxu0 %v106
  %v154 = vpop.f32.mrf.mxu0
  %v155 = vadd.f32 0.0, %v154
  %v156 = vpop.f32.mrf.mxu0
  %v157 = vadd.f32 0.0, %v156
  %158 = vmatmul.bf16.gmra.mxu0 %v109
  %v159 = vpop.f32.mrf.mxu0
  %v160 = vadd.f32 0.0, %v159
  %v161 = vpop.f32.mrf.mxu0
  %v162 = vadd.f32 0.0, %v161
  %163 = vdwg.mxu0
  %v164 = vld [vmem:[%s2] sm:$0x1]
  %v166 = vperm.slane %v164, 0
  %v168 = vmul.f32 %v125, %v166
  %v169 = vmul.f32 %v127, %v166
  %v170 = vmul.f32 %v130, %v166
  %v171 = vmul.f32 %v132, %v166
  %v172 = vmul.f32 %v135, %v166
  %v173 = vmul.f32 %v137, %v166
  %v174 = vmul.f32 %v140, %v166
  %v175 = vmul.f32 %v142, %v166
  %v176 = vmul.f32 %v145, %v166
  %v177 = vmul.f32 %v147, %v166
  %v178 = vmul.f32 %v150, %v166
  %v179 = vmul.f32 %v152, %v166
  %v180 = vmul.f32 %v155, %v166
  %v181 = vmul.f32 %v157, %v166
  %v182 = vmul.f32 %v160, %v166
  %v183 = vmul.f32 %v162, %v166
  %v184 = vld [vmem:[%s3] sm:$0x1]
  %v186 = vperm.slane %v184, 0
  %v188 = vadd.f32 %v168, %v186
  %v189 = vadd.f32 %v169, %v186
  %v190 = vadd.f32 %v170, %v186
  %v191 = vadd.f32 %v171, %v186
  %v192 = vadd.f32 %v172, %v186
  %v193 = vadd.f32 %v173, %v186
  %v194 = vadd.f32 %v174, %v186
  %v195 = vadd.f32 %v175, %v186
  %v196 = vadd.f32 %v176, %v186
  %v197 = vadd.f32 %v177, %v186
  %v198 = vadd.f32 %v178, %v186
  %v199 = vadd.f32 %v179, %v186
  %v200 = vadd.f32 %v180, %v186
  %v201 = vadd.f32 %v181, %v186
  %v202 = vadd.f32 %v182, %v186
  %v203 = vadd.f32 %v183, %v186
  %204 = vst [vmem:[%s4] sm:$0xff] %v188
  %205 = vst [vmem:[%s4 + $0x8] sm:$0xff] %v189
  %206 = vst [vmem:[%s4 + $0x10] sm:$0xff] %v190
  %207 = vst [vmem:[%s4 + $0x18] sm:$0xff] %v191
  %208 = vst [vmem:[%s4 + $0x20] sm:$0xff] %v192
  %209 = vst [vmem:[%s4 + $0x28] sm:$0xff] %v193
  %210 = vst [vmem:[%s4 + $0x30] sm:$0xff] %v194
  %211 = vst [vmem:[%s4 + $0x38] sm:$0xff] %v195
  %212 = vst [vmem:[%s4 + $0x40] sm:$0xff] %v196
  %213 = vst [vmem:[%s4 + $0x48] sm:$0xff] %v197
  %214 = vst [vmem:[%s4 + $0x50] sm:$0xff] %v198
  %215 = vst [vmem:[%s4 + $0x58] sm:$0xff] %v199
  %216 = vst [vmem:[%s4 + $0x60] sm:$0xff] %v200
  %217 = vst [vmem:[%s4 + $0x68] sm:$0xff] %v201
  %218 = vst [vmem:[%s4 + $0x70] sm:$0xff] %v202
  %219 = vst [vmem:[%s4 + $0x78] sm:$0xff] %v203
  // Predicated region
  $region18: #{resnet_ghost_forward.29} parent=0 // pred_check
    _
  $region19: #{resnet_ghost_forward.29} parent=0 // pred_check_branch
    %221 = sbr.rel (0) target = $region21
  $region20: #{resnet_ghost_forward.29} parent=0 // pred_region
    _
  $region21: #{resnet_ghost_forward.29} parent=0 // pred_fallthru
    _
  // Predicated region
  $region22: #{resnet_ghost_forward.29} parent=0 // pred_check
    _
  $region23: #{resnet_ghost_forward.29} parent=0 // pred_check_branch
    %223 = sbr.rel (0) target = $region25
  $region24: #{resnet_ghost_forward.29} parent=0 // pred_region
    _
  $region25: #{resnet_ghost_forward.29} parent=0 // pred_fallthru
    _

// kernel: resnet_ghost_forward.28
$region0: #{resnet_ghost_forward.28}
  #allocation0 [shape = 'u32[]', space=smem, size = 0x4, offset = 0x4, fixed_abs, tag = 'smem constant byte address 0x4 - core index']
  #allocation1 [shape = 'u32[72,128]{1,0:T(1,128)}', space=vmem, size = 0x9000, scoped, tag = 'internal scratch']
  %s0 = inlined_call_operand.vmem [shape: f32[9,24,128], index: 0, kind: input, shape index: {}]
  %s1 = inlined_call_operand.vmem [shape: f32[9,24,1], index: 1, kind: input, shape index: {}]
  %s2 = inlined_call_operand.vmem [shape: f32[24,1], index: 2, kind: input, shape index: {}]
  %s3 = inlined_call_operand.vmem [shape: f32[24,1], index: 3, kind: input, shape index: {}]
  %s4 = inlined_call_operand.vmem [shape: f32[24,128], index: 4, kind: output, shape index: {}]
  %s5 = sld [smem:[#allocation0]]
  $region26: #{resnet_ghost_forward.28} parent=0
    _
  %s7 = ssub.s32 1, %s5
  %s8 = scalar_select 0, %s7, %s5
  // Predicated region
  $region2: #{resnet_ghost_forward.28} parent=0 // pred_check
    _
  $region3: #{resnet_ghost_forward.28} parent=0 // pred_check_branch
    %10 = sbr.rel (0) target = $region5
  $region4: #{resnet_ghost_forward.28} parent=0 // pred_region
    _
  $region5: #{resnet_ghost_forward.28} parent=0 // pred_fallthru
    _
  // Predicated region
  $region6: #{resnet_ghost_forward.28} parent=0 // pred_check
    _
  $region7: #{resnet_ghost_forward.28} parent=0 // pred_check_branch
    %12 = sbr.rel (0) target = $region9
  $region8: #{resnet_ghost_forward.28} parent=0 // pred_region
    _
  $region9: #{resnet_ghost_forward.28} parent=0 // pred_fallthru
    _
  // Predicated region
  $region10: #{resnet_ghost_forward.28} parent=0 // pred_check
    _
  $region11: #{resnet_ghost_forward.28} parent=0 // pred_check_branch
    %14 = sbr.rel (0) target = $region13
  $region12: #{resnet_ghost_forward.28} parent=0 // pred_region
    _
  $region13: #{resnet_ghost_forward.28} parent=0 // pred_fallthru
    _
  // Predicated region
  $region14: #{resnet_ghost_forward.28} parent=0 // pred_check
    _
  $region15: #{resnet_ghost_forward.28} parent=0 // pred_check_branch
    %16 = sbr.rel (0) target = $region17
  $region16: #{resnet_ghost_forward.28} parent=0 // pred_region
    _
  $region17: #{resnet_ghost_forward.28} parent=0 // pred_fallthru
    _
  %v17 = vld [vmem:[%s0] sm:$0xff]
  %v18 = vld [vmem:[%s0 + $0x8] sm:$0xff]
  %v19 = vld [vmem:[%s0 + $0x10] sm:$0xff]
  %v20 = vld [vmem:[%s1] sm:$0xff]
  %v21 = vld [vmem:[%s1 + $0x8] sm:$0xff]
  %v22 = vld [vmem:[%s1 + $0x10] sm:$0xff]
  %24 = vset.pattern.permute.xlu0 0
  %25 = vperm.xlu0 %24, %v20
  %v26 = vpop.permute.xlu0 %25
  %29 = vset.pattern.permute.xlu0 0
  %30 = vperm.xlu0 %29, %v21
  %v31 = vpop.permute.xlu0 %30
  %34 = vset.pattern.permute.xlu0 0
  %35 = vperm.xlu0 %34, %v22
  %v36 = vpop.permute.xlu0 %35
  %v38 = vmul.f32 %v17, %v26
  %v39 = vmul.f32 %v18, %v31
  %v40 = vmul.f32 %v19, %v36
  %s41 = scalar_lea.vmem %s0, 24
  %v42 = vld [vmem:[%s41] sm:$0xff]
  %v43 = vld [vmem:[%s41 + $0x8] sm:$0xff]
  %v44 = vld [vmem:[%s41 + $0x10] sm:$0xff]
  %s45 = scalar_lea.vmem %s1, 24
  %v46 = vld [vmem:[%s45] sm:$0xff]
  %v47 = vld [vmem:[%s45 + $0x8] sm:$0xff]
  %v48 = vld [vmem:[%s45 + $0x10] sm:$0xff]
  %50 = vset.pattern.permute.xlu0 0
  %51 = vperm.xlu0 %50, %v46
  %v52 = vpop.permute.xlu0 %51
  %55 = vset.pattern.permute.xlu0 0
  %56 = vperm.xlu0 %55, %v47
  %v57 = vpop.permute.xlu0 %56
  %60 = vset.pattern.permute.xlu0 0
  %61 = vperm.xlu0 %60, %v48
  %v62 = vpop.permute.xlu0 %61
  %v64 = vmul.f32 %v42, %v52
  %v65 = vmul.f32 %v43, %v57
  %v66 = vmul.f32 %v44, %v62
  %v67 = vadd.f32 %v38, %v64
  %v68 = vadd.f32 %v39, %v65
  %v69 = vadd.f32 %v40, %v66
  %s70 = scalar_lea.vmem %s0, 48
  %v71 = vld [vmem:[%s70] sm:$0xff]
  %v72 = vld [vmem:[%s70 + $0x8] sm:$0xff]
  %v73 = vld [vmem:[%s70 + $0x10] sm:$0xff]
  %s74 = scalar_lea.vmem %s1, 48
  %v75 = vld [vmem:[%s74] sm:$0xff]
  %v76 = vld [vmem:[%s74 + $0x8] sm:$0xff]
  %v77 = vld [vmem:[%s74 + $0x10] sm:$0xff]
  %79 = vset.pattern.permute.xlu0 0
  %80 = vperm.xlu0 %79, %v75
  %v81 = vpop.permute.xlu0 %80
  %84 = vset.pattern.permute.xlu0 0
  %85 = vperm.xlu0 %84, %v76
  %v86 = vpop.permute.xlu0 %85
  %89 = vset.pattern.permute.xlu0 0
  %90 = vperm.xlu0 %89, %v77
  %v91 = vpop.permute.xlu0 %90
  %v93 = vmul.f32 %v71, %v81
  %v94 = vmul.f32 %v72, %v86
  %v95 = vmul.f32 %v73, %v91
  %v96 = vadd.f32 %v67, %v93
  %v97 = vadd.f32 %v68, %v94
  %v98 = vadd.f32 %v69, %v95
  %s99 = scalar_lea.vmem %s0, 72
  %v100 = vld [vmem:[%s99] sm:$0xff]
  %v101 = vld [vmem:[%s99 + $0x8] sm:$0xff]
  %v102 = vld [vmem:[%s99 + $0x10] sm:$0xff]
  %s103 = scalar_lea.vmem %s1, 72
  %v104 = vld [vmem:[%s103] sm:$0xff]
  %v105 = vld [vmem:[%s103 + $0x8] sm:$0xff]
  %v106 = vld [vmem:[%s103 + $0x10] sm:$0xff]
  %108 = vset.pattern.permute.xlu0 0
  %109 = vperm.xlu0 %108, %v104
  %v110 = vpop.permute.xlu0 %109
  %113 = vset.pattern.permute.xlu0 0
  %114 = vperm.xlu0 %113, %v105
  %v115 = vpop.permute.xlu0 %114
  %118 = vset.pattern.permute.xlu0 0
  %119 = vperm.xlu0 %118, %v106
  %v120 = vpop.permute.xlu0 %119
  %v122 = vmul.f32 %v100, %v110
  %v123 = vmul.f32 %v101, %v115
  %v124 = vmul.f32 %v102, %v120
  %v125 = vadd.f32 %v96, %v122
  %v126 = vadd.f32 %v97, %v123
  %v127 = vadd.f32 %v98, %v124
  %s128 = scalar_lea.vmem %s0, 96
  %v129 = vld [vmem:[%s128] sm:$0xff]
  %v130 = vld [vmem:[%s128 + $0x8] sm:$0xff]
  %v131 = vld [vmem:[%s128 + $0x10] sm:$0xff]
  %s132 = scalar_lea.vmem %s1, 96
  %v133 = vld [vmem:[%s132] sm:$0xff]
  %v134 = vld [vmem:[%s132 + $0x8] sm:$0xff]
  %v135 = vld [vmem:[%s132 + $0x10] sm:$0xff]
  %137 = vset.pattern.permute.xlu0 0
  %138 = vperm.xlu0 %137, %v133
  %v139 = vpop.permute.xlu0 %138
  %142 = vset.pattern.permute.xlu0 0
  %143 = vperm.xlu0 %142, %v134
  %v144 = vpop.permute.xlu0 %143
  %147 = vset.pattern.permute.xlu0 0
  %148 = vperm.xlu0 %147, %v135
  %v149 = vpop.permute.xlu0 %148
  %v151 = vmul.f32 %v129, %v139
  %v152 = vmul.f32 %v130, %v144
  %v153 = vmul.f32 %v131, %v149
  %v154 = vadd.f32 %v125, %v151
  %v155 = vadd.f32 %v126, %v152
  %v156 = vadd.f32 %v127, %v153
  %s157 = scalar_lea.vmem %s0, 120
  %v158 = vld [vmem:[%s157] sm:$0xff]
  %v159 = vld [vmem:[%s157 + $0x8] sm:$0xff]
  %v160 = vld [vmem:[%s157 + $0x10] sm:$0xff]
  %s161 = scalar_lea.vmem %s1, 120
  %v162 = vld [vmem:[%s161] sm:$0xff]
  %v163 = vld [vmem:[%s161 + $0x8] sm:$0xff]
  %v164 = vld [vmem:[%s161 + $0x10] sm:$0xff]
  %166 = vset.pattern.permute.xlu0 0
  %167 = vperm.xlu0 %166, %v162
  %v168 = vpop.permute.xlu0 %167
  %171 = vset.pattern.permute.xlu0 0
  %172 = vperm.xlu0 %171, %v163
  %v173 = vpop.permute.xlu0 %172
  %176 = vset.pattern.permute.xlu0 0
  %177 = vperm.xlu0 %176, %v164
  %v178 = vpop.permute.xlu0 %177
  %v180 = vmul.f32 %v158, %v168
  %v181 = vmul.f32 %v159, %v173
  %v182 = vmul.f32 %v160, %v178
  %v183 = vadd.f32 %v154, %v180
  %v184 = vadd.f32 %v155, %v181
  %v185 = vadd.f32 %v156, %v182
  %s186 = scalar_lea.vmem %s0, 144
  %v187 = vld [vmem:[%s186] sm:$0xff]
  %v188 = vld [vmem:[%s186 + $0x8] sm:$0xff]
  %v189 = vld [vmem:[%s186 + $0x10] sm:$0xff]
  %s190 = scalar_lea.vmem %s1, 144
  %v191 = vld [vmem:[%s190] sm:$0xff]
  %v192 = vld [vmem:[%s190 + $0x8] sm:$0xff]
  %v193 = vld [vmem:[%s190 + $0x10] sm:$0xff]
  %195 = vset.pattern.permute.xlu0 0
  %196 = vperm.xlu0 %195, %v191
  %v197 = vpop.permute.xlu0 %196
  %200 = vset.pattern.permute.xlu0 0
  %201 = vperm.xlu0 %200, %v192
  %v202 = vpop.permute.xlu0 %201
  %205 = vset.pattern.permute.xlu0 0
  %206 = vperm.xlu0 %205, %v193
  %v207 = vpop.permute.xlu0 %206
  %v209 = vmul.f32 %v187, %v197
  %v210 = vmul.f32 %v188, %v202
  %v211 = vmul.f32 %v189, %v207
  %v212 = vadd.f32 %v183, %v209
  %v213 = vadd.f32 %v184, %v210
  %v214 = vadd.f32 %v185, %v211
  %s215 = scalar_lea.vmem %s0, 168
  %v216 = vld [vmem:[%s215] sm:$0xff]
  %v217 = vld [vmem:[%s215 + $0x8] sm:$0xff]
  %v218 = vld [vmem:[%s215 + $0x10] sm:$0xff]
  %s219 = scalar_lea.vmem %s1, 168
  %v220 = vld [vmem:[%s219] sm:$0xff]
  %v221 = vld [vmem:[%s219 + $0x8] sm:$0xff]
  %v222 = vld [vmem:[%s219 + $0x10] sm:$0xff]
  %224 = vset.pattern.permute.xlu0 0
  %225 = vperm.xlu0 %224, %v220
  %v226 = vpop.permute.xlu0 %225
  %229 = vset.pattern.permute.xlu0 0
  %230 = vperm.xlu0 %229, %v221
  %v231 = vpop.permute.xlu0 %230
  %234 = vset.pattern.permute.xlu0 0
  %235 = vperm.xlu0 %234, %v222
  %v236 = vpop.permute.xlu0 %235
  %v238 = vmul.f32 %v216, %v226
  %v239 = vmul.f32 %v217, %v231
  %v240 = vmul.f32 %v218, %v236
  %v241 = vadd.f32 %v212, %v238
  %v242 = vadd.f32 %v213, %v239
  %v243 = vadd.f32 %v214, %v240
  %s244 = scalar_lea.vmem %s0, 192
  %v245 = vld [vmem:[%s244] sm:$0xff]
  %v246 = vld [vmem:[%s244 + $0x8] sm:$0xff]
  %v247 = vld [vmem:[%s244 + $0x10] sm:$0xff]
  %s248 = scalar_lea.vmem %s1, 192
  %v249 = vld [vmem:[%s248] sm:$0xff]
  %v250 = vld [vmem:[%s248 + $0x8] sm:$0xff]
  %v251 = vld [vmem:[%s248 + $0x10] sm:$0xff]
  %253 = vset.pattern.permute.xlu0 0
  %254 = vperm.xlu0 %253, %v249
  %v255 = vpop.permute.xlu0 %254
  %258 = vset.pattern.permute.xlu0 0
  %259 = vperm.xlu0 %258, %v250
  %v260 = vpop.permute.xlu0 %259
  %263 = vset.pattern.permute.xlu0 0
  %264 = vperm.xlu0 %263, %v251
  %v265 = vpop.permute.xlu0 %264
  %v267 = vmul.f32 %v245, %v255
  %v268 = vmul.f32 %v246, %v260
  %v269 = vmul.f32 %v247, %v265
  %v270 = vadd.f32 %v241, %v267
  %v271 = vadd.f32 %v242, %v268
  %v272 = vadd.f32 %v243, %v269
  %v273 = vld [vmem:[%s2] sm:$0xff]
  %v274 = vld [vmem:[%s2 + $0x8] sm:$0xff]
  %v275 = vld [vmem:[%s2 + $0x10] sm:$0xff]
  %277 = vset.pattern.permute.xlu0 0
  %278 = vperm.xlu0 %277, %v273
  %v279 = vpop.permute.xlu0 %278
  %282 = vset.pattern.permute.xlu0 0
  %283 = vperm.xlu0 %282, %v274
  %v284 = vpop.permute.xlu0 %283
  %287 = vset.pattern.permute.xlu0 0
  %288 = vperm.xlu0 %287, %v275
  %v289 = vpop.permute.xlu0 %288
  %v291 = vmul.f32 %v270, %v279
  %v292 = vmul.f32 %v271, %v284
  %v293 = vmul.f32 %v272, %v289
  %v294 = vld [vmem:[%s3] sm:$0xff]
  %v295 = vld [vmem:[%s3 + $0x8] sm:$0xff]
  %v296 = vld [vmem:[%s3 + $0x10] sm:$0xff]
  %298 = vset.pattern.permute.xlu0 0
  %299 = vperm.xlu0 %298, %v294
  %v300 = vpop.permute.xlu0 %299
  %303 = vset.pattern.permute.xlu0 0
  %304 = vperm.xlu0 %303, %v295
  %v305 = vpop.permute.xlu0 %304
  %308 = vset.pattern.permute.xlu0 0
  %309 = vperm.xlu0 %308, %v296
  %v310 = vpop.permute.xlu0 %309
  %v312 = vadd.f32 %v291, %v300
  %v313 = vadd.f32 %v292, %v305
  %v314 = vadd.f32 %v293, %v310
  %315 = vst [vmem:[%s4] sm:$0xff] %v312
  %316 = vst [vmem:[%s4 + $0x8] sm:$0xff] %v313
  %317 = vst [vmem:[%s4 + $0x10] sm:$0xff] %v314
  // Predicated region
  $region18: #{resnet_ghost_forward.28} parent=0 // pred_check
    _
  $region19: #{resnet_ghost_forward.28} parent=0 // pred_check_branch
    %319 = sbr.rel (0) target = $region21
  $region20: #{resnet_ghost_forward.28} parent=0 // pred_region
    _
  $region21: #{resnet_ghost_forward.28} parent=0 // pred_fallthru
    _
  // Predicated region
  $region22: #{resnet_ghost_forward.28} parent=0 // pred_check
    _
  $region23: #{resnet_ghost_forward.28} parent=0 // pred_check_branch
    %321 = sbr.rel (0) target = $region25
  $region24: #{resnet_ghost_forward.28} parent=0 // pred_region
    _
  $region25: #{resnet_ghost_forward.28} parent=0 // pred_fallthru
    _

// kernel: resnet_ghost_forward.30
$region0: #{resnet_ghost_forward.30}
  #allocation0 [shape = 'u32[]', space=smem, size = 0x4, offset = 0x4, fixed_abs, tag = 'smem constant byte address 0x4 - core index']
  #allocation1 [shape = 'u32[72,128]{1,0:T(1,128)}', space=vmem, size = 0x9000, scoped, tag = 'internal scratch']
  %s0 = inlined_call_operand.vmem [shape: f32[9,3,128], index: 0, kind: input, shape index: {}]
  %s1 = inlined_call_operand.vmem [shape: f32[9,3,1], index: 1, kind: input, shape index: {}]
  %s2 = inlined_call_operand.vmem [shape: f32[3,1], index: 2, kind: input, shape index: {}]
  %s3 = inlined_call_operand.vmem [shape: f32[3,1], index: 3, kind: input, shape index: {}]
  %s4 = inlined_call_operand.vmem [shape: f32[3,128], index: 4, kind: output, shape index: {}]
  %s5 = sld [smem:[#allocation0]]
  $region26: #{resnet_ghost_forward.30} parent=0
    _
  %s7 = ssub.s32 1, %s5
  %s8 = scalar_select 0, %s7, %s5
  // Predicated region
  $region2: #{resnet_ghost_forward.30} parent=0 // pred_check
    _
  $region3: #{resnet_ghost_forward.30} parent=0 // pred_check_branch
    %10 = sbr.rel (0) target = $region5
  $region4: #{resnet_ghost_forward.30} parent=0 // pred_region
    _
  $region5: #{resnet_ghost_forward.30} parent=0 // pred_fallthru
    _
  // Predicated region
  $region6: #{resnet_ghost_forward.30} parent=0 // pred_check
    _
  $region7: #{resnet_ghost_forward.30} parent=0 // pred_check_branch
    %12 = sbr.rel (0) target = $region9
  $region8: #{resnet_ghost_forward.30} parent=0 // pred_region
    _
  $region9: #{resnet_ghost_forward.30} parent=0 // pred_fallthru
    _
  // Predicated region
  $region10: #{resnet_ghost_forward.30} parent=0 // pred_check
    _
  $region11: #{resnet_ghost_forward.30} parent=0 // pred_check_branch
    %14 = sbr.rel (0) target = $region13
  $region12: #{resnet_ghost_forward.30} parent=0 // pred_region
    _
  $region13: #{resnet_ghost_forward.30} parent=0 // pred_fallthru
    _
  // Predicated region
  $region14: #{resnet_ghost_forward.30} parent=0 // pred_check
    _
  $region15: #{resnet_ghost_forward.30} parent=0 // pred_check_branch
    %16 = sbr.rel (0) target = $region17
  $region16: #{resnet_ghost_forward.30} parent=0 // pred_region
    _
  $region17: #{resnet_ghost_forward.30} parent=0 // pred_fallthru
    _
  %v17 = vld [vmem:[%s0] sm:$0x7]
  %v18 = vld [vmem:[%s1] sm:$0x7]
  %20 = vset.pattern.permute.xlu0 0
  %21 = vperm.xlu0 %20, %v18
  %v22 = vpop.permute.xlu0 %21
  %v24 = vmul.f32 %v17, %v22
  %s25 = scalar_lea.vmem %s0, 4
  %v26 = vld [vmem:[%s25] sm:$0x7]
  %s27 = scalar_lea.vmem %s1, 4
  %v28 = vld [vmem:[%s27] sm:$0x7]
  %30 = vset.pattern.permute.xlu0 0
  %31 = vperm.xlu0 %30, %v28
  %v32 = vpop.permute.xlu0 %31
  %v34 = vmul.f32 %v26, %v32
  %v35 = vadd.f32 %v24, %v34
  %s36 = scalar_lea.vmem %s0, 8
  %v37 = vld [vmem:[%s36] sm:$0x7]
  %s38 = scalar_lea.vmem %s1, 8
  %v39 = vld [vmem:[%s38] sm:$0x7]
  %41 = vset.pattern.permute.xlu0 0
  %42 = vperm.xlu0 %41, %v39
  %v43 = vpop.permute.xlu0 %42
  %v45 = vmul.f32 %v37, %v43
  %v46 = vadd.f32 %v35, %v45
  %s47 = scalar_lea.vmem %s0, 12
  %v48 = vld [vmem:[%s47] sm:$0x7]
  %s49 = scalar_lea.vmem %s1, 12
  %v50 = vld [vmem:[%s49] sm:$0x7]
  %52 = vset.pattern.permute.xlu0 0
  %53 = vperm.xlu0 %52, %v50
  %v54 = vpop.permute.xlu0 %53
  %v56 = vmul.f32 %v48, %v54
  %v57 = vadd.f32 %v46, %v56
  %s58 = scalar_lea.vmem %s0, 16
  %v59 = vld [vmem:[%s58] sm:$0x7]
  %s60 = scalar_lea.vmem %s1, 16
  %v61 = vld [vmem:[%s60] sm:$0x7]
  %63 = vset.pattern.permute.xlu0 0
  %64 = vperm.xlu0 %63, %v61
  %v65 = vpop.permute.xlu0 %64
  %v67 = vmul.f32 %v59, %v65
  %v68 = vadd.f32 %v57, %v67
  %s69 = scalar_lea.vmem %s0, 20
  %v70 = vld [vmem:[%s69] sm:$0x7]
  %s71 = scalar_lea.vmem %s1, 20
  %v72 = vld [vmem:[%s71] sm:$0x7]
  %74 = vset.pattern.permute.xlu0 0
  %75 = vperm.xlu0 %74, %v72
  %v76 = vpop.permute.xlu0 %75
  %v78 = vmul.f32 %v70, %v76
  %v79 = vadd.f32 %v68, %v78
  %s80 = scalar_lea.vmem %s0, 24
  %v81 = vld [vmem:[%s80] sm:$0x7]
  %s82 = scalar_lea.vmem %s1, 24
  %v83 = vld [vmem:[%s82] sm:$0x7]
  %85 = vset.pattern.permute.xlu0 0
  %86 = vperm.xlu0 %85, %v83
  %v87 = vpop.permute.xlu0 %86
  %v89 = vmul.f32 %v81, %v87
  %v90 = vadd.f32 %v79, %v89
  %s91 = scalar_lea.vmem %s0, 28
  %v92 = vld [vmem:[%s91] sm:$0x7]
  %s93 = scalar_lea.vmem %s1, 28
  %v94 = vld [vmem:[%s93] sm:$0x7]
  %96 = vset.pattern.permute.xlu0 0
  %97 = vperm.xlu0 %96, %v94
  %v98 = vpop.permute.xlu0 %97
  %v100 = vmul.f32 %v92, %v98
  %v101 = vadd.f32 %v90, %v100
  %s102 = scalar_lea.vmem %s0, 32
  %v103 = vld [vmem:[%s102] sm:$0x7]
  %s104 = scalar_lea.vmem %s1, 32
  %v105 = vld [vmem:[%s104] sm:$0x7]
  %107 = vset.pattern.permute.xlu0 0
  %108 = vperm.xlu0 %107, %v105
  %v109 = vpop.permute.xlu0 %108
  %v111 = vmul.f32 %v103, %v109
  %v112 = vadd.f32 %v101, %v111
  %v113 = vld [vmem:[%s2] sm:$0x7]
  %115 = vset.pattern.permute.xlu0 0
  %116 = vperm.xlu0 %115, %v113
  %v117 = vpop.permute.xlu0 %116
  %v119 = vmul.f32 %v112, %v117
  %v120 = vld [vmem:[%s3] sm:$0x7]
  %122 = vset.pattern.permute.xlu0 0
  %123 = vperm.xlu0 %122, %v120
  %v124 = vpop.permute.xlu0 %123
  %v126 = vadd.f32 %v119, %v124
  %127 = vst [vmem:[%s4] sm:$0x7] %v126
  // Predicated region
  $region18: #{resnet_ghost_forward.30} parent=0 // pred_check
    _
  $region19: #{resnet_ghost_forward.30} parent=0 // pred_check_branch
    %129 = sbr.rel (0) target = $region21
  $region20: #{resnet_ghost_forward.30} parent=0 // pred_region
    _
  $region21: #{resnet_ghost_forward.30} parent=0 // pred_fallthru
    _
  // Predicated region
  $region22: #{resnet_ghost_forward.30} parent=0 // pred_check
    _
  $region23: #{resnet_ghost_forward.30} parent=0 // pred_check_branch
    %131 = sbr.rel (0) target = $region25
  $region24: #{resnet_ghost_forward.30} parent=0 // pred_region
    _
  $region25: #{resnet_ghost_forward.30} parent=0 // pred_fallthru
    _

// kernel: resnet_ghost_forward.31
$region0: #{resnet_ghost_forward.31}
  #allocation0 [shape = 'u32[]', space=smem, size = 0x4, offset = 0x4, fixed_abs, tag = 'smem constant byte address 0x4 - core index']
  #allocation1 [shape = 'u32[72,128]{1,0:T(1,128)}', space=vmem, size = 0x9000, scoped, tag = 'internal scratch']
  %s0 = inlined_call_operand.vmem [shape: f32[9,3,128], index: 0, kind: input, shape index: {}]
  %s1 = inlined_call_operand.vmem [shape: f32[9,3,9], index: 1, kind: input, shape index: {}]
  %s2 = inlined_call_operand.vmem [shape: f32[3,9,1], index: 2, kind: input, shape index: {}]
  %s3 = inlined_call_operand.vmem [shape: f32[3,9,1], index: 3, kind: input, shape index: {}]
  %s4 = inlined_call_operand.vmem [shape: f32[3,9,128], index: 4, kind: output, shape index: {}]
  %s5 = sld [smem:[#allocation0]]
  $region26: #{resnet_ghost_forward.31} parent=0
    _
  %s7 = ssub.s32 1, %s5
  %s8 = scalar_select 0, %s7, %s5
  // Predicated region
  $region2: #{resnet_ghost_forward.31} parent=0 // pred_check
    _
  $region3: #{resnet_ghost_forward.31} parent=0 // pred_check_branch
    %10 = sbr.rel (0) target = $region5
  $region4: #{resnet_ghost_forward.31} parent=0 // pred_region
    _
  $region5: #{resnet_ghost_forward.31} parent=0 // pred_fallthru
    _
  // Predicated region
  $region6: #{resnet_ghost_forward.31} parent=0 // pred_check
    _
  $region7: #{resnet_ghost_forward.31} parent=0 // pred_check_branch
    %12 = sbr.rel (0) target = $region9
  $region8: #{resnet_ghost_forward.31} parent=0 // pred_region
    _
  $region9: #{resnet_ghost_forward.31} parent=0 // pred_fallthru
    _
  // Predicated region
  $region10: #{resnet_ghost_forward.31} parent=0 // pred_check
    _
  $region11: #{resnet_ghost_forward.31} parent=0 // pred_check_branch
    %14 = sbr.rel (0) target = $region13
  $region12: #{resnet_ghost_forward.31} parent=0 // pred_region
    _
  $region13: #{resnet_ghost_forward.31} parent=0 // pred_fallthru
    _
  // Predicated region
  $region14: #{resnet_ghost_forward.31} parent=0 // pred_check
    _
  $region15: #{resnet_ghost_forward.31} parent=0 // pred_check_branch
    %16 = sbr.rel (0) target = $region17
  $region16: #{resnet_ghost_forward.31} parent=0 // pred_region
    _
  $region17: #{resnet_ghost_forward.31} parent=0 // pred_fallthru
    _
  %v17 = vld [vmem:[%s0] sm:$0x7]
  %v19 = vrot.slane %v17, 1
  %v20 = vrot.slane %v17, 2
  %v21 = vld [vmem:[%s1] sm:$0x7]
  %v22 = vperm.slane %v21, 0
  %v23 = vlaneseq
  %v24 = vshrl.u32 %v23, 7
  %26 = vset.pattern.permute.xlu0 %v24
  %27 = vperm.xlu0 %26, %v22
  %v28 = vpop.permute.xlu0 %27
  %v29 = vlaneseq
  %v30 = vshrl.u32 %v29, 7
  %v31 = vadd.s32 %v30, 8
  %32 = vset.pattern.permute.xlu0 %v31
  %33 = vperm.xlu0 %32, %v22
  %v34 = vpop.permute.xlu0 %33
  %v35 = vperm.slane %v21, 1
  %v36 = vlaneseq
  %v37 = vshrl.u32 %v36, 7
  %39 = vset.pattern.permute.xlu0 %v37
  %40 = vperm.xlu0 %39, %v35
  %v41 = vpop.permute.xlu0 %40
  %v42 = vlaneseq
  %v43 = vshrl.u32 %v42, 7
  %v44 = vadd.s32 %v43, 8
  %45 = vset.pattern.permute.xlu0 %v44
  %46 = vperm.xlu0 %45, %v35
  %v47 = vpop.permute.xlu0 %46
  %v48 = vperm.slane %v21, 2
  %v49 = vlaneseq
  %v50 = vshrl.u32 %v49, 7
  %52 = vset.pattern.permute.xlu0 %v50
  %53 = vperm.xlu0 %52, %v48
  %v54 = vpop.permute.xlu0 %53
  %v55 = vlaneseq
  %v56 = vshrl.u32 %v55, 7
  %v57 = vadd.s32 %v56, 8
  %58 = vset.pattern.permute.xlu0 %v57
  %59 = vperm.xlu0 %58, %v48
  %v60 = vpop.permute.xlu0 %59
  %v61 = vperm.slane %v17, 0
  %v62 = vperm.slane %v19, 0
  %v63 = vperm.slane %v20, 0
  %v67 = vsub.f32 %v61, %v28
  %v68 = vsub.f32 %v61, %v34
  %v69 = vsub.f32 %v62, %v41
  %v70 = vsub.f32 %v62, %v47
  %v71 = vsub.f32 %v63, %v54
  %v72 = vsub.f32 %v63, %v60
  %v73 = vand.u32 2147483647, %v67
  %v74 = vand.u32 2147483647, %v68
  %v75 = vand.u32 2147483647, %v69
  %v76 = vand.u32 2147483647, %v70
  %v77 = vand.u32 2147483647, %v71
  %v78 = vand.u32 2147483647, %v72
  %s79 = scalar_lea.vmem %s0, 4
  %v80 = vld [vmem:[%s79] sm:$0x7]
  %v82 = vrot.slane %v80, 1
  %v83 = vrot.slane %v80, 2
  %s84 = scalar_lea.vmem %s1, 4
  %v85 = vld [vmem:[%s84] sm:$0x7]
  %v86 = vperm.slane %v85, 0
  %v87 = vlaneseq
  %v88 = vshrl.u32 %v87, 7
  %90 = vset.pattern.permute.xlu0 %v88
  %91 = vperm.xlu0 %90, %v86
  %v92 = vpop.permute.xlu0 %91
  %v93 = vlaneseq
  %v94 = vshrl.u32 %v93, 7
  %v95 = vadd.s32 %v94, 8
  %96 = vset.pattern.permute.xlu0 %v95
  %97 = vperm.xlu0 %96, %v86
  %v98 = vpop.permute.xlu0 %97
  %v99 = vperm.slane %v85, 1
  %v100 = vlaneseq
  %v101 = vshrl.u32 %v100, 7
  %103 = vset.pattern.permute.xlu0 %v101
  %104 = vperm.xlu0 %103, %v99
  %v105 = vpop.permute.xlu0 %104
  %v106 = vlaneseq
  %v107 = vshrl.u32 %v106, 7
  %v108 = vadd.s32 %v107, 8
  %109 = vset.pattern.permute.xlu0 %v108
  %110 = vperm.xlu0 %109, %v99
  %v111 = vpop.permute.xlu0 %110
  %v112 = vperm.slane %v85, 2
  %v113 = vlaneseq
  %v114 = vshrl.u32 %v113, 7
  %116 = vset.pattern.permute.xlu0 %v114
  %117 = vperm.xlu0 %116, %v112
  %v118 = vpop.permute.xlu0 %117
  %v119 = vlaneseq
  %v120 = vshrl.u32 %v119, 7
  %v121 = vadd.s32 %v120, 8
  %122 = vset.pattern.permute.xlu0 %v121
  %123 = vperm.xlu0 %122, %v112
  %v124 = vpop.permute.xlu0 %123
  %v125 = vperm.slane %v80, 0
  %v126 = vperm.slane %v82, 0
  %v127 = vperm.slane %v83, 0
  %v131 = vsub.f32 %v125, %v92
  %v132 = vsub.f32 %v125, %v98
  %v133 = vsub.f32 %v126, %v105
  %v134 = vsub.f32 %v126, %v111
  %v135 = vsub.f32 %v127, %v118
  %v136 = vsub.f32 %v127, %v124
  %v137 = vand.u32 2147483647, %v131
  %v138 = vand.u32 2147483647, %v132
  %v139 = vand.u32 2147483647, %v133
  %v140 = vand.u32 2147483647, %v134
  %v141 = vand.u32 2147483647, %v135
  %v142 = vand.u32 2147483647, %v136
  %v143 = vadd.f32 %v73, %v137
  %v144 = vadd.f32 %v74, %v138
  %v145 = vadd.f32 %v75, %v139
  %v146 = vadd.f32 %v76, %v140
  %v147 = vadd.f32 %v77, %v141
  %v148 = vadd.f32 %v78, %v142
  %s149 = scalar_lea.vmem %s0, 8
  %v150 = vld [vmem:[%s149] sm:$0x7]
  %v152 = vrot.slane %v150, 1
  %v153 = vrot.slane %v150, 2
  %s154 = scalar_lea.vmem %s1, 8
  %v155 = vld [vmem:[%s154] sm:$0x7]
  %v156 = vperm.slane %v155, 0
  %v157 = vlaneseq
  %v158 = vshrl.u32 %v157, 7
  %160 = vset.pattern.permute.xlu0 %v158
  %161 = vperm.xlu0 %160, %v156
  %v162 = vpop.permute.xlu0 %161
  %v163 = vlaneseq
  %v164 = vshrl.u32 %v163, 7
  %v165 = vadd.s32 %v164, 8
  %166 = vset.pattern.permute.xlu0 %v165
  %167 = vperm.xlu0 %166, %v156
  %v168 = vpop.permute.xlu0 %167
  %v169 = vperm.slane %v155, 1
  %v170 = vlaneseq
  %v171 = vshrl.u32 %v170, 7
  %173 = vset.pattern.permute.xlu0 %v171
  %174 = vperm.xlu0 %173, %v169
  %v175 = vpop.permute.xlu0 %174
  %v176 = vlaneseq
  %v177 = vshrl.u32 %v176, 7
  %v178 = vadd.s32 %v177, 8
  %179 = vset.pattern.permute.xlu0 %v178
  %180 = vperm.xlu0 %179, %v169
  %v181 = vpop.permute.xlu0 %180
  %v182 = vperm.slane %v155, 2
  %v183 = vlaneseq
  %v184 = vshrl.u32 %v183, 7
  %186 = vset.pattern.permute.xlu0 %v184
  %187 = vperm.xlu0 %186, %v182
  %v188 = vpop.permute.xlu0 %187
  %v189 = vlaneseq
  %v190 = vshrl.u32 %v189, 7
  %v191 = vadd.s32 %v190, 8
  %192 = vset.pattern.permute.xlu0 %v191
  %193 = vperm.xlu0 %192, %v182
  %v194 = vpop.permute.xlu0 %193
  %v195 = vperm.slane %v150, 0
  %v196 = vperm.slane %v152, 0
  %v197 = vperm.slane %v153, 0
  %v201 = vsub.f32 %v195, %v162
  %v202 = vsub.f32 %v195, %v168
  %v203 = vsub.f32 %v196, %v175
  %v204 = vsub.f32 %v196, %v181
  %v205 = vsub.f32 %v197, %v188
  %v206 = vsub.f32 %v197, %v194
  %v207 = vand.u32 2147483647, %v201
  %v208 = vand.u32 2147483647, %v202
  %v209 = vand.u32 2147483647, %v203
  %v210 = vand.u32 2147483647, %v204
  %v211 = vand.u32 2147483647, %v205
  %v212 = vand.u32 2147483647, %v206
  %v213 = vadd.f32 %v143, %v207
  %v214 = vadd.f32 %v144, %v208
  %v215 = vadd.f32 %v145, %v209
  %v216 = vadd.f32 %v146, %v210
  %v217 = vadd.f32 %v147, %v211
  %v218 = vadd.f32 %v148, %v212
  %s219 = scalar_lea.vmem %s0, 12
  %v220 = vld [vmem:[%s219] sm:$0x7]
  %v222 = vrot.slane %v220, 1
  %v223 = vrot.slane %v220, 2
  %s224 = scalar_lea.vmem %s1, 12
  %v225 = vld [vmem:[%s224] sm:$0x7]
  %v226 = vperm.slane %v225, 0
  %v227 = vlaneseq
  %v228 = vshrl.u32 %v227, 7
  %230 = vset.pattern.permute.xlu0 %v228
  %231 = vperm.xlu0 %230, %v226
  %v232 = vpop.permute.xlu0 %231
  %v233 = vlaneseq
  %v234 = vshrl.u32 %v233, 7
  %v235 = vadd.s32 %v234, 8
  %236 = vset.pattern.permute.xlu0 %v235
  %237 = vperm.xlu0 %236, %v226
  %v238 = vpop.permute.xlu0 %237
  %v239 = vperm.slane %v225, 1
  %v240 = vlaneseq
  %v241 = vshrl.u32 %v240, 7
  %243 = vset.pattern.permute.xlu0 %v241
  %244 = vperm.xlu0 %243, %v239
  %v245 = vpop.permute.xlu0 %244
  %v246 = vlaneseq
  %v247 = vshrl.u32 %v246, 7
  %v248 = vadd.s32 %v247, 8
  %249 = vset.pattern.permute.xlu0 %v248
  %250 = vperm.xlu0 %249, %v239
  %v251 = vpop.permute.xlu0 %250
  %v252 = vperm.slane %v225, 2
  %v253 = vlaneseq
  %v254 = vshrl.u32 %v253, 7
  %256 = vset.pattern.permute.xlu0 %v254
  %257 = vperm.xlu0 %256, %v252
  %v258 = vpop.permute.xlu0 %257
  %v259 = vlaneseq
  %v260 = vshrl.u32 %v259, 7
  %v261 = vadd.s32 %v260, 8
  %262 = vset.pattern.permute.xlu0 %v261
  %263 = vperm.xlu0 %262, %v252
  %v264 = vpop.permute.xlu0 %263
  %v265 = vperm.slane %v220, 0
  %v266 = vperm.slane %v222, 0
  %v267 = vperm.slane %v223, 0
  %v271 = vsub.f32 %v265, %v232
  %v272 = vsub.f32 %v265, %v238
  %v273 = vsub.f32 %v266, %v245
  %v274 = vsub.f32 %v266, %v251
  %v275 = vsub.f32 %v267, %v258
  %v276 = vsub.f32 %v267, %v264
  %v277 = vand.u32 2147483647, %v271
  %v278 = vand.u32 2147483647, %v272
  %v279 = vand.u32 2147483647, %v273
  %v280 = vand.u32 2147483647, %v274
  %v281 = vand.u32 2147483647, %v275
  %v282 = vand.u32 2147483647, %v276
  %v283 = vadd.f32 %v213, %v277
  %v284 = vadd.f32 %v214, %v278
  %v285 = vadd.f32 %v215, %v279
  %v286 = vadd.f32 %v216, %v280
  %v287 = vadd.f32 %v217, %v281
  %v288 = vadd.f32 %v218, %v282
  %s289 = scalar_lea.vmem %s0, 16
  %v290 = vld [vmem:[%s289] sm:$0x7]
  %v292 = vrot.slane %v290, 1
  %v293 = vrot.slane %v290, 2
  %s294 = scalar_lea.vmem %s1, 16
  %v295 = vld [vmem:[%s294] sm:$0x7]
  %v296 = vperm.slane %v295, 0
  %v297 = vlaneseq
  %v298 = vshrl.u32 %v297, 7
  %300 = vset.pattern.permute.xlu0 %v298
  %301 = vperm.xlu0 %300, %v296
  %v302 = vpop.permute.xlu0 %301
  %v303 = vlaneseq
  %v304 = vshrl.u32 %v303, 7
  %v305 = vadd.s32 %v304, 8
  %306 = vset.pattern.permute.xlu0 %v305
  %307 = vperm.xlu0 %306, %v296
  %v308 = vpop.permute.xlu0 %307
  %v309 = vperm.slane %v295, 1
  %v310 = vlaneseq
  %v311 = vshrl.u32 %v310, 7
  %313 = vset.pattern.permute.xlu0 %v311
  %314 = vperm.xlu0 %313, %v309
  %v315 = vpop.permute.xlu0 %314
  %v316 = vlaneseq
  %v317 = vshrl.u32 %v316, 7
  %v318 = vadd.s32 %v317, 8
  %319 = vset.pattern.permute.xlu0 %v318
  %320 = vperm.xlu0 %319, %v309
  %v321 = vpop.permute.xlu0 %320
  %v322 = vperm.slane %v295, 2
  %v323 = vlaneseq
  %v324 = vshrl.u32 %v323, 7
  %326 = vset.pattern.permute.xlu0 %v324
  %327 = vperm.xlu0 %326, %v322
  %v328 = vpop.permute.xlu0 %327
  %v329 = vlaneseq
  %v330 = vshrl.u32 %v329, 7
  %v331 = vadd.s32 %v330, 8
  %332 = vset.pattern.permute.xlu0 %v331
  %333 = vperm.xlu0 %332, %v322
  %v334 = vpop.permute.xlu0 %333
  %v335 = vperm.slane %v290, 0
  %v336 = vperm.slane %v292, 0
  %v337 = vperm.slane %v293, 0
  %v341 = vsub.f32 %v335, %v302
  %v342 = vsub.f32 %v335, %v308
  %v343 = vsub.f32 %v336, %v315
  %v344 = vsub.f32 %v336, %v321
  %v345 = vsub.f32 %v337, %v328
  %v346 = vsub.f32 %v337, %v334
  %v347 = vand.u32 2147483647, %v341
  %v348 = vand.u32 2147483647, %v342
  %v349 = vand.u32 2147483647, %v343
  %v350 = vand.u32 2147483647, %v344
  %v351 = vand.u32 2147483647, %v345
  %v352 = vand.u32 2147483647, %v346
  %v353 = vadd.f32 %v283, %v347
  %v354 = vadd.f32 %v284, %v348
  %v355 = vadd.f32 %v285, %v349
  %v356 = vadd.f32 %v286, %v350
  %v357 = vadd.f32 %v287, %v351
  %v358 = vadd.f32 %v288, %v352
  %s359 = scalar_lea.vmem %s0, 20
  %v360 = vld [vmem:[%s359] sm:$0x7]
  %v362 = vrot.slane %v360, 1
  %v363 = vrot.slane %v360, 2
  %s364 = scalar_lea.vmem %s1, 20
  %v365 = vld [vmem:[%s364] sm:$0x7]
  %v366 = vperm.slane %v365, 0
  %v367 = vlaneseq
  %v368 = vshrl.u32 %v367, 7
  %370 = vset.pattern.permute.xlu0 %v368
  %371 = vperm.xlu0 %370, %v366
  %v372 = vpop.permute.xlu0 %371
  %v373 = vlaneseq
  %v374 = vshrl.u32 %v373, 7
  %v375 = vadd.s32 %v374, 8
  %376 = vset.pattern.permute.xlu0 %v375
  %377 = vperm.xlu0 %376, %v366
  %v378 = vpop.permute.xlu0 %377
  %v379 = vperm.slane %v365, 1
  %v380 = vlaneseq
  %v381 = vshrl.u32 %v380, 7
  %383 = vset.pattern.permute.xlu0 %v381
  %384 = vperm.xlu0 %383, %v379
  %v385 = vpop.permute.xlu0 %384
  %v386 = vlaneseq
  %v387 = vshrl.u32 %v386, 7
  %v388 = vadd.s32 %v387, 8
  %389 = vset.pattern.permute.xlu0 %v388
  %390 = vperm.xlu0 %389, %v379
  %v391 = vpop.permute.xlu0 %390
  %v392 = vperm.slane %v365, 2
  %v393 = vlaneseq
  %v394 = vshrl.u32 %v393, 7
  %396 = vset.pattern.permute.xlu0 %v394
  %397 = vperm.xlu0 %396, %v392
  %v398 = vpop.permute.xlu0 %397
  %v399 = vlaneseq
  %v400 = vshrl.u32 %v399, 7
  %v401 = vadd.s32 %v400, 8
  %402 = vset.pattern.permute.xlu0 %v401
  %403 = vperm.xlu0 %402, %v392
  %v404 = vpop.permute.xlu0 %403
  %v405 = vperm.slane %v360, 0
  %v406 = vperm.slane %v362, 0
  %v407 = vperm.slane %v363, 0
  %v411 = vsub.f32 %v405, %v372
  %v412 = vsub.f32 %v405, %v378
  %v413 = vsub.f32 %v406, %v385
  %v414 = vsub.f32 %v406, %v391
  %v415 = vsub.f32 %v407, %v398
  %v416 = vsub.f32 %v407, %v404
  %v417 = vand.u32 2147483647, %v411
  %v418 = vand.u32 2147483647, %v412
  %v419 = vand.u32 2147483647, %v413
  %v420 = vand.u32 2147483647, %v414
  %v421 = vand.u32 2147483647, %v415
  %v422 = vand.u32 2147483647, %v416
  %v423 = vadd.f32 %v353, %v417
  %v424 = vadd.f32 %v354, %v418
  %v425 = vadd.f32 %v355, %v419
  %v426 = vadd.f32 %v356, %v420
  %v427 = vadd.f32 %v357, %v421
  %v428 = vadd.f32 %v358, %v422
  %s429 = scalar_lea.vmem %s0, 24
  %v430 = vld [vmem:[%s429] sm:$0x7]
  %v432 = vrot.slane %v430, 1
  %v433 = vrot.slane %v430, 2
  %s434 = scalar_lea.vmem %s1, 24
  %v435 = vld [vmem:[%s434] sm:$0x7]
  %v436 = vperm.slane %v435, 0
  %v437 = vlaneseq
  %v438 = vshrl.u32 %v437, 7
  %440 = vset.pattern.permute.xlu0 %v438
  %441 = vperm.xlu0 %440, %v436
  %v442 = vpop.permute.xlu0 %441
  %v443 = vlaneseq
  %v444 = vshrl.u32 %v443, 7
  %v445 = vadd.s32 %v444, 8
  %446 = vset.pattern.permute.xlu0 %v445
  %447 = vperm.xlu0 %446, %v436
  %v448 = vpop.permute.xlu0 %447
  %v449 = vperm.slane %v435, 1
  %v450 = vlaneseq
  %v451 = vshrl.u32 %v450, 7
  %453 = vset.pattern.permute.xlu0 %v451
  %454 = vperm.xlu0 %453, %v449
  %v455 = vpop.permute.xlu0 %454
  %v456 = vlaneseq
  %v457 = vshrl.u32 %v456, 7
  %v458 = vadd.s32 %v457, 8
  %459 = vset.pattern.permute.xlu0 %v458
  %460 = vperm.xlu0 %459, %v449
  %v461 = vpop.permute.xlu0 %460
  %v462 = vperm.slane %v435, 2
  %v463 = vlaneseq
  %v464 = vshrl.u32 %v463, 7
  %466 = vset.pattern.permute.xlu0 %v464
  %467 = vperm.xlu0 %466, %v462
  %v468 = vpop.permute.xlu0 %467
  %v469 = vlaneseq
  %v470 = vshrl.u32 %v469, 7
  %v471 = vadd.s32 %v470, 8
  %472 = vset.pattern.permute.xlu0 %v471
  %473 = vperm.xlu0 %472, %v462
  %v474 = vpop.permute.xlu0 %473
  %v475 = vperm.slane %v430, 0
  %v476 = vperm.slane %v432, 0
  %v477 = vperm.slane %v433, 0
  %v481 = vsub.f32 %v475, %v442
  %v482 = vsub.f32 %v475, %v448
  %v483 = vsub.f32 %v476, %v455
  %v484 = vsub.f32 %v476, %v461
  %v485 = vsub.f32 %v477, %v468
  %v486 = vsub.f32 %v477, %v474
  %v487 = vand.u32 2147483647, %v481
  %v488 = vand.u32 2147483647, %v482
  %v489 = vand.u32 2147483647, %v483
  %v490 = vand.u32 2147483647, %v484
  %v491 = vand.u32 2147483647, %v485
  %v492 = vand.u32 2147483647, %v486
  %v493 = vadd.f32 %v423, %v487
  %v494 = vadd.f32 %v424, %v488
  %v495 = vadd.f32 %v425, %v489
  %v496 = vadd.f32 %v426, %v490
  %v497 = vadd.f32 %v427, %v491
  %v498 = vadd.f32 %v428, %v492
  %s499 = scalar_lea.vmem %s0, 28
  %v500 = vld [vmem:[%s499] sm:$0x7]
  %v502 = vrot.slane %v500, 1
  %v503 = vrot.slane %v500, 2
  %s504 = scalar_lea.vmem %s1, 28
  %v505 = vld [vmem:[%s504] sm:$0x7]
  %v506 = vperm.slane %v505, 0
  %v507 = vlaneseq
  %v508 = vshrl.u32 %v507, 7
  %510 = vset.pattern.permute.xlu0 %v508
  %511 = vperm.xlu0 %510, %v506
  %v512 = vpop.permute.xlu0 %511
  %v513 = vlaneseq
  %v514 = vshrl.u32 %v513, 7
  %v515 = vadd.s32 %v514, 8
  %516 = vset.pattern.permute.xlu0 %v515
  %517 = vperm.xlu0 %516, %v506
  %v518 = vpop.permute.xlu0 %517
  %v519 = vperm.slane %v505, 1
  %v520 = vlaneseq
  %v521 = vshrl.u32 %v520, 7
  %523 = vset.pattern.permute.xlu0 %v521
  %524 = vperm.xlu0 %523, %v519
  %v525 = vpop.permute.xlu0 %524
  %v526 = vlaneseq
  %v527 = vshrl.u32 %v526, 7
  %v528 = vadd.s32 %v527, 8
  %529 = vset.pattern.permute.xlu0 %v528
  %530 = vperm.xlu0 %529, %v519
  %v531 = vpop.permute.xlu0 %530
  %v532 = vperm.slane %v505, 2
  %v533 = vlaneseq
  %v534 = vshrl.u32 %v533, 7
  %536 = vset.pattern.permute.xlu0 %v534
  %537 = vperm.xlu0 %536, %v532
  %v538 = vpop.permute.xlu0 %537
  %v539 = vlaneseq
  %v540 = vshrl.u32 %v539, 7
  %v541 = vadd.s32 %v540, 8
  %542 = vset.pattern.permute.xlu0 %v541
  %543 = vperm.xlu0 %542, %v532
  %v544 = vpop.permute.xlu0 %543
  %v545 = vperm.slane %v500, 0
  %v546 = vperm.slane %v502, 0
  %v547 = vperm.slane %v503, 0
  %v551 = vsub.f32 %v545, %v512
  %v552 = vsub.f32 %v545, %v518
  %v553 = vsub.f32 %v546, %v525
  %v554 = vsub.f32 %v546, %v531
  %v555 = vsub.f32 %v547, %v538
  %v556 = vsub.f32 %v547, %v544
  %v557 = vand.u32 2147483647, %v551
  %v558 = vand.u32 2147483647, %v552
  %v559 = vand.u32 2147483647, %v553
  %v560 = vand.u32 2147483647, %v554
  %v561 = vand.u32 2147483647, %v555
  %v562 = vand.u32 2147483647, %v556
  %v563 = vadd.f32 %v493, %v557
  %v564 = vadd.f32 %v494, %v558
  %v565 = vadd.f32 %v495, %v559
  %v566 = vadd.f32 %v496, %v560
  %v567 = vadd.f32 %v497, %v561
  %v568 = vadd.f32 %v498, %v562
  %s569 = scalar_lea.vmem %s0, 32
  %v570 = vld [vmem:[%s569] sm:$0x7]
  %v572 = vrot.slane %v570, 1
  %v573 = vrot.slane %v570, 2
  %s574 = scalar_lea.vmem %s1, 32
  %v575 = vld [vmem:[%s574] sm:$0x7]
  %v576 = vperm.slane %v575, 0
  %v577 = vlaneseq
  %v578 = vshrl.u32 %v577, 7
  %580 = vset.pattern.permute.xlu0 %v578
  %581 = vperm.xlu0 %580, %v576
  %v582 = vpop.permute.xlu0 %581
  %v583 = vlaneseq
  %v584 = vshrl.u32 %v583, 7
  %v585 = vadd.s32 %v584, 8
  %586 = vset.pattern.permute.xlu0 %v585
  %587 = vperm.xlu0 %586, %v576
  %v588 = vpop.permute.xlu0 %587
  %v589 = vperm.slane %v575, 1
  %v590 = vlaneseq
  %v591 = vshrl.u32 %v590, 7
  %593 = vset.pattern.permute.xlu0 %v591
  %594 = vperm.xlu0 %593, %v589
  %v595 = vpop.permute.xlu0 %594
  %v596 = vlaneseq
  %v597 = vshrl.u32 %v596, 7
  %v598 = vadd.s32 %v597, 8
  %599 = vset.pattern.permute.xlu0 %v598
  %600 = vperm.xlu0 %599, %v589
  %v601 = vpop.permute.xlu0 %600
  %v602 = vperm.slane %v575, 2
  %v603 = vlaneseq
  %v604 = vshrl.u32 %v603, 7
  %606 = vset.pattern.permute.xlu0 %v604
  %607 = vperm.xlu0 %606, %v602
  %v608 = vpop.permute.xlu0 %607
  %v609 = vlaneseq
  %v610 = vshrl.u32 %v609, 7
  %v611 = vadd.s32 %v610, 8
  %612 = vset.pattern.permute.xlu0 %v611
  %613 = vperm.xlu0 %612, %v602
  %v614 = vpop.permute.xlu0 %613
  %v615 = vperm.slane %v570, 0
  %v616 = vperm.slane %v572, 0
  %v617 = vperm.slane %v573, 0
  %v621 = vsub.f32 %v615, %v582
  %v622 = vsub.f32 %v615, %v588
  %v623 = vsub.f32 %v616, %v595
  %v624 = vsub.f32 %v616, %v601
  %v625 = vsub.f32 %v617, %v608
  %v626 = vsub.f32 %v617, %v614
  %v627 = vand.u32 2147483647, %v621
  %v628 = vand.u32 2147483647, %v622
  %v629 = vand.u32 2147483647, %v623
  %v630 = vand.u32 2147483647, %v624
  %v631 = vand.u32 2147483647, %v625
  %v632 = vand.u32 2147483647, %v626
  %v633 = vadd.f32 %v563, %v627
  %v634 = vadd.f32 %v564, %v628
  %v635 = vadd.f32 %v565, %v629
  %v636 = vadd.f32 %v566, %v630
  %v637 = vadd.f32 %v567, %v631
  %v638 = vadd.f32 %v568, %v632
  %v639 = vsub.f32 0.0, %v633
  %v640 = vsub.f32 0.0, %v634
  %v641 = vsub.f32 0.0, %v635
  %v642 = vsub.f32 0.0, %v636
  %v643 = vsub.f32 0.0, %v637
  %v644 = vsub.f32 0.0, %v638
  %v645 = vld [vmem:[%s2] sm:$0xff]
  %v646 = vld [vmem:[%s2 + $0x8] sm:$0x1]
  %v647 = vld [vmem:[%s2 + $0x10] sm:$0xff]
  %v648 = vld [vmem:[%s2 + $0x18] sm:$0x1]
  %v649 = vld [vmem:[%s2 + $0x20] sm:$0xff]
  %v650 = vld [vmem:[%s2 + $0x28] sm:$0x1]
  %652 = vset.pattern.permute.xlu0 0
  %653 = vperm.xlu0 %652, %v645
  %v654 = vpop.permute.xlu0 %653
  %657 = vset.pattern.permute.xlu0 0
  %658 = vperm.xlu0 %657, %v646
  %v659 = vpop.permute.xlu0 %658
  %662 = vset.pattern.permute.xlu0 0
  %663 = vperm.xlu0 %662, %v647
  %v664 = vpop.permute.xlu0 %663
  %667 = vset.pattern.permute.xlu0 0
  %668 = vperm.xlu0 %667, %v648
  %v669 = vpop.permute.xlu0 %668
  %672 = vset.pattern.permute.xlu0 0
  %673 = vperm.xlu0 %672, %v649
  %v674 = vpop.permute.xlu0 %673
  %677 = vset.pattern.permute.xlu0 0
  %678 = vperm.xlu0 %677, %v650
  %v679 = vpop.permute.xlu0 %678
  %v681 = vmul.f32 %v639, %v654
  %v682 = vmul.f32 %v640, %v659
  %v683 = vmul.f32 %v641, %v664
  %v684 = vmul.f32 %v642, %v669
  %v685 = vmul.f32 %v643, %v674
  %v686 = vmul.f32 %v644, %v679
  %v687 = vld [vmem:[%s3] sm:$0xff]
  %v688 = vld [vmem:[%s3 + $0x8] sm:$0x1]
  %v689 = vld [vmem:[%s3 + $0x10] sm:$0xff]
  %v690 = vld [vmem:[%s3 + $0x18] sm:$0x1]
  %v691 = vld [vmem:[%s3 + $0x20] sm:$0xff]
  %v692 = vld [vmem:[%s3 + $0x28] sm:$0x1]
  %694 = vset.pattern.permute.xlu0 0
  %695 = vperm.xlu0 %694, %v687
  %v696 = vpop.permute.xlu0 %695
  %699 = vset.pattern.permute.xlu0 0
  %700 = vperm.xlu0 %699, %v688
  %v701 = vpop.permute.xlu0 %700
  %704 = vset.pattern.permute.xlu0 0
  %705 = vperm.xlu0 %704, %v689
  %v706 = vpop.permute.xlu0 %705
  %709 = vset.pattern.permute.xlu0 0
  %710 = vperm.xlu0 %709, %v690
  %v711 = vpop.permute.xlu0 %710
  %714 = vset.pattern.permute.xlu0 0
  %715 = vperm.xlu0 %714, %v691
  %v716 = vpop.permute.xlu0 %715
  %719 = vset.pattern.permute.xlu0 0
  %720 = vperm.xlu0 %719, %v692
  %v721 = vpop.permute.xlu0 %720
  %v723 = vadd.f32 %v681, %v696
  %v724 = vadd.f32 %v682, %v701
  %v725 = vadd.f32 %v683, %v706
  %v726 = vadd.f32 %v684, %v711
  %v727 = vadd.f32 %v685, %v716
  %v728 = vadd.f32 %v686, %v721
  %v729 = vmax.f32 %v723, 0.0
  %v730 = vmax.f32 %v724, 0.0
  %v731 = vmax.f32 %v725, 0.0
  %v732 = vmax.f32 %v726, 0.0
  %v733 = vmax.f32 %v727, 0.0
  %v734 = vmax.f32 %v728, 0.0
  %735 = vst [vmem:[%s4] sm:$0xff] %v729
  %736 = vst [vmem:[%s4 + $0x8] sm:$0x1] %v730
  %737 = vst [vmem:[%s4 + $0x10] sm:$0xff] %v731
  %738 = vst [vmem:[%s4 + $0x18] sm:$0x1] %v732
  %739 = vst [vmem:[%s4 + $0x20] sm:$0xff] %v733
  %740 = vst [vmem:[%s4 + $0x28] sm:$0x1] %v734
  // Predicated region
  $region18: #{resnet_ghost_forward.31} parent=0 // pred_check
    _
  $region19: #{resnet_ghost_forward.31} parent=0 // pred_check_branch
    %742 = sbr.rel (0) target = $region21
  $region20: #{resnet_ghost_forward.31} parent=0 // pred_region
    _
  $region21: #{resnet_ghost_forward.31} parent=0 // pred_fallthru
    _
  // Predicated region
  $region22: #{resnet_ghost_forward.31} parent=0 // pred_check
    _
  $region23: #{resnet_ghost_forward.31} parent=0 // pred_check_branch
    %744 = sbr.rel (0) target = $region25
  $region24: #{resnet_ghost_forward.31} parent=0 // pred_region
    _
  $region25: #{resnet_ghost_forward.31} parent=0 // pred_fallthru
    _

// kernel: resnet_ghost_forward.35
$region0: #{resnet_ghost_forward.35}
  #allocation0 [shape = 'u32[]', space=smem, size = 0x4, offset = 0x4, fixed_abs, tag = 'smem constant byte address 0x4 - core index']
  #allocation1 [shape = 'u32[72,128]{1,0:T(1,128)}', space=vmem, size = 0x9000, scoped, tag = 'internal scratch']
  %s0 = inlined_call_operand.vmem [shape: bf16[8,24], index: 0, kind: input, shape index: {}]
  %s1 = inlined_call_operand.vmem [shape: bf16[24,128], index: 1, kind: input, shape index: {}]
  %s2 = inlined_call_operand.vmem [shape: f32[1,128], index: 2, kind: input, shape index: {}]
  %s3 = inlined_call_operand.vmem [shape: f32[1,128], index: 3, kind: input, shape index: {}]
  %s4 = inlined_call_operand.vmem [shape: f32[8,128], index: 4, kind: output, shape index: {}]
  %s5 = sld [smem:[#allocation0]]
  $region26: #{resnet_ghost_forward.35} parent=0
    _
  %s7 = ssub.s32 1, %s5
  %s8 = scalar_select 0, %s7, %s5
  // Predicated region
  $region2: #{resnet_ghost_forward.35} parent=0 // pred_check
    _
  $region3: #{resnet_ghost_forward.35} parent=0 // pred_check_branch
    %10 = sbr.rel (0) target = $region5
  $region4: #{resnet_ghost_forward.35} parent=0 // pred_region
    _
  $region5: #{resnet_ghost_forward.35} parent=0 // pred_fallthru
    _
  // Predicated region
  $region6: #{resnet_ghost_forward.35} parent=0 // pred_check
    _
  $region7: #{resnet_ghost_forward.35} parent=0 // pred_check_branch
    %12 = sbr.rel (0) target = $region9
  $region8: #{resnet_ghost_forward.35} parent=0 // pred_region
    _
  $region9: #{resnet_ghost_forward.35} parent=0 // pred_fallthru
    _
  // Predicated region
  $region10: #{resnet_ghost_forward.35} parent=0 // pred_check
    _
  $region11: #{resnet_ghost_forward.35} parent=0 // pred_check_branch
    %14 = sbr.rel (0) target = $region13
  $region12: #{resnet_ghost_forward.35} parent=0 // pred_region
    _
  $region13: #{resnet_ghost_forward.35} parent=0 // pred_fallthru
    _
  // Predicated region
  $region14: #{resnet_ghost_forward.35} parent=0 // pred_check
    _
  $region15: #{resnet_ghost_forward.35} parent=0 // pred_check_branch
    %16 = sbr.rel (0) target = $region17
  $region16: #{resnet_ghost_forward.35} parent=0 // pred_region
    _
  $region17: #{resnet_ghost_forward.35} parent=0 // pred_fallthru
    _
  %v18 = vld [vmem:[%s0] sm:$0xf]
  %v19 = vld [vmem:[%s1] sm:$0xf]
  %v20 = vld [vmem:[%s1 + $0x4] sm:$0xf]
  %v21 = vld [vmem:[%s1 + $0x8] sm:$0xf]
  %v25 = vunpack.c.l.b16 %v19
  %v26 = vunpack.c.l.b16 %v20
  %v27 = vunpack.c.l.b16 %v21
  %v28 = vpack.c.b16 %v26, %v25
  %v29 = vpack.c.b16 %v27, %v27
  %vm31 = vcmask 195584
  %v33 = vsel %vm31, %v18, 0
  %vm35 = vcmask 1043456
  %v37 = vsel %vm35, %v29, 0
  %39 = vmatpush.bf16.msra.mxu0 0
  %40 = vmatpush.bf16.msra.mxu0 0
  %41 = vmatpush.bf16.msra.mxu0 0
  %42 = vmatpush.bf16.msra.mxu0 0
  %43 = vmatpush.bf16.msra.mxu0 0
  %44 = vmatpush.bf16.msra.mxu0 0
  %45 = vmatpush.bf16.msra.mxu0 %v37
  %46 = vmatpush.bf16.msra.mxu0 %v28
  %47 = vmatmul.bf16.gmra.mxu0 %v33
  %v48 = vpop.f32.mrf.mxu0
  %v49 = vadd.f32 0.0, %v48
  %v50 = vpop.f32.mrf.mxu0
  %51 = vdwg.mxu0
  %v52 = vld [vmem:[%s2] sm:$0x1]
  %v54 = vperm.slane %v52, 0
  %v56 = vmul.f32 %v49, %v54
  %v57 = vld [vmem:[%s3] sm:$0x1]
  %v59 = vperm.slane %v57, 0
  %v61 = vadd.f32 %v56, %v59
  %62 = vst [vmem:[%s4] sm:$0xff] %v61
  // Predicated region
  $region18: #{resnet_ghost_forward.35} parent=0 // pred_check
    _
  $region19: #{resnet_ghost_forward.35} parent=0 // pred_check_branch
    %64 = sbr.rel (0) target = $region21
  $region20: #{resnet_ghost_forward.35} parent=0 // pred_region
    _
  $region21: #{resnet_ghost_forward.35} parent=0 // pred_fallthru
    _
  // Predicated region
  $region22: #{resnet_ghost_forward.35} parent=0 // pred_check
    _
  $region23: #{resnet_ghost_forward.35} parent=0 // pred_check_branch
    %66 = sbr.rel (0) target = $region25
  $region24: #{resnet_ghost_forward.35} parent=0 // pred_region
    _
  $region25: #{resnet_ghost_forward.35} parent=0 // pred_fallthru
    _

// kernel: resnet_ghost_forward.34
$region0: #{resnet_ghost_forward.34}
  #allocation0 [shape = 'u32[]', space=smem, size = 0x4, offset = 0x4, fixed_abs, tag = 'smem constant byte address 0x4 - core index']
  #allocation1 [shape = 'u32[72,128]{1,0:T(1,128)}', space=vmem, size = 0x9000, scoped, tag = 'internal scratch']
  %s0 = inlined_call_operand.vmem [shape: bf16[128,24], index: 0, kind: input, shape index: {}]
  %s1 = inlined_call_operand.vmem [shape: bf16[24,128], index: 1, kind: input, shape index: {}]
  %s2 = inlined_call_operand.vmem [shape: f32[1,128], index: 2, kind: input, shape index: {}]
  %s3 = inlined_call_operand.vmem [shape: f32[1,128], index: 3, kind: input, shape index: {}]
  %s4 = inlined_call_operand.vmem [shape: f32[128,128], index: 4, kind: output, shape index: {}]
  %s5 = sld [smem:[#allocation0]]
  $region26: #{resnet_ghost_forward.34} parent=0
    _
  %s7 = ssub.s32 1, %s5
  %s8 = scalar_select 0, %s7, %s5
  // Predicated region
  $region2: #{resnet_ghost_forward.34} parent=0 // pred_check
    _
  $region3: #{resnet_ghost_forward.34} parent=0 // pred_check_branch
    %10 = sbr.rel (0) target = $region5
  $region4: #{resnet_ghost_forward.34} parent=0 // pred_region
    _
  $region5: #{resnet_ghost_forward.34} parent=0 // pred_fallthru
    _
  // Predicated region
  $region6: #{resnet_ghost_forward.34} parent=0 // pred_check
    _
  $region7: #{resnet_ghost_forward.34} parent=0 // pred_check_branch
    %12 = sbr.rel (0) target = $region9
  $region8: #{resnet_ghost_forward.34} parent=0 // pred_region
    _
  $region9: #{resnet_ghost_forward.34} parent=0 // pred_fallthru
    _
  // Predicated region
  $region10: #{resnet_ghost_forward.34} parent=0 // pred_check
    _
  $region11: #{resnet_ghost_forward.34} parent=0 // pred_check_branch
    %14 = sbr.rel (0) target = $region13
  $region12: #{resnet_ghost_forward.34} parent=0 // pred_region
    _
  $region13: #{resnet_ghost_forward.34} parent=0 // pred_fallthru
    _
  // Predicated region
  $region14: #{resnet_ghost_forward.34} parent=0 // pred_check
    _
  $region15: #{resnet_ghost_forward.34} parent=0 // pred_check_branch
    %16 = sbr.rel (0) target = $region17
  $region16: #{resnet_ghost_forward.34} parent=0 // pred_region
    _
  $region17: #{resnet_ghost_forward.34} parent=0 // pred_fallthru
    _
  %v18 = vld [vmem:[%s0] sm:$0xf]
  %v19 = vld [vmem:[%s0 + $0x4] sm:$0xf]
  %v20 = vld [vmem:[%s0 + $0x8] sm:$0xf]
  %v21 = vld [vmem:[%s0 + $0xc] sm:$0xf]
  %v22 = vld [vmem:[%s0 + $0x10] sm:$0xf]
  %v23 = vld [vmem:[%s0 + $0x14] sm:$0xf]
  %v24 = vld [vmem:[%s0 + $0x18] sm:$0xf]
  %v25 = vld [vmem:[%s0 + $0x1c] sm:$0xf]
  %v26 = vld [vmem:[%s0 + $0x20] sm:$0xf]
  %v27 = vld [vmem:[%s0 + $0x24] sm:$0xf]
  %v28 = vld [vmem:[%s0 + $0x28] sm:$0xf]
  %v29 = vld [vmem:[%s0 + $0x2c] sm:$0xf]
  %v30 = vld [vmem:[%s0 + $0x30] sm:$0xf]
  %v31 = vld [vmem:[%s0 + $0x34] sm:$0xf]
  %v32 = vld [vmem:[%s0 + $0x38] sm:$0xf]
  %v33 = vld [vmem:[%s0 + $0x3c] sm:$0xf]
  %v34 = vld [vmem:[%s1] sm:$0xf]
  %v35 = vld [vmem:[%s1 + $0x4] sm:$0xf]
  %v36 = vld [vmem:[%s1 + $0x8] sm:$0xf]
  %v53 = vunpack.c.l.b16 %v18
  %v54 = vunpack.c.l.b16 %v19
  %v55 = vunpack.c.l.b16 %v20
  %v56 = vunpack.c.l.b16 %v21
  %v57 = vunpack.c.l.b16 %v22
  %v58 = vunpack.c.l.b16 %v23
  %v59 = vunpack.c.l.b16 %v24
  %v60 = vunpack.c.l.b16 %v25
  %v61 = vunpack.c.l.b16 %v26
  %v62 = vunpack.c.l.b16 %v27
  %v63 = vunpack.c.l.b16 %v28
  %v64 = vunpack.c.l.b16 %v29
  %v65 = vunpack.c.l.b16 %v30
  %v66 = vunpack.c.l.b16 %v31
  %v67 = vunpack.c.l.b16 %v32
  %v68 = vunpack.c.l.b16 %v33
  %v69 = vpack.c.b16 %v54, %v53
  %v70 = vpack.c.b16 %v56, %v55
  %v71 = vpack.c.b16 %v58, %v57
  %v72 = vpack.c.b16 %v60, %v59
  %v73 = vpack.c.b16 %v62, %v61
  %v74 = vpack.c.b16 %v64, %v63
  %v75 = vpack.c.b16 %v66, %v65
  %v76 = vpack.c.b16 %v68, %v67
  %v80 = vunpack.c.l.b16 %v34
  %v81 = vunpack.c.l.b16 %v35
  %v82 = vunpack.c.l.b16 %v36
  %v83 = vpack.c.b16 %v81, %v80
  %v84 = vpack.c.b16 %v82, %v82
  %vm86 = vcmask 195584
  %v88 = vsel %vm86, %v69, 0
  %v91 = vsel %vm86, %v70, 0
  %v94 = vsel %vm86, %v71, 0
  %v97 = vsel %vm86, %v72, 0
  %v100 = vsel %vm86, %v73, 0
  %v103 = vsel %vm86, %v74, 0
  %v106 = vsel %vm86, %v75, 0
  %v109 = vsel %vm86, %v76, 0
  %vm111 = vcmask 1043456
  %v113 = vsel %vm111, %v84, 0
  %115 = vmatpush.bf16.msra.mxu0 0
  %116 = vmatpush.bf16.msra.mxu0 0
  %117 = vmatpush.bf16.msra.mxu0 0
  %118 = vmatpush.bf16.msra.mxu0 0
  %119 = vmatpush.bf16.msra.mxu0 0
  %120 = vmatpush.bf16.msra.mxu0 0
  %121 = vmatpush.bf16.msra.mxu0 %v113
  %122 = vmatpush.bf16.msra.mxu0 %v83
  %123 = vmatmul.bf16.gmra.mxu0 %v88
  %v124 = vpop.f32.mrf.mxu0
  %v125 = vadd.f32 0.0, %v124
  %v126 = vpop.f32.mrf.mxu0
  %v127 = vadd.f32 0.0, %v126
  %128 = vmatmul.bf16.gmra.mxu0 %v91
  %v129 = vpop.f32.mrf.mxu0
  %v130 = vadd.f32 0.0, %v129
  %v131 = vpop.f32.mrf.mxu0
  %v132 = vadd.f32 0.0, %v131
  %133 = vmatmul.bf16.gmra.mxu0 %v94
  %v134 = vpop.f32.mrf.mxu0
  %v135 = vadd.f32 0.0, %v134
  %v136 = vpop.f32.mrf.mxu0
  %v137 = vadd.f32 0.0, %v136
  %138 = vmatmul.bf16.gmra.mxu0 %v97
  %v139 = vpop.f32.mrf.mxu0
  %v140 = vadd.f32 0.0, %v139
  %v141 = vpop.f32.mrf.mxu0
  %v142 = vadd.f32 0.0, %v141
  %143 = vmatmul.bf16.gmra.mxu0 %v100
  %v144 = vpop.f32.mrf.mxu0
  %v145 = vadd.f32 0.0, %v144
  %v146 = vpop.f32.mrf.mxu0
  %v147 = vadd.f32 0.0, %v146
  %148 = vmatmul.bf16.gmra.mxu0 %v103
  %v149 = vpop.f32.mrf.mxu0
  %v150 = vadd.f32 0.0, %v149
  %v151 = vpop.f32.mrf.mxu0
  %v152 = vadd.f32 0.0, %v151
  %153 = vmatmul.bf16.gmra.mxu0 %v106
  %v154 = vpop.f32.mrf.mxu0
  %v155 = vadd.f32 0.0, %v154
  %v156 = vpop.f32.mrf.mxu0
  %v157 = vadd.f32 0.0, %v156
  %158 = vmatmul.bf16.gmra.mxu0 %v109
  %v159 = vpop.f32.mrf.mxu0
  %v160 = vadd.f32 0.0, %v159
  %v161 = vpop.f32.mrf.mxu0
  %v162 = vadd.f32 0.0, %v161
  %163 = vdwg.mxu0
  %v164 = vld [vmem:[%s2] sm:$0x1]
  %v166 = vperm.slane %v164, 0
  %v168 = vmul.f32 %v125, %v166
  %v169 = vmul.f32 %v127, %v166
  %v170 = vmul.f32 %v130, %v166
  %v171 = vmul.f32 %v132, %v166
  %v172 = vmul.f32 %v135, %v166
  %v173 = vmul.f32 %v137, %v166
  %v174 = vmul.f32 %v140, %v166
  %v175 = vmul.f32 %v142, %v166
  %v176 = vmul.f32 %v145, %v166
  %v177 = vmul.f32 %v147, %v166
  %v178 = vmul.f32 %v150, %v166
  %v179 = vmul.f32 %v152, %v166
  %v180 = vmul.f32 %v155, %v166
  %v181 = vmul.f32 %v157, %v166
  %v182 = vmul.f32 %v160, %v166
  %v183 = vmul.f32 %v162, %v166
  %v184 = vld [vmem:[%s3] sm:$0x1]
  %v186 = vperm.slane %v184, 0
  %v188 = vadd.f32 %v168, %v186
  %v189 = vadd.f32 %v169, %v186
  %v190 = vadd.f32 %v170, %v186
  %v191 = vadd.f32 %v171, %v186
  %v192 = vadd.f32 %v172, %v186
  %v193 = vadd.f32 %v173, %v186
  %v194 = vadd.f32 %v174, %v186
  %v195 = vadd.f32 %v175, %v186
  %v196 = vadd.f32 %v176, %v186
  %v197 = vadd.f32 %v177, %v186
  %v198 = vadd.f32 %v178, %v186
  %v199 = vadd.f32 %v179, %v186
  %v200 = vadd.f32 %v180, %v186
  %v201 = vadd.f32 %v181, %v186
  %v202 = vadd.f32 %v182, %v186
  %v203 = vadd.f32 %v183, %v186
  %v204 = vmax.f32 %v188, 0.0
  %v205 = vmax.f32 %v189, 0.0
  %v206 = vmax.f32 %v190, 0.0
  %v207 = vmax.f32 %v191, 0.0
  %v208 = vmax.f32 %v192, 0.0
  %v209 = vmax.f32 %v193, 0.0
  %v210 = vmax.f32 %v194, 0.0
  %v211 = vmax.f32 %v195, 0.0
  %v212 = vmax.f32 %v196, 0.0
  %v213 = vmax.f32 %v197, 0.0
  %v214 = vmax.f32 %v198, 0.0
  %v215 = vmax.f32 %v199, 0.0
  %v216 = vmax.f32 %v200, 0.0
  %v217 = vmax.f32 %v201, 0.0
  %v218 = vmax.f32 %v202, 0.0
  %v219 = vmax.f32 %v203, 0.0
  %220 = vst [vmem:[%s4] sm:$0xff] %v204
  %221 = vst [vmem:[%s4 + $0x8] sm:$0xff] %v205
  %222 = vst [vmem:[%s4 + $0x10] sm:$0xff] %v206
  %223 = vst [vmem:[%s4 + $0x18] sm:$0xff] %v207
  %224 = vst [vmem:[%s4 + $0x20] sm:$0xff] %v208
  %225 = vst [vmem:[%s4 + $0x28] sm:$0xff] %v209
  %226 = vst [vmem:[%s4 + $0x30] sm:$0xff] %v210
  %227 = vst [vmem:[%s4 + $0x38] sm:$0xff] %v211
  %228 = vst [vmem:[%s4 + $0x40] sm:$0xff] %v212
  %229 = vst [vmem:[%s4 + $0x48] sm:$0xff] %v213
  %230 = vst [vmem:[%s4 + $0x50] sm:$0xff] %v214
  %231 = vst [vmem:[%s4 + $0x58] sm:$0xff] %v215
  %232 = vst [vmem:[%s4 + $0x60] sm:$0xff] %v216
  %233 = vst [vmem:[%s4 + $0x68] sm:$0xff] %v217
  %234 = vst [vmem:[%s4 + $0x70] sm:$0xff] %v218
  %235 = vst [vmem:[%s4 + $0x78] sm:$0xff] %v219
  // Predicated region
  $region18: #{resnet_ghost_forward.34} parent=0 // pred_check
    _
  $region19: #{resnet_ghost_forward.34} parent=0 // pred_check_branch
    %237 = sbr.rel (0) target = $region21
  $region20: #{resnet_ghost_forward.34} parent=0 // pred_region
    _
  $region21: #{resnet_ghost_forward.34} parent=0 // pred_fallthru
    _
  // Predicated region
  $region22: #{resnet_ghost_forward.34} parent=0 // pred_check
    _
  $region23: #{resnet_ghost_forward.34} parent=0 // pred_check_branch
    %239 = sbr.rel (0) target = $region25
  $region24: #{resnet_ghost_forward.34} parent=0 // pred_region
    _
  $region25: #{resnet_ghost_forward.34} parent=0 // pred_fallthru
    _

// kernel: resnet_ghost_forward.33
$region0: #{resnet_ghost_forward.33}
  #allocation0 [shape = 'u32[]', space=smem, size = 0x4, offset = 0x4, fixed_abs, tag = 'smem constant byte address 0x4 - core index']
  #allocation1 [shape = 'u32[72,128]{1,0:T(1,128)}', space=vmem, size = 0x9000, scoped, tag = 'internal scratch']
  %s0 = inlined_call_operand.vmem [shape: bf16[128,16], index: 0, kind: input, shape index: {}]
  %s1 = inlined_call_operand.vmem [shape: bf16[16,128], index: 1, kind: input, shape index: {}]
  %s2 = inlined_call_operand.vmem [shape: f32[1,128], index: 2, kind: input, shape index: {}]
  %s3 = inlined_call_operand.vmem [shape: f32[1,128], index: 3, kind: input, shape index: {}]
  %s4 = inlined_call_operand.vmem [shape: f32[128,128], index: 4, kind: input, shape index: {}]
  %s5 = inlined_call_operand.vmem [shape: f32[128,128], index: 5, kind: output, shape index: {}]
  %s6 = sld [smem:[#allocation0]]
  $region30: #{resnet_ghost_forward.33} parent=0
    _
  %s8 = ssub.s32 1, %s6
  %s9 = scalar_select 0, %s8, %s6
  // Predicated region
  $region2: #{resnet_ghost_forward.33} parent=0 // pred_check
    _
  $region3: #{resnet_ghost_forward.33} parent=0 // pred_check_branch
    %11 = sbr.rel (0) target = $region5
  $region4: #{resnet_ghost_forward.33} parent=0 // pred_region
    _
  $region5: #{resnet_ghost_forward.33} parent=0 // pred_fallthru
    _
  // Predicated region
  $region6: #{resnet_ghost_forward.33} parent=0 // pred_check
    _
  $region7: #{resnet_ghost_forward.33} parent=0 // pred_check_branch
    %13 = sbr.rel (0) target = $region9
  $region8: #{resnet_ghost_forward.33} parent=0 // pred_region
    _
  $region9: #{resnet_ghost_forward.33} parent=0 // pred_fallthru
    _
  // Predicated region
  $region10: #{resnet_ghost_forward.33} parent=0 // pred_check
    _
  $region11: #{resnet_ghost_forward.33} parent=0 // pred_check_branch
    %15 = sbr.rel (0) target = $region13
  $region12: #{resnet_ghost_forward.33} parent=0 // pred_region
    _
  $region13: #{resnet_ghost_forward.33} parent=0 // pred_fallthru
    _
  // Predicated region
  $region14: #{resnet_ghost_forward.33} parent=0 // pred_check
    _
  $region15: #{resnet_ghost_forward.33} parent=0 // pred_check_branch
    %17 = sbr.rel (0) target = $region17
  $region16: #{resnet_ghost_forward.33} parent=0 // pred_region
    _
  $region17: #{resnet_ghost_forward.33} parent=0 // pred_fallthru
    _
  // Predicated region
  $region18: #{resnet_ghost_forward.33} parent=0 // pred_check
    _
  $region19: #{resnet_ghost_forward.33} parent=0 // pred_check_branch
    %19 = sbr.rel (0) target = $region21
  $region20: #{resnet_ghost_forward.33} parent=0 // pred_region
    _
  $region21: #{resnet_ghost_forward.33} parent=0 // pred_fallthru
    _
  %v21 = vld [vmem:[%s0] sm:$0xf]
  %v22 = vld [vmem:[%s0 + $0x4] sm:$0xf]
  %v23 = vld [vmem:[%s0 + $0x8] sm:$0xf]
  %v24 = vld [vmem:[%s0 + $0xc] sm:$0xf]
  %v25 = vld [vmem:[%s0 + $0x10] sm:$0xf]
  %v26 = vld [vmem:[%s0 + $0x14] sm:$0xf]
  %v27 = vld [vmem:[%s0 + $0x18] sm:$0xf]
  %v28 = vld [vmem:[%s0 + $0x1c] sm:$0xf]
  %v29 = vld [vmem:[%s0 + $0x20] sm:$0xf]
  %v30 = vld [vmem:[%s0 + $0x24] sm:$0xf]
  %v31 = vld [vmem:[%s0 + $0x28] sm:$0xf]
  %v32 = vld [vmem:[%s0 + $0x2c] sm:$0xf]
  %v33 = vld [vmem:[%s0 + $0x30] sm:$0xf]
  %v34 = vld [vmem:[%s0 + $0x34] sm:$0xf]
  %v35 = vld [vmem:[%s0 + $0x38] sm:$0xf]
  %v36 = vld [vmem:[%s0 + $0x3c] sm:$0xf]
  %v37 = vld [vmem:[%s1] sm:$0xf]
  %v38 = vld [vmem:[%s1 + $0x4] sm:$0xf]
  %v55 = vunpack.c.l.b16 %v21
  %v56 = vunpack.c.l.b16 %v22
  %v57 = vunpack.c.l.b16 %v23
  %v58 = vunpack.c.l.b16 %v24
  %v59 = vunpack.c.l.b16 %v25
  %v60 = vunpack.c.l.b16 %v26
  %v61 = vunpack.c.l.b16 %v27
  %v62 = vunpack.c.l.b16 %v28
  %v63 = vunpack.c.l.b16 %v29
  %v64 = vunpack.c.l.b16 %v30
  %v65 = vunpack.c.l.b16 %v31
  %v66 = vunpack.c.l.b16 %v32
  %v67 = vunpack.c.l.b16 %v33
  %v68 = vunpack.c.l.b16 %v34
  %v69 = vunpack.c.l.b16 %v35
  %v70 = vunpack.c.l.b16 %v36
  %v71 = vpack.c.b16 %v56, %v55
  %v72 = vpack.c.b16 %v58, %v57
  %v73 = vpack.c.b16 %v60, %v59
  %v74 = vpack.c.b16 %v62, %v61
  %v75 = vpack.c.b16 %v64, %v63
  %v76 = vpack.c.b16 %v66, %v65
  %v77 = vpack.c.b16 %v68, %v67
  %v78 = vpack.c.b16 %v70, %v69
  %v81 = vunpack.c.l.b16 %v37
  %v82 = vunpack.c.l.b16 %v38
  %v83 = vpack.c.b16 %v82, %v81
  %vm85 = vcmask 130048
  %v87 = vsel %vm85, %v71, 0
  %v90 = vsel %vm85, %v72, 0
  %v93 = vsel %vm85, %v73, 0
  %v96 = vsel %vm85, %v74, 0
  %v99 = vsel %vm85, %v75, 0
  %v102 = vsel %vm85, %v76, 0
  %v105 = vsel %vm85, %v77, 0
  %v108 = vsel %vm85, %v78, 0
  %110 = vmatpush.bf16.msra.mxu0 0
  %111 = vmatpush.bf16.msra.mxu0 0
  %112 = vmatpush.bf16.msra.mxu0 0
  %113 = vmatpush.bf16.msra.mxu0 0
  %114 = vmatpush.bf16.msra.mxu0 0
  %115 = vmatpush.bf16.msra.mxu0 0
  %116 = vmatpush.bf16.msra.mxu0 0
  %117 = vmatpush.bf16.msra.mxu0 %v83
  %118 = vmatmul.bf16.gmra.mxu0 %v87
  %v119 = vpop.f32.mrf.mxu0
  %v120 = vadd.f32 0.0, %v119
  %v121 = vpop.f32.mrf.mxu0
  %v122 = vadd.f32 0.0, %v121
  %123 = vmatmul.bf16.gmra.mxu0 %v90
  %v124 = vpop.f32.mrf.mxu0
  %v125 = vadd.f32 0.0, %v124
  %v126 = vpop.f32.mrf.mxu0
  %v127 = vadd.f32 0.0, %v126
  %128 = vmatmul.bf16.gmra.mxu0 %v93
  %v129 = vpop.f32.mrf.mxu0
  %v130 = vadd.f32 0.0, %v129
  %v131 = vpop.f32.mrf.mxu0
  %v132 = vadd.f32 0.0, %v131
  %133 = vmatmul.bf16.gmra.mxu0 %v96
  %v134 = vpop.f32.mrf.mxu0
  %v135 = vadd.f32 0.0, %v134
  %v136 = vpop.f32.mrf.mxu0
  %v137 = vadd.f32 0.0, %v136
  %138 = vmatmul.bf16.gmra.mxu0 %v99
  %v139 = vpop.f32.mrf.mxu0
  %v140 = vadd.f32 0.0, %v139
  %v141 = vpop.f32.mrf.mxu0
  %v142 = vadd.f32 0.0, %v141
  %143 = vmatmul.bf16.gmra.mxu0 %v102
  %v144 = vpop.f32.mrf.mxu0
  %v145 = vadd.f32 0.0, %v144
  %v146 = vpop.f32.mrf.mxu0
  %v147 = vadd.f32 0.0, %v146
  %148 = vmatmul.bf16.gmra.mxu0 %v105
  %v149 = vpop.f32.mrf.mxu0
  %v150 = vadd.f32 0.0, %v149
  %v151 = vpop.f32.mrf.mxu0
  %v152 = vadd.f32 0.0, %v151
  %153 = vmatmul.bf16.gmra.mxu0 %v108
  %v154 = vpop.f32.mrf.mxu0
  %v155 = vadd.f32 0.0, %v154
  %v156 = vpop.f32.mrf.mxu0
  %v157 = vadd.f32 0.0, %v156
  %158 = vdwg.mxu0
  %v159 = vld [vmem:[%s2] sm:$0x1]
  %v161 = vperm.slane %v159, 0
  %v163 = vmul.f32 %v120, %v161
  %v164 = vmul.f32 %v122, %v161
  %v165 = vmul.f32 %v125, %v161
  %v166 = vmul.f32 %v127, %v161
  %v167 = vmul.f32 %v130, %v161
  %v168 = vmul.f32 %v132, %v161
  %v169 = vmul.f32 %v135, %v161
  %v170 = vmul.f32 %v137, %v161
  %v171 = vmul.f32 %v140, %v161
  %v172 = vmul.f32 %v142, %v161
  %v173 = vmul.f32 %v145, %v161
  %v174 = vmul.f32 %v147, %v161
  %v175 = vmul.f32 %v150, %v161
  %v176 = vmul.f32 %v152, %v161
  %v177 = vmul.f32 %v155, %v161
  %v178 = vmul.f32 %v157, %v161
  %v179 = vld [vmem:[%s3] sm:$0x1]
  %v181 = vperm.slane %v179, 0
  %v183 = vadd.f32 %v163, %v181
  %v184 = vadd.f32 %v164, %v181
  %v185 = vadd.f32 %v165, %v181
  %v186 = vadd.f32 %v166, %v181
  %v187 = vadd.f32 %v167, %v181
  %v188 = vadd.f32 %v168, %v181
  %v189 = vadd.f32 %v169, %v181
  %v190 = vadd.f32 %v170, %v181
  %v191 = vadd.f32 %v171, %v181
  %v192 = vadd.f32 %v172, %v181
  %v193 = vadd.f32 %v173, %v181
  %v194 = vadd.f32 %v174, %v181
  %v195 = vadd.f32 %v175, %v181
  %v196 = vadd.f32 %v176, %v181
  %v197 = vadd.f32 %v177, %v181
  %v198 = vadd.f32 %v178, %v181
  %v199 = vld [vmem:[%s4] sm:$0xff]
  %v200 = vld [vmem:[%s4 + $0x8] sm:$0xff]
  %v201 = vld [vmem:[%s4 + $0x10] sm:$0xff]
  %v202 = vld [vmem:[%s4 + $0x18] sm:$0xff]
  %v203 = vld [vmem:[%s4 + $0x20] sm:$0xff]
  %v204 = vld [vmem:[%s4 + $0x28] sm:$0xff]
  %v205 = vld [vmem:[%s4 + $0x30] sm:$0xff]
  %v206 = vld [vmem:[%s4 + $0x38] sm:$0xff]
  %v207 = vld [vmem:[%s4 + $0x40] sm:$0xff]
  %v208 = vld [vmem:[%s4 + $0x48] sm:$0xff]
  %v209 = vld [vmem:[%s4 + $0x50] sm:$0xff]
  %v210 = vld [vmem:[%s4 + $0x58] sm:$0xff]
  %v211 = vld [vmem:[%s4 + $0x60] sm:$0xff]
  %v212 = vld [vmem:[%s4 + $0x68] sm:$0xff]
  %v213 = vld [vmem:[%s4 + $0x70] sm:$0xff]
  %v214 = vld [vmem:[%s4 + $0x78] sm:$0xff]
  %v215 = vadd.f32 %v183, %v199
  %v216 = vadd.f32 %v184, %v200
  %v217 = vadd.f32 %v185, %v201
  %v218 = vadd.f32 %v186, %v202
  %v219 = vadd.f32 %v187, %v203
  %v220 = vadd.f32 %v188, %v204
  %v221 = vadd.f32 %v189, %v205
  %v222 = vadd.f32 %v190, %v206
  %v223 = vadd.f32 %v191, %v207
  %v224 = vadd.f32 %v192, %v208
  %v225 = vadd.f32 %v193, %v209
  %v226 = vadd.f32 %v194, %v210
  %v227 = vadd.f32 %v195, %v211
  %v228 = vadd.f32 %v196, %v212
  %v229 = vadd.f32 %v197, %v213
  %v230 = vadd.f32 %v198, %v214
  %231 = vst [vmem:[%s5] sm:$0xff] %v215
  %232 = vst [vmem:[%s5 + $0x8] sm:$0xff] %v216
  %233 = vst [vmem:[%s5 + $0x10] sm:$0xff] %v217
  %234 = vst [vmem:[%s5 + $0x18] sm:$0xff] %v218
  %235 = vst [vmem:[%s5 + $0x20] sm:$0xff] %v219
  %236 = vst [vmem:[%s5 + $0x28] sm:$0xff] %v220
  %237 = vst [vmem:[%s5 + $0x30] sm:$0xff] %v221
  %238 = vst [vmem:[%s5 + $0x38] sm:$0xff] %v222
  %239 = vst [vmem:[%s5 + $0x40] sm:$0xff] %v223
  %240 = vst [vmem:[%s5 + $0x48] sm:$0xff] %v224
  %241 = vst [vmem:[%s5 + $0x50] sm:$0xff] %v225
  %242 = vst [vmem:[%s5 + $0x58] sm:$0xff] %v226
  %243 = vst [vmem:[%s5 + $0x60] sm:$0xff] %v227
  %244 = vst [vmem:[%s5 + $0x68] sm:$0xff] %v228
  %245 = vst [vmem:[%s5 + $0x70] sm:$0xff] %v229
  %246 = vst [vmem:[%s5 + $0x78] sm:$0xff] %v230
  // Predicated region
  $region22: #{resnet_ghost_forward.33} parent=0 // pred_check
    _
  $region23: #{resnet_ghost_forward.33} parent=0 // pred_check_branch
    %248 = sbr.rel (0) target = $region25
  $region24: #{resnet_ghost_forward.33} parent=0 // pred_region
    _
  $region25: #{resnet_ghost_forward.33} parent=0 // pred_fallthru
    _
  // Predicated region
  $region26: #{resnet_ghost_forward.33} parent=0 // pred_check
    _
  $region27: #{resnet_ghost_forward.33} parent=0 // pred_check_branch
    %250 = sbr.rel (0) target = $region29
  $region28: #{resnet_ghost_forward.33} parent=0 // pred_region
    _
  $region29: #{resnet_ghost_forward.33} parent=0 // pred_fallthru
    _

</llo_original>
